<compile_context>
chip_gen: v7x
topology: tpu7x:2x2x1
jax: 0.10.0
libtpu: 0.0.40
codegen_flags: <defaults>
</compile_context>

<pallas_src>
import functools

import jax
import jax.numpy as jnp
from jax.experimental import pallas as pl
from jax.experimental.pallas import tpu as pltpu


# --------------------------- in-kernel math helpers --------------------------

def _ln(x, g, b, eps=1e-5):
    """LayerNorm over the last axis (PyTorch eps=1e-5)."""
    mean = jnp.mean(x, axis=-1, keepdims=True)
    var = jnp.mean(jnp.square(x - mean), axis=-1, keepdims=True)
    return (x - mean) * jax.lax.rsqrt(var + eps) * g + b


def _erf_f32(x):
    # Abramowitz & Stegun 7.1.26 rational approximation, |err| <= 1.5e-7.
    a1, a2, a3, a4, a5 = (0.254829592, -0.284496736, 1.421413741,
                          -1.453152027, 1.061405429)
    p = 0.3275911
    sgn = jnp.where(x >= 0.0, 1.0, -1.0)
    ax = jnp.abs(x)
    t = 1.0 / (1.0 + p * ax)
    poly = ((((a5 * t + a4) * t + a3) * t + a2) * t + a1) * t
    return sgn * (1.0 - poly * jnp.exp(-ax * ax))


def _gelu_exact(x):
    # TODO(synk): lax.erf has no guaranteed Mosaic lowering; exact erf-GELU is
    # reproduced in-kernel with the A&S 7.1.26 polynomial (f32-accurate).
    return 0.5 * x * (1.0 + _erf_f32(x * 0.7071067811865476))


# ---------------------- fully fused encoder kernel ---------------------------
#
# grid = (num_layers,), "arbitrary".  Activation x_sc (B*S, d) persists in
# VMEM across the layer axis.  Per-layer weight slabs selected via index_map.

def _encoder_kernel(xin_ref, guid_ref, pre_ref, head_ref, norms_ref,
                    wslab_ref, w2slab_ref, vslab_ref,
                    o_ref, x_sc,
                    *, nhead, d, B, S, Lg, Din, num_layers):
    hd = d // nhead
    scale = 1.0 / float(hd) ** 0.5
    l = pl.program_id(0)

    # ---- first grid step: stage_proj + input_norm -> VMEM-resident scratch --
    @pl.when(l == 0)
    def _():
        pre = pre_ref[...]                              # (Din+1, d): [W ; b]
        nrm = norms_ref[...]                            # (1, 4d)
        y = jnp.dot(xin_ref[...], pre[:Din, :],
                    preferred_element_type=jnp.float32) + pre[Din:Din + 1, :]
        x_sc[...] = _ln(y, nrm[:, 0:d], nrm[:, d:2 * d])

    # ---------------- unpack this layer's packed weight slabs ----------------
    W = wslab_ref[0]                                    # (d, 12d)
    sa_wq, sa_wkv, sa_wo = W[:, 0:d], W[:, d:3 * d], W[:, 3 * d:4 * d]
    ca_wq, ca_wkv, ca_wo = W[:, 4 * d:5 * d], W[:, 5 * d:7 * d], W[:, 7 * d:8 * d]
    w1 = W[:, 8 * d:12 * d]                             # (d, 4d)
    w2 = w2slab_ref[0]                                  # (4d, d)
    rows = vslab_ref[0]                                 # (5, 4d) biases / norms
    sa_bq, sa_bkv, sa_bo = rows[0:1, 0:d], rows[0:1, d:3 * d], rows[0:1, 3 * d:4 * d]
    ca_bq, ca_bkv, ca_bo = rows[1:2, 0:d], rows[1:2, d:3 * d], rows[1:2, 3 * d:4 * d]
    b1 = rows[2:3, :]
    b2, g1, bn1, g2 = (rows[3:4, 0:d], rows[3:4, d:2 * d],
                       rows[3:4, 2 * d:3 * d], rows[3:4, 3 * d:4 * d])
    bn2, g3, bn3 = rows[4:5, 0:d], rows[4:5, d:2 * d], rows[4:5, 2 * d:3 * d]

    def mha(x2, kv2, n_kv, wq, wkv, bq, bkv, wo, bo):
        """Multi-head attention on row-stacked (B*n, d) operands.

        Heads accumulate straight into the out-projection (no concat)."""
        q = jnp.dot(x2, wq, preferred_element_type=jnp.float32) + bq
        kvp = jnp.dot(kv2, wkv, preferred_element_type=jnp.float32) + bkv
        k, v = kvp[:, :d], kvp[:, d:]
        outs = []
        for b in range(B):                               # static, B tiny
            qb = q[b * S:(b + 1) * S, :] * scale
            kb = k[b * n_kv:(b + 1) * n_kv, :]
            vb = v[b * n_kv:(b + 1) * n_kv, :]
            acc = jnp.zeros((S, d), jnp.float32)
            for h in range(nhead):                       # static head loop
                sl = slice(h * hd, (h + 1) * hd)
                s = jax.lax.dot_general(qb[:, sl], kb[:, sl],
                                        (((1,), (1,)), ((), ())),
                                        preferred_element_type=jnp.float32)
                s = s - jnp.max(s, axis=-1, keepdims=True)
                p = jnp.exp(s)
                p = p * pl.reciprocal(jnp.sum(p, axis=-1, keepdims=True),
                                      approx=True)
                hv = jnp.dot(p, vb[:, sl], preferred_element_type=jnp.float32)
                acc = acc + jnp.dot(hv, wo[sl, :],
                                    preferred_element_type=jnp.float32)
            outs.append(acc)
        return jnp.concatenate(outs, axis=0) + bo

    # ------------------------------ layer body --------------------------------
    guid2 = guid_ref[...]                                # (B*Lg, d)
    x = x_sc[...]                                        # (B*S, d)
    # self-attention + residual + norm1
    x = _ln(x + mha(x, x, S, sa_wq, sa_wkv, sa_bq, sa_bkv, sa_wo, sa_bo),
            g1, bn1)
    # cross-attention + residual + norm2
    x = _ln(x + mha(x, guid2, Lg, ca_wq, ca_wkv, ca_bq, ca_bkv, ca_wo, ca_bo),
            g2, bn2)
    # feed-forward (GELU) + residual + norm3
    h = _gelu_exact(jnp.dot(x, w1, preferred_element_type=jnp.float32) + b1)
    y = jnp.dot(h, w2, preferred_element_type=jnp.float32) + b2
    x = _ln(x + y, g3, bn3)
    x_sc[...] = x

    # ---- last grid step: output_norm + lane-dense (padded) output head ------
    @pl.when(l == num_layers - 1)
    def _():
        nrm = norms_ref[...]
        hw = head_ref[...]                               # (d+1, Vp): [W ; b]
        xn = _ln(x, nrm[:, 2 * d:3 * d], nrm[:, 3 * d:4 * d])
        o_ref[...] = (jnp.dot(xn, hw[:d, :], preferred_element_type=jnp.float32)
                      + hw[d:d + 1, :]).astype(o_ref.dtype)


def encoder_forward(x, stage_indices, guidance, ep, cfg):
    """CrossGridMLMHEncoder.forward — one fused Pallas launch."""
    B, S, d = x.shape
    Lg = guidance.shape[1]
    L = cfg["num_layers"]
    Vp = ep["head"].shape[1]

    if stage_indices is not None:
        stage_emb = ep["stage_embedding"][stage_indices]              # (B, sd)
        stage_emb = jnp.broadcast_to(stage_emb[:, None, :],
                                     (B, S, stage_emb.shape[-1]))
        xin = jnp.concatenate([x, stage_emb], axis=-1)                # (B,S,d+sd)
        pre = ep["pre"]                                               # (d+sd+1, d)
    else:
        # no stage_proj: identity weight + zero bias (input_norm still applied)
        xin = x
        pre = jnp.concatenate([jnp.eye(d, dtype=jnp.float32),
                               jnp.zeros((1, d), jnp.float32)], axis=0)
    Din = xin.shape[-1]
    xin2 = xin.reshape(B * S, Din)
    guid2 = guidance.reshape(B * Lg, d)

    kernel = functools.partial(_encoder_kernel, nhead=cfg["nhead"], d=d, B=B,
                               S=S, Lg=Lg, Din=Din, num_layers=L)
    out = pl.pallas_call(
        kernel,
        out_shape=jax.ShapeDtypeStruct((B * S, Vp), jnp.float32),
        grid=(L,),
        in_specs=[
            pl.BlockSpec((B * S, Din), lambda l: (0, 0)),
            pl.BlockSpec((B * Lg, d), lambda l: (0, 0)),
            pl.BlockSpec(pre.shape, lambda l: (0, 0)),
            pl.BlockSpec(ep["head"].shape, lambda l: (0, 0)),
            pl.BlockSpec(ep["norms"].shape, lambda l: (0, 0)),
            pl.BlockSpec((1, d, 12 * d), lambda l: (l, 0, 0)),
            pl.BlockSpec((1, 4 * d, d), lambda l: (l, 0, 0)),
            pl.BlockSpec((1, 5, 4 * d), lambda l: (l, 0, 0)),
        ],
        out_specs=pl.BlockSpec((B * S, Vp), lambda l: (0, 0)),
        scratch_shapes=[pltpu.VMEM((B * S, d), jnp.float32)],
        compiler_params=pltpu.CompilerParams(dimension_semantics=("arbitrary",)),
    )(xin2, guid2, pre, ep["head"], ep["norms"],
      ep["wslab"], ep["w2slab"], ep["vslab"])

    # LayerNorm/head are per-position, so slicing after is equivalent to the
    # reference's output_head(full_seq[:, -256:, :]).
    logits = out.reshape(B, S, Vp)[:, -256:, :cfg["chord_vocab_size"]]
    return logits


# ------------------------------- guidance BiLSTM ------------------------------

def bilstm(g_emb, lp, H):
    """Bidirectional single-layer LSTM, PyTorch gate order (i, f, g, o).

    Both directions share ONE lax.scan: the backward stream is time-reversed
    and a block-diagonal (2H, 8H) recurrent weight makes each step a single
    lane-dense matmul.  The input projection is hoisted out of the recurrence.
    """
    B, T, E = g_emb.shape
    gx = g_emb.reshape(B * T, E) @ lp["w_ih_t"] + lp["b_ih"]          # (B*T, 8H)
    gx = gx.reshape(B, T, 8 * H)
    gx_f = jnp.swapaxes(gx[..., :4 * H], 0, 1)                        # (T, B, 4H)
    gx_b = jnp.swapaxes(gx[..., 4 * H:], 0, 1)[::-1]                  # reversed
    gseq = jnp.concatenate([gx_f, gx_b], axis=-1)                     # (T, B, 8H)
    w_hh = lp["w_hh_blockdiag"]                                       # (2H, 8H)

    # TODO(synk): the h/c recurrence is inherently sequential; it stays in a
    # plain-JAX lax.scan (one (B,2H)x(2H,8H) matmul per step).
    def step(carry, gt):
        h, c = carry                                                  # (B,2,H)
        gates = (gt + h.reshape(B, 2 * H) @ w_hh).reshape(B, 2, 4 * H)
        i = jax.nn.sigmoid(gates[..., 0:H])
        f = jax.nn.sigmoid(gates[..., H:2 * H])
        g = jnp.tanh(gates[..., 2 * H:3 * H])
        o = jax.nn.sigmoid(gates[..., 3 * H:4 * H])
        c = f * c + i * g
        h = o * jnp.tanh(c)
        return (h, c), h

    h0 = jnp.zeros((B, 2, H), jnp.float32)
    c0 = jnp.zeros((B, 2, H), jnp.float32)
    _, hs = jax.lax.scan(step, (h0, c0), gseq)                        # (T,B,2,H)
    fwd = jnp.swapaxes(hs[:, :, 0, :], 0, 1)                          # (B, T, H)
    bwd = jnp.swapaxes(hs[::-1, :, 1, :], 0, 1)                       # (B, T, H)
    return jnp.concatenate([fwd, bwd], axis=-1)                       # (B, T, 2H)


# --------------------------------- full model ---------------------------------

def cross_guided_mlmh_forward(prepared, conditioning_vec, melody_grid,
                              harmony_tokens, guiding_harmony, stage_indices, cfg):
    """CrossGuidedMLMH.forward (return_loss=False)."""
    B = conditioning_vec.shape[0]
    d = cfg["d_model"]
    G = cfg["grid_length"]
    H = cfg["lstm_hidden"]

    # Tiny pre-projections: plain jnp (XLA fuses); a pallas_call would cost
    # more in dispatch than these matmuls do in compute.
    cond_emb = (conditioning_vec @ prepared["condition_proj_w"]
                + prepared["condition_proj_b"])[:, None, :]               # (B,1,d)
    melody_emb = (melody_grid.reshape(B * G, -1) @ prepared["melody_proj_w"]
                  + prepared["melody_proj_b"]).reshape(B, G, d)           # (B,G,d)
    if harmony_tokens is not None:
        harmony_emb = prepared["harmony_embedding"][harmony_tokens]       # (B,G,d)
    else:
        harmony_emb = jnp.zeros((B, G, d), jnp.float32)

    input_seq = jnp.concatenate([cond_emb, melody_emb, harmony_emb], axis=1)
    S = input_seq.shape[1]
    input_seq = input_seq + prepared["pos_embedding"][:, :S, :]

    # guidance path
    g_emb = prepared["guidance_embedding"][guiding_harmony]               # (B,Lg,E)
    guid_enc = bilstm(g_emb, prepared["guidance_lstm"], H)                # (B,Lg,2H)
    Lg = guid_enc.shape[1]
    guidance_proj = (guid_enc.reshape(B * Lg, 2 * H) @ prepared["proj_guidance_w"]
                     + prepared["proj_guidance_b"]).reshape(B, Lg, d)

    return encoder_forward(input_seq, stage_indices, guidance_proj,
                           prepared["encoder"], cfg)


# --------------------- parameter init (PyTorch layout) -----------------------

def make_params(cfg):
    base_key = jax.random.PRNGKey(0)
    counter = [0]

    def nxt():
        counter[0] += 1
        return jax.random.fold_in(base_key, counter[0])

    def nrm(shape, scale=0.02):
        return scale * jax.random.normal(nxt(), shape, dtype=jnp.float32)

    zeros = lambda shape: jnp.zeros(shape, jnp.float32)
    ones = lambda shape: jnp.ones(shape, jnp.float32)

    d = cfg["d_model"]
    V = cfg["chord_vocab_size"]
    sd = cfg["stage_embedding_dim"]
    E = cfg["lstm_embed"]
    H = cfg["lstm_hidden"]
    seq_len = 1 + 2 * cfg["grid_length"]

    def mha_params():
        return {
            "in_proj_weight": nrm((3 * d, d)),
            "in_proj_bias": zeros((3 * d,)),
            "out_proj_weight": nrm((d, d)),
            "out_proj_bias": zeros((d,)),
        }

    def layer_params():
        ff = 4 * d
        return {
            "self_attn": mha_params(),
            "cross_attn": mha_params(),
            "linear1_w": nrm((ff, d)), "linear1_b": zeros((ff,)),
            "linear2_w": nrm((d, ff)), "linear2_b": zeros((d,)),
            "norm1_g": ones((d,)), "norm1_b": zeros((d,)),
            "norm2_g": ones((d,)), "norm2_b": zeros((d,)),
            "norm3_g": ones((d,)), "norm3_b": zeros((d,)),
        }

    encoder = {
        "stage_embedding": nrm((cfg["max_stages"], sd)),
        "stage_proj_w": nrm((d, d + sd)), "stage_proj_b": zeros((d,)),
        "layers": [layer_params() for _ in range(cfg["num_layers"])],
        "input_norm_g": ones((d,)), "input_norm_b": zeros((d,)),
        "output_norm_g": ones((d,)), "output_norm_b": zeros((d,)),
        "output_head_w": nrm((V, d)), "output_head_b": zeros((V,)),
    }

    guidance_lstm = {
        "w_ih_f": nrm((4 * H, E)), "w_hh_f": nrm((4 * H, H)),
        "b_ih_f": zeros((4 * H,)), "b_hh_f": zeros((4 * H,)),
        "w_ih_b": nrm((4 * H, E)), "w_hh_b": nrm((4 * H, H)),
        "b_ih_b": zeros((4 * H,)), "b_hh_b": zeros((4 * H,)),
    }

    return {
        "condition_proj_w": nrm((d, cfg["conditioning_dim"])),
        "condition_proj_b": zeros((d,)),
        "melody_proj_w": nrm((d, cfg["pianoroll_dim"])),
        "melody_proj_b": zeros((d,)),
        "harmony_embedding": nrm((V, d)),
        "pos_embedding": nrm((1, seq_len, d), scale=1.0),   # torch.randn
        "guidance_embedding": nrm((cfg["lstm_vocab"], E)),
        "guidance_lstm": guidance_lstm,
        "proj_guidance_w": nrm((d, 2 * H)),
        "proj_guidance_b": zeros((d,)),
        "encoder": encoder,
    }


# ------------- one-time weight packing (slabs; no .T in hot path) -------------

def prepare_params(params, cfg):
    d = cfg["d_model"]
    V = cfg["chord_vocab_size"]
    H = cfg["lstm_hidden"]
    f32 = jnp.float32
    e = params["encoder"]

    def pack_layer(p):
        def split_mha(mp):
            w_in, b_in = mp["in_proj_weight"], mp["in_proj_bias"]
            return (w_in[:d].T, w_in[d:].T, mp["out_proj_weight"].T,
                    b_in[:d], b_in[d:], mp["out_proj_bias"])

        sa_wq, sa_wkv, sa_wo, sa_bq, sa_bkv, sa_bo = split_mha(p["self_attn"])
        ca_wq, ca_wkv, ca_wo, ca_bq, ca_bkv, ca_bo = split_mha(p["cross_attn"])
        wslab = jnp.concatenate(
            [sa_wq, sa_wkv, sa_wo, ca_wq, ca_wkv, ca_wo, p["linear1_w"].T],
            axis=1)                                                    # (d, 12d)
        vslab = jnp.stack([
            jnp.concatenate([sa_bq, sa_bkv, sa_bo]),                   # (4d,)
            jnp.concatenate([ca_bq, ca_bkv, ca_bo]),
            p["linear1_b"],
            jnp.concatenate([p["linear2_b"], p["norm1_g"],
                             p["norm1_b"], p["norm2_g"]]),
            jnp.concatenate([p["norm2_b"], p["norm3_g"], p["norm3_b"],
                             jnp.zeros((d,), f32)]),
        ])                                                             # (5, 4d)
        return wslab, p["linear2_w"].T, vslab

    packed = [pack_layer(p) for p in e["layers"]]
    wslab = jnp.stack([w for w, _, _ in packed])       # (L, d, 12d)
    w2slab = jnp.stack([w2 for _, w2, _ in packed])     # (L, 4d, d)
    vslab = jnp.stack([v for _, _, v in packed])        # (L, 5, 4d)

    # lane-dense (padded) output head, bias appended as last row
    Vp = max(128, ((V + 127) // 128) * 128)
    head = jnp.zeros((d + 1, Vp), f32)
    head = head.at[:d, :V].set(e["output_head_w"].T)
    head = head.at[d, :V].set(e["output_head_b"])

    pre = jnp.concatenate([e["stage_proj_w"].T,
                           e["stage_proj_b"][None, :]], axis=0)        # (d+sd+1, d)
    norms = jnp.concatenate([e["input_norm_g"], e["input_norm_b"],
                             e["output_norm_g"],
                             e["output_norm_b"]]).reshape(1, 4 * d)

    encoder = dict(stage_embedding=e["stage_embedding"], pre=pre, head=head,
                   norms=norms, wslab=wslab, w2slab=w2slab, vslab=vslab)

    lp = params["guidance_lstm"]
    w_hh_bd = jnp.zeros((2 * H, 8 * H), f32)
    w_hh_bd = w_hh_bd.at[:H, :4 * H].set(lp["w_hh_f"].T)
    w_hh_bd = w_hh_bd.at[H:, 4 * H:].set(lp["w_hh_b"].T)
    lstm = dict(
        w_ih_t=jnp.concatenate([lp["w_ih_f"].T, lp["w_ih_b"].T], axis=1),
        b_ih=jnp.concatenate([lp["b_ih_f"] + lp["b_hh_f"],
                              lp["b_ih_b"] + lp["b_hh_b"]]).reshape(1, -1),
        w_hh_blockdiag=w_hh_bd,
    )

    return dict(
        condition_proj_w=params["condition_proj_w"].T,
        condition_proj_b=params["condition_proj_b"][None, :],
        melody_proj_w=params["melody_proj_w"].T,
        melody_proj_b=params["melody_proj_b"][None, :],
        harmony_embedding=params["harmony_embedding"],
        pos_embedding=params["pos_embedding"],
        guidance_embedding=params["guidance_embedding"],
        guidance_lstm=lstm,
        proj_guidance_w=params["proj_guidance_w"].T,
        proj_guidance_b=params["proj_guidance_b"][None, :],
        encoder=encoder,
    )


# ----------------------------------- main ------------------------------------

if __name__ == "__main__":
    cfg = dict(
        chord_vocab_size=24,
        d_model=32,
        nhead=4,
        num_layers=2,
        stage_embedding_dim=8,
        max_stages=4,
        conditioning_dim=16,
        pianoroll_dim=12,
        grid_length=8,
        lstm_vocab=24,
        lstm_embed=16,
        lstm_hidden=16,
    )

    params = make_params(cfg)
    prepared = prepare_params(params, cfg)

    key = jax.random.PRNGKey(0)
    k1, k2, k3, k4, k5 = jax.random.split(key, 5)
    B = 2
    G = cfg["grid_length"]
    Lg = 8
    conditioning_vec = jax.random.normal(k1, (B, cfg["conditioning_dim"]), jnp.float32)
    melody_grid = jax.random.normal(k2, (B, G, cfg["pianoroll_dim"]), jnp.float32)
    harmony_tokens = jax.random.randint(k3, (B, G), 0, cfg["chord_vocab_size"])
    guiding_harmony = jax.random.randint(k4, (B, Lg), 0, cfg["lstm_vocab"])
    stage_indices = jax.random.randint(k5, (B,), 0, cfg["max_stages"])

    forward = jax.jit(functools.partial(cross_guided_mlmh_forward, cfg=cfg))
    out = forward(prepared, conditioning_vec, melody_grid, harmony_tokens,
                  guiding_harmony, stage_indices)
    out = jax.block_until_ready(out)

    assert out.shape == (B, 1 + 2 * G, cfg["chord_vocab_size"]), out.shape
    assert bool(jnp.all(jnp.isfinite(out)))
    print("KERNEL_OK")
</pallas_src>

<mosaic_0001>
module attributes {stable_mosaic.version = 11 : i64} {
  func.func @_encoder_kernel(%arg0: i32, %arg1: memref<34x40xf32, #tpu.memory_space<vmem>>, %arg2: memref<16x32xf32, #tpu.memory_space<vmem>>, %arg3: memref<41x32xf32, #tpu.memory_space<vmem>>, %arg4: memref<33x128xf32, #tpu.memory_space<vmem>>, %arg5: memref<1x128xf32, #tpu.memory_space<vmem>>, %arg6: memref<1x32x384xf32, #tpu.memory_space<vmem>>, %arg7: memref<1x128x32xf32, #tpu.memory_space<vmem>>, %arg8: memref<1x5x128xf32, #tpu.memory_space<vmem>>, %arg9: memref<34x128xf32, #tpu.memory_space<vmem>>, %arg10: memref<34x32xf32, #tpu.memory_space<vmem>>) attributes {dimension_semantics = [#tpu.dimension_semantics<arbitrary>], iteration_bounds = array<i64: 2>, scalar_prefetch = 0 : i64, scratch_operands = 1 : i64, tpu.core_type = #tpu.core_type<tc>, window_params = [{pipeline_mode = #tpu.pipeline_mode<synchronous>, transform_indices = @transform_0, window_bounds = array<i64: 34, 40>}, {pipeline_mode = #tpu.pipeline_mode<synchronous>, transform_indices = @transform_1, window_bounds = array<i64: 16, 32>}, {pipeline_mode = #tpu.pipeline_mode<synchronous>, transform_indices = @transform_2, window_bounds = array<i64: 41, 32>}, {pipeline_mode = #tpu.pipeline_mode<synchronous>, transform_indices = @transform_3, window_bounds = array<i64: 33, 128>}, {pipeline_mode = #tpu.pipeline_mode<synchronous>, transform_indices = @transform_4, window_bounds = array<i64: 1, 128>}, {transform_indices = @transform_5, window_bounds = array<i64: 1, 32, 384>}, {transform_indices = @transform_6, window_bounds = array<i64: 1, 128, 32>}, {transform_indices = @transform_7, window_bounds = array<i64: 1, 5, 128>}, {pipeline_mode = #tpu.pipeline_mode<synchronous>, transform_indices = @transform_8, window_bounds = array<i64: 34, 128>}]} {
    %c0_i32 = arith.constant 0 : i32
    %0 = arith.cmpi eq, %arg0, %c0_i32 : i32
    %1 = arith.extui %0 : i1 to i32
    %c0_i32_0 = arith.constant 0 : i32
    %2 = arith.cmpi ne, %1, %c0_i32_0 : i32
    scf.if %2 {
      %c0_140 = arith.constant 0 : index
      %c0_141 = arith.constant 0 : index
      %486 = vector.load %arg3[%c0_140, %c0_141] : memref<41x32xf32, #tpu.memory_space<vmem>>, vector<41x32xf32>
      %c0_142 = arith.constant 0 : index
      %c0_143 = arith.constant 0 : index
      %487 = vector.load %arg5[%c0_142, %c0_143] : memref<1x128xf32, #tpu.memory_space<vmem>>, vector<1x128xf32>
      %c0_144 = arith.constant 0 : index
      %c0_145 = arith.constant 0 : index
      %488 = vector.load %arg1[%c0_144, %c0_145] : memref<34x40xf32, #tpu.memory_space<vmem>>, vector<34x40xf32>
      %489 = vector.extract_strided_slice %486 {offsets = [0, 0], sizes = [40, 32], strides = [1, 1]} : vector<41x32xf32> to vector<40x32xf32>
      %cst_146 = arith.constant dense<0.000000e+00> : vector<34x32xf32>
      %490 = tpu.matmul %488, %489, %cst_146 {dimension_numbers = #tpu.dot_dimension_numbers<[1], [0], [0], [1], [0, 0, 1, 1], [], []>} : vector<34x40xf32>, vector<40x32xf32>, vector<34x32xf32> -> vector<34x32xf32>
      %491 = vector.extract_strided_slice %486 {offsets = [40, 0], sizes = [1, 32], strides = [1, 1]} : vector<41x32xf32> to vector<1x32xf32>
      %492 = vector.broadcast %491 : vector<1x32xf32> to vector<34x32xf32>
      %493 = arith.addf %490, %492 : vector<34x32xf32>
      %494 = vector.extract_strided_slice %487 {offsets = [0, 0], sizes = [1, 32], strides = [1, 1]} : vector<1x128xf32> to vector<1x32xf32>
      %495 = vector.extract_strided_slice %487 {offsets = [0, 32], sizes = [1, 32], strides = [1, 1]} : vector<1x128xf32> to vector<1x32xf32>
      %cst_147 = arith.constant dense<0.000000e+00> : vector<34xf32>
      %496 = vector.multi_reduction <add>, %493, %cst_147 [1] : vector<34x32xf32> to vector<34xf32>
      %497 = vector.shape_cast %496 : vector<34xf32> to vector<34x1xf32>
      %cst_148 = arith.constant 3.200000e+01 : f32
      %498 = vector.broadcast %cst_148 : f32 to vector<34x1xf32>
      %499 = arith.divf %497, %498 : vector<34x1xf32>
      %500 = vector.broadcast %499 : vector<34x1xf32> to vector<34x32xf32>
      %501 = arith.subf %493, %500 : vector<34x32xf32>
      %502 = arith.mulf %501, %501 : vector<34x32xf32>
      %cst_149 = arith.constant dense<0.000000e+00> : vector<34xf32>
      %503 = vector.multi_reduction <add>, %502, %cst_149 [1] : vector<34x32xf32> to vector<34xf32>
      %504 = vector.shape_cast %503 : vector<34xf32> to vector<34x1xf32>
      %cst_150 = arith.constant 3.200000e+01 : f32
      %505 = vector.broadcast %cst_150 : f32 to vector<34x1xf32>
      %506 = arith.divf %504, %505 : vector<34x1xf32>
      %507 = vector.broadcast %499 : vector<34x1xf32> to vector<34x32xf32>
      %508 = arith.subf %493, %507 : vector<34x32xf32>
      %cst_151 = arith.constant 9.99999974E-6 : f32
      %509 = vector.broadcast %cst_151 : f32 to vector<34x1xf32>
      %510 = arith.addf %506, %509 : vector<34x1xf32>
      %511 = math.rsqrt %510 : vector<34x1xf32>
      %512 = vector.broadcast %511 : vector<34x1xf32> to vector<34x32xf32>
      %513 = arith.mulf %508, %512 : vector<34x32xf32>
      %514 = vector.broadcast %494 : vector<1x32xf32> to vector<34x32xf32>
      %515 = arith.mulf %513, %514 : vector<34x32xf32>
      %516 = vector.broadcast %495 : vector<1x32xf32> to vector<34x32xf32>
      %517 = arith.addf %515, %516 : vector<34x32xf32>
      %c0_152 = arith.constant 0 : index
      %c0_153 = arith.constant 0 : index
      %518 = vector.load %arg10[%c0_152, %c0_153] : memref<34x32xf32, #tpu.memory_space<vmem>>, vector<34x32xf32>
      tpu.vector_store %arg10[%c0_152, %c0_153], %517 {strides = array<i32>} : memref<34x32xf32, #tpu.memory_space<vmem>>, vector<34x32xf32>,
    } else {
    }
    %c0 = arith.constant 0 : index
    %c0_1 = arith.constant 0 : index
    %c0_2 = arith.constant 0 : index
    %3 = vector.load %arg6[%c0, %c0_1, %c0_2] : memref<1x32x384xf32, #tpu.memory_space<vmem>>, vector<1x32x384xf32>
    %4 = vector.shape_cast %3 : vector<1x32x384xf32> to vector<32x384xf32>
    %5 = vector.extract_strided_slice %4 {offsets = [0, 0], sizes = [32, 32], strides = [1, 1]} : vector<32x384xf32> to vector<32x32xf32>
    %6 = vector.extract_strided_slice %4 {offsets = [0, 32], sizes = [32, 64], strides = [1, 1]} : vector<32x384xf32> to vector<32x64xf32>
    %7 = vector.extract_strided_slice %4 {offsets = [0, 96], sizes = [32, 32], strides = [1, 1]} : vector<32x384xf32> to vector<32x32xf32>
    %8 = vector.extract_strided_slice %4 {offsets = [0, 128], sizes = [32, 32], strides = [1, 1]} : vector<32x384xf32> to vector<32x32xf32>
    %9 = vector.extract_strided_slice %4 {offsets = [0, 160], sizes = [32, 64], strides = [1, 1]} : vector<32x384xf32> to vector<32x64xf32>
    %10 = vector.extract_strided_slice %4 {offsets = [0, 224], sizes = [32, 32], strides = [1, 1]} : vector<32x384xf32> to vector<32x32xf32>
    %11 = vector.extract_strided_slice %4 {offsets = [0, 256], sizes = [32, 128], strides = [1, 1]} : vector<32x384xf32> to vector<32x128xf32>
    %c0_3 = arith.constant 0 : index
    %c0_4 = arith.constant 0 : index
    %c0_5 = arith.constant 0 : index
    %12 = vector.load %arg7[%c0_3, %c0_4, %c0_5] : memref<1x128x32xf32, #tpu.memory_space<vmem>>, vector<1x128x32xf32>
    %13 = vector.shape_cast %12 : vector<1x128x32xf32> to vector<128x32xf32>
    %c0_6 = arith.constant 0 : index
    %c0_7 = arith.constant 0 : index
    %c0_8 = arith.constant 0 : index
    %14 = vector.load %arg8[%c0_6, %c0_7, %c0_8] : memref<1x5x128xf32, #tpu.memory_space<vmem>>, vector<1x5x128xf32>
    %15 = vector.shape_cast %14 : vector<1x5x128xf32> to vector<5x128xf32>
    %16 = vector.extract_strided_slice %15 {offsets = [0, 0], sizes = [1, 32], strides = [1, 1]} : vector<5x128xf32> to vector<1x32xf32>
    %17 = vector.extract_strided_slice %15 {offsets = [0, 32], sizes = [1, 64], strides = [1, 1]} : vector<5x128xf32> to vector<1x64xf32>
    %18 = vector.extract_strided_slice %15 {offsets = [0, 96], sizes = [1, 32], strides = [1, 1]} : vector<5x128xf32> to vector<1x32xf32>
    %19 = vector.extract_strided_slice %15 {offsets = [1, 0], sizes = [1, 32], strides = [1, 1]} : vector<5x128xf32> to vector<1x32xf32>
    %20 = vector.extract_strided_slice %15 {offsets = [1, 32], sizes = [1, 64], strides = [1, 1]} : vector<5x128xf32> to vector<1x64xf32>
    %21 = vector.extract_strided_slice %15 {offsets = [1, 96], sizes = [1, 32], strides = [1, 1]} : vector<5x128xf32> to vector<1x32xf32>
    %22 = vector.extract_strided_slice %15 {offsets = [2, 0], sizes = [1, 128], strides = [1, 1]} : vector<5x128xf32> to vector<1x128xf32>
    %23 = vector.extract_strided_slice %15 {offsets = [3, 0], sizes = [1, 32], strides = [1, 1]} : vector<5x128xf32> to vector<1x32xf32>
    %24 = vector.extract_strided_slice %15 {offsets = [3, 32], sizes = [1, 32], strides = [1, 1]} : vector<5x128xf32> to vector<1x32xf32>
    %25 = vector.extract_strided_slice %15 {offsets = [3, 64], sizes = [1, 32], strides = [1, 1]} : vector<5x128xf32> to vector<1x32xf32>
    %26 = vector.extract_strided_slice %15 {offsets = [3, 96], sizes = [1, 32], strides = [1, 1]} : vector<5x128xf32> to vector<1x32xf32>
    %27 = vector.extract_strided_slice %15 {offsets = [4, 0], sizes = [1, 32], strides = [1, 1]} : vector<5x128xf32> to vector<1x32xf32>
    %28 = vector.extract_strided_slice %15 {offsets = [4, 32], sizes = [1, 32], strides = [1, 1]} : vector<5x128xf32> to vector<1x32xf32>
    %29 = vector.extract_strided_slice %15 {offsets = [4, 64], sizes = [1, 32], strides = [1, 1]} : vector<5x128xf32> to vector<1x32xf32>
    %c0_9 = arith.constant 0 : index
    %c0_10 = arith.constant 0 : index
    %30 = vector.load %arg2[%c0_9, %c0_10] : memref<16x32xf32, #tpu.memory_space<vmem>>, vector<16x32xf32>
    %c0_11 = arith.constant 0 : index
    %c0_12 = arith.constant 0 : index
    %31 = vector.load %arg10[%c0_11, %c0_12] : memref<34x32xf32, #tpu.memory_space<vmem>>, vector<34x32xf32>
    %cst = arith.constant dense<0.000000e+00> : vector<34x32xf32>
    %32 = tpu.matmul %31, %5, %cst {dimension_numbers = #tpu.dot_dimension_numbers<[1], [0], [0], [1], [0, 0, 1, 1], [], []>} : vector<34x32xf32>, vector<32x32xf32>, vector<34x32xf32> -> vector<34x32xf32>
    %33 = vector.broadcast %16 : vector<1x32xf32> to vector<34x32xf32>
    %34 = arith.addf %32, %33 : vector<34x32xf32>
    %cst_13 = arith.constant dense<0.000000e+00> : vector<34x64xf32>
    %35 = tpu.matmul %31, %6, %cst_13 {dimension_numbers = #tpu.dot_dimension_numbers<[1], [0], [0], [1], [0, 0, 1, 1], [], []>} : vector<34x32xf32>, vector<32x64xf32>, vector<34x64xf32> -> vector<34x64xf32>
    %36 = vector.broadcast %17 : vector<1x64xf32> to vector<34x64xf32>
    %37 = arith.addf %35, %36 : vector<34x64xf32>
    %38 = vector.extract_strided_slice %37 {offsets = [0, 0], sizes = [34, 32], strides = [1, 1]} : vector<34x64xf32> to vector<34x32xf32>
    %39 = vector.extract_strided_slice %37 {offsets = [0, 32], sizes = [34, 32], strides = [1, 1]} : vector<34x64xf32> to vector<34x32xf32>
    %40 = vector.extract_strided_slice %34 {offsets = [0, 0], sizes = [17, 32], strides = [1, 1]} : vector<34x32xf32> to vector<17x32xf32>
    %cst_14 = arith.constant 0.353553385 : f32
    %41 = vector.broadcast %cst_14 : f32 to vector<17x32xf32>
    %42 = arith.mulf %40, %41 : vector<17x32xf32>
    %43 = vector.extract_strided_slice %38 {offsets = [0, 0], sizes = [17, 32], strides = [1, 1]} : vector<34x32xf32> to vector<17x32xf32>
    %44 = vector.extract_strided_slice %39 {offsets = [0, 0], sizes = [17, 32], strides = [1, 1]} : vector<34x32xf32> to vector<17x32xf32>
    %cst_15 = arith.constant 0.000000e+00 : f32
    %45 = vector.broadcast %cst_15 : f32 to vector<17x32xf32>
    %46 = vector.extract_strided_slice %42 {offsets = [0, 0], sizes = [17, 8], strides = [1, 1]} : vector<17x32xf32> to vector<17x8xf32>
    %47 = vector.extract_strided_slice %43 {offsets = [0, 0], sizes = [17, 8], strides = [1, 1]} : vector<17x32xf32> to vector<17x8xf32>
    %cst_16 = arith.constant dense<0.000000e+00> : vector<17x17xf32>
    %48 = tpu.matmul %46, %47, %cst_16 {dimension_numbers = #tpu.dot_dimension_numbers<[1], [1], [0], [0], [0, 0, 1, 0], [], []>} : vector<17x8xf32>, vector<17x8xf32>, vector<17x17xf32> -> vector<17x17xf32>
    %cst_17 = arith.constant dense<0xFF800000> : vector<17xf32>
    %49 = vector.multi_reduction <maximumf>, %48, %cst_17 [1] : vector<17x17xf32> to vector<17xf32>
    %50 = vector.shape_cast %49 : vector<17xf32> to vector<17x1xf32>
    %51 = vector.broadcast %50 : vector<17x1xf32> to vector<17x17xf32>
    %52 = arith.subf %48, %51 : vector<17x17xf32>
    %53 = math.exp %52 : vector<17x17xf32>
    %cst_18 = arith.constant dense<0.000000e+00> : vector<17xf32>
    %54 = vector.multi_reduction <add>, %53, %cst_18 [1] : vector<17x17xf32> to vector<17xf32>
    %55 = vector.shape_cast %54 : vector<17xf32> to vector<17x1xf32>
    %56 = tpu.reciprocal %55 {approx = true} : vector<17x1xf32> -> vector<17x1xf32>
    %57 = vector.broadcast %56 : vector<17x1xf32> to vector<17x17xf32>
    %58 = arith.mulf %53, %57 : vector<17x17xf32>
    %59 = vector.extract_strided_slice %44 {offsets = [0, 0], sizes = [17, 8], strides = [1, 1]} : vector<17x32xf32> to vector<17x8xf32>
    %cst_19 = arith.constant dense<0.000000e+00> : vector<17x8xf32>
    %60 = tpu.matmul %58, %59, %cst_19 {dimension_numbers = #tpu.dot_dimension_numbers<[1], [0], [0], [1], [0, 0, 1, 1], [], []>} : vector<17x17xf32>, vector<17x8xf32>, vector<17x8xf32> -> vector<17x8xf32>
    %61 = vector.extract_strided_slice %7 {offsets = [0, 0], sizes = [8, 32], strides = [1, 1]} : vector<32x32xf32> to vector<8x32xf32>
    %cst_20 = arith.constant dense<0.000000e+00> : vector<17x32xf32>
    %62 = tpu.matmul %60, %61, %cst_20 {dimension_numbers = #tpu.dot_dimension_numbers<[1], [0], [0], [1], [0, 0, 1, 1], [], []>} : vector<17x8xf32>, vector<8x32xf32>, vector<17x32xf32> -> vector<17x32xf32>
    %63 = arith.addf %45, %62 : vector<17x32xf32>
    %64 = vector.extract_strided_slice %42 {offsets = [0, 8], sizes = [17, 8], strides = [1, 1]} : vector<17x32xf32> to vector<17x8xf32>
    %65 = vector.extract_strided_slice %43 {offsets = [0, 8], sizes = [17, 8], strides = [1, 1]} : vector<17x32xf32> to vector<17x8xf32>
    %cst_21 = arith.constant dense<0.000000e+00> : vector<17x17xf32>
    %66 = tpu.matmul %64, %65, %cst_21 {dimension_numbers = #tpu.dot_dimension_numbers<[1], [1], [0], [0], [0, 0, 1, 0], [], []>} : vector<17x8xf32>, vector<17x8xf32>, vector<17x17xf32> -> vector<17x17xf32>
    %cst_22 = arith.constant dense<0xFF800000> : vector<17xf32>
    %67 = vector.multi_reduction <maximumf>, %66, %cst_22 [1] : vector<17x17xf32> to vector<17xf32>
    %68 = vector.shape_cast %67 : vector<17xf32> to vector<17x1xf32>
    %69 = vector.broadcast %68 : vector<17x1xf32> to vector<17x17xf32>
    %70 = arith.subf %66, %69 : vector<17x17xf32>
    %71 = math.exp %70 : vector<17x17xf32>
    %cst_23 = arith.constant dense<0.000000e+00> : vector<17xf32>
    %72 = vector.multi_reduction <add>, %71, %cst_23 [1] : vector<17x17xf32> to vector<17xf32>
    %73 = vector.shape_cast %72 : vector<17xf32> to vector<17x1xf32>
    %74 = tpu.reciprocal %73 {approx = true} : vector<17x1xf32> -> vector<17x1xf32>
    %75 = vector.broadcast %74 : vector<17x1xf32> to vector<17x17xf32>
    %76 = arith.mulf %71, %75 : vector<17x17xf32>
    %77 = vector.extract_strided_slice %44 {offsets = [0, 8], sizes = [17, 8], strides = [1, 1]} : vector<17x32xf32> to vector<17x8xf32>
    %cst_24 = arith.constant dense<0.000000e+00> : vector<17x8xf32>
    %78 = tpu.matmul %76, %77, %cst_24 {dimension_numbers = #tpu.dot_dimension_numbers<[1], [0], [0], [1], [0, 0, 1, 1], [], []>} : vector<17x17xf32>, vector<17x8xf32>, vector<17x8xf32> -> vector<17x8xf32>
    %79 = vector.extract_strided_slice %7 {offsets = [8, 0], sizes = [8, 32], strides = [1, 1]} : vector<32x32xf32> to vector<8x32xf32>
    %cst_25 = arith.constant dense<0.000000e+00> : vector<17x32xf32>
    %80 = tpu.matmul %78, %79, %cst_25 {dimension_numbers = #tpu.dot_dimension_numbers<[1], [0], [0], [1], [0, 0, 1, 1], [], []>} : vector<17x8xf32>, vector<8x32xf32>, vector<17x32xf32> -> vector<17x32xf32>
    %81 = arith.addf %63, %80 : vector<17x32xf32>
    %82 = vector.extract_strided_slice %42 {offsets = [0, 16], sizes = [17, 8], strides = [1, 1]} : vector<17x32xf32> to vector<17x8xf32>
    %83 = vector.extract_strided_slice %43 {offsets = [0, 16], sizes = [17, 8], strides = [1, 1]} : vector<17x32xf32> to vector<17x8xf32>
    %cst_26 = arith.constant dense<0.000000e+00> : vector<17x17xf32>
    %84 = tpu.matmul %82, %83, %cst_26 {dimension_numbers = #tpu.dot_dimension_numbers<[1], [1], [0], [0], [0, 0, 1, 0], [], []>} : vector<17x8xf32>, vector<17x8xf32>, vector<17x17xf32> -> vector<17x17xf32>
    %cst_27 = arith.constant dense<0xFF800000> : vector<17xf32>
    %85 = vector.multi_reduction <maximumf>, %84, %cst_27 [1] : vector<17x17xf32> to vector<17xf32>
    %86 = vector.shape_cast %85 : vector<17xf32> to vector<17x1xf32>
    %87 = vector.broadcast %86 : vector<17x1xf32> to vector<17x17xf32>
    %88 = arith.subf %84, %87 : vector<17x17xf32>
    %89 = math.exp %88 : vector<17x17xf32>
    %cst_28 = arith.constant dense<0.000000e+00> : vector<17xf32>
    %90 = vector.multi_reduction <add>, %89, %cst_28 [1] : vector<17x17xf32> to vector<17xf32>
    %91 = vector.shape_cast %90 : vector<17xf32> to vector<17x1xf32>
    %92 = tpu.reciprocal %91 {approx = true} : vector<17x1xf32> -> vector<17x1xf32>
    %93 = vector.broadcast %92 : vector<17x1xf32> to vector<17x17xf32>
    %94 = arith.mulf %89, %93 : vector<17x17xf32>
    %95 = vector.extract_strided_slice %44 {offsets = [0, 16], sizes = [17, 8], strides = [1, 1]} : vector<17x32xf32> to vector<17x8xf32>
    %cst_29 = arith.constant dense<0.000000e+00> : vector<17x8xf32>
    %96 = tpu.matmul %94, %95, %cst_29 {dimension_numbers = #tpu.dot_dimension_numbers<[1], [0], [0], [1], [0, 0, 1, 1], [], []>} : vector<17x17xf32>, vector<17x8xf32>, vector<17x8xf32> -> vector<17x8xf32>
    %97 = vector.extract_strided_slice %7 {offsets = [16, 0], sizes = [8, 32], strides = [1, 1]} : vector<32x32xf32> to vector<8x32xf32>
    %cst_30 = arith.constant dense<0.000000e+00> : vector<17x32xf32>
    %98 = tpu.matmul %96, %97, %cst_30 {dimension_numbers = #tpu.dot_dimension_numbers<[1], [0], [0], [1], [0, 0, 1, 1], [], []>} : vector<17x8xf32>, vector<8x32xf32>, vector<17x32xf32> -> vector<17x32xf32>
    %99 = arith.addf %81, %98 : vector<17x32xf32>
    %100 = vector.extract_strided_slice %42 {offsets = [0, 24], sizes = [17, 8], strides = [1, 1]} : vector<17x32xf32> to vector<17x8xf32>
    %101 = vector.extract_strided_slice %43 {offsets = [0, 24], sizes = [17, 8], strides = [1, 1]} : vector<17x32xf32> to vector<17x8xf32>
    %cst_31 = arith.constant dense<0.000000e+00> : vector<17x17xf32>
    %102 = tpu.matmul %100, %101, %cst_31 {dimension_numbers = #tpu.dot_dimension_numbers<[1], [1], [0], [0], [0, 0, 1, 0], [], []>} : vector<17x8xf32>, vector<17x8xf32>, vector<17x17xf32> -> vector<17x17xf32>
    %cst_32 = arith.constant dense<0xFF800000> : vector<17xf32>
    %103 = vector.multi_reduction <maximumf>, %102, %cst_32 [1] : vector<17x17xf32> to vector<17xf32>
    %104 = vector.shape_cast %103 : vector<17xf32> to vector<17x1xf32>
    %105 = vector.broadcast %104 : vector<17x1xf32> to vector<17x17xf32>
    %106 = arith.subf %102, %105 : vector<17x17xf32>
    %107 = math.exp %106 : vector<17x17xf32>
    %cst_33 = arith.constant dense<0.000000e+00> : vector<17xf32>
    %108 = vector.multi_reduction <add>, %107, %cst_33 [1] : vector<17x17xf32> to vector<17xf32>
    %109 = vector.shape_cast %108 : vector<17xf32> to vector<17x1xf32>
    %110 = tpu.reciprocal %109 {approx = true} : vector<17x1xf32> -> vector<17x1xf32>
    %111 = vector.broadcast %110 : vector<17x1xf32> to vector<17x17xf32>
    %112 = arith.mulf %107, %111 : vector<17x17xf32>
    %113 = vector.extract_strided_slice %44 {offsets = [0, 24], sizes = [17, 8], strides = [1, 1]} : vector<17x32xf32> to vector<17x8xf32>
    %cst_34 = arith.constant dense<0.000000e+00> : vector<17x8xf32>
    %114 = tpu.matmul %112, %113, %cst_34 {dimension_numbers = #tpu.dot_dimension_numbers<[1], [0], [0], [1], [0, 0, 1, 1], [], []>} : vector<17x17xf32>, vector<17x8xf32>, vector<17x8xf32> -> vector<17x8xf32>
    %115 = vector.extract_strided_slice %7 {offsets = [24, 0], sizes = [8, 32], strides = [1, 1]} : vector<32x32xf32> to vector<8x32xf32>
    %cst_35 = arith.constant dense<0.000000e+00> : vector<17x32xf32>
    %116 = tpu.matmul %114, %115, %cst_35 {dimension_numbers = #tpu.dot_dimension_numbers<[1], [0], [0], [1], [0, 0, 1, 1], [], []>} : vector<17x8xf32>, vector<8x32xf32>, vector<17x32xf32> -> vector<17x32xf32>
    %117 = arith.addf %99, %116 : vector<17x32xf32>
    %118 = vector.extract_strided_slice %34 {offsets = [17, 0], sizes = [17, 32], strides = [1, 1]} : vector<34x32xf32> to vector<17x32xf32>
    %cst_36 = arith.constant 0.353553385 : f32
    %119 = vector.broadcast %cst_36 : f32 to vector<17x32xf32>
    %120 = arith.mulf %118, %119 : vector<17x32xf32>
    %121 = vector.extract_strided_slice %38 {offsets = [17, 0], sizes = [17, 32], strides = [1, 1]} : vector<34x32xf32> to vector<17x32xf32>
    %122 = vector.extract_strided_slice %39 {offsets = [17, 0], sizes = [17, 32], strides = [1, 1]} : vector<34x32xf32> to vector<17x32xf32>
    %cst_37 = arith.constant 0.000000e+00 : f32
    %123 = vector.broadcast %cst_37 : f32 to vector<17x32xf32>
    %124 = vector.extract_strided_slice %120 {offsets = [0, 0], sizes = [17, 8], strides = [1, 1]} : vector<17x32xf32> to vector<17x8xf32>
    %125 = vector.extract_strided_slice %121 {offsets = [0, 0], sizes = [17, 8], strides = [1, 1]} : vector<17x32xf32> to vector<17x8xf32>
    %cst_38 = arith.constant dense<0.000000e+00> : vector<17x17xf32>
    %126 = tpu.matmul %124, %125, %cst_38 {dimension_numbers = #tpu.dot_dimension_numbers<[1], [1], [0], [0], [0, 0, 1, 0], [], []>} : vector<17x8xf32>, vector<17x8xf32>, vector<17x17xf32> -> vector<17x17xf32>
    %cst_39 = arith.constant dense<0xFF800000> : vector<17xf32>
    %127 = vector.multi_reduction <maximumf>, %126, %cst_39 [1] : vector<17x17xf32> to vector<17xf32>
    %128 = vector.shape_cast %127 : vector<17xf32> to vector<17x1xf32>
    %129 = vector.broadcast %128 : vector<17x1xf32> to vector<17x17xf32>
    %130 = arith.subf %126, %129 : vector<17x17xf32>
    %131 = math.exp %130 : vector<17x17xf32>
    %cst_40 = arith.constant dense<0.000000e+00> : vector<17xf32>
    %132 = vector.multi_reduction <add>, %131, %cst_40 [1] : vector<17x17xf32> to vector<17xf32>
    %133 = vector.shape_cast %132 : vector<17xf32> to vector<17x1xf32>
    %134 = tpu.reciprocal %133 {approx = true} : vector<17x1xf32> -> vector<17x1xf32>
    %135 = vector.broadcast %134 : vector<17x1xf32> to vector<17x17xf32>
    %136 = arith.mulf %131, %135 : vector<17x17xf32>
    %137 = vector.extract_strided_slice %122 {offsets = [0, 0], sizes = [17, 8], strides = [1, 1]} : vector<17x32xf32> to vector<17x8xf32>
    %cst_41 = arith.constant dense<0.000000e+00> : vector<17x8xf32>
    %138 = tpu.matmul %136, %137, %cst_41 {dimension_numbers = #tpu.dot_dimension_numbers<[1], [0], [0], [1], [0, 0, 1, 1], [], []>} : vector<17x17xf32>, vector<17x8xf32>, vector<17x8xf32> -> vector<17x8xf32>
    %139 = vector.extract_strided_slice %7 {offsets = [0, 0], sizes = [8, 32], strides = [1, 1]} : vector<32x32xf32> to vector<8x32xf32>
    %cst_42 = arith.constant dense<0.000000e+00> : vector<17x32xf32>
    %140 = tpu.matmul %138, %139, %cst_42 {dimension_numbers = #tpu.dot_dimension_numbers<[1], [0], [0], [1], [0, 0, 1, 1], [], []>} : vector<17x8xf32>, vector<8x32xf32>, vector<17x32xf32> -> vector<17x32xf32>
    %141 = arith.addf %123, %140 : vector<17x32xf32>
    %142 = vector.extract_strided_slice %120 {offsets = [0, 8], sizes = [17, 8], strides = [1, 1]} : vector<17x32xf32> to vector<17x8xf32>
    %143 = vector.extract_strided_slice %121 {offsets = [0, 8], sizes = [17, 8], strides = [1, 1]} : vector<17x32xf32> to vector<17x8xf32>
    %cst_43 = arith.constant dense<0.000000e+00> : vector<17x17xf32>
    %144 = tpu.matmul %142, %143, %cst_43 {dimension_numbers = #tpu.dot_dimension_numbers<[1], [1], [0], [0], [0, 0, 1, 0], [], []>} : vector<17x8xf32>, vector<17x8xf32>, vector<17x17xf32> -> vector<17x17xf32>
    %cst_44 = arith.constant dense<0xFF800000> : vector<17xf32>
    %145 = vector.multi_reduction <maximumf>, %144, %cst_44 [1] : vector<17x17xf32> to vector<17xf32>
    %146 = vector.shape_cast %145 : vector<17xf32> to vector<17x1xf32>
    %147 = vector.broadcast %146 : vector<17x1xf32> to vector<17x17xf32>
    %148 = arith.subf %144, %147 : vector<17x17xf32>
    %149 = math.exp %148 : vector<17x17xf32>
    %cst_45 = arith.constant dense<0.000000e+00> : vector<17xf32>
    %150 = vector.multi_reduction <add>, %149, %cst_45 [1] : vector<17x17xf32> to vector<17xf32>
    %151 = vector.shape_cast %150 : vector<17xf32> to vector<17x1xf32>
    %152 = tpu.reciprocal %151 {approx = true} : vector<17x1xf32> -> vector<17x1xf32>
    %153 = vector.broadcast %152 : vector<17x1xf32> to vector<17x17xf32>
    %154 = arith.mulf %149, %153 : vector<17x17xf32>
    %155 = vector.extract_strided_slice %122 {offsets = [0, 8], sizes = [17, 8], strides = [1, 1]} : vector<17x32xf32> to vector<17x8xf32>
    %cst_46 = arith.constant dense<0.000000e+00> : vector<17x8xf32>
    %156 = tpu.matmul %154, %155, %cst_46 {dimension_numbers = #tpu.dot_dimension_numbers<[1], [0], [0], [1], [0, 0, 1, 1], [], []>} : vector<17x17xf32>, vector<17x8xf32>, vector<17x8xf32> -> vector<17x8xf32>
    %157 = vector.extract_strided_slice %7 {offsets = [8, 0], sizes = [8, 32], strides = [1, 1]} : vector<32x32xf32> to vector<8x32xf32>
    %cst_47 = arith.constant dense<0.000000e+00> : vector<17x32xf32>
    %158 = tpu.matmul %156, %157, %cst_47 {dimension_numbers = #tpu.dot_dimension_numbers<[1], [0], [0], [1], [0, 0, 1, 1], [], []>} : vector<17x8xf32>, vector<8x32xf32>, vector<17x32xf32> -> vector<17x32xf32>
    %159 = arith.addf %141, %158 : vector<17x32xf32>
    %160 = vector.extract_strided_slice %120 {offsets = [0, 16], sizes = [17, 8], strides = [1, 1]} : vector<17x32xf32> to vector<17x8xf32>
    %161 = vector.extract_strided_slice %121 {offsets = [0, 16], sizes = [17, 8], strides = [1, 1]} : vector<17x32xf32> to vector<17x8xf32>
    %cst_48 = arith.constant dense<0.000000e+00> : vector<17x17xf32>
    %162 = tpu.matmul %160, %161, %cst_48 {dimension_numbers = #tpu.dot_dimension_numbers<[1], [1], [0], [0], [0, 0, 1, 0], [], []>} : vector<17x8xf32>, vector<17x8xf32>, vector<17x17xf32> -> vector<17x17xf32>
    %cst_49 = arith.constant dense<0xFF800000> : vector<17xf32>
    %163 = vector.multi_reduction <maximumf>, %162, %cst_49 [1] : vector<17x17xf32> to vector<17xf32>
    %164 = vector.shape_cast %163 : vector<17xf32> to vector<17x1xf32>
    %165 = vector.broadcast %164 : vector<17x1xf32> to vector<17x17xf32>
    %166 = arith.subf %162, %165 : vector<17x17xf32>
    %167 = math.exp %166 : vector<17x17xf32>
    %cst_50 = arith.constant dense<0.000000e+00> : vector<17xf32>
    %168 = vector.multi_reduction <add>, %167, %cst_50 [1] : vector<17x17xf32> to vector<17xf32>
    %169 = vector.shape_cast %168 : vector<17xf32> to vector<17x1xf32>
    %170 = tpu.reciprocal %169 {approx = true} : vector<17x1xf32> -> vector<17x1xf32>
    %171 = vector.broadcast %170 : vector<17x1xf32> to vector<17x17xf32>
    %172 = arith.mulf %167, %171 : vector<17x17xf32>
    %173 = vector.extract_strided_slice %122 {offsets = [0, 16], sizes = [17, 8], strides = [1, 1]} : vector<17x32xf32> to vector<17x8xf32>
    %cst_51 = arith.constant dense<0.000000e+00> : vector<17x8xf32>
    %174 = tpu.matmul %172, %173, %cst_51 {dimension_numbers = #tpu.dot_dimension_numbers<[1], [0], [0], [1], [0, 0, 1, 1], [], []>} : vector<17x17xf32>, vector<17x8xf32>, vector<17x8xf32> -> vector<17x8xf32>
    %175 = vector.extract_strided_slice %7 {offsets = [16, 0], sizes = [8, 32], strides = [1, 1]} : vector<32x32xf32> to vector<8x32xf32>
    %cst_52 = arith.constant dense<0.000000e+00> : vector<17x32xf32>
    %176 = tpu.matmul %174, %175, %cst_52 {dimension_numbers = #tpu.dot_dimension_numbers<[1], [0], [0], [1], [0, 0, 1, 1], [], []>} : vector<17x8xf32>, vector<8x32xf32>, vector<17x32xf32> -> vector<17x32xf32>
    %177 = arith.addf %159, %176 : vector<17x32xf32>
    %178 = vector.extract_strided_slice %120 {offsets = [0, 24], sizes = [17, 8], strides = [1, 1]} : vector<17x32xf32> to vector<17x8xf32>
    %179 = vector.extract_strided_slice %121 {offsets = [0, 24], sizes = [17, 8], strides = [1, 1]} : vector<17x32xf32> to vector<17x8xf32>
    %cst_53 = arith.constant dense<0.000000e+00> : vector<17x17xf32>
    %180 = tpu.matmul %178, %179, %cst_53 {dimension_numbers = #tpu.dot_dimension_numbers<[1], [1], [0], [0], [0, 0, 1, 0], [], []>} : vector<17x8xf32>, vector<17x8xf32>, vector<17x17xf32> -> vector<17x17xf32>
    %cst_54 = arith.constant dense<0xFF800000> : vector<17xf32>
    %181 = vector.multi_reduction <maximumf>, %180, %cst_54 [1] : vector<17x17xf32> to vector<17xf32>
    %182 = vector.shape_cast %181 : vector<17xf32> to vector<17x1xf32>
    %183 = vector.broadcast %182 : vector<17x1xf32> to vector<17x17xf32>
    %184 = arith.subf %180, %183 : vector<17x17xf32>
    %185 = math.exp %184 : vector<17x17xf32>
    %cst_55 = arith.constant dense<0.000000e+00> : vector<17xf32>
    %186 = vector.multi_reduction <add>, %185, %cst_55 [1] : vector<17x17xf32> to vector<17xf32>
    %187 = vector.shape_cast %186 : vector<17xf32> to vector<17x1xf32>
    %188 = tpu.reciprocal %187 {approx = true} : vector<17x1xf32> -> vector<17x1xf32>
    %189 = vector.broadcast %188 : vector<17x1xf32> to vector<17x17xf32>
    %190 = arith.mulf %185, %189 : vector<17x17xf32>
    %191 = vector.extract_strided_slice %122 {offsets = [0, 24], sizes = [17, 8], strides = [1, 1]} : vector<17x32xf32> to vector<17x8xf32>
    %cst_56 = arith.constant dense<0.000000e+00> : vector<17x8xf32>
    %192 = tpu.matmul %190, %191, %cst_56 {dimension_numbers = #tpu.dot_dimension_numbers<[1], [0], [0], [1], [0, 0, 1, 1], [], []>} : vector<17x17xf32>, vector<17x8xf32>, vector<17x8xf32> -> vector<17x8xf32>
    %193 = vector.extract_strided_slice %7 {offsets = [24, 0], sizes = [8, 32], strides = [1, 1]} : vector<32x32xf32> to vector<8x32xf32>
    %cst_57 = arith.constant dense<0.000000e+00> : vector<17x32xf32>
    %194 = tpu.matmul %192, %193, %cst_57 {dimension_numbers = #tpu.dot_dimension_numbers<[1], [0], [0], [1], [0, 0, 1, 1], [], []>} : vector<17x8xf32>, vector<8x32xf32>, vector<17x32xf32> -> vector<17x32xf32>
    %195 = arith.addf %177, %194 : vector<17x32xf32>
    %196 = tpu.concatenate %117, %195 in 0 : vector<17x32xf32>, vector<17x32xf32> -> vector<34x32xf32>
    %197 = vector.broadcast %18 : vector<1x32xf32> to vector<34x32xf32>
    %198 = arith.addf %196, %197 : vector<34x32xf32>
    %199 = arith.addf %31, %198 : vector<34x32xf32>
    %cst_58 = arith.constant dense<0.000000e+00> : vector<34xf32>
    %200 = vector.multi_reduction <add>, %199, %cst_58 [1] : vector<34x32xf32> to vector<34xf32>
    %201 = vector.shape_cast %200 : vector<34xf32> to vector<34x1xf32>
    %cst_59 = arith.constant 3.200000e+01 : f32
    %202 = vector.broadcast %cst_59 : f32 to vector<34x1xf32>
    %203 = arith.divf %201, %202 : vector<34x1xf32>
    %204 = vector.broadcast %203 : vector<34x1xf32> to vector<34x32xf32>
    %205 = arith.subf %199, %204 : vector<34x32xf32>
    %206 = arith.mulf %205, %205 : vector<34x32xf32>
    %cst_60 = arith.constant dense<0.000000e+00> : vector<34xf32>
    %207 = vector.multi_reduction <add>, %206, %cst_60 [1] : vector<34x32xf32> to vector<34xf32>
    %208 = vector.shape_cast %207 : vector<34xf32> to vector<34x1xf32>
    %cst_61 = arith.constant 3.200000e+01 : f32
    %209 = vector.broadcast %cst_61 : f32 to vector<34x1xf32>
    %210 = arith.divf %208, %209 : vector<34x1xf32>
    %211 = vector.broadcast %203 : vector<34x1xf32> to vector<34x32xf32>
    %212 = arith.subf %199, %211 : vector<34x32xf32>
    %cst_62 = arith.constant 9.99999974E-6 : f32
    %213 = vector.broadcast %cst_62 : f32 to vector<34x1xf32>
    %214 = arith.addf %210, %213 : vector<34x1xf32>
    %215 = math.rsqrt %214 : vector<34x1xf32>
    %216 = vector.broadcast %215 : vector<34x1xf32> to vector<34x32xf32>
    %217 = arith.mulf %212, %216 : vector<34x32xf32>
    %218 = vector.broadcast %24 : vector<1x32xf32> to vector<34x32xf32>
    %219 = arith.mulf %217, %218 : vector<34x32xf32>
    %220 = vector.broadcast %25 : vector<1x32xf32> to vector<34x32xf32>
    %221 = arith.addf %219, %220 : vector<34x32xf32>
    %cst_63 = arith.constant dense<0.000000e+00> : vector<34x32xf32>
    %222 = tpu.matmul %221, %8, %cst_63 {dimension_numbers = #tpu.dot_dimension_numbers<[1], [0], [0], [1], [0, 0, 1, 1], [], []>} : vector<34x32xf32>, vector<32x32xf32>, vector<34x32xf32> -> vector<34x32xf32>
    %223 = vector.broadcast %19 : vector<1x32xf32> to vector<34x32xf32>
    %224 = arith.addf %222, %223 : vector<34x32xf32>
    %cst_64 = arith.constant dense<0.000000e+00> : vector<16x64xf32>
    %225 = tpu.matmul %30, %9, %cst_64 {dimension_numbers = #tpu.dot_dimension_numbers<[1], [0], [0], [1], [0, 0, 1, 1], [], []>} : vector<16x32xf32>, vector<32x64xf32>, vector<16x64xf32> -> vector<16x64xf32>
    %226 = vector.broadcast %20 : vector<1x64xf32> to vector<16x64xf32>
    %227 = arith.addf %225, %226 : vector<16x64xf32>
    %228 = vector.extract_strided_slice %227 {offsets = [0, 0], sizes = [16, 32], strides = [1, 1]} : vector<16x64xf32> to vector<16x32xf32>
    %229 = vector.extract_strided_slice %227 {offsets = [0, 32], sizes = [16, 32], strides = [1, 1]} : vector<16x64xf32> to vector<16x32xf32>
    %230 = vector.extract_strided_slice %224 {offsets = [0, 0], sizes = [17, 32], strides = [1, 1]} : vector<34x32xf32> to vector<17x32xf32>
    %cst_65 = arith.constant 0.353553385 : f32
    %231 = vector.broadcast %cst_65 : f32 to vector<17x32xf32>
    %232 = arith.mulf %230, %231 : vector<17x32xf32>
    %233 = vector.extract_strided_slice %228 {offsets = [0, 0], sizes = [8, 32], strides = [1, 1]} : vector<16x32xf32> to vector<8x32xf32>
    %234 = vector.extract_strided_slice %229 {offsets = [0, 0], sizes = [8, 32], strides = [1, 1]} : vector<16x32xf32> to vector<8x32xf32>
    %cst_66 = arith.constant 0.000000e+00 : f32
    %235 = vector.broadcast %cst_66 : f32 to vector<17x32xf32>
    %236 = vector.extract_strided_slice %232 {offsets = [0, 0], sizes = [17, 8], strides = [1, 1]} : vector<17x32xf32> to vector<17x8xf32>
    %237 = vector.extract_strided_slice %233 {offsets = [0, 0], sizes = [8, 8], strides = [1, 1]} : vector<8x32xf32> to vector<8x8xf32>
    %cst_67 = arith.constant dense<0.000000e+00> : vector<17x8xf32>
    %238 = tpu.matmul %236, %237, %cst_67 {dimension_numbers = #tpu.dot_dimension_numbers<[1], [1], [0], [0], [0, 0, 1, 0], [], []>} : vector<17x8xf32>, vector<8x8xf32>, vector<17x8xf32> -> vector<17x8xf32>
    %cst_68 = arith.constant dense<0xFF800000> : vector<17xf32>
    %239 = vector.multi_reduction <maximumf>, %238, %cst_68 [1] : vector<17x8xf32> to vector<17xf32>
    %240 = vector.shape_cast %239 : vector<17xf32> to vector<17x1xf32>
    %241 = vector.broadcast %240 : vector<17x1xf32> to vector<17x8xf32>
    %242 = arith.subf %238, %241 : vector<17x8xf32>
    %243 = math.exp %242 : vector<17x8xf32>
    %cst_69 = arith.constant dense<0.000000e+00> : vector<17xf32>
    %244 = vector.multi_reduction <add>, %243, %cst_69 [1] : vector<17x8xf32> to vector<17xf32>
    %245 = vector.shape_cast %244 : vector<17xf32> to vector<17x1xf32>
    %246 = tpu.reciprocal %245 {approx = true} : vector<17x1xf32> -> vector<17x1xf32>
    %247 = vector.broadcast %246 : vector<17x1xf32> to vector<17x8xf32>
    %248 = arith.mulf %243, %247 : vector<17x8xf32>
    %249 = vector.extract_strided_slice %234 {offsets = [0, 0], sizes = [8, 8], strides = [1, 1]} : vector<8x32xf32> to vector<8x8xf32>
    %cst_70 = arith.constant dense<0.000000e+00> : vector<17x8xf32>
    %250 = tpu.matmul %248, %249, %cst_70 {dimension_numbers = #tpu.dot_dimension_numbers<[1], [0], [0], [1], [0, 0, 1, 1], [], []>} : vector<17x8xf32>, vector<8x8xf32>, vector<17x8xf32> -> vector<17x8xf32>
    %251 = vector.extract_strided_slice %10 {offsets = [0, 0], sizes = [8, 32], strides = [1, 1]} : vector<32x32xf32> to vector<8x32xf32>
    %cst_71 = arith.constant dense<0.000000e+00> : vector<17x32xf32>
    %252 = tpu.matmul %250, %251, %cst_71 {dimension_numbers = #tpu.dot_dimension_numbers<[1], [0], [0], [1], [0, 0, 1, 1], [], []>} : vector<17x8xf32>, vector<8x32xf32>, vector<17x32xf32> -> vector<17x32xf32>
    %253 = arith.addf %235, %252 : vector<17x32xf32>
    %254 = vector.extract_strided_slice %232 {offsets = [0, 8], sizes = [17, 8], strides = [1, 1]} : vector<17x32xf32> to vector<17x8xf32>
    %255 = vector.extract_strided_slice %233 {offsets = [0, 8], sizes = [8, 8], strides = [1, 1]} : vector<8x32xf32> to vector<8x8xf32>
    %cst_72 = arith.constant dense<0.000000e+00> : vector<17x8xf32>
    %256 = tpu.matmul %254, %255, %cst_72 {dimension_numbers = #tpu.dot_dimension_numbers<[1], [1], [0], [0], [0, 0, 1, 0], [], []>} : vector<17x8xf32>, vector<8x8xf32>, vector<17x8xf32> -> vector<17x8xf32>
    %cst_73 = arith.constant dense<0xFF800000> : vector<17xf32>
    %257 = vector.multi_reduction <maximumf>, %256, %cst_73 [1] : vector<17x8xf32> to vector<17xf32>
    %258 = vector.shape_cast %257 : vector<17xf32> to vector<17x1xf32>
    %259 = vector.broadcast %258 : vector<17x1xf32> to vector<17x8xf32>
    %260 = arith.subf %256, %259 : vector<17x8xf32>
    %261 = math.exp %260 : vector<17x8xf32>
    %cst_74 = arith.constant dense<0.000000e+00> : vector<17xf32>
    %262 = vector.multi_reduction <add>, %261, %cst_74 [1] : vector<17x8xf32> to vector<17xf32>
    %263 = vector.shape_cast %262 : vector<17xf32> to vector<17x1xf32>
    %264 = tpu.reciprocal %263 {approx = true} : vector<17x1xf32> -> vector<17x1xf32>
    %265 = vector.broadcast %264 : vector<17x1xf32> to vector<17x8xf32>
    %266 = arith.mulf %261, %265 : vector<17x8xf32>
    %267 = vector.extract_strided_slice %234 {offsets = [0, 8], sizes = [8, 8], strides = [1, 1]} : vector<8x32xf32> to vector<8x8xf32>
    %cst_75 = arith.constant dense<0.000000e+00> : vector<17x8xf32>
    %268 = tpu.matmul %266, %267, %cst_75 {dimension_numbers = #tpu.dot_dimension_numbers<[1], [0], [0], [1], [0, 0, 1, 1], [], []>} : vector<17x8xf32>, vector<8x8xf32>, vector<17x8xf32> -> vector<17x8xf32>
    %269 = vector.extract_strided_slice %10 {offsets = [8, 0], sizes = [8, 32], strides = [1, 1]} : vector<32x32xf32> to vector<8x32xf32>
    %cst_76 = arith.constant dense<0.000000e+00> : vector<17x32xf32>
    %270 = tpu.matmul %268, %269, %cst_76 {dimension_numbers = #tpu.dot_dimension_numbers<[1], [0], [0], [1], [0, 0, 1, 1], [], []>} : vector<17x8xf32>, vector<8x32xf32>, vector<17x32xf32> -> vector<17x32xf32>
    %271 = arith.addf %253, %270 : vector<17x32xf32>
    %272 = vector.extract_strided_slice %232 {offsets = [0, 16], sizes = [17, 8], strides = [1, 1]} : vector<17x32xf32> to vector<17x8xf32>
    %273 = vector.extract_strided_slice %233 {offsets = [0, 16], sizes = [8, 8], strides = [1, 1]} : vector<8x32xf32> to vector<8x8xf32>
    %cst_77 = arith.constant dense<0.000000e+00> : vector<17x8xf32>
    %274 = tpu.matmul %272, %273, %cst_77 {dimension_numbers = #tpu.dot_dimension_numbers<[1], [1], [0], [0], [0, 0, 1, 0], [], []>} : vector<17x8xf32>, vector<8x8xf32>, vector<17x8xf32> -> vector<17x8xf32>
    %cst_78 = arith.constant dense<0xFF800000> : vector<17xf32>
    %275 = vector.multi_reduction <maximumf>, %274, %cst_78 [1] : vector<17x8xf32> to vector<17xf32>
    %276 = vector.shape_cast %275 : vector<17xf32> to vector<17x1xf32>
    %277 = vector.broadcast %276 : vector<17x1xf32> to vector<17x8xf32>
    %278 = arith.subf %274, %277 : vector<17x8xf32>
    %279 = math.exp %278 : vector<17x8xf32>
    %cst_79 = arith.constant dense<0.000000e+00> : vector<17xf32>
    %280 = vector.multi_reduction <add>, %279, %cst_79 [1] : vector<17x8xf32> to vector<17xf32>
    %281 = vector.shape_cast %280 : vector<17xf32> to vector<17x1xf32>
    %282 = tpu.reciprocal %281 {approx = true} : vector<17x1xf32> -> vector<17x1xf32>
    %283 = vector.broadcast %282 : vector<17x1xf32> to vector<17x8xf32>
    %284 = arith.mulf %279, %283 : vector<17x8xf32>
    %285 = vector.extract_strided_slice %234 {offsets = [0, 16], sizes = [8, 8], strides = [1, 1]} : vector<8x32xf32> to vector<8x8xf32>
    %cst_80 = arith.constant dense<0.000000e+00> : vector<17x8xf32>
    %286 = tpu.matmul %284, %285, %cst_80 {dimension_numbers = #tpu.dot_dimension_numbers<[1], [0], [0], [1], [0, 0, 1, 1], [], []>} : vector<17x8xf32>, vector<8x8xf32>, vector<17x8xf32> -> vector<17x8xf32>
    %287 = vector.extract_strided_slice %10 {offsets = [16, 0], sizes = [8, 32], strides = [1, 1]} : vector<32x32xf32> to vector<8x32xf32>
    %cst_81 = arith.constant dense<0.000000e+00> : vector<17x32xf32>
    %288 = tpu.matmul %286, %287, %cst_81 {dimension_numbers = #tpu.dot_dimension_numbers<[1], [0], [0], [1], [0, 0, 1, 1], [], []>} : vector<17x8xf32>, vector<8x32xf32>, vector<17x32xf32> -> vector<17x32xf32>
    %289 = arith.addf %271, %288 : vector<17x32xf32>
    %290 = vector.extract_strided_slice %232 {offsets = [0, 24], sizes = [17, 8], strides = [1, 1]} : vector<17x32xf32> to vector<17x8xf32>
    %291 = vector.extract_strided_slice %233 {offsets = [0, 24], sizes = [8, 8], strides = [1, 1]} : vector<8x32xf32> to vector<8x8xf32>
    %cst_82 = arith.constant dense<0.000000e+00> : vector<17x8xf32>
    %292 = tpu.matmul %290, %291, %cst_82 {dimension_numbers = #tpu.dot_dimension_numbers<[1], [1], [0], [0], [0, 0, 1, 0], [], []>} : vector<17x8xf32>, vector<8x8xf32>, vector<17x8xf32> -> vector<17x8xf32>
    %cst_83 = arith.constant dense<0xFF800000> : vector<17xf32>
    %293 = vector.multi_reduction <maximumf>, %292, %cst_83 [1] : vector<17x8xf32> to vector<17xf32>
    %294 = vector.shape_cast %293 : vector<17xf32> to vector<17x1xf32>
    %295 = vector.broadcast %294 : vector<17x1xf32> to vector<17x8xf32>
    %296 = arith.subf %292, %295 : vector<17x8xf32>
    %297 = math.exp %296 : vector<17x8xf32>
    %cst_84 = arith.constant dense<0.000000e+00> : vector<17xf32>
    %298 = vector.multi_reduction <add>, %297, %cst_84 [1] : vector<17x8xf32> to vector<17xf32>
    %299 = vector.shape_cast %298 : vector<17xf32> to vector<17x1xf32>
    %300 = tpu.reciprocal %299 {approx = true} : vector<17x1xf32> -> vector<17x1xf32>
    %301 = vector.broadcast %300 : vector<17x1xf32> to vector<17x8xf32>
    %302 = arith.mulf %297, %301 : vector<17x8xf32>
    %303 = vector.extract_strided_slice %234 {offsets = [0, 24], sizes = [8, 8], strides = [1, 1]} : vector<8x32xf32> to vector<8x8xf32>
    %cst_85 = arith.constant dense<0.000000e+00> : vector<17x8xf32>
    %304 = tpu.matmul %302, %303, %cst_85 {dimension_numbers = #tpu.dot_dimension_numbers<[1], [0], [0], [1], [0, 0, 1, 1], [], []>} : vector<17x8xf32>, vector<8x8xf32>, vector<17x8xf32> -> vector<17x8xf32>
    %305 = vector.extract_strided_slice %10 {offsets = [24, 0], sizes = [8, 32], strides = [1, 1]} : vector<32x32xf32> to vector<8x32xf32>
    %cst_86 = arith.constant dense<0.000000e+00> : vector<17x32xf32>
    %306 = tpu.matmul %304, %305, %cst_86 {dimension_numbers = #tpu.dot_dimension_numbers<[1], [0], [0], [1], [0, 0, 1, 1], [], []>} : vector<17x8xf32>, vector<8x32xf32>, vector<17x32xf32> -> vector<17x32xf32>
    %307 = arith.addf %289, %306 : vector<17x32xf32>
    %308 = vector.extract_strided_slice %224 {offsets = [17, 0], sizes = [17, 32], strides = [1, 1]} : vector<34x32xf32> to vector<17x32xf32>
    %cst_87 = arith.constant 0.353553385 : f32
    %309 = vector.broadcast %cst_87 : f32 to vector<17x32xf32>
    %310 = arith.mulf %308, %309 : vector<17x32xf32>
    %311 = vector.extract_strided_slice %228 {offsets = [8, 0], sizes = [8, 32], strides = [1, 1]} : vector<16x32xf32> to vector<8x32xf32>
    %312 = vector.extract_strided_slice %229 {offsets = [8, 0], sizes = [8, 32], strides = [1, 1]} : vector<16x32xf32> to vector<8x32xf32>
    %cst_88 = arith.constant 0.000000e+00 : f32
    %313 = vector.broadcast %cst_88 : f32 to vector<17x32xf32>
    %314 = vector.extract_strided_slice %310 {offsets = [0, 0], sizes = [17, 8], strides = [1, 1]} : vector<17x32xf32> to vector<17x8xf32>
    %315 = vector.extract_strided_slice %311 {offsets = [0, 0], sizes = [8, 8], strides = [1, 1]} : vector<8x32xf32> to vector<8x8xf32>
    %cst_89 = arith.constant dense<0.000000e+00> : vector<17x8xf32>
    %316 = tpu.matmul %314, %315, %cst_89 {dimension_numbers = #tpu.dot_dimension_numbers<[1], [1], [0], [0], [0, 0, 1, 0], [], []>} : vector<17x8xf32>, vector<8x8xf32>, vector<17x8xf32> -> vector<17x8xf32>
    %cst_90 = arith.constant dense<0xFF800000> : vector<17xf32>
    %317 = vector.multi_reduction <maximumf>, %316, %cst_90 [1] : vector<17x8xf32> to vector<17xf32>
    %318 = vector.shape_cast %317 : vector<17xf32> to vector<17x1xf32>
    %319 = vector.broadcast %318 : vector<17x1xf32> to vector<17x8xf32>
    %320 = arith.subf %316, %319 : vector<17x8xf32>
    %321 = math.exp %320 : vector<17x8xf32>
    %cst_91 = arith.constant dense<0.000000e+00> : vector<17xf32>
    %322 = vector.multi_reduction <add>, %321, %cst_91 [1] : vector<17x8xf32> to vector<17xf32>
    %323 = vector.shape_cast %322 : vector<17xf32> to vector<17x1xf32>
    %324 = tpu.reciprocal %323 {approx = true} : vector<17x1xf32> -> vector<17x1xf32>
    %325 = vector.broadcast %324 : vector<17x1xf32> to vector<17x8xf32>
    %326 = arith.mulf %321, %325 : vector<17x8xf32>
    %327 = vector.extract_strided_slice %312 {offsets = [0, 0], sizes = [8, 8], strides = [1, 1]} : vector<8x32xf32> to vector<8x8xf32>
    %cst_92 = arith.constant dense<0.000000e+00> : vector<17x8xf32>
    %328 = tpu.matmul %326, %327, %cst_92 {dimension_numbers = #tpu.dot_dimension_numbers<[1], [0], [0], [1], [0, 0, 1, 1], [], []>} : vector<17x8xf32>, vector<8x8xf32>, vector<17x8xf32> -> vector<17x8xf32>
    %329 = vector.extract_strided_slice %10 {offsets = [0, 0], sizes = [8, 32], strides = [1, 1]} : vector<32x32xf32> to vector<8x32xf32>
    %cst_93 = arith.constant dense<0.000000e+00> : vector<17x32xf32>
    %330 = tpu.matmul %328, %329, %cst_93 {dimension_numbers = #tpu.dot_dimension_numbers<[1], [0], [0], [1], [0, 0, 1, 1], [], []>} : vector<17x8xf32>, vector<8x32xf32>, vector<17x32xf32> -> vector<17x32xf32>
    %331 = arith.addf %313, %330 : vector<17x32xf32>
    %332 = vector.extract_strided_slice %310 {offsets = [0, 8], sizes = [17, 8], strides = [1, 1]} : vector<17x32xf32> to vector<17x8xf32>
    %333 = vector.extract_strided_slice %311 {offsets = [0, 8], sizes = [8, 8], strides = [1, 1]} : vector<8x32xf32> to vector<8x8xf32>
    %cst_94 = arith.constant dense<0.000000e+00> : vector<17x8xf32>
    %334 = tpu.matmul %332, %333, %cst_94 {dimension_numbers = #tpu.dot_dimension_numbers<[1], [1], [0], [0], [0, 0, 1, 0], [], []>} : vector<17x8xf32>, vector<8x8xf32>, vector<17x8xf32> -> vector<17x8xf32>
    %cst_95 = arith.constant dense<0xFF800000> : vector<17xf32>
    %335 = vector.multi_reduction <maximumf>, %334, %cst_95 [1] : vector<17x8xf32> to vector<17xf32>
    %336 = vector.shape_cast %335 : vector<17xf32> to vector<17x1xf32>
    %337 = vector.broadcast %336 : vector<17x1xf32> to vector<17x8xf32>
    %338 = arith.subf %334, %337 : vector<17x8xf32>
    %339 = math.exp %338 : vector<17x8xf32>
    %cst_96 = arith.constant dense<0.000000e+00> : vector<17xf32>
    %340 = vector.multi_reduction <add>, %339, %cst_96 [1] : vector<17x8xf32> to vector<17xf32>
    %341 = vector.shape_cast %340 : vector<17xf32> to vector<17x1xf32>
    %342 = tpu.reciprocal %341 {approx = true} : vector<17x1xf32> -> vector<17x1xf32>
    %343 = vector.broadcast %342 : vector<17x1xf32> to vector<17x8xf32>
    %344 = arith.mulf %339, %343 : vector<17x8xf32>
    %345 = vector.extract_strided_slice %312 {offsets = [0, 8], sizes = [8, 8], strides = [1, 1]} : vector<8x32xf32> to vector<8x8xf32>
    %cst_97 = arith.constant dense<0.000000e+00> : vector<17x8xf32>
    %346 = tpu.matmul %344, %345, %cst_97 {dimension_numbers = #tpu.dot_dimension_numbers<[1], [0], [0], [1], [0, 0, 1, 1], [], []>} : vector<17x8xf32>, vector<8x8xf32>, vector<17x8xf32> -> vector<17x8xf32>
    %347 = vector.extract_strided_slice %10 {offsets = [8, 0], sizes = [8, 32], strides = [1, 1]} : vector<32x32xf32> to vector<8x32xf32>
    %cst_98 = arith.constant dense<0.000000e+00> : vector<17x32xf32>
    %348 = tpu.matmul %346, %347, %cst_98 {dimension_numbers = #tpu.dot_dimension_numbers<[1], [0], [0], [1], [0, 0, 1, 1], [], []>} : vector<17x8xf32>, vector<8x32xf32>, vector<17x32xf32> -> vector<17x32xf32>
    %349 = arith.addf %331, %348 : vector<17x32xf32>
    %350 = vector.extract_strided_slice %310 {offsets = [0, 16], sizes = [17, 8], strides = [1, 1]} : vector<17x32xf32> to vector<17x8xf32>
    %351 = vector.extract_strided_slice %311 {offsets = [0, 16], sizes = [8, 8], strides = [1, 1]} : vector<8x32xf32> to vector<8x8xf32>
    %cst_99 = arith.constant dense<0.000000e+00> : vector<17x8xf32>
    %352 = tpu.matmul %350, %351, %cst_99 {dimension_numbers = #tpu.dot_dimension_numbers<[1], [1], [0], [0], [0, 0, 1, 0], [], []>} : vector<17x8xf32>, vector<8x8xf32>, vector<17x8xf32> -> vector<17x8xf32>
    %cst_100 = arith.constant dense<0xFF800000> : vector<17xf32>
    %353 = vector.multi_reduction <maximumf>, %352, %cst_100 [1] : vector<17x8xf32> to vector<17xf32>
    %354 = vector.shape_cast %353 : vector<17xf32> to vector<17x1xf32>
    %355 = vector.broadcast %354 : vector<17x1xf32> to vector<17x8xf32>
    %356 = arith.subf %352, %355 : vector<17x8xf32>
    %357 = math.exp %356 : vector<17x8xf32>
    %cst_101 = arith.constant dense<0.000000e+00> : vector<17xf32>
    %358 = vector.multi_reduction <add>, %357, %cst_101 [1] : vector<17x8xf32> to vector<17xf32>
    %359 = vector.shape_cast %358 : vector<17xf32> to vector<17x1xf32>
    %360 = tpu.reciprocal %359 {approx = true} : vector<17x1xf32> -> vector<17x1xf32>
    %361 = vector.broadcast %360 : vector<17x1xf32> to vector<17x8xf32>
    %362 = arith.mulf %357, %361 : vector<17x8xf32>
    %363 = vector.extract_strided_slice %312 {offsets = [0, 16], sizes = [8, 8], strides = [1, 1]} : vector<8x32xf32> to vector<8x8xf32>
    %cst_102 = arith.constant dense<0.000000e+00> : vector<17x8xf32>
    %364 = tpu.matmul %362, %363, %cst_102 {dimension_numbers = #tpu.dot_dimension_numbers<[1], [0], [0], [1], [0, 0, 1, 1], [], []>} : vector<17x8xf32>, vector<8x8xf32>, vector<17x8xf32> -> vector<17x8xf32>
    %365 = vector.extract_strided_slice %10 {offsets = [16, 0], sizes = [8, 32], strides = [1, 1]} : vector<32x32xf32> to vector<8x32xf32>
    %cst_103 = arith.constant dense<0.000000e+00> : vector<17x32xf32>
    %366 = tpu.matmul %364, %365, %cst_103 {dimension_numbers = #tpu.dot_dimension_numbers<[1], [0], [0], [1], [0, 0, 1, 1], [], []>} : vector<17x8xf32>, vector<8x32xf32>, vector<17x32xf32> -> vector<17x32xf32>
    %367 = arith.addf %349, %366 : vector<17x32xf32>
    %368 = vector.extract_strided_slice %310 {offsets = [0, 24], sizes = [17, 8], strides = [1, 1]} : vector<17x32xf32> to vector<17x8xf32>
    %369 = vector.extract_strided_slice %311 {offsets = [0, 24], sizes = [8, 8], strides = [1, 1]} : vector<8x32xf32> to vector<8x8xf32>
    %cst_104 = arith.constant dense<0.000000e+00> : vector<17x8xf32>
    %370 = tpu.matmul %368, %369, %cst_104 {dimension_numbers = #tpu.dot_dimension_numbers<[1], [1], [0], [0], [0, 0, 1, 0], [], []>} : vector<17x8xf32>, vector<8x8xf32>, vector<17x8xf32> -> vector<17x8xf32>
    %cst_105 = arith.constant dense<0xFF800000> : vector<17xf32>
    %371 = vector.multi_reduction <maximumf>, %370, %cst_105 [1] : vector<17x8xf32> to vector<17xf32>
    %372 = vector.shape_cast %371 : vector<17xf32> to vector<17x1xf32>
    %373 = vector.broadcast %372 : vector<17x1xf32> to vector<17x8xf32>
    %374 = arith.subf %370, %373 : vector<17x8xf32>
    %375 = math.exp %374 : vector<17x8xf32>
    %cst_106 = arith.constant dense<0.000000e+00> : vector<17xf32>
    %376 = vector.multi_reduction <add>, %375, %cst_106 [1] : vector<17x8xf32> to vector<17xf32>
    %377 = vector.shape_cast %376 : vector<17xf32> to vector<17x1xf32>
    %378 = tpu.reciprocal %377 {approx = true} : vector<17x1xf32> -> vector<17x1xf32>
    %379 = vector.broadcast %378 : vector<17x1xf32> to vector<17x8xf32>
    %380 = arith.mulf %375, %379 : vector<17x8xf32>
    %381 = vector.extract_strided_slice %312 {offsets = [0, 24], sizes = [8, 8], strides = [1, 1]} : vector<8x32xf32> to vector<8x8xf32>
    %cst_107 = arith.constant dense<0.000000e+00> : vector<17x8xf32>
    %382 = tpu.matmul %380, %381, %cst_107 {dimension_numbers = #tpu.dot_dimension_numbers<[1], [0], [0], [1], [0, 0, 1, 1], [], []>} : vector<17x8xf32>, vector<8x8xf32>, vector<17x8xf32> -> vector<17x8xf32>
    %383 = vector.extract_strided_slice %10 {offsets = [24, 0], sizes = [8, 32], strides = [1, 1]} : vector<32x32xf32> to vector<8x32xf32>
    %cst_108 = arith.constant dense<0.000000e+00> : vector<17x32xf32>
    %384 = tpu.matmul %382, %383, %cst_108 {dimension_numbers = #tpu.dot_dimension_numbers<[1], [0], [0], [1], [0, 0, 1, 1], [], []>} : vector<17x8xf32>, vector<8x32xf32>, vector<17x32xf32> -> vector<17x32xf32>
    %385 = arith.addf %367, %384 : vector<17x32xf32>
    %386 = tpu.concatenate %307, %385 in 0 : vector<17x32xf32>, vector<17x32xf32> -> vector<34x32xf32>
    %387 = vector.broadcast %21 : vector<1x32xf32> to vector<34x32xf32>
    %388 = arith.addf %386, %387 : vector<34x32xf32>
    %389 = arith.addf %221, %388 : vector<34x32xf32>
    %cst_109 = arith.constant dense<0.000000e+00> : vector<34xf32>
    %390 = vector.multi_reduction <add>, %389, %cst_109 [1] : vector<34x32xf32> to vector<34xf32>
    %391 = vector.shape_cast %390 : vector<34xf32> to vector<34x1xf32>
    %cst_110 = arith.constant 3.200000e+01 : f32
    %392 = vector.broadcast %cst_110 : f32 to vector<34x1xf32>
    %393 = arith.divf %391, %392 : vector<34x1xf32>
    %394 = vector.broadcast %393 : vector<34x1xf32> to vector<34x32xf32>
    %395 = arith.subf %389, %394 : vector<34x32xf32>
    %396 = arith.mulf %395, %395 : vector<34x32xf32>
    %cst_111 = arith.constant dense<0.000000e+00> : vector<34xf32>
    %397 = vector.multi_reduction <add>, %396, %cst_111 [1] : vector<34x32xf32> to vector<34xf32>
    %398 = vector.shape_cast %397 : vector<34xf32> to vector<34x1xf32>
    %cst_112 = arith.constant 3.200000e+01 : f32
    %399 = vector.broadcast %cst_112 : f32 to vector<34x1xf32>
    %400 = arith.divf %398, %399 : vector<34x1xf32>
    %401 = vector.broadcast %393 : vector<34x1xf32> to vector<34x32xf32>
    %402 = arith.subf %389, %401 : vector<34x32xf32>
    %cst_113 = arith.constant 9.99999974E-6 : f32
    %403 = vector.broadcast %cst_113 : f32 to vector<34x1xf32>
    %404 = arith.addf %400, %403 : vector<34x1xf32>
    %405 = math.rsqrt %404 : vector<34x1xf32>
    %406 = vector.broadcast %405 : vector<34x1xf32> to vector<34x32xf32>
    %407 = arith.mulf %402, %406 : vector<34x32xf32>
    %408 = vector.broadcast %26 : vector<1x32xf32> to vector<34x32xf32>
    %409 = arith.mulf %407, %408 : vector<34x32xf32>
    %410 = vector.broadcast %27 : vector<1x32xf32> to vector<34x32xf32>
    %411 = arith.addf %409, %410 : vector<34x32xf32>
    %cst_114 = arith.constant dense<0.000000e+00> : vector<34x128xf32>
    %412 = tpu.matmul %411, %11, %cst_114 {dimension_numbers = #tpu.dot_dimension_numbers<[1], [0], [0], [1], [0, 0, 1, 1], [], []>} : vector<34x32xf32>, vector<32x128xf32>, vector<34x128xf32> -> vector<34x128xf32>
    %413 = vector.broadcast %22 : vector<1x128xf32> to vector<34x128xf32>
    %414 = arith.addf %412, %413 : vector<34x128xf32>
    %cst_115 = arith.constant 5.000000e-01 : f32
    %415 = vector.broadcast %cst_115 : f32 to vector<34x128xf32>
    %416 = arith.mulf %415, %414 : vector<34x128xf32>
    %cst_116 = arith.constant 0.707106769 : f32
    %417 = vector.broadcast %cst_116 : f32 to vector<34x128xf32>
    %418 = arith.mulf %414, %417 : vector<34x128xf32>
    %cst_117 = arith.constant 0.000000e+00 : f32
    %419 = vector.broadcast %cst_117 : f32 to vector<34x128xf32>
    %420 = arith.cmpf oge, %418, %419 : vector<34x128xf32>
    %cst_118 = arith.constant 1.000000e+00 : f32
    %cst_119 = arith.constant -1.000000e+00 : f32
    %421 = vector.broadcast %cst_118 : f32 to vector<34x128xf32>
    %422 = vector.broadcast %cst_119 : f32 to vector<34x128xf32>
    %423 = arith.select %420, %421, %422 : vector<34x128xi1>, vector<34x128xf32>
    %424 = math.absf %418 : vector<34x128xf32>
    %cst_120 = arith.constant 0.327591091 : f32
    %425 = vector.broadcast %cst_120 : f32 to vector<34x128xf32>
    %426 = arith.mulf %425, %424 : vector<34x128xf32>
    %cst_121 = arith.constant 1.000000e+00 : f32
    %427 = vector.broadcast %cst_121 : f32 to vector<34x128xf32>
    %428 = arith.addf %427, %426 : vector<34x128xf32>
    %cst_122 = arith.constant 1.000000e+00 : f32
    %429 = vector.broadcast %cst_122 : f32 to vector<34x128xf32>
    %430 = arith.divf %429, %428 : vector<34x128xf32>
    %cst_123 = arith.constant 1.06140542 : f32
    %431 = vector.broadcast %cst_123 : f32 to vector<34x128xf32>
    %432 = arith.mulf %431, %430 : vector<34x128xf32>
    %cst_124 = arith.constant -1.45315206 : f32
    %433 = vector.broadcast %cst_124 : f32 to vector<34x128xf32>
    %434 = arith.addf %432, %433 : vector<34x128xf32>
    %435 = arith.mulf %434, %430 : vector<34x128xf32>
    %cst_125 = arith.constant 1.42141378 : f32
    %436 = vector.broadcast %cst_125 : f32 to vector<34x128xf32>
    %437 = arith.addf %435, %436 : vector<34x128xf32>
    %438 = arith.mulf %437, %430 : vector<34x128xf32>
    %cst_126 = arith.constant -0.284496725 : f32
    %439 = vector.broadcast %cst_126 : f32 to vector<34x128xf32>
    %440 = arith.addf %438, %439 : vector<34x128xf32>
    %441 = arith.mulf %440, %430 : vector<34x128xf32>
    %cst_127 = arith.constant 0.254829586 : f32
    %442 = vector.broadcast %cst_127 : f32 to vector<34x128xf32>
    %443 = arith.addf %441, %442 : vector<34x128xf32>
    %444 = arith.mulf %443, %430 : vector<34x128xf32>
    %cst_128 = arith.constant 0.000000e+00 : f32
    %445 = vector.broadcast %cst_128 : f32 to vector<34x128xf32>
    %446 = arith.subf %445, %424 : vector<34x128xf32>
    %447 = arith.mulf %446, %424 : vector<34x128xf32>
    %448 = math.exp %447 : vector<34x128xf32>
    %449 = arith.mulf %444, %448 : vector<34x128xf32>
    %cst_129 = arith.constant 1.000000e+00 : f32
    %450 = vector.broadcast %cst_129 : f32 to vector<34x128xf32>
    %451 = arith.subf %450, %449 : vector<34x128xf32>
    %452 = arith.mulf %423, %451 : vector<34x128xf32>
    %cst_130 = arith.constant 1.000000e+00 : f32
    %453 = vector.broadcast %cst_130 : f32 to vector<34x128xf32>
    %454 = arith.addf %453, %452 : vector<34x128xf32>
    %455 = arith.mulf %416, %454 : vector<34x128xf32>
    %cst_131 = arith.constant dense<0.000000e+00> : vector<34x32xf32>
    %456 = tpu.matmul %455, %13, %cst_131 {dimension_numbers = #tpu.dot_dimension_numbers<[1], [0], [0], [1], [0, 0, 1, 1], [], []>} : vector<34x128xf32>, vector<128x32xf32>, vector<34x32xf32> -> vector<34x32xf32>
    %457 = vector.broadcast %23 : vector<1x32xf32> to vector<34x32xf32>
    %458 = arith.addf %456, %457 : vector<34x32xf32>
    %459 = arith.addf %411, %458 : vector<34x32xf32>
    %cst_132 = arith.constant dense<0.000000e+00> : vector<34xf32>
    %460 = vector.multi_reduction <add>, %459, %cst_132 [1] : vector<34x32xf32> to vector<34xf32>
    %461 = vector.shape_cast %460 : vector<34xf32> to vector<34x1xf32>
    %cst_133 = arith.constant 3.200000e+01 : f32
    %462 = vector.broadcast %cst_133 : f32 to vector<34x1xf32>
    %463 = arith.divf %461, %462 : vector<34x1xf32>
    %464 = vector.broadcast %463 : vector<34x1xf32> to vector<34x32xf32>
    %465 = arith.subf %459, %464 : vector<34x32xf32>
    %466 = arith.mulf %465, %465 : vector<34x32xf32>
    %cst_134 = arith.constant dense<0.000000e+00> : vector<34xf32>
    %467 = vector.multi_reduction <add>, %466, %cst_134 [1] : vector<34x32xf32> to vector<34xf32>
    %468 = vector.shape_cast %467 : vector<34xf32> to vector<34x1xf32>
    %cst_135 = arith.constant 3.200000e+01 : f32
    %469 = vector.broadcast %cst_135 : f32 to vector<34x1xf32>
    %470 = arith.divf %468, %469 : vector<34x1xf32>
    %471 = vector.broadcast %463 : vector<34x1xf32> to vector<34x32xf32>
    %472 = arith.subf %459, %471 : vector<34x32xf32>
    %cst_136 = arith.constant 9.99999974E-6 : f32
    %473 = vector.broadcast %cst_136 : f32 to vector<34x1xf32>
    %474 = arith.addf %470, %473 : vector<34x1xf32>
    %475 = math.rsqrt %474 : vector<34x1xf32>
    %476 = vector.broadcast %475 : vector<34x1xf32> to vector<34x32xf32>
    %477 = arith.mulf %472, %476 : vector<34x32xf32>
    %478 = vector.broadcast %28 : vector<1x32xf32> to vector<34x32xf32>
    %479 = arith.mulf %477, %478 : vector<34x32xf32>
    %480 = vector.broadcast %29 : vector<1x32xf32> to vector<34x32xf32>
    %481 = arith.addf %479, %480 : vector<34x32xf32>
    %c0_137 = arith.constant 0 : index
    %c0_138 = arith.constant 0 : index
    %482 = vector.load %arg10[%c0_137, %c0_138] : memref<34x32xf32, #tpu.memory_space<vmem>>, vector<34x32xf32>
    tpu.vector_store %arg10[%c0_137, %c0_138], %481 {strides = array<i32>} : memref<34x32xf32, #tpu.memory_space<vmem>>, vector<34x32xf32>,
    %c1_i32 = arith.constant 1 : i32
    %483 = arith.cmpi eq, %arg0, %c1_i32 : i32
    %484 = arith.extui %483 : i1 to i32
    %c0_i32_139 = arith.constant 0 : i32
    %485 = arith.cmpi ne, %484, %c0_i32_139 : i32
    scf.if %485 {
      %c0_140 = arith.constant 0 : index
      %c0_141 = arith.constant 0 : index
      %486 = vector.load %arg5[%c0_140, %c0_141] : memref<1x128xf32, #tpu.memory_space<vmem>>, vector<1x128xf32>
      %c0_142 = arith.constant 0 : index
      %c0_143 = arith.constant 0 : index
      %487 = vector.load %arg4[%c0_142, %c0_143] : memref<33x128xf32, #tpu.memory_space<vmem>>, vector<33x128xf32>
      %488 = vector.extract_strided_slice %486 {offsets = [0, 64], sizes = [1, 32], strides = [1, 1]} : vector<1x128xf32> to vector<1x32xf32>
      %489 = vector.extract_strided_slice %486 {offsets = [0, 96], sizes = [1, 32], strides = [1, 1]} : vector<1x128xf32> to vector<1x32xf32>
      %cst_144 = arith.constant dense<0.000000e+00> : vector<34xf32>
      %490 = vector.multi_reduction <add>, %481, %cst_144 [1] : vector<34x32xf32> to vector<34xf32>
      %491 = vector.shape_cast %490 : vector<34xf32> to vector<34x1xf32>
      %cst_145 = arith.constant 3.200000e+01 : f32
      %492 = vector.broadcast %cst_145 : f32 to vector<34x1xf32>
      %493 = arith.divf %491, %492 : vector<34x1xf32>
      %494 = vector.broadcast %493 : vector<34x1xf32> to vector<34x32xf32>
      %495 = arith.subf %481, %494 : vector<34x32xf32>
      %496 = arith.mulf %495, %495 : vector<34x32xf32>
      %cst_146 = arith.constant dense<0.000000e+00> : vector<34xf32>
      %497 = vector.multi_reduction <add>, %496, %cst_146 [1] : vector<34x32xf32> to vector<34xf32>
      %498 = vector.shape_cast %497 : vector<34xf32> to vector<34x1xf32>
      %cst_147 = arith.constant 3.200000e+01 : f32
      %499 = vector.broadcast %cst_147 : f32 to vector<34x1xf32>
      %500 = arith.divf %498, %499 : vector<34x1xf32>
      %501 = vector.broadcast %493 : vector<34x1xf32> to vector<34x32xf32>
      %502 = arith.subf %481, %501 : vector<34x32xf32>
      %cst_148 = arith.constant 9.99999974E-6 : f32
      %503 = vector.broadcast %cst_148 : f32 to vector<34x1xf32>
      %504 = arith.addf %500, %503 : vector<34x1xf32>
      %505 = math.rsqrt %504 : vector<34x1xf32>
      %506 = vector.broadcast %505 : vector<34x1xf32> to vector<34x32xf32>
      %507 = arith.mulf %502, %506 : vector<34x32xf32>
      %508 = vector.broadcast %488 : vector<1x32xf32> to vector<34x32xf32>
      %509 = arith.mulf %507, %508 : vector<34x32xf32>
      %510 = vector.broadcast %489 : vector<1x32xf32> to vector<34x32xf32>
      %511 = arith.addf %509, %510 : vector<34x32xf32>
      %512 = vector.extract_strided_slice %487 {offsets = [0, 0], sizes = [32, 128], strides = [1, 1]} : vector<33x128xf32> to vector<32x128xf32>
      %cst_149 = arith.constant dense<0.000000e+00> : vector<34x128xf32>
      %513 = tpu.matmul %511, %512, %cst_149 {dimension_numbers = #tpu.dot_dimension_numbers<[1], [0], [0], [1], [0, 0, 1, 1], [], []>} : vector<34x32xf32>, vector<32x128xf32>, vector<34x128xf32> -> vector<34x128xf32>
      %514 = vector.extract_strided_slice %487 {offsets = [32, 0], sizes = [1, 128], strides = [1, 1]} : vector<33x128xf32> to vector<1x128xf32>
      %515 = vector.broadcast %514 : vector<1x128xf32> to vector<34x128xf32>
      %516 = arith.addf %513, %515 : vector<34x128xf32>
      %c0_150 = arith.constant 0 : index
      %c0_151 = arith.constant 0 : index
      %517 = vector.load %arg9[%c0_150, %c0_151] : memref<34x128xf32, #tpu.memory_space<vmem>>, vector<34x128xf32>
      tpu.vector_store %arg9[%c0_150, %c0_151], %516 {strides = array<i32>} : memref<34x128xf32, #tpu.memory_space<vmem>>, vector<34x128xf32>,
    } else {
    }
    return
  }
  func.func @transform_0(%arg0: i32) -> (i32, i32) {
    %c0_i32 = arith.constant 0 : i32
    %c0_i32_0 = arith.constant 0 : i32
    %c0_i32_1 = arith.constant 0 : i32
    return %c0_i32, %c0_i32_0 : i32, i32
  }
  func.func @transform_1(%arg0: i32) -> (i32, i32) {
    %c0_i32 = arith.constant 0 : i32
    %c0_i32_0 = arith.constant 0 : i32
    %c0_i32_1 = arith.constant 0 : i32
    return %c0_i32, %c0_i32_0 : i32, i32
  }
  func.func @transform_2(%arg0: i32) -> (i32, i32) {
    %c0_i32 = arith.constant 0 : i32
    %c0_i32_0 = arith.constant 0 : i32
    %c0_i32_1 = arith.constant 0 : i32
    return %c0_i32, %c0_i32_0 : i32, i32
  }
  func.func @transform_3(%arg0: i32) -> (i32, i32) {
    %c0_i32 = arith.constant 0 : i32
    %c0_i32_0 = arith.constant 0 : i32
    %c0_i32_1 = arith.constant 0 : i32
    return %c0_i32, %c0_i32_0 : i32, i32
  }
  func.func @transform_4(%arg0: i32) -> (i32, i32) {
    %c0_i32 = arith.constant 0 : i32
    %c0_i32_0 = arith.constant 0 : i32
    %c0_i32_1 = arith.constant 0 : i32
    return %c0_i32, %c0_i32_0 : i32, i32
  }
  func.func @transform_5(%arg0: i32) -> (i32, i32, i32) {
    %c0_i32 = arith.constant 0 : i32
    %c0_i32_0 = arith.constant 0 : i32
    %c0_i32_1 = arith.constant 0 : i32
    return %arg0, %c0_i32, %c0_i32_0 : i32, i32, i32
  }
  func.func @transform_6(%arg0: i32) -> (i32, i32, i32) {
    %c0_i32 = arith.constant 0 : i32
    %c0_i32_0 = arith.constant 0 : i32
    %c0_i32_1 = arith.constant 0 : i32
    return %arg0, %c0_i32, %c0_i32_0 : i32, i32, i32
  }
  func.func @transform_7(%arg0: i32) -> (i32, i32, i32) {
    %c0_i32 = arith.constant 0 : i32
    %c0_i32_0 = arith.constant 0 : i32
    %c0_i32_1 = arith.constant 0 : i32
    return %arg0, %c0_i32, %c0_i32_0 : i32, i32, i32
  }
  func.func @transform_8(%arg0: i32) -> (i32, i32) {
    %c0_i32 = arith.constant 0 : i32
    %c0_i32_0 = arith.constant 0 : i32
    %c0_i32_1 = arith.constant 0 : i32
    return %c0_i32, %c0_i32_0 : i32, i32
  }
}

</mosaic_0001>

<llo_original>
// kernel: custom-call
$region0: #{custom-call}
  %s0 = inlined_call_operand.vmem [shape: bf16[2,2,16], index: 0, kind: output, shape index: {}]

// kernel: custom-call.1
$region0: #{custom-call.1}
  %s0 = inlined_call_operand.vmem [shape: f32[2,2,16], index: 0, kind: output, shape index: {}]

// kernel: custom-call.8
$region0: #{custom-call.8}
  %s0 = inlined_call_operand.vmem [shape: bf16[8,2,2,16], index: 0, kind: output, shape index: {}]

// kernel: cross_guided_mlmh_forward.1
$region0: #{cross_guided_mlmh_forward.1}
  #allocation0 [shape = 'u32[]', space=smem, size = 0x4, offset = 0x4, fixed_abs, tag = 'smem constant byte address 0x4 - core index']
  #allocation1 [shape = 'u32[144,128]{1,0:T(1,128)}', space=vmem, size = 0x12000, scoped, tag = 'internal scratch']
  #allocation2 [shape = 'f32[34,32]{1,0:T(8,128)}', space=vmem, size = 0x5000, scoped, tag = 'scratch operand']
  %s0 = inlined_call_operand.vmem [shape: f32[34,40], index: 0, kind: input, shape index: {}]
  %s1 = inlined_call_operand.vmem [shape: f32[16,32], index: 1, kind: input, shape index: {}]
  %s2 = inlined_call_operand.vmem [shape: f32[41,32], index: 2, kind: input, shape index: {}]
  %s3 = inlined_call_operand.vmem [shape: f32[33,128], index: 3, kind: input, shape index: {}]
  %s4 = inlined_call_operand.vmem [shape: f32[1,128], index: 4, kind: input, shape index: {}]
  %s5 = inlined_call_operand.vmem [shape: f32[2,32,384], index: 5, kind: input, shape index: {}]
  %s6 = inlined_call_operand.vmem [shape: f32[2,128,32], index: 6, kind: input, shape index: {}]
  %s7 = inlined_call_operand.vmem [shape: f32[2,5,128], index: 7, kind: input, shape index: {}]
  %s8 = inlined_call_operand.vmem [shape: f32[34,128], index: 8, kind: output, shape index: {}]
  %s9 = sld [smem:[#allocation0]]
  $region73: #{cross_guided_mlmh_forward.1} parent=0
    _
  %s11 = ssub.s32 1, %s9
  %s12 = scalar_select 0, %s11, %s9
  loop: start=0, step=1, limit=4
  $region2: #{cross_guided_mlmh_forward.1} parent=0 // loop_pre_header
    _
  $region3: #{cross_guided_mlmh_forward.1} parent=0 // loop_header
    %s14 = sphi 0, %s18
    %p15 = scmp.ge.s32.totalorder %s14, 4
    %s22 = sphi 0, %s22
    %s24 = sphi 0, %s22
    %s25 = sphi 0, %s24
    %s39 = sphi 0, %s25
    %s43 = sphi 0, %s43
    %s45 = sphi 0, %s43
    %s46 = sphi 0, %s45
    %s60 = sphi 0, %s46
    %s64 = sphi 0, %s64
    %s66 = sphi 0, %s64
    %s67 = sphi 0, %s66
    %s81 = sphi 0, %s67
    %s85 = sphi 0, %s85
    %s87 = sphi 0, %s85
    %s88 = sphi 0, %s87
    %s102 = sphi 0, %s88
    %s106 = sphi 0, %s106
    %s108 = sphi 0, %s106
    %s109 = sphi 0, %s108
    %s123 = sphi 0, %s109
    %s129 = sphi 0, %s131
    %s132 = sphi 0, %s129
    %s133 = sphi 0, %s132
    %s149 = sphi 0, %s133
    %s155 = sphi 0, %s157
    %s158 = sphi 0, %s155
    %s159 = sphi 0, %s158
    %s175 = sphi 0, %s159
    %s181 = sphi 0, %s183
    %s184 = sphi 0, %s181
    %s185 = sphi 0, %s184
    %s201 = sphi 0, %s185
    %s205 = sphi 0, %s205
    %s207 = sphi 0, %s205
    %s208 = sphi 0, %s207
    %s222 = sphi 0, %s208
  $region4: #{cross_guided_mlmh_forward.1} parent=0 // loop_header_branch
    %17 = sbr.rel (%p15) target = $region8
  $region5: #{cross_guided_mlmh_forward.1} parent=0 // loop_body
    %s19 = ssub.s32 %s14, 1
    %s20 = ssub.s32 %s14, 2
    %s21 = sadd.s32 %s14, 1
    %s23 = sadd.s32 %s22, 1
    %p26 = scmp.eq.s32.totalorder %s14, 1
    %p27 = scmp.ne.s32.totalorder %s22, %s24
    %p28 = scmp.eq.s32.totalorder %s14, 0
    %p29 = por %p27, %p28
    %p30 = scmp.ne.s32.totalorder %s22, %s24
    %p31 = scmp.eq.s32.totalorder %s19, 1
    %p32 = por %p30, %p31
    %p33 = scmp.ne.s32.totalorder %s24, %s25
    %p34 = scmp.eq.s32.totalorder %s19, 0
    %p35 = por %p33, %p34
    %p36 = scmp.ne.s32.totalorder %s24, %s25
    %p37 = scmp.eq.s32.totalorder %s20, 1
    %p38 = por %p36, %p37
    %p40 = scmp.ne.s32.totalorder %s25, %s39
    %p41 = scmp.eq.s32.totalorder %s20, 0
    %p42 = por %p40, %p41
    %s44 = sadd.s32 %s43, 1
    %p47 = scmp.eq.s32.totalorder %s14, 1
    %p48 = scmp.ne.s32.totalorder %s43, %s45
    %p49 = scmp.eq.s32.totalorder %s14, 0
    %p50 = por %p48, %p49
    %p51 = scmp.ne.s32.totalorder %s43, %s45
    %p52 = scmp.eq.s32.totalorder %s19, 1
    %p53 = por %p51, %p52
    %p54 = scmp.ne.s32.totalorder %s45, %s46
    %p55 = scmp.eq.s32.totalorder %s19, 0
    %p56 = por %p54, %p55
    %p57 = scmp.ne.s32.totalorder %s45, %s46
    %p58 = scmp.eq.s32.totalorder %s20, 1
    %p59 = por %p57, %p58
    %p61 = scmp.ne.s32.totalorder %s46, %s60
    %p62 = scmp.eq.s32.totalorder %s20, 0
    %p63 = por %p61, %p62
    %s65 = sadd.s32 %s64, 1
    %p68 = scmp.eq.s32.totalorder %s14, 1
    %p69 = scmp.ne.s32.totalorder %s64, %s66
    %p70 = scmp.eq.s32.totalorder %s14, 0
    %p71 = por %p69, %p70
    %p72 = scmp.ne.s32.totalorder %s64, %s66
    %p73 = scmp.eq.s32.totalorder %s19, 1
    %p74 = por %p72, %p73
    %p75 = scmp.ne.s32.totalorder %s66, %s67
    %p76 = scmp.eq.s32.totalorder %s19, 0
    %p77 = por %p75, %p76
    %p78 = scmp.ne.s32.totalorder %s66, %s67
    %p79 = scmp.eq.s32.totalorder %s20, 1
    %p80 = por %p78, %p79
    %p82 = scmp.ne.s32.totalorder %s67, %s81
    %p83 = scmp.eq.s32.totalorder %s20, 0
    %p84 = por %p82, %p83
    %s86 = sadd.s32 %s85, 1
    %p89 = scmp.eq.s32.totalorder %s14, 1
    %p90 = scmp.ne.s32.totalorder %s85, %s87
    %p91 = scmp.eq.s32.totalorder %s14, 0
    %p92 = por %p90, %p91
    %p93 = scmp.ne.s32.totalorder %s85, %s87
    %p94 = scmp.eq.s32.totalorder %s19, 1
    %p95 = por %p93, %p94
    %p96 = scmp.ne.s32.totalorder %s87, %s88
    %p97 = scmp.eq.s32.totalorder %s19, 0
    %p98 = por %p96, %p97
    %p99 = scmp.ne.s32.totalorder %s87, %s88
    %p100 = scmp.eq.s32.totalorder %s20, 1
    %p101 = por %p99, %p100
    %p103 = scmp.ne.s32.totalorder %s88, %s102
    %p104 = scmp.eq.s32.totalorder %s20, 0
    %p105 = por %p103, %p104
    %s107 = sadd.s32 %s106, 1
    %p110 = scmp.eq.s32.totalorder %s14, 1
    %p111 = scmp.ne.s32.totalorder %s106, %s108
    %p112 = scmp.eq.s32.totalorder %s14, 0
    %p113 = por %p111, %p112
    %p114 = scmp.ne.s32.totalorder %s106, %s108
    %p115 = scmp.eq.s32.totalorder %s19, 1
    %p116 = por %p114, %p115
    %p117 = scmp.ne.s32.totalorder %s108, %s109
    %p118 = scmp.eq.s32.totalorder %s19, 0
    %p119 = por %p117, %p118
    %p120 = scmp.ne.s32.totalorder %s108, %s109
    %p121 = scmp.eq.s32.totalorder %s20, 1
    %p122 = por %p120, %p121
    %p124 = scmp.ne.s32.totalorder %s109, %s123
    %p125 = scmp.eq.s32.totalorder %s20, 0
    %p126 = por %p124, %p125
    %s127 = ssub.s32 %s14, %s21
    %p128 = scmp.eq.s32.totalorder %s127, 0
    %s130 = sadd.s32 %s129, 1
    %s131 = scalar_select %p128, %s129, %s130
    %p134 = pneg %p128
    %p135 = scmp.eq.s32.totalorder %s14, 1
    %p136 = por %p134, %p135
    %p137 = scmp.ne.s32.totalorder %s129, %s132
    %p138 = scmp.eq.s32.totalorder %s14, 0
    %p139 = por %p137, %p138
    %p140 = scmp.ne.s32.totalorder %s129, %s132
    %p141 = scmp.eq.s32.totalorder %s19, 1
    %p142 = por %p140, %p141
    %p143 = scmp.ne.s32.totalorder %s132, %s133
    %p144 = scmp.eq.s32.totalorder %s19, 0
    %p145 = por %p143, %p144
    %p146 = scmp.ne.s32.totalorder %s132, %s133
    %p147 = scmp.eq.s32.totalorder %s20, 1
    %p148 = por %p146, %p147
    %p150 = scmp.ne.s32.totalorder %s133, %s149
    %p151 = scmp.eq.s32.totalorder %s20, 0
    %p152 = por %p150, %p151
    %s153 = ssub.s32 %s14, %s21
    %p154 = scmp.eq.s32.totalorder %s153, 0
    %s156 = sadd.s32 %s155, 1
    %s157 = scalar_select %p154, %s155, %s156
    %p160 = pneg %p154
    %p161 = scmp.eq.s32.totalorder %s14, 1
    %p162 = por %p160, %p161
    %p163 = scmp.ne.s32.totalorder %s155, %s158
    %p164 = scmp.eq.s32.totalorder %s14, 0
    %p165 = por %p163, %p164
    %p166 = scmp.ne.s32.totalorder %s155, %s158
    %p167 = scmp.eq.s32.totalorder %s19, 1
    %p168 = por %p166, %p167
    %p169 = scmp.ne.s32.totalorder %s158, %s159
    %p170 = scmp.eq.s32.totalorder %s19, 0
    %p171 = por %p169, %p170
    %p172 = scmp.ne.s32.totalorder %s158, %s159
    %p173 = scmp.eq.s32.totalorder %s20, 1
    %p174 = por %p172, %p173
    %p176 = scmp.ne.s32.totalorder %s159, %s175
    %p177 = scmp.eq.s32.totalorder %s20, 0
    %p178 = por %p176, %p177
    %s179 = ssub.s32 %s14, %s21
    %p180 = scmp.eq.s32.totalorder %s179, 0
    %s182 = sadd.s32 %s181, 1
    %s183 = scalar_select %p180, %s181, %s182
    %p186 = pneg %p180
    %p187 = scmp.eq.s32.totalorder %s14, 1
    %p188 = por %p186, %p187
    %p189 = scmp.ne.s32.totalorder %s181, %s184
    %p190 = scmp.eq.s32.totalorder %s14, 0
    %p191 = por %p189, %p190
    %p192 = scmp.ne.s32.totalorder %s181, %s184
    %p193 = scmp.eq.s32.totalorder %s19, 1
    %p194 = por %p192, %p193
    %p195 = scmp.ne.s32.totalorder %s184, %s185
    %p196 = scmp.eq.s32.totalorder %s19, 0
    %p197 = por %p195, %p196
    %p198 = scmp.ne.s32.totalorder %s184, %s185
    %p199 = scmp.eq.s32.totalorder %s20, 1
    %p200 = por %p198, %p199
    %p202 = scmp.ne.s32.totalorder %s185, %s201
    %p203 = scmp.eq.s32.totalorder %s20, 0
    %p204 = por %p202, %p203
    %s206 = sadd.s32 %s205, 1
    %p209 = scmp.eq.s32.totalorder %s14, 1
    %p210 = scmp.ne.s32.totalorder %s205, %s207
    %p211 = scmp.eq.s32.totalorder %s14, 0
    %p212 = por %p210, %p211
    %p213 = scmp.ne.s32.totalorder %s205, %s207
    %p214 = scmp.eq.s32.totalorder %s19, 1
    %p215 = por %p213, %p214
    %p216 = scmp.ne.s32.totalorder %s207, %s208
    %p217 = scmp.eq.s32.totalorder %s19, 0
    %p218 = por %p216, %p217
    %p219 = scmp.ne.s32.totalorder %s207, %s208
    %p220 = scmp.eq.s32.totalorder %s20, 1
    %p221 = por %p219, %p220
    %p223 = scmp.ne.s32.totalorder %s208, %s222
    %p224 = scmp.eq.s32.totalorder %s20, 0
    %p225 = por %p223, %p224
    %p226 = scmp.le.s32.totalorder 1, %s14
    %p227 = scmp.lt.s32.totalorder %s14, 3
    %p228 = pnand %p226, %p227
    %p229 = pneg %p228
    // Predicated region
    $region9: #{cross_guided_mlmh_forward.1} parent=5 // pred_check
      _
    $region10: #{cross_guided_mlmh_forward.1} parent=5 // pred_check_branch
      %231 = sbr.rel (%p228) target = $region12
    $region11: #{cross_guided_mlmh_forward.1} parent=5 // pred_region
      %s232 = ssub.s32 %s14, 1
      // Predicated region
      $region13: #{cross_guided_mlmh_forward.1} parent=11 // pred_check
        %p233 = pneg %p35
      $region14: #{cross_guided_mlmh_forward.1} parent=11 // pred_check_branch
        %235 = sbr.rel (%p233) target = $region16
      $region15: #{cross_guided_mlmh_forward.1} parent=11 // pred_region
        _
      $region16: #{cross_guided_mlmh_forward.1} parent=11 // pred_fallthru
        _
      // Predicated region
      $region17: #{cross_guided_mlmh_forward.1} parent=11 // pred_check
        %p236 = pneg %p56
      $region18: #{cross_guided_mlmh_forward.1} parent=11 // pred_check_branch
        %238 = sbr.rel (%p236) target = $region20
      $region19: #{cross_guided_mlmh_forward.1} parent=11 // pred_region
        _
      $region20: #{cross_guided_mlmh_forward.1} parent=11 // pred_fallthru
        _
      // Predicated region
      $region21: #{cross_guided_mlmh_forward.1} parent=11 // pred_check
        %p239 = pneg %p77
      $region22: #{cross_guided_mlmh_forward.1} parent=11 // pred_check_branch
        %241 = sbr.rel (%p239) target = $region24
      $region23: #{cross_guided_mlmh_forward.1} parent=11 // pred_region
        _
      $region24: #{cross_guided_mlmh_forward.1} parent=11 // pred_fallthru
        _
      // Predicated region
      $region25: #{cross_guided_mlmh_forward.1} parent=11 // pred_check
        %p242 = pneg %p98
      $region26: #{cross_guided_mlmh_forward.1} parent=11 // pred_check_branch
        %244 = sbr.rel (%p242) target = $region28
      $region27: #{cross_guided_mlmh_forward.1} parent=11 // pred_region
        _
      $region28: #{cross_guided_mlmh_forward.1} parent=11 // pred_fallthru
        _
      // Predicated region
      $region29: #{cross_guided_mlmh_forward.1} parent=11 // pred_check
        %p245 = pneg %p119
      $region30: #{cross_guided_mlmh_forward.1} parent=11 // pred_check_branch
        %247 = sbr.rel (%p245) target = $region32
      $region31: #{cross_guided_mlmh_forward.1} parent=11 // pred_region
        _
      $region32: #{cross_guided_mlmh_forward.1} parent=11 // pred_fallthru
        _
    $region12: #{cross_guided_mlmh_forward.1} parent=5 // pred_fallthru
      _
    %p248 = scmp.lt.s32.totalorder %s14, 2
    // Predicated region
    $region33: #{cross_guided_mlmh_forward.1} parent=5 // pred_check
      %p249 = pneg %p248
    $region34: #{cross_guided_mlmh_forward.1} parent=5 // pred_check_branch
      %251 = sbr.rel (%p249) target = $region36
    $region35: #{cross_guided_mlmh_forward.1} parent=5 // pred_region
      // Predicated region
      $region37: #{cross_guided_mlmh_forward.1} parent=35 // pred_check
        %p252 = pneg %p139
      $region38: #{cross_guided_mlmh_forward.1} parent=35 // pred_check_branch
        %254 = sbr.rel (%p252) target = $region40
      $region39: #{cross_guided_mlmh_forward.1} parent=35 // pred_region
        %p255 = scmp.lt.s32.totalorder %s14, 1
        %s256 = scalar_select %p255, %s14, 1
        %s257 = smul.addr %s256, 12
        %s258 = smul.addr %s257, 8
        %s259 = scalar_lea.vmem %s5, %s258
      $region40: #{cross_guided_mlmh_forward.1} parent=35 // pred_fallthru
        _
      // Predicated region
      $region41: #{cross_guided_mlmh_forward.1} parent=35 // pred_check
        %p260 = pneg %p165
      $region42: #{cross_guided_mlmh_forward.1} parent=35 // pred_check_branch
        %262 = sbr.rel (%p260) target = $region44
      $region43: #{cross_guided_mlmh_forward.1} parent=35 // pred_region
        %p263 = scmp.lt.s32.totalorder %s14, 1
        %s264 = scalar_select %p263, %s14, 1
        %s265 = smul.addr %s264, 16
        %s266 = smul.addr %s265, 8
        %s267 = scalar_lea.vmem %s6, %s266
      $region44: #{cross_guided_mlmh_forward.1} parent=35 // pred_fallthru
        _
      // Predicated region
      $region45: #{cross_guided_mlmh_forward.1} parent=35 // pred_check
        %p268 = pneg %p191
      $region46: #{cross_guided_mlmh_forward.1} parent=35 // pred_check_branch
        %270 = sbr.rel (%p268) target = $region48
      $region47: #{cross_guided_mlmh_forward.1} parent=35 // pred_region
        %p271 = scmp.lt.s32.totalorder %s14, 1
        %s272 = scalar_select %p271, %s14, 1
        %s273 = smul.addr %s272, 8
        %s274 = scalar_lea.vmem %s7, %s273
      $region48: #{cross_guided_mlmh_forward.1} parent=35 // pred_fallthru
        _
    $region36: #{cross_guided_mlmh_forward.1} parent=5 // pred_fallthru
      _
    %p275 = scmp.le.s32.totalorder 1, %s14
    %p276 = scmp.lt.s32.totalorder %s14, 3
    %p277 = pnand %p275, %p276
    %p278 = pneg %p277
    // Predicated region
    $region49: #{cross_guided_mlmh_forward.1} parent=5 // pred_check
      _
    $region50: #{cross_guided_mlmh_forward.1} parent=5 // pred_check_branch
      %280 = sbr.rel (%p277) target = $region52
    $region51: #{cross_guided_mlmh_forward.1} parent=5 // pred_region
      %s281 = ssub.s32 %s14, 1
      %p282 = pneg %p35
      %p283 = pneg %p32
      %p284 = pneg %p56
      %p285 = pneg %p53
      %p286 = pneg %p77
      %p287 = pneg %p74
      %p288 = pneg %p98
      %p289 = pneg %p95
      %p290 = pneg %p119
      %p291 = pneg %p116
      %p292 = scmp.lt.s32.totalorder %s19, 1
      %s293 = scalar_select %p292, %s19, 1
      %s294 = smul.addr %s293, 12
      %s295 = smul.addr %s294, 8
      %s296 = scalar_lea.vmem %s5, %s295
      %p297 = pneg %p145
      %p298 = pneg %p142
      %p299 = scmp.lt.s32.totalorder %s19, 1
      %s300 = scalar_select %p299, %s19, 1
      %s301 = smul.addr %s300, 16
      %s302 = smul.addr %s301, 8
      %s303 = scalar_lea.vmem %s6, %s302
      %p304 = pneg %p171
      %p305 = pneg %p168
      %p306 = scmp.lt.s32.totalorder %s19, 1
      %s307 = scalar_select %p306, %s19, 1
      %s308 = smul.addr %s307, 8
      %s309 = scalar_lea.vmem %s7, %s308
      %p310 = pneg %p197
      %p311 = pneg %p194
      %p312 = pneg %p218
      %p313 = pneg %p215
      %p314 = scmp.lt.s32.totalorder %s19, 1
      %s315 = scalar_select %p314, %s19, 1
      %s316 = smul.addr %s315, 12
      %s317 = smul.addr %s316, 8
      %s318 = scalar_lea.vmem %s5, %s317
      %p319 = scmp.lt.s32.totalorder %s19, 1
      %s320 = scalar_select %p319, %s19, 1
      %s321 = smul.addr %s320, 16
      %s322 = smul.addr %s321, 8
      %s323 = scalar_lea.vmem %s6, %s322
      %p324 = scmp.lt.s32.totalorder %s19, 1
      %s325 = scalar_select %p324, %s19, 1
      %s326 = smul.addr %s325, 8
      %s327 = scalar_lea.vmem %s7, %s326
      %p328 = scmp.eq.s32.totalorder %s19, 0
      // Predicated region
      $region53: #{cross_guided_mlmh_forward.1} parent=51 // pred_check
        %p329 = pneg %p328
      $region54: #{cross_guided_mlmh_forward.1} parent=51 // pred_check_branch
        %331 = sbr.rel (%p329) target = $region56
      $region55: #{cross_guided_mlmh_forward.1} parent=51 // pred_region
        %v332 = vld [vmem:[%s2] sm:$0xff]
        %v333 = vld [vmem:[%s2 + $0x8] sm:$0xff]
        %v334 = vld [vmem:[%s2 + $0x10] sm:$0xff]
        %v335 = vld [vmem:[%s2 + $0x18] sm:$0xff]
        %v336 = vld [vmem:[%s2 + $0x20] sm:$0xff]
        %v337 = vld [vmem:[%s2 + $0x28] sm:$0x1]
        %v338 = vld [vmem:[%s4] sm:$0x1]
        %v339 = vld [vmem:[%s0] sm:$0xff]
        %v340 = vld [vmem:[%s0 + $0x8] sm:$0xff]
        %v341 = vld [vmem:[%s0 + $0x10] sm:$0xff]
        %v342 = vld [vmem:[%s0 + $0x18] sm:$0xff]
        %v343 = vld [vmem:[%s0 + $0x20] sm:$0x3]
        %v344 = vlaneseq
        %v345 = vshrl.u32 %v344, 7
        %v346 = vsub.s32 0, %v345
        %v347 = vrot.slane %v337, %v346
        %vm348 = vcmask 326656
        %v350 = vsel %vm348, %v339, 0
        %v353 = vsel %vm348, %v340, 0
        %v356 = vsel %vm348, %v341, 0
        %v359 = vsel %vm348, %v342, 0
        %v362 = vsel %vm348, %v343, 0
        %364 = vmatprep.subr.mxu0 0.0
        %365 = vmatpush1.msra.mxu0 %v332
        %366 = vmatprep.subr.mxu0 0.0
        %367 = vmatpush1.msra.mxu0 %v333
        %368 = vmatprep.subr.mxu0 0.0
        %369 = vmatpush1.msra.mxu0 %v334
        %370 = vmatprep.subr.mxu0 0.0
        %371 = vmatpush1.msra.mxu0 %v335
        %372 = vmatprep.subr.mxu0 0.0
        %373 = vmatpush1.msra.mxu0 %v336
        %374 = vmatprep.subr.mxu0 0.0
        %375 = vmatpush1.msra.mxu0 0.0
        %376 = vmatprep.subr.mxu0 0.0
        %377 = vmatpush1.msra.mxu0 0.0
        %378 = vmatprep.subr.mxu0 0.0
        %379 = vmatpush1.msra.mxu0 0.0
        %380 = vmatprep.subr.mxu0 0.0
        %381 = vmatpush1.msra.mxu0 0.0
        %382 = vmatprep.subr.mxu0 0.0
        %383 = vmatpush1.msra.mxu0 0.0
        %384 = vmatprep.subr.mxu0 0.0
        %385 = vmatpush1.msra.mxu0 0.0
        %386 = vmatprep.subr.mxu0 0.0
        %387 = vmatpush1.msra.mxu0 0.0
        %388 = vmatprep.subr.mxu0 0.0
        %389 = vmatpush1.msra.mxu0 0.0
        %390 = vmatprep.subr.mxu0 0.0
        %391 = vmatpush1.msra.mxu0 0.0
        %392 = vmatprep.subr.mxu0 0.0
        %393 = vmatpush1.msra.mxu0 0.0
        %394 = vmatprep.subr.mxu0 0.0
        %395 = vmatpush1.msra.mxu0 0.0
        %396 = vmatprep.subr.mxu0 0.0
        %397 = vmatpush1.msra.mxu0 0.0
        %398 = vmatprep.subr.mxu0 0.0
        %399 = vmatpush1.msra.mxu0 0.0
        %400 = vmatprep.subr.mxu0 0.0
        %401 = vmatpush1.msra.mxu0 0.0
        %402 = vmatprep.subr.mxu0 0.0
        %403 = vmatpush1.msra.mxu0 0.0
        %404 = vmatprep.subr.mxu0 0.0
        %405 = vmatpush1.msra.mxu0 0.0
        %406 = vmatprep.subr.mxu0 0.0
        %407 = vmatpush1.msra.mxu0 0.0
        %408 = vmatprep.subr.mxu0 0.0
        %409 = vmatpush1.msra.mxu0 0.0
        %410 = vmatprep.subr.mxu0 0.0
        %411 = vmatpush1.msra.mxu0 0.0
        %412 = vmatprep.subr.mxu0 0.0
        %413 = vmatpush1.msra.mxu0 0.0
        %414 = vmatprep.subr.mxu0 0.0
        %415 = vmatpush1.msra.mxu0 0.0
        %416 = vmatprep.subr.mxu0 0.0
        %417 = vmatpush1.msra.mxu0 0.0
        %418 = vmatprep.subr.mxu0 0.0
        %419 = vmatpush1.msra.mxu0 0.0
        %420 = vmatprep.subr.mxu0 0.0
        %421 = vmatpush1.msra.mxu0 0.0
        %422 = vmatprep.subr.mxu0 0.0
        %423 = vmatpush1.msra.mxu0 0.0
        %424 = vmatprep.subr.mxu0 0.0
        %425 = vmatpush1.msra.mxu0 0.0
        %426 = vmatprep.subr.mxu0 0.0
        %427 = vmatpush1.msra.mxu0 0.0
        %428 = vmatprep.mubr.f32.mxu0 0.0
        %429 = vmatmul.mubr.f32.gmra.mrb[0].mxu0 %v350
        %v430 = vpop.f32.mrb[0].mxu0
        %v431 = vadd.f32 %v347, %v430
        %v432 = vpop.f32.mrb[0].mxu0
        %433 = vmatprep.mubr.f32.mxu0 0.0
        %434 = vmatmul.mubr.f32.gmra.mrb[0].mxu0 %v353
        %v435 = vpop.f32.mrb[0].mxu0
        %v436 = vadd.f32 %v347, %v435
        %v437 = vpop.f32.mrb[0].mxu0
        %438 = vmatprep.mubr.f32.mxu0 0.0
        %439 = vmatmul.mubr.f32.gmra.mrb[0].mxu0 %v356
        %v440 = vpop.f32.mrb[0].mxu0
        %v441 = vadd.f32 %v347, %v440
        %v442 = vpop.f32.mrb[0].mxu0
        %443 = vmatprep.mubr.f32.mxu0 0.0
        %444 = vmatmul.mubr.f32.gmra.mrb[0].mxu0 %v359
        %v445 = vpop.f32.mrb[0].mxu0
        %v446 = vadd.f32 %v347, %v445
        %v447 = vpop.f32.mrb[0].mxu0
        %448 = vmatprep.mubr.f32.mxu0 0.0
        %449 = vmatmul.mubr.f32.gmra.mrb[0].mxu0 %v362
        %v450 = vpop.f32.mrb[0].mxu0
        %v451 = vadd.f32 %v347, %v450
        %v452 = vpop.f32.mrb[0].mxu0
        %453 = vdwg.mxu0
        %vm454 = vcmask 261120
        %v455 = vsel %vm454, %v431, 0.0
        %456 = vadd.xlane.f32.xlu0 %v455
        %v457 = vpop.xlane.xlu0 %456
        %v458 = vsel %vm454, %v436, 0.0
        %459 = vadd.xlane.f32.xlu0 %v458
        %v460 = vpop.xlane.xlu0 %459
        %v461 = vsel %vm454, %v441, 0.0
        %462 = vadd.xlane.f32.xlu0 %v461
        %v463 = vpop.xlane.xlu0 %462
        %v464 = vsel %vm454, %v446, 0.0
        %465 = vadd.xlane.f32.xlu0 %v464
        %v466 = vpop.xlane.xlu0 %465
        %vm467 = vcmask 254976
        %v468 = vsel %vm467, %v451, 0.0
        %469 = vadd.xlane.f32.xlu0 %v468
        %v470 = vpop.xlane.xlu0 %469
        %v471 = vrcp.pop 32.0
        %v472 = vmul.f32 %v457, %v471
        %v473 = vmul.f32 %v460, %v471
        %v474 = vmul.f32 %v463, %v471
        %v475 = vmul.f32 %v466, %v471
        %v476 = vmul.f32 %v470, %v471
        %v477 = vsub.f32 %v431, %v472
        %v478 = vsub.f32 %v436, %v473
        %v479 = vsub.f32 %v441, %v474
        %v480 = vsub.f32 %v446, %v475
        %v481 = vsub.f32 %v451, %v476
        %v482 = vmul.f32 %v477, %v477
        %v483 = vmul.f32 %v478, %v478
        %v484 = vmul.f32 %v479, %v479
        %v485 = vmul.f32 %v480, %v480
        %v486 = vmul.f32 %v481, %v481
        %v487 = vsel %vm454, %v482, 0.0
        %488 = vadd.xlane.f32.xlu0 %v487
        %v489 = vpop.xlane.xlu0 %488
        %v490 = vsel %vm454, %v483, 0.0
        %491 = vadd.xlane.f32.xlu0 %v490
        %v492 = vpop.xlane.xlu0 %491
        %v493 = vsel %vm454, %v484, 0.0
        %494 = vadd.xlane.f32.xlu0 %v493
        %v495 = vpop.xlane.xlu0 %494
        %v496 = vsel %vm454, %v485, 0.0
        %497 = vadd.xlane.f32.xlu0 %v496
        %v498 = vpop.xlane.xlu0 %497
        %v499 = vsel %vm467, %v486, 0.0
        %500 = vadd.xlane.f32.xlu0 %v499
        %v501 = vpop.xlane.xlu0 %500
        %v502 = vmul.f32 %v489, %v471
        %v503 = vmul.f32 %v492, %v471
        %v504 = vmul.f32 %v495, %v471
        %v505 = vmul.f32 %v498, %v471
        %v506 = vmul.f32 %v501, %v471
        %v507 = vadd.f32 %v502, 1e-05
        %v508 = vadd.f32 %v503, 1e-05
        %v509 = vadd.f32 %v504, 1e-05
        %v510 = vadd.f32 %v505, 1e-05
        %v511 = vadd.f32 %v506, 1e-05
        %v512 = vrsqrt.pop %v507
        %v513 = vrsqrt.pop %v508
        %v514 = vrsqrt.pop %v509
        %v515 = vrsqrt.pop %v510
        %v516 = vrsqrt.pop %v511
        %v517 = vmul.f32 %v477, %v512
        %v518 = vmul.f32 %v478, %v513
        %v519 = vmul.f32 %v479, %v514
        %v520 = vmul.f32 %v480, %v515
        %v521 = vmul.f32 %v481, %v516
        %v523 = vlaneseq
        %v524 = vshrl.u32 %v523, 7
        %v525 = vsub.s32 0, %v524
        %v526 = vrot.slane %v338, %v525
        %v528 = vmul.f32 %v517, %v526
        %v529 = vmul.f32 %v518, %v526
        %v530 = vmul.f32 %v519, %v526
        %v531 = vmul.f32 %v520, %v526
        %v532 = vmul.f32 %v521, %v526
        %533 = vrot.lane.b32.xlu0 %v526, 96
        %v534 = vpop.permute.xlu0 %533
        %v536 = vadd.f32 %v528, %v534
        %v537 = vadd.f32 %v529, %v534
        %v538 = vadd.f32 %v530, %v534
        %v539 = vadd.f32 %v531, %v534
        %v540 = vadd.f32 %v532, %v534
        %541 = vst.msk [vmem:[#allocation2] sm:$0xff] %vm454, %v536
        %542 = vst.msk [vmem:[#allocation2 + $0x8] sm:$0xff] %vm454, %v537
        %543 = vst.msk [vmem:[#allocation2 + $0x10] sm:$0xff] %vm454, %v538
        %544 = vst.msk [vmem:[#allocation2 + $0x18] sm:$0xff] %vm454, %v539
        %545 = vst.msk [vmem:[#allocation2 + $0x20] sm:$0x3] %vm467, %v540
      $region56: #{cross_guided_mlmh_forward.1} parent=51 // pred_fallthru
        _
      %v546 = vld [vmem:[%s318] sm:$0xff]
      %v547 = vld [vmem:[%s318 + $0x8] sm:$0xff]
      %v548 = vld [vmem:[%s318 + $0x10] sm:$0xff]
      %v549 = vld [vmem:[%s318 + $0x18] sm:$0xff]
      %v550 = vld [vmem:[%s318 + $0x20] sm:$0xff]
      %v551 = vld [vmem:[%s318 + $0x28] sm:$0xff]
      %v552 = vld [vmem:[%s318 + $0x30] sm:$0xff]
      %v553 = vld [vmem:[%s318 + $0x38] sm:$0xff]
      %v554 = vld [vmem:[%s318 + $0x40] sm:$0xff]
      %v555 = vld [vmem:[%s318 + $0x48] sm:$0xff]
      %v556 = vld [vmem:[%s318 + $0x50] sm:$0xff]
      %v557 = vld [vmem:[%s318 + $0x58] sm:$0xff]
      %v558 = vld [vmem:[%s323] sm:$0xff]
      %v559 = vld [vmem:[%s323 + $0x8] sm:$0xff]
      %v560 = vld [vmem:[%s323 + $0x10] sm:$0xff]
      %v561 = vld [vmem:[%s323 + $0x18] sm:$0xff]
      %v562 = vld [vmem:[%s323 + $0x20] sm:$0xff]
      %v563 = vld [vmem:[%s323 + $0x28] sm:$0xff]
      %v564 = vld [vmem:[%s323 + $0x30] sm:$0xff]
      %v565 = vld [vmem:[%s323 + $0x38] sm:$0xff]
      %v566 = vld [vmem:[%s323 + $0x40] sm:$0xff]
      %v567 = vld [vmem:[%s323 + $0x48] sm:$0xff]
      %v568 = vld [vmem:[%s323 + $0x50] sm:$0xff]
      %v569 = vld [vmem:[%s323 + $0x58] sm:$0xff]
      %v570 = vld [vmem:[%s323 + $0x60] sm:$0xff]
      %v571 = vld [vmem:[%s323 + $0x68] sm:$0xff]
      %v572 = vld [vmem:[%s323 + $0x70] sm:$0xff]
      %v573 = vld [vmem:[%s323 + $0x78] sm:$0xff]
      %v574 = vld [vmem:[%s327] sm:$0x1f]
      %v575 = vld [vmem:[%s1] sm:$0xff]
      %v576 = vld [vmem:[%s1 + $0x8] sm:$0xff]
      %v577 = vld [vmem:[#allocation2] sm:$0xff]
      %v578 = vld [vmem:[#allocation2 + $0x8] sm:$0xff]
      %v579 = vld [vmem:[#allocation2 + $0x10] sm:$0xff]
      %v580 = vld [vmem:[#allocation2 + $0x18] sm:$0xff]
      %v581 = vld [vmem:[#allocation2 + $0x20] sm:$0x3]
      %v582 = vlaneseq
      %v583 = vshrl.u32 %v582, 7
      %v584 = vsub.s32 0, %v583
      %v585 = vrot.slane %v574, %v584
      %vm586 = vcmask 261120
      %v588 = vsel %vm586, %v577, 0
      %v591 = vsel %vm586, %v578, 0
      %v594 = vsel %vm586, %v579, 0
      %v597 = vsel %vm586, %v580, 0
      %v600 = vsel %vm586, %v581, 0
      %602 = vmatprep.subr.mxu0 0.0
      %603 = vmatpush1.msra.mxu0 %v546
      %604 = vmatprep.subr.mxu0 0.0
      %605 = vmatpush1.msra.mxu0 %v549
      %606 = vmatprep.subr.mxu0 0.0
      %607 = vmatpush1.msra.mxu0 %v552
      %608 = vmatprep.subr.mxu0 0.0
      %609 = vmatpush1.msra.mxu0 %v555
      %610 = vmatprep.subr.mxu0 0.0
      %611 = vmatpush1.msra.mxu0 0.0
      %612 = vmatprep.subr.mxu0 0.0
      %613 = vmatpush1.msra.mxu0 0.0
      %614 = vmatprep.subr.mxu0 0.0
      %615 = vmatpush1.msra.mxu0 0.0
      %616 = vmatprep.subr.mxu0 0.0
      %617 = vmatpush1.msra.mxu0 0.0
      %618 = vmatprep.subr.mxu0 0.0
      %619 = vmatpush1.msra.mxu0 0.0
      %620 = vmatprep.subr.mxu0 0.0
      %621 = vmatpush1.msra.mxu0 0.0
      %622 = vmatprep.subr.mxu0 0.0
      %623 = vmatpush1.msra.mxu0 0.0
      %624 = vmatprep.subr.mxu0 0.0
      %625 = vmatpush1.msra.mxu0 0.0
      %626 = vmatprep.subr.mxu0 0.0
      %627 = vmatpush1.msra.mxu0 0.0
      %628 = vmatprep.subr.mxu0 0.0
      %629 = vmatpush1.msra.mxu0 0.0
      %630 = vmatprep.subr.mxu0 0.0
      %631 = vmatpush1.msra.mxu0 0.0
      %632 = vmatprep.subr.mxu0 0.0
      %633 = vmatpush1.msra.mxu0 0.0
      %634 = vmatprep.subr.mxu0 0.0
      %635 = vmatpush1.msra.mxu0 0.0
      %636 = vmatprep.subr.mxu0 0.0
      %637 = vmatpush1.msra.mxu0 0.0
      %638 = vmatprep.subr.mxu0 0.0
      %639 = vmatpush1.msra.mxu0 0.0
      %640 = vmatprep.subr.mxu0 0.0
      %641 = vmatpush1.msra.mxu0 0.0
      %642 = vmatprep.subr.mxu0 0.0
      %643 = vmatpush1.msra.mxu0 0.0
      %644 = vmatprep.subr.mxu0 0.0
      %645 = vmatpush1.msra.mxu0 0.0
      %646 = vmatprep.subr.mxu0 0.0
      %647 = vmatpush1.msra.mxu0 0.0
      %648 = vmatprep.subr.mxu0 0.0
      %649 = vmatpush1.msra.mxu0 0.0
      %650 = vmatprep.subr.mxu0 0.0
      %651 = vmatpush1.msra.mxu0 0.0
      %652 = vmatprep.subr.mxu0 0.0
      %653 = vmatpush1.msra.mxu0 0.0
      %654 = vmatprep.subr.mxu0 0.0
      %655 = vmatpush1.msra.mxu0 0.0
      %656 = vmatprep.subr.mxu0 0.0
      %657 = vmatpush1.msra.mxu0 0.0
      %658 = vmatprep.subr.mxu0 0.0
      %659 = vmatpush1.msra.mxu0 0.0
      %660 = vmatprep.subr.mxu0 0.0
      %661 = vmatpush1.msra.mxu0 0.0
      %662 = vmatprep.subr.mxu0 0.0
      %663 = vmatpush1.msra.mxu0 0.0
      %664 = vmatprep.subr.mxu0 0.0
      %665 = vmatpush1.msra.mxu0 0.0
      %666 = vmatprep.mubr.f32.mxu0 0.0
      %667 = vmatmul.mubr.f32.gmra.mrb[0].mxu0 %v588
      %v668 = vpop.f32.mrb[0].mxu0
      %v669 = vadd.f32 %v585, %v668
      %v670 = vpop.f32.mrb[0].mxu0
      %671 = vmatprep.mubr.f32.mxu0 0.0
      %672 = vmatmul.mubr.f32.gmra.mrb[0].mxu0 %v591
      %v673 = vpop.f32.mrb[0].mxu0
      %v674 = vadd.f32 %v585, %v673
      %v675 = vpop.f32.mrb[0].mxu0
      %676 = vmatprep.mubr.f32.mxu0 0.0
      %677 = vmatmul.mubr.f32.gmra.mrb[0].mxu0 %v594
      %v678 = vpop.f32.mrb[0].mxu0
      %v679 = vadd.f32 %v585, %v678
      %v680 = vpop.f32.mrb[0].mxu0
      %681 = vmatprep.mubr.f32.mxu0 0.0
      %682 = vmatmul.mubr.f32.gmra.mrb[0].mxu0 %v597
      %v683 = vpop.f32.mrb[0].mxu0
      %v684 = vadd.f32 %v585, %v683
      %v685 = vpop.f32.mrb[0].mxu0
      %686 = vmatprep.mubr.f32.mxu0 0.0
      %687 = vmatmul.mubr.f32.gmra.mrb[0].mxu0 %v600
      %v688 = vpop.f32.mrb[0].mxu0
      %v689 = vadd.f32 %v585, %v688
      %v690 = vpop.f32.mrb[0].mxu0
      %691 = vdwg.mxu0
      %696 = vrot.lane.b32.xlu0 %v546, 96
      %v697 = vpop.permute.xlu0 %696
      %698 = vrot.lane.b32.xlu0 %v549, 96
      %v699 = vpop.permute.xlu0 %698
      %700 = vrot.lane.b32.xlu0 %v552, 96
      %v701 = vpop.permute.xlu0 %700
      %702 = vrot.lane.b32.xlu0 %v555, 96
      %v703 = vpop.permute.xlu0 %702
      %709 = vrot.lane.b32.xlu0 %v585, 96
      %v710 = vpop.permute.xlu0 %709
      %712 = vmatprep.subr.mxu0 0.0
      %713 = vmatpush1.msra.mxu0 %v697
      %714 = vmatprep.subr.mxu0 0.0
      %715 = vmatpush1.msra.mxu0 %v699
      %716 = vmatprep.subr.mxu0 0.0
      %717 = vmatpush1.msra.mxu0 %v701
      %718 = vmatprep.subr.mxu0 0.0
      %719 = vmatpush1.msra.mxu0 %v703
      %720 = vmatprep.subr.mxu0 0.0
      %721 = vmatpush1.msra.mxu0 0.0
      %722 = vmatprep.subr.mxu0 0.0
      %723 = vmatpush1.msra.mxu0 0.0
      %724 = vmatprep.subr.mxu0 0.0
      %725 = vmatpush1.msra.mxu0 0.0
      %726 = vmatprep.subr.mxu0 0.0
      %727 = vmatpush1.msra.mxu0 0.0
      %728 = vmatprep.subr.mxu0 0.0
      %729 = vmatpush1.msra.mxu0 0.0
      %730 = vmatprep.subr.mxu0 0.0
      %731 = vmatpush1.msra.mxu0 0.0
      %732 = vmatprep.subr.mxu0 0.0
      %733 = vmatpush1.msra.mxu0 0.0
      %734 = vmatprep.subr.mxu0 0.0
      %735 = vmatpush1.msra.mxu0 0.0
      %736 = vmatprep.subr.mxu0 0.0
      %737 = vmatpush1.msra.mxu0 0.0
      %738 = vmatprep.subr.mxu0 0.0
      %739 = vmatpush1.msra.mxu0 0.0
      %740 = vmatprep.subr.mxu0 0.0
      %741 = vmatpush1.msra.mxu0 0.0
      %742 = vmatprep.subr.mxu0 0.0
      %743 = vmatpush1.msra.mxu0 0.0
      %744 = vmatprep.subr.mxu0 0.0
      %745 = vmatpush1.msra.mxu0 0.0
      %746 = vmatprep.subr.mxu0 0.0
      %747 = vmatpush1.msra.mxu0 0.0
      %748 = vmatprep.subr.mxu0 0.0
      %749 = vmatpush1.msra.mxu0 0.0
      %750 = vmatprep.subr.mxu0 0.0
      %751 = vmatpush1.msra.mxu0 0.0
      %752 = vmatprep.subr.mxu0 0.0
      %753 = vmatpush1.msra.mxu0 0.0
      %754 = vmatprep.subr.mxu0 0.0
      %755 = vmatpush1.msra.mxu0 0.0
      %756 = vmatprep.subr.mxu0 0.0
      %757 = vmatpush1.msra.mxu0 0.0
      %758 = vmatprep.subr.mxu0 0.0
      %759 = vmatpush1.msra.mxu0 0.0
      %760 = vmatprep.subr.mxu0 0.0
      %761 = vmatpush1.msra.mxu0 0.0
      %762 = vmatprep.subr.mxu0 0.0
      %763 = vmatpush1.msra.mxu0 0.0
      %764 = vmatprep.subr.mxu0 0.0
      %765 = vmatpush1.msra.mxu0 0.0
      %766 = vmatprep.subr.mxu0 0.0
      %767 = vmatpush1.msra.mxu0 0.0
      %768 = vmatprep.subr.mxu0 0.0
      %769 = vmatpush1.msra.mxu0 0.0
      %770 = vmatprep.subr.mxu0 0.0
      %771 = vmatpush1.msra.mxu0 0.0
      %772 = vmatprep.subr.mxu0 0.0
      %773 = vmatpush1.msra.mxu0 0.0
      %774 = vmatprep.subr.mxu0 0.0
      %775 = vmatpush1.msra.mxu0 0.0
      %776 = vmatprep.mubr.f32.mxu0 0.0
      %777 = vmatmul.mubr.f32.gmra.mrb[0].mxu0 %v588
      %v778 = vpop.f32.mrb[0].mxu0
      %v779 = vadd.f32 %v710, %v778
      %v780 = vpop.f32.mrb[0].mxu0
      %781 = vmatprep.mubr.f32.mxu0 0.0
      %782 = vmatmul.mubr.f32.gmra.mrb[0].mxu0 %v591
      %v783 = vpop.f32.mrb[0].mxu0
      %v784 = vadd.f32 %v710, %v783
      %v785 = vpop.f32.mrb[0].mxu0
      %786 = vmatprep.mubr.f32.mxu0 0.0
      %787 = vmatmul.mubr.f32.gmra.mrb[0].mxu0 %v594
      %v788 = vpop.f32.mrb[0].mxu0
      %v789 = vadd.f32 %v710, %v788
      %v790 = vpop.f32.mrb[0].mxu0
      %791 = vmatprep.mubr.f32.mxu0 0.0
      %792 = vmatmul.mubr.f32.gmra.mrb[0].mxu0 %v597
      %v793 = vpop.f32.mrb[0].mxu0
      %v794 = vadd.f32 %v710, %v793
      %v795 = vpop.f32.mrb[0].mxu0
      %796 = vmatprep.mubr.f32.mxu0 0.0
      %797 = vmatmul.mubr.f32.gmra.mrb[0].mxu0 %v600
      %v798 = vpop.f32.mrb[0].mxu0
      %v799 = vadd.f32 %v710, %v798
      %v800 = vpop.f32.mrb[0].mxu0
      %801 = vdwg.mxu0
      %v802 = vmul.f32 %v669, 0.35355338
      %v803 = vmul.f32 %v674, 0.35355338
      %v804 = vmul.f32 %v679, 0.35355338
      %vm805 = vcmask 64512
      %v807 = vsel %vm805, %v802, 0
      %v810 = vsel %vm805, %v803, 0
      %v813 = vsel %vm805, %v804, 0
      %v816 = vsel %vm805, %v779, 0
      %v819 = vsel %vm805, %v784, 0
      %v822 = vsel %vm805, %v789, 0
      %824 = vmatprep.subr.mxu0 0.0
      %825 = vmatpush1.xpose.msra.mxu0 %v816
      %826 = vmatprep.subr.mxu0 0.0
      %827 = vmatpush1.xpose.msra.mxu0 %v819
      %828 = vmatprep.subr.mxu0 0.0
      %829 = vmatpush1.xpose.msra.mxu0 %v822
      %830 = vmatprep.subr.mxu0 0.0
      %831 = vmatpush1.xpose.msra.mxu0 0.0
      %832 = vmatprep.subr.mxu0 0.0
      %833 = vmatpush1.xpose.msra.mxu0 0.0
      %834 = vmatprep.subr.mxu0 0.0
      %835 = vmatpush1.xpose.msra.mxu0 0.0
      %836 = vmatprep.subr.mxu0 0.0
      %837 = vmatpush1.xpose.msra.mxu0 0.0
      %838 = vmatprep.subr.mxu0 0.0
      %839 = vmatpush1.xpose.msra.mxu0 0.0
      %840 = vmatprep.subr.mxu0 0.0
      %841 = vmatpush1.xpose.msra.mxu0 0.0
      %842 = vmatprep.subr.mxu0 0.0
      %843 = vmatpush1.xpose.msra.mxu0 0.0
      %844 = vmatprep.subr.mxu0 0.0
      %845 = vmatpush1.xpose.msra.mxu0 0.0
      %846 = vmatprep.subr.mxu0 0.0
      %847 = vmatpush1.xpose.msra.mxu0 0.0
      %848 = vmatprep.subr.mxu0 0.0
      %849 = vmatpush1.xpose.msra.mxu0 0.0
      %850 = vmatprep.subr.mxu0 0.0
      %851 = vmatpush1.xpose.msra.mxu0 0.0
      %852 = vmatprep.subr.mxu0 0.0
      %853 = vmatpush1.xpose.msra.mxu0 0.0
      %854 = vmatprep.subr.mxu0 0.0
      %855 = vmatpush1.xpose.msra.mxu0 0.0
      %856 = vmatprep.subr.mxu0 0.0
      %857 = vmatpush1.xpose.msra.mxu0 0.0
      %858 = vmatprep.subr.mxu0 0.0
      %859 = vmatpush1.xpose.msra.mxu0 0.0
      %860 = vmatprep.subr.mxu0 0.0
      %861 = vmatpush1.xpose.msra.mxu0 0.0
      %862 = vmatprep.subr.mxu0 0.0
      %863 = vmatpush1.xpose.msra.mxu0 0.0
      %864 = vmatprep.subr.mxu0 0.0
      %865 = vmatpush1.xpose.msra.mxu0 0.0
      %866 = vmatprep.subr.mxu0 0.0
      %867 = vmatpush1.xpose.msra.mxu0 0.0
      %868 = vmatprep.subr.mxu0 0.0
      %869 = vmatpush1.xpose.msra.mxu0 0.0
      %870 = vmatprep.subr.mxu0 0.0
      %871 = vmatpush1.xpose.msra.mxu0 0.0
      %872 = vmatprep.subr.mxu0 0.0
      %873 = vmatpush1.xpose.msra.mxu0 0.0
      %874 = vmatprep.subr.mxu0 0.0
      %875 = vmatpush1.xpose.msra.mxu0 0.0
      %876 = vmatprep.subr.mxu0 0.0
      %877 = vmatpush1.xpose.msra.mxu0 0.0
      %878 = vmatprep.subr.mxu0 0.0
      %879 = vmatpush1.xpose.msra.mxu0 0.0
      %880 = vmatprep.subr.mxu0 0.0
      %881 = vmatpush1.xpose.msra.mxu0 0.0
      %882 = vmatprep.subr.mxu0 0.0
      %883 = vmatpush1.xpose.msra.mxu0 0.0
      %884 = vmatprep.subr.mxu0 0.0
      %885 = vmatpush1.xpose.msra.mxu0 0.0
      %886 = vmatprep.subr.mxu0 0.0
      %887 = vmatpush1.xpose.msra.mxu0 0.0
      %888 = vmatprep.mubr.f32.mxu0 0.0
      %889 = vmatmul.mubr.f32.gmra.mrb[0].mxu0 %v807
      %v890 = vpop.f32.mrb[0].mxu0
      %v891 = vadd.f32 0.0, %v890
      %v892 = vpop.f32.mrb[0].mxu0
      %893 = vmatprep.mubr.f32.mxu0 0.0
      %894 = vmatmul.mubr.f32.gmra.mrb[0].mxu0 %v810
      %v895 = vpop.f32.mrb[0].mxu0
      %v896 = vadd.f32 0.0, %v895
      %v897 = vpop.f32.mrb[0].mxu0
      %898 = vmatprep.mubr.f32.mxu0 0.0
      %899 = vmatmul.mubr.f32.gmra.mrb[0].mxu0 %v813
      %v900 = vpop.f32.mrb[0].mxu0
      %v901 = vadd.f32 0.0, %v900
      %v902 = vpop.f32.mrb[0].mxu0
      %903 = vdwg.mxu0
      %vm904 = vcmask 138240
      %v905 = vsel %vm904, %v891, -inf
      %906 = vmax.xlane.f32.xlu0 %v905
      %v907 = vpop.xlane.xlu0 %906
      %v908 = vsel %vm904, %v896, -inf
      %909 = vmax.xlane.f32.xlu0 %v908
      %v910 = vpop.xlane.xlu0 %909
      %vm911 = vcmask 131072
      %v912 = vsel %vm911, %v901, -inf
      %913 = vmax.xlane.f32.xlu0 %v912
      %v914 = vpop.xlane.xlu0 %913
      %v915 = vsub.f32 %v891, %v907
      %v916 = vsub.f32 %v896, %v910
      %v917 = vsub.f32 %v901, %v914
      %v918 = vmul.f32 %v915, 1.442695
      %v919 = vpow.pop %v918
      %v920 = vmul.f32 %v916, 1.442695
      %v921 = vpow.pop %v920
      %v922 = vmul.f32 %v917, 1.442695
      %v923 = vpow.pop %v922
      %v924 = vsel %vm904, %v919, 0.0
      %925 = vadd.xlane.f32.xlu0 %v924
      %v926 = vpop.xlane.xlu0 %925
      %v927 = vsel %vm904, %v921, 0.0
      %928 = vadd.xlane.f32.xlu0 %v927
      %v929 = vpop.xlane.xlu0 %928
      %v930 = vsel %vm911, %v923, 0.0
      %931 = vadd.xlane.f32.xlu0 %v930
      %v932 = vpop.xlane.xlu0 %931
      %v933 = vrcp.pop %v926
      %v934 = vrcp.pop %v929
      %v935 = vrcp.pop %v932
      %v936 = vmul.f32 %v919, %v933
      %v937 = vmul.f32 %v921, %v934
      %v938 = vmul.f32 %v923, %v935
      %939 = vrot.lane.b32.xlu0 %v779, 96
      %v940 = vpop.permute.xlu0 %939
      %941 = vrot.lane.b32.xlu0 %v784, 96
      %v942 = vpop.permute.xlu0 %941
      %943 = vrot.lane.b32.xlu0 %v789, 96
      %v944 = vpop.permute.xlu0 %943
      %v948 = vsel %vm904, %v936, 0
      %v951 = vsel %vm904, %v937, 0
      %v954 = vsel %vm904, %v938, 0
      %vm956 = vcmask 1040384
      %v957 = vsel %vm956, %v944, 0
      %959 = vmatprep.subr.mxu0 0.0
      %960 = vmatpush1.msra.mxu0 %v940
      %961 = vmatprep.subr.mxu0 0.0
      %962 = vmatpush1.msra.mxu0 %v942
      %963 = vmatprep.subr.mxu0 0.0
      %964 = vmatpush1.msra.mxu0 %v957
      %965 = vmatprep.subr.mxu0 0.0
      %966 = vmatpush1.msra.mxu0 0.0
      %967 = vmatprep.subr.mxu0 0.0
      %968 = vmatpush1.msra.mxu0 0.0
      %969 = vmatprep.subr.mxu0 0.0
      %970 = vmatpush1.msra.mxu0 0.0
      %971 = vmatprep.subr.mxu0 0.0
      %972 = vmatpush1.msra.mxu0 0.0
      %973 = vmatprep.subr.mxu0 0.0
      %974 = vmatpush1.msra.mxu0 0.0
      %975 = vmatprep.subr.mxu0 0.0
      %976 = vmatpush1.msra.mxu0 0.0
      %977 = vmatprep.subr.mxu0 0.0
      %978 = vmatpush1.msra.mxu0 0.0
      %979 = vmatprep.subr.mxu0 0.0
      %980 = vmatpush1.msra.mxu0 0.0
      %981 = vmatprep.subr.mxu0 0.0
      %982 = vmatpush1.msra.mxu0 0.0
      %983 = vmatprep.subr.mxu0 0.0
      %984 = vmatpush1.msra.mxu0 0.0
      %985 = vmatprep.subr.mxu0 0.0
      %986 = vmatpush1.msra.mxu0 0.0
      %987 = vmatprep.subr.mxu0 0.0
      %988 = vmatpush1.msra.mxu0 0.0
      %989 = vmatprep.subr.mxu0 0.0
      %990 = vmatpush1.msra.mxu0 0.0
      %991 = vmatprep.subr.mxu0 0.0
      %992 = vmatpush1.msra.mxu0 0.0
      %993 = vmatprep.subr.mxu0 0.0
      %994 = vmatpush1.msra.mxu0 0.0
      %995 = vmatprep.subr.mxu0 0.0
      %996 = vmatpush1.msra.mxu0 0.0
      %997 = vmatprep.subr.mxu0 0.0
      %998 = vmatpush1.msra.mxu0 0.0
      %999 = vmatprep.subr.mxu0 0.0
      %1000 = vmatpush1.msra.mxu0 0.0
      %1001 = vmatprep.subr.mxu0 0.0
      %1002 = vmatpush1.msra.mxu0 0.0
      %1003 = vmatprep.subr.mxu0 0.0
      %1004 = vmatpush1.msra.mxu0 0.0
      %1005 = vmatprep.subr.mxu0 0.0
      %1006 = vmatpush1.msra.mxu0 0.0
      %1007 = vmatprep.subr.mxu0 0.0
      %1008 = vmatpush1.msra.mxu0 0.0
      %1009 = vmatprep.subr.mxu0 0.0
      %1010 = vmatpush1.msra.mxu0 0.0
      %1011 = vmatprep.subr.mxu0 0.0
      %1012 = vmatpush1.msra.mxu0 0.0
      %1013 = vmatprep.subr.mxu0 0.0
      %1014 = vmatpush1.msra.mxu0 0.0
      %1015 = vmatprep.subr.mxu0 0.0
      %1016 = vmatpush1.msra.mxu0 0.0
      %1017 = vmatprep.subr.mxu0 0.0
      %1018 = vmatpush1.msra.mxu0 0.0
      %1019 = vmatprep.subr.mxu0 0.0
      %1020 = vmatpush1.msra.mxu0 0.0
      %1021 = vmatprep.subr.mxu0 0.0
      %1022 = vmatpush1.msra.mxu0 0.0
      %1023 = vmatprep.mubr.f32.mxu0 0.0
      %1024 = vmatmul.mubr.f32.gmra.mrb[0].mxu0 %v948
      %v1025 = vpop.f32.mrb[0].mxu0
      %v1026 = vadd.f32 0.0, %v1025
      %v1027 = vpop.f32.mrb[0].mxu0
      %1028 = vmatprep.mubr.f32.mxu0 0.0
      %1029 = vmatmul.mubr.f32.gmra.mrb[0].mxu0 %v951
      %v1030 = vpop.f32.mrb[0].mxu0
      %v1031 = vadd.f32 0.0, %v1030
      %v1032 = vpop.f32.mrb[0].mxu0
      %1033 = vmatprep.mubr.f32.mxu0 0.0
      %1034 = vmatmul.mubr.f32.gmra.mrb[0].mxu0 %v954
      %v1035 = vpop.f32.mrb[0].mxu0
      %v1036 = vadd.f32 0.0, %v1035
      %v1037 = vpop.f32.mrb[0].mxu0
      %1038 = vdwg.mxu0
      %1039 = vrot.lane.b32.xlu0 %v802, 120
      %v1040 = vpop.permute.xlu0 %1039
      %1041 = vrot.lane.b32.xlu0 %v803, 120
      %v1042 = vpop.permute.xlu0 %1041
      %1043 = vrot.lane.b32.xlu0 %v804, 120
      %v1044 = vpop.permute.xlu0 %1043
      %1045 = vrot.lane.b32.xlu0 %v779, 120
      %v1046 = vpop.permute.xlu0 %1045
      %1047 = vrot.lane.b32.xlu0 %v784, 120
      %v1048 = vpop.permute.xlu0 %1047
      %1049 = vrot.lane.b32.xlu0 %v789, 120
      %v1050 = vpop.permute.xlu0 %1049
      %v1051 = vsel %vm805, %v1040, 0
      %v1053 = vsel %vm805, %v1042, 0
      %v1055 = vsel %vm805, %v1044, 0
      %v1057 = vsel %vm805, %v1046, 0
      %v1059 = vsel %vm805, %v1048, 0
      %v1061 = vsel %vm805, %v1050, 0
      %1063 = vmatprep.subr.mxu0 0.0
      %1064 = vmatpush1.xpose.msra.mxu0 %v1057
      %1065 = vmatprep.subr.mxu0 0.0
      %1066 = vmatpush1.xpose.msra.mxu0 %v1059
      %1067 = vmatprep.subr.mxu0 0.0
      %1068 = vmatpush1.xpose.msra.mxu0 %v1061
      %1069 = vmatprep.subr.mxu0 0.0
      %1070 = vmatpush1.xpose.msra.mxu0 0.0
      %1071 = vmatprep.subr.mxu0 0.0
      %1072 = vmatpush1.xpose.msra.mxu0 0.0
      %1073 = vmatprep.subr.mxu0 0.0
      %1074 = vmatpush1.xpose.msra.mxu0 0.0
      %1075 = vmatprep.subr.mxu0 0.0
      %1076 = vmatpush1.xpose.msra.mxu0 0.0
      %1077 = vmatprep.subr.mxu0 0.0
      %1078 = vmatpush1.xpose.msra.mxu0 0.0
      %1079 = vmatprep.subr.mxu0 0.0
      %1080 = vmatpush1.xpose.msra.mxu0 0.0
      %1081 = vmatprep.subr.mxu0 0.0
      %1082 = vmatpush1.xpose.msra.mxu0 0.0
      %1083 = vmatprep.subr.mxu0 0.0
      %1084 = vmatpush1.xpose.msra.mxu0 0.0
      %1085 = vmatprep.subr.mxu0 0.0
      %1086 = vmatpush1.xpose.msra.mxu0 0.0
      %1087 = vmatprep.subr.mxu0 0.0
      %1088 = vmatpush1.xpose.msra.mxu0 0.0
      %1089 = vmatprep.subr.mxu0 0.0
      %1090 = vmatpush1.xpose.msra.mxu0 0.0
      %1091 = vmatprep.subr.mxu0 0.0
      %1092 = vmatpush1.xpose.msra.mxu0 0.0
      %1093 = vmatprep.subr.mxu0 0.0
      %1094 = vmatpush1.xpose.msra.mxu0 0.0
      %1095 = vmatprep.subr.mxu0 0.0
      %1096 = vmatpush1.xpose.msra.mxu0 0.0
      %1097 = vmatprep.subr.mxu0 0.0
      %1098 = vmatpush1.xpose.msra.mxu0 0.0
      %1099 = vmatprep.subr.mxu0 0.0
      %1100 = vmatpush1.xpose.msra.mxu0 0.0
      %1101 = vmatprep.subr.mxu0 0.0
      %1102 = vmatpush1.xpose.msra.mxu0 0.0
      %1103 = vmatprep.subr.mxu0 0.0
      %1104 = vmatpush1.xpose.msra.mxu0 0.0
      %1105 = vmatprep.subr.mxu0 0.0
      %1106 = vmatpush1.xpose.msra.mxu0 0.0
      %1107 = vmatprep.subr.mxu0 0.0
      %1108 = vmatpush1.xpose.msra.mxu0 0.0
      %1109 = vmatprep.subr.mxu0 0.0
      %1110 = vmatpush1.xpose.msra.mxu0 0.0
      %1111 = vmatprep.subr.mxu0 0.0
      %1112 = vmatpush1.xpose.msra.mxu0 0.0
      %1113 = vmatprep.subr.mxu0 0.0
      %1114 = vmatpush1.xpose.msra.mxu0 0.0
      %1115 = vmatprep.subr.mxu0 0.0
      %1116 = vmatpush1.xpose.msra.mxu0 0.0
      %1117 = vmatprep.subr.mxu0 0.0
      %1118 = vmatpush1.xpose.msra.mxu0 0.0
      %1119 = vmatprep.subr.mxu0 0.0
      %1120 = vmatpush1.xpose.msra.mxu0 0.0
      %1121 = vmatprep.subr.mxu0 0.0
      %1122 = vmatpush1.xpose.msra.mxu0 0.0
      %1123 = vmatprep.subr.mxu0 0.0
      %1124 = vmatpush1.xpose.msra.mxu0 0.0
      %1125 = vmatprep.subr.mxu0 0.0
      %1126 = vmatpush1.xpose.msra.mxu0 0.0
      %1127 = vmatprep.mubr.f32.mxu0 0.0
      %1128 = vmatmul.mubr.f32.gmra.mrb[0].mxu0 %v1051
      %v1129 = vpop.f32.mrb[0].mxu0
      %v1130 = vadd.f32 0.0, %v1129
      %v1131 = vpop.f32.mrb[0].mxu0
      %1132 = vmatprep.mubr.f32.mxu0 0.0
      %1133 = vmatmul.mubr.f32.gmra.mrb[0].mxu0 %v1053
      %v1134 = vpop.f32.mrb[0].mxu0
      %v1135 = vadd.f32 0.0, %v1134
      %v1136 = vpop.f32.mrb[0].mxu0
      %1137 = vmatprep.mubr.f32.mxu0 0.0
      %1138 = vmatmul.mubr.f32.gmra.mrb[0].mxu0 %v1055
      %v1139 = vpop.f32.mrb[0].mxu0
      %v1140 = vadd.f32 0.0, %v1139
      %v1141 = vpop.f32.mrb[0].mxu0
      %1142 = vdwg.mxu0
      %v1143 = vsel %vm904, %v1130, -inf
      %1144 = vmax.xlane.f32.xlu0 %v1143
      %v1145 = vpop.xlane.xlu0 %1144
      %v1146 = vsel %vm904, %v1135, -inf
      %1147 = vmax.xlane.f32.xlu0 %v1146
      %v1148 = vpop.xlane.xlu0 %1147
      %v1149 = vsel %vm911, %v1140, -inf
      %1150 = vmax.xlane.f32.xlu0 %v1149
      %v1151 = vpop.xlane.xlu0 %1150
      %v1152 = vsub.f32 %v1130, %v1145
      %v1153 = vsub.f32 %v1135, %v1148
      %v1154 = vsub.f32 %v1140, %v1151
      %v1155 = vmul.f32 %v1152, 1.442695
      %v1156 = vpow.pop %v1155
      %v1157 = vmul.f32 %v1153, 1.442695
      %v1158 = vpow.pop %v1157
      %v1159 = vmul.f32 %v1154, 1.442695
      %v1160 = vpow.pop %v1159
      %v1161 = vsel %vm904, %v1156, 0.0
      %1162 = vadd.xlane.f32.xlu0 %v1161
      %v1163 = vpop.xlane.xlu0 %1162
      %v1164 = vsel %vm904, %v1158, 0.0
      %1165 = vadd.xlane.f32.xlu0 %v1164
      %v1166 = vpop.xlane.xlu0 %1165
      %v1167 = vsel %vm911, %v1160, 0.0
      %1168 = vadd.xlane.f32.xlu0 %v1167
      %v1169 = vpop.xlane.xlu0 %1168
      %v1170 = vrcp.pop %v1163
      %v1171 = vrcp.pop %v1166
      %v1172 = vrcp.pop %v1169
      %v1173 = vmul.f32 %v1156, %v1170
      %v1174 = vmul.f32 %v1158, %v1171
      %v1175 = vmul.f32 %v1160, %v1172
      %1176 = vrot.lane.b32.xlu0 %v779, 88
      %v1177 = vpop.permute.xlu0 %1176
      %1178 = vrot.lane.b32.xlu0 %v784, 88
      %v1179 = vpop.permute.xlu0 %1178
      %1180 = vrot.lane.b32.xlu0 %v789, 88
      %v1181 = vpop.permute.xlu0 %1180
      %v1185 = vsel %vm904, %v1173, 0
      %v1188 = vsel %vm904, %v1174, 0
      %v1191 = vsel %vm904, %v1175, 0
      %v1193 = vsel %vm956, %v1181, 0
      %1195 = vmatprep.subr.mxu0 0.0
      %1196 = vmatpush1.msra.mxu0 %v1177
      %1197 = vmatprep.subr.mxu0 0.0
      %1198 = vmatpush1.msra.mxu0 %v1179
      %1199 = vmatprep.subr.mxu0 0.0
      %1200 = vmatpush1.msra.mxu0 %v1193
      %1201 = vmatprep.subr.mxu0 0.0
      %1202 = vmatpush1.msra.mxu0 0.0
      %1203 = vmatprep.subr.mxu0 0.0
      %1204 = vmatpush1.msra.mxu0 0.0
      %1205 = vmatprep.subr.mxu0 0.0
      %1206 = vmatpush1.msra.mxu0 0.0
      %1207 = vmatprep.subr.mxu0 0.0
      %1208 = vmatpush1.msra.mxu0 0.0
      %1209 = vmatprep.subr.mxu0 0.0
      %1210 = vmatpush1.msra.mxu0 0.0
      %1211 = vmatprep.subr.mxu0 0.0
      %1212 = vmatpush1.msra.mxu0 0.0
      %1213 = vmatprep.subr.mxu0 0.0
      %1214 = vmatpush1.msra.mxu0 0.0
      %1215 = vmatprep.subr.mxu0 0.0
      %1216 = vmatpush1.msra.mxu0 0.0
      %1217 = vmatprep.subr.mxu0 0.0
      %1218 = vmatpush1.msra.mxu0 0.0
      %1219 = vmatprep.subr.mxu0 0.0
      %1220 = vmatpush1.msra.mxu0 0.0
      %1221 = vmatprep.subr.mxu0 0.0
      %1222 = vmatpush1.msra.mxu0 0.0
      %1223 = vmatprep.subr.mxu0 0.0
      %1224 = vmatpush1.msra.mxu0 0.0
      %1225 = vmatprep.subr.mxu0 0.0
      %1226 = vmatpush1.msra.mxu0 0.0
      %1227 = vmatprep.subr.mxu0 0.0
      %1228 = vmatpush1.msra.mxu0 0.0
      %1229 = vmatprep.subr.mxu0 0.0
      %1230 = vmatpush1.msra.mxu0 0.0
      %1231 = vmatprep.subr.mxu0 0.0
      %1232 = vmatpush1.msra.mxu0 0.0
      %1233 = vmatprep.subr.mxu0 0.0
      %1234 = vmatpush1.msra.mxu0 0.0
      %1235 = vmatprep.subr.mxu0 0.0
      %1236 = vmatpush1.msra.mxu0 0.0
      %1237 = vmatprep.subr.mxu0 0.0
      %1238 = vmatpush1.msra.mxu0 0.0
      %1239 = vmatprep.subr.mxu0 0.0
      %1240 = vmatpush1.msra.mxu0 0.0
      %1241 = vmatprep.subr.mxu0 0.0
      %1242 = vmatpush1.msra.mxu0 0.0
      %1243 = vmatprep.subr.mxu0 0.0
      %1244 = vmatpush1.msra.mxu0 0.0
      %1245 = vmatprep.subr.mxu0 0.0
      %1246 = vmatpush1.msra.mxu0 0.0
      %1247 = vmatprep.subr.mxu0 0.0
      %1248 = vmatpush1.msra.mxu0 0.0
      %1249 = vmatprep.subr.mxu0 0.0
      %1250 = vmatpush1.msra.mxu0 0.0
      %1251 = vmatprep.subr.mxu0 0.0
      %1252 = vmatpush1.msra.mxu0 0.0
      %1253 = vmatprep.subr.mxu0 0.0
      %1254 = vmatpush1.msra.mxu0 0.0
      %1255 = vmatprep.subr.mxu0 0.0
      %1256 = vmatpush1.msra.mxu0 0.0
      %1257 = vmatprep.subr.mxu0 0.0
      %1258 = vmatpush1.msra.mxu0 0.0
      %1259 = vmatprep.mubr.f32.mxu0 0.0
      %1260 = vmatmul.mubr.f32.gmra.mrb[0].mxu0 %v1185
      %v1261 = vpop.f32.mrb[0].mxu0
      %v1262 = vadd.f32 0.0, %v1261
      %v1263 = vpop.f32.mrb[0].mxu0
      %1264 = vmatprep.mubr.f32.mxu0 0.0
      %1265 = vmatmul.mubr.f32.gmra.mrb[0].mxu0 %v1188
      %v1266 = vpop.f32.mrb[0].mxu0
      %v1267 = vadd.f32 0.0, %v1266
      %v1268 = vpop.f32.mrb[0].mxu0
      %1269 = vmatprep.mubr.f32.mxu0 0.0
      %1270 = vmatmul.mubr.f32.gmra.mrb[0].mxu0 %v1191
      %v1271 = vpop.f32.mrb[0].mxu0
      %v1272 = vadd.f32 0.0, %v1271
      %v1273 = vpop.f32.mrb[0].mxu0
      %1274 = vdwg.mxu0
      %1275 = vrot.lane.b32.xlu0 %v549, 32
      %v1276 = vpop.permute.xlu0 %1275
      %v1279 = vsel %vm805, %v1262, 0
      %v1282 = vsel %vm805, %v1267, 0
      %v1285 = vsel %vm805, %v1272, 0
      %1287 = vmatprep.subr.mxu0 0.0
      %1288 = vmatpush1.msra.mxu0 %v1276
      %1289 = vmatprep.subr.mxu0 0.0
      %1290 = vmatpush1.msra.mxu0 0.0
      %1291 = vmatprep.subr.mxu0 0.0
      %1292 = vmatpush1.msra.mxu0 0.0
      %1293 = vmatprep.subr.mxu0 0.0
      %1294 = vmatpush1.msra.mxu0 0.0
      %1295 = vmatprep.subr.mxu0 0.0
      %1296 = vmatpush1.msra.mxu0 0.0
      %1297 = vmatprep.subr.mxu0 0.0
      %1298 = vmatpush1.msra.mxu0 0.0
      %1299 = vmatprep.subr.mxu0 0.0
      %1300 = vmatpush1.msra.mxu0 0.0
      %1301 = vmatprep.subr.mxu0 0.0
      %1302 = vmatpush1.msra.mxu0 0.0
      %1303 = vmatprep.subr.mxu0 0.0
      %1304 = vmatpush1.msra.mxu0 0.0
      %1305 = vmatprep.subr.mxu0 0.0
      %1306 = vmatpush1.msra.mxu0 0.0
      %1307 = vmatprep.subr.mxu0 0.0
      %1308 = vmatpush1.msra.mxu0 0.0
      %1309 = vmatprep.subr.mxu0 0.0
      %1310 = vmatpush1.msra.mxu0 0.0
      %1311 = vmatprep.subr.mxu0 0.0
      %1312 = vmatpush1.msra.mxu0 0.0
      %1313 = vmatprep.subr.mxu0 0.0
      %1314 = vmatpush1.msra.mxu0 0.0
      %1315 = vmatprep.subr.mxu0 0.0
      %1316 = vmatpush1.msra.mxu0 0.0
      %1317 = vmatprep.subr.mxu0 0.0
      %1318 = vmatpush1.msra.mxu0 0.0
      %1319 = vmatprep.subr.mxu0 0.0
      %1320 = vmatpush1.msra.mxu0 0.0
      %1321 = vmatprep.subr.mxu0 0.0
      %1322 = vmatpush1.msra.mxu0 0.0
      %1323 = vmatprep.subr.mxu0 0.0
      %1324 = vmatpush1.msra.mxu0 0.0
      %1325 = vmatprep.subr.mxu0 0.0
      %1326 = vmatpush1.msra.mxu0 0.0
      %1327 = vmatprep.subr.mxu0 0.0
      %1328 = vmatpush1.msra.mxu0 0.0
      %1329 = vmatprep.subr.mxu0 0.0
      %1330 = vmatpush1.msra.mxu0 0.0
      %1331 = vmatprep.subr.mxu0 0.0
      %1332 = vmatpush1.msra.mxu0 0.0
      %1333 = vmatprep.subr.mxu0 0.0
      %1334 = vmatpush1.msra.mxu0 0.0
      %1335 = vmatprep.subr.mxu0 0.0
      %1336 = vmatpush1.msra.mxu0 0.0
      %1337 = vmatprep.subr.mxu0 0.0
      %1338 = vmatpush1.msra.mxu0 0.0
      %1339 = vmatprep.subr.mxu0 0.0
      %1340 = vmatpush1.msra.mxu0 0.0
      %1341 = vmatprep.subr.mxu0 0.0
      %1342 = vmatpush1.msra.mxu0 0.0
      %1343 = vmatprep.subr.mxu0 0.0
      %1344 = vmatpush1.msra.mxu0 0.0
      %1345 = vmatprep.subr.mxu0 0.0
      %1346 = vmatpush1.msra.mxu0 0.0
      %1347 = vmatprep.subr.mxu0 0.0
      %1348 = vmatpush1.msra.mxu0 0.0
      %1349 = vmatprep.subr.mxu0 0.0
      %1350 = vmatpush1.msra.mxu0 0.0
      %1351 = vmatprep.mubr.f32.mxu0 0.0
      %1352 = vmatmul.mubr.f32.gmra.mrb[0].mxu0 %v1279
      %v1353 = vpop.f32.mrb[0].mxu0
      %v1354 = vadd.f32 0.0, %v1353
      %v1355 = vpop.f32.mrb[0].mxu0
      %1356 = vmatprep.mubr.f32.mxu0 0.0
      %1357 = vmatmul.mubr.f32.gmra.mrb[0].mxu0 %v1282
      %v1358 = vpop.f32.mrb[0].mxu0
      %v1359 = vadd.f32 0.0, %v1358
      %v1360 = vpop.f32.mrb[0].mxu0
      %1361 = vmatprep.mubr.f32.mxu0 0.0
      %1362 = vmatmul.mubr.f32.gmra.mrb[0].mxu0 %v1285
      %v1363 = vpop.f32.mrb[0].mxu0
      %v1364 = vadd.f32 0.0, %v1363
      %v1365 = vpop.f32.mrb[0].mxu0
      %1366 = vdwg.mxu0
      %1367 = vrot.lane.b32.xlu0 %v546, 32
      %v1368 = vpop.permute.xlu0 %1367
      %v1371 = vsel %vm805, %v1026, 0
      %v1374 = vsel %vm805, %v1031, 0
      %v1377 = vsel %vm805, %v1036, 0
      %1379 = vmatprep.subr.mxu0 0.0
      %1380 = vmatpush1.msra.mxu0 %v1368
      %1381 = vmatprep.subr.mxu0 0.0
      %1382 = vmatpush1.msra.mxu0 0.0
      %1383 = vmatprep.subr.mxu0 0.0
      %1384 = vmatpush1.msra.mxu0 0.0
      %1385 = vmatprep.subr.mxu0 0.0
      %1386 = vmatpush1.msra.mxu0 0.0
      %1387 = vmatprep.subr.mxu0 0.0
      %1388 = vmatpush1.msra.mxu0 0.0
      %1389 = vmatprep.subr.mxu0 0.0
      %1390 = vmatpush1.msra.mxu0 0.0
      %1391 = vmatprep.subr.mxu0 0.0
      %1392 = vmatpush1.msra.mxu0 0.0
      %1393 = vmatprep.subr.mxu0 0.0
      %1394 = vmatpush1.msra.mxu0 0.0
      %1395 = vmatprep.subr.mxu0 0.0
      %1396 = vmatpush1.msra.mxu0 0.0
      %1397 = vmatprep.subr.mxu0 0.0
      %1398 = vmatpush1.msra.mxu0 0.0
      %1399 = vmatprep.subr.mxu0 0.0
      %1400 = vmatpush1.msra.mxu0 0.0
      %1401 = vmatprep.subr.mxu0 0.0
      %1402 = vmatpush1.msra.mxu0 0.0
      %1403 = vmatprep.subr.mxu0 0.0
      %1404 = vmatpush1.msra.mxu0 0.0
      %1405 = vmatprep.subr.mxu0 0.0
      %1406 = vmatpush1.msra.mxu0 0.0
      %1407 = vmatprep.subr.mxu0 0.0
      %1408 = vmatpush1.msra.mxu0 0.0
      %1409 = vmatprep.subr.mxu0 0.0
      %1410 = vmatpush1.msra.mxu0 0.0
      %1411 = vmatprep.subr.mxu0 0.0
      %1412 = vmatpush1.msra.mxu0 0.0
      %1413 = vmatprep.subr.mxu0 0.0
      %1414 = vmatpush1.msra.mxu0 0.0
      %1415 = vmatprep.subr.mxu0 0.0
      %1416 = vmatpush1.msra.mxu0 0.0
      %1417 = vmatprep.subr.mxu0 0.0
      %1418 = vmatpush1.msra.mxu0 0.0
      %1419 = vmatprep.subr.mxu0 0.0
      %1420 = vmatpush1.msra.mxu0 0.0
      %1421 = vmatprep.subr.mxu0 0.0
      %1422 = vmatpush1.msra.mxu0 0.0
      %1423 = vmatprep.subr.mxu0 0.0
      %1424 = vmatpush1.msra.mxu0 0.0
      %1425 = vmatprep.subr.mxu0 0.0
      %1426 = vmatpush1.msra.mxu0 0.0
      %1427 = vmatprep.subr.mxu0 0.0
      %1428 = vmatpush1.msra.mxu0 0.0
      %1429 = vmatprep.subr.mxu0 0.0
      %1430 = vmatpush1.msra.mxu0 0.0
      %1431 = vmatprep.subr.mxu0 0.0
      %1432 = vmatpush1.msra.mxu0 0.0
      %1433 = vmatprep.subr.mxu0 0.0
      %1434 = vmatpush1.msra.mxu0 0.0
      %1435 = vmatprep.subr.mxu0 0.0
      %1436 = vmatpush1.msra.mxu0 0.0
      %1437 = vmatprep.subr.mxu0 0.0
      %1438 = vmatpush1.msra.mxu0 0.0
      %1439 = vmatprep.subr.mxu0 0.0
      %1440 = vmatpush1.msra.mxu0 0.0
      %1441 = vmatprep.subr.mxu0 0.0
      %1442 = vmatpush1.msra.mxu0 0.0
      %1443 = vmatprep.mubr.f32.mxu0 0.0
      %1444 = vmatmul.mubr.f32.gmra.mrb[0].mxu0 %v1371
      %v1445 = vpop.f32.mrb[0].mxu0
      %v1446 = vadd.f32 %v1354, %v1445
      %v1447 = vpop.f32.mrb[0].mxu0
      %1448 = vmatprep.mubr.f32.mxu0 0.0
      %1449 = vmatmul.mubr.f32.gmra.mrb[0].mxu0 %v1374
      %v1450 = vpop.f32.mrb[0].mxu0
      %v1451 = vadd.f32 %v1359, %v1450
      %v1452 = vpop.f32.mrb[0].mxu0
      %1453 = vmatprep.mubr.f32.mxu0 0.0
      %1454 = vmatmul.mubr.f32.gmra.mrb[0].mxu0 %v1377
      %v1455 = vpop.f32.mrb[0].mxu0
      %v1456 = vadd.f32 %v1364, %v1455
      %v1457 = vpop.f32.mrb[0].mxu0
      %1458 = vdwg.mxu0
      %1459 = vrot.lane.b32.xlu0 %v802, 112
      %v1460 = vpop.permute.xlu0 %1459
      %1461 = vrot.lane.b32.xlu0 %v803, 112
      %v1462 = vpop.permute.xlu0 %1461
      %1463 = vrot.lane.b32.xlu0 %v804, 112
      %v1464 = vpop.permute.xlu0 %1463
      %1465 = vrot.lane.b32.xlu0 %v779, 112
      %v1466 = vpop.permute.xlu0 %1465
      %1467 = vrot.lane.b32.xlu0 %v784, 112
      %v1468 = vpop.permute.xlu0 %1467
      %1469 = vrot.lane.b32.xlu0 %v789, 112
      %v1470 = vpop.permute.xlu0 %1469
      %v1471 = vsel %vm805, %v1460, 0
      %v1473 = vsel %vm805, %v1462, 0
      %v1475 = vsel %vm805, %v1464, 0
      %v1477 = vsel %vm805, %v1466, 0
      %v1479 = vsel %vm805, %v1468, 0
      %v1481 = vsel %vm805, %v1470, 0
      %1483 = vmatprep.subr.mxu0 0.0
      %1484 = vmatpush1.xpose.msra.mxu0 %v1477
      %1485 = vmatprep.subr.mxu0 0.0
      %1486 = vmatpush1.xpose.msra.mxu0 %v1479
      %1487 = vmatprep.subr.mxu0 0.0
      %1488 = vmatpush1.xpose.msra.mxu0 %v1481
      %1489 = vmatprep.subr.mxu0 0.0
      %1490 = vmatpush1.xpose.msra.mxu0 0.0
      %1491 = vmatprep.subr.mxu0 0.0
      %1492 = vmatpush1.xpose.msra.mxu0 0.0
      %1493 = vmatprep.subr.mxu0 0.0
      %1494 = vmatpush1.xpose.msra.mxu0 0.0
      %1495 = vmatprep.subr.mxu0 0.0
      %1496 = vmatpush1.xpose.msra.mxu0 0.0
      %1497 = vmatprep.subr.mxu0 0.0
      %1498 = vmatpush1.xpose.msra.mxu0 0.0
      %1499 = vmatprep.subr.mxu0 0.0
      %1500 = vmatpush1.xpose.msra.mxu0 0.0
      %1501 = vmatprep.subr.mxu0 0.0
      %1502 = vmatpush1.xpose.msra.mxu0 0.0
      %1503 = vmatprep.subr.mxu0 0.0
      %1504 = vmatpush1.xpose.msra.mxu0 0.0
      %1505 = vmatprep.subr.mxu0 0.0
      %1506 = vmatpush1.xpose.msra.mxu0 0.0
      %1507 = vmatprep.subr.mxu0 0.0
      %1508 = vmatpush1.xpose.msra.mxu0 0.0
      %1509 = vmatprep.subr.mxu0 0.0
      %1510 = vmatpush1.xpose.msra.mxu0 0.0
      %1511 = vmatprep.subr.mxu0 0.0
      %1512 = vmatpush1.xpose.msra.mxu0 0.0
      %1513 = vmatprep.subr.mxu0 0.0
      %1514 = vmatpush1.xpose.msra.mxu0 0.0
      %1515 = vmatprep.subr.mxu0 0.0
      %1516 = vmatpush1.xpose.msra.mxu0 0.0
      %1517 = vmatprep.subr.mxu0 0.0
      %1518 = vmatpush1.xpose.msra.mxu0 0.0
      %1519 = vmatprep.subr.mxu0 0.0
      %1520 = vmatpush1.xpose.msra.mxu0 0.0
      %1521 = vmatprep.subr.mxu0 0.0
      %1522 = vmatpush1.xpose.msra.mxu0 0.0
      %1523 = vmatprep.subr.mxu0 0.0
      %1524 = vmatpush1.xpose.msra.mxu0 0.0
      %1525 = vmatprep.subr.mxu0 0.0
      %1526 = vmatpush1.xpose.msra.mxu0 0.0
      %1527 = vmatprep.subr.mxu0 0.0
      %1528 = vmatpush1.xpose.msra.mxu0 0.0
      %1529 = vmatprep.subr.mxu0 0.0
      %1530 = vmatpush1.xpose.msra.mxu0 0.0
      %1531 = vmatprep.subr.mxu0 0.0
      %1532 = vmatpush1.xpose.msra.mxu0 0.0
      %1533 = vmatprep.subr.mxu0 0.0
      %1534 = vmatpush1.xpose.msra.mxu0 0.0
      %1535 = vmatprep.subr.mxu0 0.0
      %1536 = vmatpush1.xpose.msra.mxu0 0.0
      %1537 = vmatprep.subr.mxu0 0.0
      %1538 = vmatpush1.xpose.msra.mxu0 0.0
      %1539 = vmatprep.subr.mxu0 0.0
      %1540 = vmatpush1.xpose.msra.mxu0 0.0
      %1541 = vmatprep.subr.mxu0 0.0
      %1542 = vmatpush1.xpose.msra.mxu0 0.0
      %1543 = vmatprep.subr.mxu0 0.0
      %1544 = vmatpush1.xpose.msra.mxu0 0.0
      %1545 = vmatprep.subr.mxu0 0.0
      %1546 = vmatpush1.xpose.msra.mxu0 0.0
      %1547 = vmatprep.mubr.f32.mxu0 0.0
      %1548 = vmatmul.mubr.f32.gmra.mrb[0].mxu0 %v1471
      %v1549 = vpop.f32.mrb[0].mxu0
      %v1550 = vadd.f32 0.0, %v1549
      %v1551 = vpop.f32.mrb[0].mxu0
      %1552 = vmatprep.mubr.f32.mxu0 0.0
      %1553 = vmatmul.mubr.f32.gmra.mrb[0].mxu0 %v1473
      %v1554 = vpop.f32.mrb[0].mxu0
      %v1555 = vadd.f32 0.0, %v1554
      %v1556 = vpop.f32.mrb[0].mxu0
      %1557 = vmatprep.mubr.f32.mxu0 0.0
      %1558 = vmatmul.mubr.f32.gmra.mrb[0].mxu0 %v1475
      %v1559 = vpop.f32.mrb[0].mxu0
      %v1560 = vadd.f32 0.0, %v1559
      %v1561 = vpop.f32.mrb[0].mxu0
      %1562 = vdwg.mxu0
      %v1563 = vsel %vm904, %v1550, -inf
      %1564 = vmax.xlane.f32.xlu0 %v1563
      %v1565 = vpop.xlane.xlu0 %1564
      %v1566 = vsel %vm904, %v1555, -inf
      %1567 = vmax.xlane.f32.xlu0 %v1566
      %v1568 = vpop.xlane.xlu0 %1567
      %v1569 = vsel %vm911, %v1560, -inf
      %1570 = vmax.xlane.f32.xlu0 %v1569
      %v1571 = vpop.xlane.xlu0 %1570
      %v1572 = vsub.f32 %v1550, %v1565
      %v1573 = vsub.f32 %v1555, %v1568
      %v1574 = vsub.f32 %v1560, %v1571
      %v1575 = vmul.f32 %v1572, 1.442695
      %v1576 = vpow.pop %v1575
      %v1577 = vmul.f32 %v1573, 1.442695
      %v1578 = vpow.pop %v1577
      %v1579 = vmul.f32 %v1574, 1.442695
      %v1580 = vpow.pop %v1579
      %v1581 = vsel %vm904, %v1576, 0.0
      %1582 = vadd.xlane.f32.xlu0 %v1581
      %v1583 = vpop.xlane.xlu0 %1582
      %v1584 = vsel %vm904, %v1578, 0.0
      %1585 = vadd.xlane.f32.xlu0 %v1584
      %v1586 = vpop.xlane.xlu0 %1585
      %v1587 = vsel %vm911, %v1580, 0.0
      %1588 = vadd.xlane.f32.xlu0 %v1587
      %v1589 = vpop.xlane.xlu0 %1588
      %v1590 = vrcp.pop %v1583
      %v1591 = vrcp.pop %v1586
      %v1592 = vrcp.pop %v1589
      %v1593 = vmul.f32 %v1576, %v1590
      %v1594 = vmul.f32 %v1578, %v1591
      %v1595 = vmul.f32 %v1580, %v1592
      %1596 = vrot.lane.b32.xlu0 %v779, 80
      %v1597 = vpop.permute.xlu0 %1596
      %1598 = vrot.lane.b32.xlu0 %v784, 80
      %v1599 = vpop.permute.xlu0 %1598
      %1600 = vrot.lane.b32.xlu0 %v789, 80
      %v1601 = vpop.permute.xlu0 %1600
      %v1605 = vsel %vm904, %v1593, 0
      %v1608 = vsel %vm904, %v1594, 0
      %v1611 = vsel %vm904, %v1595, 0
      %v1613 = vsel %vm956, %v1601, 0
      %1615 = vmatprep.subr.mxu0 0.0
      %1616 = vmatpush1.msra.mxu0 %v1597
      %1617 = vmatprep.subr.mxu0 0.0
      %1618 = vmatpush1.msra.mxu0 %v1599
      %1619 = vmatprep.subr.mxu0 0.0
      %1620 = vmatpush1.msra.mxu0 %v1613
      %1621 = vmatprep.subr.mxu0 0.0
      %1622 = vmatpush1.msra.mxu0 0.0
      %1623 = vmatprep.subr.mxu0 0.0
      %1624 = vmatpush1.msra.mxu0 0.0
      %1625 = vmatprep.subr.mxu0 0.0
      %1626 = vmatpush1.msra.mxu0 0.0
      %1627 = vmatprep.subr.mxu0 0.0
      %1628 = vmatpush1.msra.mxu0 0.0
      %1629 = vmatprep.subr.mxu0 0.0
      %1630 = vmatpush1.msra.mxu0 0.0
      %1631 = vmatprep.subr.mxu0 0.0
      %1632 = vmatpush1.msra.mxu0 0.0
      %1633 = vmatprep.subr.mxu0 0.0
      %1634 = vmatpush1.msra.mxu0 0.0
      %1635 = vmatprep.subr.mxu0 0.0
      %1636 = vmatpush1.msra.mxu0 0.0
      %1637 = vmatprep.subr.mxu0 0.0
      %1638 = vmatpush1.msra.mxu0 0.0
      %1639 = vmatprep.subr.mxu0 0.0
      %1640 = vmatpush1.msra.mxu0 0.0
      %1641 = vmatprep.subr.mxu0 0.0
      %1642 = vmatpush1.msra.mxu0 0.0
      %1643 = vmatprep.subr.mxu0 0.0
      %1644 = vmatpush1.msra.mxu0 0.0
      %1645 = vmatprep.subr.mxu0 0.0
      %1646 = vmatpush1.msra.mxu0 0.0
      %1647 = vmatprep.subr.mxu0 0.0
      %1648 = vmatpush1.msra.mxu0 0.0
      %1649 = vmatprep.subr.mxu0 0.0
      %1650 = vmatpush1.msra.mxu0 0.0
      %1651 = vmatprep.subr.mxu0 0.0
      %1652 = vmatpush1.msra.mxu0 0.0
      %1653 = vmatprep.subr.mxu0 0.0
      %1654 = vmatpush1.msra.mxu0 0.0
      %1655 = vmatprep.subr.mxu0 0.0
      %1656 = vmatpush1.msra.mxu0 0.0
      %1657 = vmatprep.subr.mxu0 0.0
      %1658 = vmatpush1.msra.mxu0 0.0
      %1659 = vmatprep.subr.mxu0 0.0
      %1660 = vmatpush1.msra.mxu0 0.0
      %1661 = vmatprep.subr.mxu0 0.0
      %1662 = vmatpush1.msra.mxu0 0.0
      %1663 = vmatprep.subr.mxu0 0.0
      %1664 = vmatpush1.msra.mxu0 0.0
      %1665 = vmatprep.subr.mxu0 0.0
      %1666 = vmatpush1.msra.mxu0 0.0
      %1667 = vmatprep.subr.mxu0 0.0
      %1668 = vmatpush1.msra.mxu0 0.0
      %1669 = vmatprep.subr.mxu0 0.0
      %1670 = vmatpush1.msra.mxu0 0.0
      %1671 = vmatprep.subr.mxu0 0.0
      %1672 = vmatpush1.msra.mxu0 0.0
      %1673 = vmatprep.subr.mxu0 0.0
      %1674 = vmatpush1.msra.mxu0 0.0
      %1675 = vmatprep.subr.mxu0 0.0
      %1676 = vmatpush1.msra.mxu0 0.0
      %1677 = vmatprep.subr.mxu0 0.0
      %1678 = vmatpush1.msra.mxu0 0.0
      %1679 = vmatprep.mubr.f32.mxu0 0.0
      %1680 = vmatmul.mubr.f32.gmra.mrb[0].mxu0 %v1605
      %v1681 = vpop.f32.mrb[0].mxu0
      %v1682 = vadd.f32 0.0, %v1681
      %v1683 = vpop.f32.mrb[0].mxu0
      %1684 = vmatprep.mubr.f32.mxu0 0.0
      %1685 = vmatmul.mubr.f32.gmra.mrb[0].mxu0 %v1608
      %v1686 = vpop.f32.mrb[0].mxu0
      %v1687 = vadd.f32 0.0, %v1686
      %v1688 = vpop.f32.mrb[0].mxu0
      %1689 = vmatprep.mubr.f32.mxu0 0.0
      %1690 = vmatmul.mubr.f32.gmra.mrb[0].mxu0 %v1611
      %v1691 = vpop.f32.mrb[0].mxu0
      %v1692 = vadd.f32 0.0, %v1691
      %v1693 = vpop.f32.mrb[0].mxu0
      %1694 = vdwg.mxu0
      %1695 = vrot.lane.b32.xlu0 %v552, 32
      %v1696 = vpop.permute.xlu0 %1695
      %v1699 = vsel %vm805, %v1682, 0
      %v1702 = vsel %vm805, %v1687, 0
      %v1705 = vsel %vm805, %v1692, 0
      %1707 = vmatprep.subr.mxu0 0.0
      %1708 = vmatpush1.msra.mxu0 %v1696
      %1709 = vmatprep.subr.mxu0 0.0
      %1710 = vmatpush1.msra.mxu0 0.0
      %1711 = vmatprep.subr.mxu0 0.0
      %1712 = vmatpush1.msra.mxu0 0.0
      %1713 = vmatprep.subr.mxu0 0.0
      %1714 = vmatpush1.msra.mxu0 0.0
      %1715 = vmatprep.subr.mxu0 0.0
      %1716 = vmatpush1.msra.mxu0 0.0
      %1717 = vmatprep.subr.mxu0 0.0
      %1718 = vmatpush1.msra.mxu0 0.0
      %1719 = vmatprep.subr.mxu0 0.0
      %1720 = vmatpush1.msra.mxu0 0.0
      %1721 = vmatprep.subr.mxu0 0.0
      %1722 = vmatpush1.msra.mxu0 0.0
      %1723 = vmatprep.subr.mxu0 0.0
      %1724 = vmatpush1.msra.mxu0 0.0
      %1725 = vmatprep.subr.mxu0 0.0
      %1726 = vmatpush1.msra.mxu0 0.0
      %1727 = vmatprep.subr.mxu0 0.0
      %1728 = vmatpush1.msra.mxu0 0.0
      %1729 = vmatprep.subr.mxu0 0.0
      %1730 = vmatpush1.msra.mxu0 0.0
      %1731 = vmatprep.subr.mxu0 0.0
      %1732 = vmatpush1.msra.mxu0 0.0
      %1733 = vmatprep.subr.mxu0 0.0
      %1734 = vmatpush1.msra.mxu0 0.0
      %1735 = vmatprep.subr.mxu0 0.0
      %1736 = vmatpush1.msra.mxu0 0.0
      %1737 = vmatprep.subr.mxu0 0.0
      %1738 = vmatpush1.msra.mxu0 0.0
      %1739 = vmatprep.subr.mxu0 0.0
      %1740 = vmatpush1.msra.mxu0 0.0
      %1741 = vmatprep.subr.mxu0 0.0
      %1742 = vmatpush1.msra.mxu0 0.0
      %1743 = vmatprep.subr.mxu0 0.0
      %1744 = vmatpush1.msra.mxu0 0.0
      %1745 = vmatprep.subr.mxu0 0.0
      %1746 = vmatpush1.msra.mxu0 0.0
      %1747 = vmatprep.subr.mxu0 0.0
      %1748 = vmatpush1.msra.mxu0 0.0
      %1749 = vmatprep.subr.mxu0 0.0
      %1750 = vmatpush1.msra.mxu0 0.0
      %1751 = vmatprep.subr.mxu0 0.0
      %1752 = vmatpush1.msra.mxu0 0.0
      %1753 = vmatprep.subr.mxu0 0.0
      %1754 = vmatpush1.msra.mxu0 0.0
      %1755 = vmatprep.subr.mxu0 0.0
      %1756 = vmatpush1.msra.mxu0 0.0
      %1757 = vmatprep.subr.mxu0 0.0
      %1758 = vmatpush1.msra.mxu0 0.0
      %1759 = vmatprep.subr.mxu0 0.0
      %1760 = vmatpush1.msra.mxu0 0.0
      %1761 = vmatprep.subr.mxu0 0.0
      %1762 = vmatpush1.msra.mxu0 0.0
      %1763 = vmatprep.subr.mxu0 0.0
      %1764 = vmatpush1.msra.mxu0 0.0
      %1765 = vmatprep.subr.mxu0 0.0
      %1766 = vmatpush1.msra.mxu0 0.0
      %1767 = vmatprep.subr.mxu0 0.0
      %1768 = vmatpush1.msra.mxu0 0.0
      %1769 = vmatprep.subr.mxu0 0.0
      %1770 = vmatpush1.msra.mxu0 0.0
      %1771 = vmatprep.mubr.f32.mxu0 0.0
      %1772 = vmatmul.mubr.f32.gmra.mrb[0].mxu0 %v1699
      %v1773 = vpop.f32.mrb[0].mxu0
      %v1774 = vadd.f32 0.0, %v1773
      %v1775 = vpop.f32.mrb[0].mxu0
      %1776 = vmatprep.mubr.f32.mxu0 0.0
      %1777 = vmatmul.mubr.f32.gmra.mrb[0].mxu0 %v1702
      %v1778 = vpop.f32.mrb[0].mxu0
      %v1779 = vadd.f32 0.0, %v1778
      %v1780 = vpop.f32.mrb[0].mxu0
      %1781 = vmatprep.mubr.f32.mxu0 0.0
      %1782 = vmatmul.mubr.f32.gmra.mrb[0].mxu0 %v1705
      %v1783 = vpop.f32.mrb[0].mxu0
      %v1784 = vadd.f32 0.0, %v1783
      %v1785 = vpop.f32.mrb[0].mxu0
      %1786 = vdwg.mxu0
      %v1787 = vadd.f32 %v1446, %v1774
      %v1788 = vadd.f32 %v1451, %v1779
      %v1789 = vadd.f32 %v1456, %v1784
      %1790 = vrot.lane.b32.xlu0 %v802, 104
      %v1791 = vpop.permute.xlu0 %1790
      %1792 = vrot.lane.b32.xlu0 %v803, 104
      %v1793 = vpop.permute.xlu0 %1792
      %1794 = vrot.lane.b32.xlu0 %v804, 104
      %v1795 = vpop.permute.xlu0 %1794
      %1796 = vrot.lane.b32.xlu0 %v779, 104
      %v1797 = vpop.permute.xlu0 %1796
      %1798 = vrot.lane.b32.xlu0 %v784, 104
      %v1799 = vpop.permute.xlu0 %1798
      %1800 = vrot.lane.b32.xlu0 %v789, 104
      %v1801 = vpop.permute.xlu0 %1800
      %v1802 = vsel %vm805, %v1791, 0
      %v1804 = vsel %vm805, %v1793, 0
      %v1806 = vsel %vm805, %v1795, 0
      %v1808 = vsel %vm805, %v1797, 0
      %v1810 = vsel %vm805, %v1799, 0
      %v1812 = vsel %vm805, %v1801, 0
      %1814 = vmatprep.subr.mxu0 0.0
      %1815 = vmatpush1.xpose.msra.mxu0 %v1808
      %1816 = vmatprep.subr.mxu0 0.0
      %1817 = vmatpush1.xpose.msra.mxu0 %v1810
      %1818 = vmatprep.subr.mxu0 0.0
      %1819 = vmatpush1.xpose.msra.mxu0 %v1812
      %1820 = vmatprep.subr.mxu0 0.0
      %1821 = vmatpush1.xpose.msra.mxu0 0.0
      %1822 = vmatprep.subr.mxu0 0.0
      %1823 = vmatpush1.xpose.msra.mxu0 0.0
      %1824 = vmatprep.subr.mxu0 0.0
      %1825 = vmatpush1.xpose.msra.mxu0 0.0
      %1826 = vmatprep.subr.mxu0 0.0
      %1827 = vmatpush1.xpose.msra.mxu0 0.0
      %1828 = vmatprep.subr.mxu0 0.0
      %1829 = vmatpush1.xpose.msra.mxu0 0.0
      %1830 = vmatprep.subr.mxu0 0.0
      %1831 = vmatpush1.xpose.msra.mxu0 0.0
      %1832 = vmatprep.subr.mxu0 0.0
      %1833 = vmatpush1.xpose.msra.mxu0 0.0
      %1834 = vmatprep.subr.mxu0 0.0
      %1835 = vmatpush1.xpose.msra.mxu0 0.0
      %1836 = vmatprep.subr.mxu0 0.0
      %1837 = vmatpush1.xpose.msra.mxu0 0.0
      %1838 = vmatprep.subr.mxu0 0.0
      %1839 = vmatpush1.xpose.msra.mxu0 0.0
      %1840 = vmatprep.subr.mxu0 0.0
      %1841 = vmatpush1.xpose.msra.mxu0 0.0
      %1842 = vmatprep.subr.mxu0 0.0
      %1843 = vmatpush1.xpose.msra.mxu0 0.0
      %1844 = vmatprep.subr.mxu0 0.0
      %1845 = vmatpush1.xpose.msra.mxu0 0.0
      %1846 = vmatprep.subr.mxu0 0.0
      %1847 = vmatpush1.xpose.msra.mxu0 0.0
      %1848 = vmatprep.subr.mxu0 0.0
      %1849 = vmatpush1.xpose.msra.mxu0 0.0
      %1850 = vmatprep.subr.mxu0 0.0
      %1851 = vmatpush1.xpose.msra.mxu0 0.0
      %1852 = vmatprep.subr.mxu0 0.0
      %1853 = vmatpush1.xpose.msra.mxu0 0.0
      %1854 = vmatprep.subr.mxu0 0.0
      %1855 = vmatpush1.xpose.msra.mxu0 0.0
      %1856 = vmatprep.subr.mxu0 0.0
      %1857 = vmatpush1.xpose.msra.mxu0 0.0
      %1858 = vmatprep.subr.mxu0 0.0
      %1859 = vmatpush1.xpose.msra.mxu0 0.0
      %1860 = vmatprep.subr.mxu0 0.0
      %1861 = vmatpush1.xpose.msra.mxu0 0.0
      %1862 = vmatprep.subr.mxu0 0.0
      %1863 = vmatpush1.xpose.msra.mxu0 0.0
      %1864 = vmatprep.subr.mxu0 0.0
      %1865 = vmatpush1.xpose.msra.mxu0 0.0
      %1866 = vmatprep.subr.mxu0 0.0
      %1867 = vmatpush1.xpose.msra.mxu0 0.0
      %1868 = vmatprep.subr.mxu0 0.0
      %1869 = vmatpush1.xpose.msra.mxu0 0.0
      %1870 = vmatprep.subr.mxu0 0.0
      %1871 = vmatpush1.xpose.msra.mxu0 0.0
      %1872 = vmatprep.subr.mxu0 0.0
      %1873 = vmatpush1.xpose.msra.mxu0 0.0
      %1874 = vmatprep.subr.mxu0 0.0
      %1875 = vmatpush1.xpose.msra.mxu0 0.0
      %1876 = vmatprep.subr.mxu0 0.0
      %1877 = vmatpush1.xpose.msra.mxu0 0.0
      %1878 = vmatprep.mubr.f32.mxu0 0.0
      %1879 = vmatmul.mubr.f32.gmra.mrb[0].mxu0 %v1802
      %v1880 = vpop.f32.mrb[0].mxu0
      %v1881 = vadd.f32 0.0, %v1880
      %v1882 = vpop.f32.mrb[0].mxu0
      %1883 = vmatprep.mubr.f32.mxu0 0.0
      %1884 = vmatmul.mubr.f32.gmra.mrb[0].mxu0 %v1804
      %v1885 = vpop.f32.mrb[0].mxu0
      %v1886 = vadd.f32 0.0, %v1885
      %v1887 = vpop.f32.mrb[0].mxu0
      %1888 = vmatprep.mubr.f32.mxu0 0.0
      %1889 = vmatmul.mubr.f32.gmra.mrb[0].mxu0 %v1806
      %v1890 = vpop.f32.mrb[0].mxu0
      %v1891 = vadd.f32 0.0, %v1890
      %v1892 = vpop.f32.mrb[0].mxu0
      %1893 = vdwg.mxu0
      %v1894 = vsel %vm904, %v1881, -inf
      %1895 = vmax.xlane.f32.xlu0 %v1894
      %v1896 = vpop.xlane.xlu0 %1895
      %v1897 = vsel %vm904, %v1886, -inf
      %1898 = vmax.xlane.f32.xlu0 %v1897
      %v1899 = vpop.xlane.xlu0 %1898
      %v1900 = vsel %vm911, %v1891, -inf
      %1901 = vmax.xlane.f32.xlu0 %v1900
      %v1902 = vpop.xlane.xlu0 %1901
      %v1903 = vsub.f32 %v1881, %v1896
      %v1904 = vsub.f32 %v1886, %v1899
      %v1905 = vsub.f32 %v1891, %v1902
      %v1906 = vmul.f32 %v1903, 1.442695
      %v1907 = vpow.pop %v1906
      %v1908 = vmul.f32 %v1904, 1.442695
      %v1909 = vpow.pop %v1908
      %v1910 = vmul.f32 %v1905, 1.442695
      %v1911 = vpow.pop %v1910
      %v1912 = vsel %vm904, %v1907, 0.0
      %1913 = vadd.xlane.f32.xlu0 %v1912
      %v1914 = vpop.xlane.xlu0 %1913
      %v1915 = vsel %vm904, %v1909, 0.0
      %1916 = vadd.xlane.f32.xlu0 %v1915
      %v1917 = vpop.xlane.xlu0 %1916
      %v1918 = vsel %vm911, %v1911, 0.0
      %1919 = vadd.xlane.f32.xlu0 %v1918
      %v1920 = vpop.xlane.xlu0 %1919
      %v1921 = vrcp.pop %v1914
      %v1922 = vrcp.pop %v1917
      %v1923 = vrcp.pop %v1920
      %v1924 = vmul.f32 %v1907, %v1921
      %v1925 = vmul.f32 %v1909, %v1922
      %v1926 = vmul.f32 %v1911, %v1923
      %1927 = vrot.lane.b32.xlu0 %v779, 72
      %v1928 = vpop.permute.xlu0 %1927
      %1929 = vrot.lane.b32.xlu0 %v784, 72
      %v1930 = vpop.permute.xlu0 %1929
      %1931 = vrot.lane.b32.xlu0 %v789, 72
      %v1932 = vpop.permute.xlu0 %1931
      %v1936 = vsel %vm904, %v1924, 0
      %v1939 = vsel %vm904, %v1925, 0
      %v1942 = vsel %vm904, %v1926, 0
      %v1944 = vsel %vm956, %v1932, 0
      %1946 = vmatprep.subr.mxu0 0.0
      %1947 = vmatpush1.msra.mxu0 %v1928
      %1948 = vmatprep.subr.mxu0 0.0
      %1949 = vmatpush1.msra.mxu0 %v1930
      %1950 = vmatprep.subr.mxu0 0.0
      %1951 = vmatpush1.msra.mxu0 %v1944
      %1952 = vmatprep.subr.mxu0 0.0
      %1953 = vmatpush1.msra.mxu0 0.0
      %1954 = vmatprep.subr.mxu0 0.0
      %1955 = vmatpush1.msra.mxu0 0.0
      %1956 = vmatprep.subr.mxu0 0.0
      %1957 = vmatpush1.msra.mxu0 0.0
      %1958 = vmatprep.subr.mxu0 0.0
      %1959 = vmatpush1.msra.mxu0 0.0
      %1960 = vmatprep.subr.mxu0 0.0
      %1961 = vmatpush1.msra.mxu0 0.0
      %1962 = vmatprep.subr.mxu0 0.0
      %1963 = vmatpush1.msra.mxu0 0.0
      %1964 = vmatprep.subr.mxu0 0.0
      %1965 = vmatpush1.msra.mxu0 0.0
      %1966 = vmatprep.subr.mxu0 0.0
      %1967 = vmatpush1.msra.mxu0 0.0
      %1968 = vmatprep.subr.mxu0 0.0
      %1969 = vmatpush1.msra.mxu0 0.0
      %1970 = vmatprep.subr.mxu0 0.0
      %1971 = vmatpush1.msra.mxu0 0.0
      %1972 = vmatprep.subr.mxu0 0.0
      %1973 = vmatpush1.msra.mxu0 0.0
      %1974 = vmatprep.subr.mxu0 0.0
      %1975 = vmatpush1.msra.mxu0 0.0
      %1976 = vmatprep.subr.mxu0 0.0
      %1977 = vmatpush1.msra.mxu0 0.0
      %1978 = vmatprep.subr.mxu0 0.0
      %1979 = vmatpush1.msra.mxu0 0.0
      %1980 = vmatprep.subr.mxu0 0.0
      %1981 = vmatpush1.msra.mxu0 0.0
      %1982 = vmatprep.subr.mxu0 0.0
      %1983 = vmatpush1.msra.mxu0 0.0
      %1984 = vmatprep.subr.mxu0 0.0
      %1985 = vmatpush1.msra.mxu0 0.0
      %1986 = vmatprep.subr.mxu0 0.0
      %1987 = vmatpush1.msra.mxu0 0.0
      %1988 = vmatprep.subr.mxu0 0.0
      %1989 = vmatpush1.msra.mxu0 0.0
      %1990 = vmatprep.subr.mxu0 0.0
      %1991 = vmatpush1.msra.mxu0 0.0
      %1992 = vmatprep.subr.mxu0 0.0
      %1993 = vmatpush1.msra.mxu0 0.0
      %1994 = vmatprep.subr.mxu0 0.0
      %1995 = vmatpush1.msra.mxu0 0.0
      %1996 = vmatprep.subr.mxu0 0.0
      %1997 = vmatpush1.msra.mxu0 0.0
      %1998 = vmatprep.subr.mxu0 0.0
      %1999 = vmatpush1.msra.mxu0 0.0
      %2000 = vmatprep.subr.mxu0 0.0
      %2001 = vmatpush1.msra.mxu0 0.0
      %2002 = vmatprep.subr.mxu0 0.0
      %2003 = vmatpush1.msra.mxu0 0.0
      %2004 = vmatprep.subr.mxu0 0.0
      %2005 = vmatpush1.msra.mxu0 0.0
      %2006 = vmatprep.subr.mxu0 0.0
      %2007 = vmatpush1.msra.mxu0 0.0
      %2008 = vmatprep.subr.mxu0 0.0
      %2009 = vmatpush1.msra.mxu0 0.0
      %2010 = vmatprep.mubr.f32.mxu0 0.0
      %2011 = vmatmul.mubr.f32.gmra.mrb[0].mxu0 %v1936
      %v2012 = vpop.f32.mrb[0].mxu0
      %v2013 = vadd.f32 0.0, %v2012
      %v2014 = vpop.f32.mrb[0].mxu0
      %2015 = vmatprep.mubr.f32.mxu0 0.0
      %2016 = vmatmul.mubr.f32.gmra.mrb[0].mxu0 %v1939
      %v2017 = vpop.f32.mrb[0].mxu0
      %v2018 = vadd.f32 0.0, %v2017
      %v2019 = vpop.f32.mrb[0].mxu0
      %2020 = vmatprep.mubr.f32.mxu0 0.0
      %2021 = vmatmul.mubr.f32.gmra.mrb[0].mxu0 %v1942
      %v2022 = vpop.f32.mrb[0].mxu0
      %v2023 = vadd.f32 0.0, %v2022
      %v2024 = vpop.f32.mrb[0].mxu0
      %2025 = vdwg.mxu0
      %2026 = vrot.lane.b32.xlu0 %v555, 32
      %v2027 = vpop.permute.xlu0 %2026
      %v2030 = vsel %vm805, %v2013, 0
      %v2033 = vsel %vm805, %v2018, 0
      %v2036 = vsel %vm805, %v2023, 0
      %2038 = vmatprep.subr.mxu0 0.0
      %2039 = vmatpush1.msra.mxu0 %v2027
      %2040 = vmatprep.subr.mxu0 0.0
      %2041 = vmatpush1.msra.mxu0 0.0
      %2042 = vmatprep.subr.mxu0 0.0
      %2043 = vmatpush1.msra.mxu0 0.0
      %2044 = vmatprep.subr.mxu0 0.0
      %2045 = vmatpush1.msra.mxu0 0.0
      %2046 = vmatprep.subr.mxu0 0.0
      %2047 = vmatpush1.msra.mxu0 0.0
      %2048 = vmatprep.subr.mxu0 0.0
      %2049 = vmatpush1.msra.mxu0 0.0
      %2050 = vmatprep.subr.mxu0 0.0
      %2051 = vmatpush1.msra.mxu0 0.0
      %2052 = vmatprep.subr.mxu0 0.0
      %2053 = vmatpush1.msra.mxu0 0.0
      %2054 = vmatprep.subr.mxu0 0.0
      %2055 = vmatpush1.msra.mxu0 0.0
      %2056 = vmatprep.subr.mxu0 0.0
      %2057 = vmatpush1.msra.mxu0 0.0
      %2058 = vmatprep.subr.mxu0 0.0
      %2059 = vmatpush1.msra.mxu0 0.0
      %2060 = vmatprep.subr.mxu0 0.0
      %2061 = vmatpush1.msra.mxu0 0.0
      %2062 = vmatprep.subr.mxu0 0.0
      %2063 = vmatpush1.msra.mxu0 0.0
      %2064 = vmatprep.subr.mxu0 0.0
      %2065 = vmatpush1.msra.mxu0 0.0
      %2066 = vmatprep.subr.mxu0 0.0
      %2067 = vmatpush1.msra.mxu0 0.0
      %2068 = vmatprep.subr.mxu0 0.0
      %2069 = vmatpush1.msra.mxu0 0.0
      %2070 = vmatprep.subr.mxu0 0.0
      %2071 = vmatpush1.msra.mxu0 0.0
      %2072 = vmatprep.subr.mxu0 0.0
      %2073 = vmatpush1.msra.mxu0 0.0
      %2074 = vmatprep.subr.mxu0 0.0
      %2075 = vmatpush1.msra.mxu0 0.0
      %2076 = vmatprep.subr.mxu0 0.0
      %2077 = vmatpush1.msra.mxu0 0.0
      %2078 = vmatprep.subr.mxu0 0.0
      %2079 = vmatpush1.msra.mxu0 0.0
      %2080 = vmatprep.subr.mxu0 0.0
      %2081 = vmatpush1.msra.mxu0 0.0
      %2082 = vmatprep.subr.mxu0 0.0
      %2083 = vmatpush1.msra.mxu0 0.0
      %2084 = vmatprep.subr.mxu0 0.0
      %2085 = vmatpush1.msra.mxu0 0.0
      %2086 = vmatprep.subr.mxu0 0.0
      %2087 = vmatpush1.msra.mxu0 0.0
      %2088 = vmatprep.subr.mxu0 0.0
      %2089 = vmatpush1.msra.mxu0 0.0
      %2090 = vmatprep.subr.mxu0 0.0
      %2091 = vmatpush1.msra.mxu0 0.0
      %2092 = vmatprep.subr.mxu0 0.0
      %2093 = vmatpush1.msra.mxu0 0.0
      %2094 = vmatprep.subr.mxu0 0.0
      %2095 = vmatpush1.msra.mxu0 0.0
      %2096 = vmatprep.subr.mxu0 0.0
      %2097 = vmatpush1.msra.mxu0 0.0
      %2098 = vmatprep.subr.mxu0 0.0
      %2099 = vmatpush1.msra.mxu0 0.0
      %2100 = vmatprep.subr.mxu0 0.0
      %2101 = vmatpush1.msra.mxu0 0.0
      %2102 = vmatprep.mubr.f32.mxu0 0.0
      %2103 = vmatmul.mubr.f32.gmra.mrb[0].mxu0 %v2030
      %v2104 = vpop.f32.mrb[0].mxu0
      %v2105 = vadd.f32 0.0, %v2104
      %v2106 = vpop.f32.mrb[0].mxu0
      %2107 = vmatprep.mubr.f32.mxu0 0.0
      %2108 = vmatmul.mubr.f32.gmra.mrb[0].mxu0 %v2033
      %v2109 = vpop.f32.mrb[0].mxu0
      %v2110 = vadd.f32 0.0, %v2109
      %v2111 = vpop.f32.mrb[0].mxu0
      %2112 = vmatprep.mubr.f32.mxu0 0.0
      %2113 = vmatmul.mubr.f32.gmra.mrb[0].mxu0 %v2036
      %v2114 = vpop.f32.mrb[0].mxu0
      %v2115 = vadd.f32 0.0, %v2114
      %v2116 = vpop.f32.mrb[0].mxu0
      %2117 = vdwg.mxu0
      %v2118 = vadd.f32 %v1787, %v2105
      %v2119 = vadd.f32 %v1788, %v2110
      %v2120 = vadd.f32 %v1789, %v2115
      %v2121 = vmul.f32 %v684, 0.35355338
      %v2122 = vmul.f32 %v689, 0.35355338
      %vm2125 = vcmask 1046528
      %v2126 = vrot.slane %v804, 1
      %v2127 = vrot.slane %v2121, 1
      %v2128 = vsel %vm2125, %v2126, %v2127
      %v2129 = vrot.slane %v2122, 1
      %v2130 = vsel %vm2125, %v2127, %v2129
      %v2133 = vrot.slane %v789, 1
      %v2134 = vrot.slane %v794, 1
      %v2135 = vsel %vm2125, %v2133, %v2134
      %v2136 = vrot.slane %v799, 1
      %v2137 = vsel %vm2125, %v2134, %v2136
      %v2138 = vsel %vm805, %v2128, 0
      %v2140 = vsel %vm805, %v2130, 0
      %v2142 = vsel %vm805, %v2129, 0
      %v2144 = vsel %vm805, %v2135, 0
      %v2146 = vsel %vm805, %v2137, 0
      %v2148 = vsel %vm805, %v2136, 0
      %2150 = vmatprep.subr.mxu0 0.0
      %2151 = vmatpush1.xpose.msra.mxu0 %v2144
      %2152 = vmatprep.subr.mxu0 0.0
      %2153 = vmatpush1.xpose.msra.mxu0 %v2146
      %2154 = vmatprep.subr.mxu0 0.0
      %2155 = vmatpush1.xpose.msra.mxu0 %v2148
      %2156 = vmatprep.subr.mxu0 0.0
      %2157 = vmatpush1.xpose.msra.mxu0 0.0
      %2158 = vmatprep.subr.mxu0 0.0
      %2159 = vmatpush1.xpose.msra.mxu0 0.0
      %2160 = vmatprep.subr.mxu0 0.0
      %2161 = vmatpush1.xpose.msra.mxu0 0.0
      %2162 = vmatprep.subr.mxu0 0.0
      %2163 = vmatpush1.xpose.msra.mxu0 0.0
      %2164 = vmatprep.subr.mxu0 0.0
      %2165 = vmatpush1.xpose.msra.mxu0 0.0
      %2166 = vmatprep.subr.mxu0 0.0
      %2167 = vmatpush1.xpose.msra.mxu0 0.0
      %2168 = vmatprep.subr.mxu0 0.0
      %2169 = vmatpush1.xpose.msra.mxu0 0.0
      %2170 = vmatprep.subr.mxu0 0.0
      %2171 = vmatpush1.xpose.msra.mxu0 0.0
      %2172 = vmatprep.subr.mxu0 0.0
      %2173 = vmatpush1.xpose.msra.mxu0 0.0
      %2174 = vmatprep.subr.mxu0 0.0
      %2175 = vmatpush1.xpose.msra.mxu0 0.0
      %2176 = vmatprep.subr.mxu0 0.0
      %2177 = vmatpush1.xpose.msra.mxu0 0.0
      %2178 = vmatprep.subr.mxu0 0.0
      %2179 = vmatpush1.xpose.msra.mxu0 0.0
      %2180 = vmatprep.subr.mxu0 0.0
      %2181 = vmatpush1.xpose.msra.mxu0 0.0
      %2182 = vmatprep.subr.mxu0 0.0
      %2183 = vmatpush1.xpose.msra.mxu0 0.0
      %2184 = vmatprep.subr.mxu0 0.0
      %2185 = vmatpush1.xpose.msra.mxu0 0.0
      %2186 = vmatprep.subr.mxu0 0.0
      %2187 = vmatpush1.xpose.msra.mxu0 0.0
      %2188 = vmatprep.subr.mxu0 0.0
      %2189 = vmatpush1.xpose.msra.mxu0 0.0
      %2190 = vmatprep.subr.mxu0 0.0
      %2191 = vmatpush1.xpose.msra.mxu0 0.0
      %2192 = vmatprep.subr.mxu0 0.0
      %2193 = vmatpush1.xpose.msra.mxu0 0.0
      %2194 = vmatprep.subr.mxu0 0.0
      %2195 = vmatpush1.xpose.msra.mxu0 0.0
      %2196 = vmatprep.subr.mxu0 0.0
      %2197 = vmatpush1.xpose.msra.mxu0 0.0
      %2198 = vmatprep.subr.mxu0 0.0
      %2199 = vmatpush1.xpose.msra.mxu0 0.0
      %2200 = vmatprep.subr.mxu0 0.0
      %2201 = vmatpush1.xpose.msra.mxu0 0.0
      %2202 = vmatprep.subr.mxu0 0.0
      %2203 = vmatpush1.xpose.msra.mxu0 0.0
      %2204 = vmatprep.subr.mxu0 0.0
      %2205 = vmatpush1.xpose.msra.mxu0 0.0
      %2206 = vmatprep.subr.mxu0 0.0
      %2207 = vmatpush1.xpose.msra.mxu0 0.0
      %2208 = vmatprep.subr.mxu0 0.0
      %2209 = vmatpush1.xpose.msra.mxu0 0.0
      %2210 = vmatprep.subr.mxu0 0.0
      %2211 = vmatpush1.xpose.msra.mxu0 0.0
      %2212 = vmatprep.subr.mxu0 0.0
      %2213 = vmatpush1.xpose.msra.mxu0 0.0
      %2214 = vmatprep.mubr.f32.mxu0 0.0
      %2215 = vmatmul.mubr.f32.gmra.mrb[0].mxu0 %v2138
      %v2216 = vpop.f32.mrb[0].mxu0
      %v2217 = vadd.f32 0.0, %v2216
      %v2218 = vpop.f32.mrb[0].mxu0
      %2219 = vmatprep.mubr.f32.mxu0 0.0
      %2220 = vmatmul.mubr.f32.gmra.mrb[0].mxu0 %v2140
      %v2221 = vpop.f32.mrb[0].mxu0
      %v2222 = vadd.f32 0.0, %v2221
      %v2223 = vpop.f32.mrb[0].mxu0
      %2224 = vmatprep.mubr.f32.mxu0 0.0
      %2225 = vmatmul.mubr.f32.gmra.mrb[0].mxu0 %v2142
      %v2226 = vpop.f32.mrb[0].mxu0
      %v2227 = vadd.f32 0.0, %v2226
      %v2228 = vpop.f32.mrb[0].mxu0
      %2229 = vdwg.mxu0
      %v2230 = vsel %vm904, %v2217, -inf
      %2231 = vmax.xlane.f32.xlu0 %v2230
      %v2232 = vpop.xlane.xlu0 %2231
      %v2233 = vsel %vm904, %v2222, -inf
      %2234 = vmax.xlane.f32.xlu0 %v2233
      %v2235 = vpop.xlane.xlu0 %2234
      %v2236 = vsel %vm911, %v2227, -inf
      %2237 = vmax.xlane.f32.xlu0 %v2236
      %v2238 = vpop.xlane.xlu0 %2237
      %v2239 = vsub.f32 %v2217, %v2232
      %v2240 = vsub.f32 %v2222, %v2235
      %v2241 = vsub.f32 %v2227, %v2238
      %v2242 = vmul.f32 %v2239, 1.442695
      %v2243 = vpow.pop %v2242
      %v2244 = vmul.f32 %v2240, 1.442695
      %v2245 = vpow.pop %v2244
      %v2246 = vmul.f32 %v2241, 1.442695
      %v2247 = vpow.pop %v2246
      %v2248 = vsel %vm904, %v2243, 0.0
      %2249 = vadd.xlane.f32.xlu0 %v2248
      %v2250 = vpop.xlane.xlu0 %2249
      %v2251 = vsel %vm904, %v2245, 0.0
      %2252 = vadd.xlane.f32.xlu0 %v2251
      %v2253 = vpop.xlane.xlu0 %2252
      %v2254 = vsel %vm911, %v2247, 0.0
      %2255 = vadd.xlane.f32.xlu0 %v2254
      %v2256 = vpop.xlane.xlu0 %2255
      %v2257 = vrcp.pop %v2250
      %v2258 = vrcp.pop %v2253
      %v2259 = vrcp.pop %v2256
      %v2260 = vmul.f32 %v2243, %v2257
      %v2261 = vmul.f32 %v2245, %v2258
      %v2262 = vmul.f32 %v2247, %v2259
      %2263 = vrot.lane.b32.xlu0 %v2135, 96
      %v2264 = vpop.permute.xlu0 %2263
      %2265 = vrot.lane.b32.xlu0 %v2137, 96
      %v2266 = vpop.permute.xlu0 %2265
      %2267 = vrot.lane.b32.xlu0 %v2136, 96
      %v2268 = vpop.permute.xlu0 %2267
      %v2272 = vsel %vm904, %v2260, 0
      %v2275 = vsel %vm904, %v2261, 0
      %v2278 = vsel %vm904, %v2262, 0
      %v2280 = vsel %vm956, %v2268, 0
      %2282 = vmatprep.subr.mxu0 0.0
      %2283 = vmatpush1.msra.mxu0 %v2264
      %2284 = vmatprep.subr.mxu0 0.0
      %2285 = vmatpush1.msra.mxu0 %v2266
      %2286 = vmatprep.subr.mxu0 0.0
      %2287 = vmatpush1.msra.mxu0 %v2280
      %2288 = vmatprep.subr.mxu0 0.0
      %2289 = vmatpush1.msra.mxu0 0.0
      %2290 = vmatprep.subr.mxu0 0.0
      %2291 = vmatpush1.msra.mxu0 0.0
      %2292 = vmatprep.subr.mxu0 0.0
      %2293 = vmatpush1.msra.mxu0 0.0
      %2294 = vmatprep.subr.mxu0 0.0
      %2295 = vmatpush1.msra.mxu0 0.0
      %2296 = vmatprep.subr.mxu0 0.0
      %2297 = vmatpush1.msra.mxu0 0.0
      %2298 = vmatprep.subr.mxu0 0.0
      %2299 = vmatpush1.msra.mxu0 0.0
      %2300 = vmatprep.subr.mxu0 0.0
      %2301 = vmatpush1.msra.mxu0 0.0
      %2302 = vmatprep.subr.mxu0 0.0
      %2303 = vmatpush1.msra.mxu0 0.0
      %2304 = vmatprep.subr.mxu0 0.0
      %2305 = vmatpush1.msra.mxu0 0.0
      %2306 = vmatprep.subr.mxu0 0.0
      %2307 = vmatpush1.msra.mxu0 0.0
      %2308 = vmatprep.subr.mxu0 0.0
      %2309 = vmatpush1.msra.mxu0 0.0
      %2310 = vmatprep.subr.mxu0 0.0
      %2311 = vmatpush1.msra.mxu0 0.0
      %2312 = vmatprep.subr.mxu0 0.0
      %2313 = vmatpush1.msra.mxu0 0.0
      %2314 = vmatprep.subr.mxu0 0.0
      %2315 = vmatpush1.msra.mxu0 0.0
      %2316 = vmatprep.subr.mxu0 0.0
      %2317 = vmatpush1.msra.mxu0 0.0
      %2318 = vmatprep.subr.mxu0 0.0
      %2319 = vmatpush1.msra.mxu0 0.0
      %2320 = vmatprep.subr.mxu0 0.0
      %2321 = vmatpush1.msra.mxu0 0.0
      %2322 = vmatprep.subr.mxu0 0.0
      %2323 = vmatpush1.msra.mxu0 0.0
      %2324 = vmatprep.subr.mxu0 0.0
      %2325 = vmatpush1.msra.mxu0 0.0
      %2326 = vmatprep.subr.mxu0 0.0
      %2327 = vmatpush1.msra.mxu0 0.0
      %2328 = vmatprep.subr.mxu0 0.0
      %2329 = vmatpush1.msra.mxu0 0.0
      %2330 = vmatprep.subr.mxu0 0.0
      %2331 = vmatpush1.msra.mxu0 0.0
      %2332 = vmatprep.subr.mxu0 0.0
      %2333 = vmatpush1.msra.mxu0 0.0
      %2334 = vmatprep.subr.mxu0 0.0
      %2335 = vmatpush1.msra.mxu0 0.0
      %2336 = vmatprep.subr.mxu0 0.0
      %2337 = vmatpush1.msra.mxu0 0.0
      %2338 = vmatprep.subr.mxu0 0.0
      %2339 = vmatpush1.msra.mxu0 0.0
      %2340 = vmatprep.subr.mxu0 0.0
      %2341 = vmatpush1.msra.mxu0 0.0
      %2342 = vmatprep.subr.mxu0 0.0
      %2343 = vmatpush1.msra.mxu0 0.0
      %2344 = vmatprep.subr.mxu0 0.0
      %2345 = vmatpush1.msra.mxu0 0.0
      %2346 = vmatprep.mubr.f32.mxu0 0.0
      %2347 = vmatmul.mubr.f32.gmra.mrb[0].mxu0 %v2272
      %v2348 = vpop.f32.mrb[0].mxu0
      %v2349 = vadd.f32 0.0, %v2348
      %v2350 = vpop.f32.mrb[0].mxu0
      %2351 = vmatprep.mubr.f32.mxu0 0.0
      %2352 = vmatmul.mubr.f32.gmra.mrb[0].mxu0 %v2275
      %v2353 = vpop.f32.mrb[0].mxu0
      %v2354 = vadd.f32 0.0, %v2353
      %v2355 = vpop.f32.mrb[0].mxu0
      %2356 = vmatprep.mubr.f32.mxu0 0.0
      %2357 = vmatmul.mubr.f32.gmra.mrb[0].mxu0 %v2278
      %v2358 = vpop.f32.mrb[0].mxu0
      %v2359 = vadd.f32 0.0, %v2358
      %v2360 = vpop.f32.mrb[0].mxu0
      %2361 = vdwg.mxu0
      %2362 = vrot.lane.b32.xlu0 %v2128, 120
      %v2363 = vpop.permute.xlu0 %2362
      %2364 = vrot.lane.b32.xlu0 %v2130, 120
      %v2365 = vpop.permute.xlu0 %2364
      %2366 = vrot.lane.b32.xlu0 %v2129, 120
      %v2367 = vpop.permute.xlu0 %2366
      %2368 = vrot.lane.b32.xlu0 %v2135, 120
      %v2369 = vpop.permute.xlu0 %2368
      %2370 = vrot.lane.b32.xlu0 %v2137, 120
      %v2371 = vpop.permute.xlu0 %2370
      %2372 = vrot.lane.b32.xlu0 %v2136, 120
      %v2373 = vpop.permute.xlu0 %2372
      %v2374 = vsel %vm805, %v2363, 0
      %v2376 = vsel %vm805, %v2365, 0
      %v2378 = vsel %vm805, %v2367, 0
      %v2380 = vsel %vm805, %v2369, 0
      %v2382 = vsel %vm805, %v2371, 0
      %v2384 = vsel %vm805, %v2373, 0
      %2386 = vmatprep.subr.mxu0 0.0
      %2387 = vmatpush1.xpose.msra.mxu0 %v2380
      %2388 = vmatprep.subr.mxu0 0.0
      %2389 = vmatpush1.xpose.msra.mxu0 %v2382
      %2390 = vmatprep.subr.mxu0 0.0
      %2391 = vmatpush1.xpose.msra.mxu0 %v2384
      %2392 = vmatprep.subr.mxu0 0.0
      %2393 = vmatpush1.xpose.msra.mxu0 0.0
      %2394 = vmatprep.subr.mxu0 0.0
      %2395 = vmatpush1.xpose.msra.mxu0 0.0
      %2396 = vmatprep.subr.mxu0 0.0
      %2397 = vmatpush1.xpose.msra.mxu0 0.0
      %2398 = vmatprep.subr.mxu0 0.0
      %2399 = vmatpush1.xpose.msra.mxu0 0.0
      %2400 = vmatprep.subr.mxu0 0.0
      %2401 = vmatpush1.xpose.msra.mxu0 0.0
      %2402 = vmatprep.subr.mxu0 0.0
      %2403 = vmatpush1.xpose.msra.mxu0 0.0
      %2404 = vmatprep.subr.mxu0 0.0
      %2405 = vmatpush1.xpose.msra.mxu0 0.0
      %2406 = vmatprep.subr.mxu0 0.0
      %2407 = vmatpush1.xpose.msra.mxu0 0.0
      %2408 = vmatprep.subr.mxu0 0.0
      %2409 = vmatpush1.xpose.msra.mxu0 0.0
      %2410 = vmatprep.subr.mxu0 0.0
      %2411 = vmatpush1.xpose.msra.mxu0 0.0
      %2412 = vmatprep.subr.mxu0 0.0
      %2413 = vmatpush1.xpose.msra.mxu0 0.0
      %2414 = vmatprep.subr.mxu0 0.0
      %2415 = vmatpush1.xpose.msra.mxu0 0.0
      %2416 = vmatprep.subr.mxu0 0.0
      %2417 = vmatpush1.xpose.msra.mxu0 0.0
      %2418 = vmatprep.subr.mxu0 0.0
      %2419 = vmatpush1.xpose.msra.mxu0 0.0
      %2420 = vmatprep.subr.mxu0 0.0
      %2421 = vmatpush1.xpose.msra.mxu0 0.0
      %2422 = vmatprep.subr.mxu0 0.0
      %2423 = vmatpush1.xpose.msra.mxu0 0.0
      %2424 = vmatprep.subr.mxu0 0.0
      %2425 = vmatpush1.xpose.msra.mxu0 0.0
      %2426 = vmatprep.subr.mxu0 0.0
      %2427 = vmatpush1.xpose.msra.mxu0 0.0
      %2428 = vmatprep.subr.mxu0 0.0
      %2429 = vmatpush1.xpose.msra.mxu0 0.0
      %2430 = vmatprep.subr.mxu0 0.0
      %2431 = vmatpush1.xpose.msra.mxu0 0.0
      %2432 = vmatprep.subr.mxu0 0.0
      %2433 = vmatpush1.xpose.msra.mxu0 0.0
      %2434 = vmatprep.subr.mxu0 0.0
      %2435 = vmatpush1.xpose.msra.mxu0 0.0
      %2436 = vmatprep.subr.mxu0 0.0
      %2437 = vmatpush1.xpose.msra.mxu0 0.0
      %2438 = vmatprep.subr.mxu0 0.0
      %2439 = vmatpush1.xpose.msra.mxu0 0.0
      %2440 = vmatprep.subr.mxu0 0.0
      %2441 = vmatpush1.xpose.msra.mxu0 0.0
      %2442 = vmatprep.subr.mxu0 0.0
      %2443 = vmatpush1.xpose.msra.mxu0 0.0
      %2444 = vmatprep.subr.mxu0 0.0
      %2445 = vmatpush1.xpose.msra.mxu0 0.0
      %2446 = vmatprep.subr.mxu0 0.0
      %2447 = vmatpush1.xpose.msra.mxu0 0.0
      %2448 = vmatprep.subr.mxu0 0.0
      %2449 = vmatpush1.xpose.msra.mxu0 0.0
      %2450 = vmatprep.mubr.f32.mxu0 0.0
      %2451 = vmatmul.mubr.f32.gmra.mrb[0].mxu0 %v2374
      %v2452 = vpop.f32.mrb[0].mxu0
      %v2453 = vadd.f32 0.0, %v2452
      %v2454 = vpop.f32.mrb[0].mxu0
      %2455 = vmatprep.mubr.f32.mxu0 0.0
      %2456 = vmatmul.mubr.f32.gmra.mrb[0].mxu0 %v2376
      %v2457 = vpop.f32.mrb[0].mxu0
      %v2458 = vadd.f32 0.0, %v2457
      %v2459 = vpop.f32.mrb[0].mxu0
      %2460 = vmatprep.mubr.f32.mxu0 0.0
      %2461 = vmatmul.mubr.f32.gmra.mrb[0].mxu0 %v2378
      %v2462 = vpop.f32.mrb[0].mxu0
      %v2463 = vadd.f32 0.0, %v2462
      %v2464 = vpop.f32.mrb[0].mxu0
      %2465 = vdwg.mxu0
      %v2466 = vsel %vm904, %v2453, -inf
      %2467 = vmax.xlane.f32.xlu0 %v2466
      %v2468 = vpop.xlane.xlu0 %2467
      %v2469 = vsel %vm904, %v2458, -inf
      %2470 = vmax.xlane.f32.xlu0 %v2469
      %v2471 = vpop.xlane.xlu0 %2470
      %v2472 = vsel %vm911, %v2463, -inf
      %2473 = vmax.xlane.f32.xlu0 %v2472
      %v2474 = vpop.xlane.xlu0 %2473
      %v2475 = vsub.f32 %v2453, %v2468
      %v2476 = vsub.f32 %v2458, %v2471
      %v2477 = vsub.f32 %v2463, %v2474
      %v2478 = vmul.f32 %v2475, 1.442695
      %v2479 = vpow.pop %v2478
      %v2480 = vmul.f32 %v2476, 1.442695
      %v2481 = vpow.pop %v2480
      %v2482 = vmul.f32 %v2477, 1.442695
      %v2483 = vpow.pop %v2482
      %v2484 = vsel %vm904, %v2479, 0.0
      %2485 = vadd.xlane.f32.xlu0 %v2484
      %v2486 = vpop.xlane.xlu0 %2485
      %v2487 = vsel %vm904, %v2481, 0.0
      %2488 = vadd.xlane.f32.xlu0 %v2487
      %v2489 = vpop.xlane.xlu0 %2488
      %v2490 = vsel %vm911, %v2483, 0.0
      %2491 = vadd.xlane.f32.xlu0 %v2490
      %v2492 = vpop.xlane.xlu0 %2491
      %v2493 = vrcp.pop %v2486
      %v2494 = vrcp.pop %v2489
      %v2495 = vrcp.pop %v2492
      %v2496 = vmul.f32 %v2479, %v2493
      %v2497 = vmul.f32 %v2481, %v2494
      %v2498 = vmul.f32 %v2483, %v2495
      %2499 = vrot.lane.b32.xlu0 %v2135, 88
      %v2500 = vpop.permute.xlu0 %2499
      %2501 = vrot.lane.b32.xlu0 %v2137, 88
      %v2502 = vpop.permute.xlu0 %2501
      %2503 = vrot.lane.b32.xlu0 %v2136, 88
      %v2504 = vpop.permute.xlu0 %2503
      %v2508 = vsel %vm904, %v2496, 0
      %v2511 = vsel %vm904, %v2497, 0
      %v2514 = vsel %vm904, %v2498, 0
      %v2516 = vsel %vm956, %v2504, 0
      %2518 = vmatprep.subr.mxu0 0.0
      %2519 = vmatpush1.msra.mxu0 %v2500
      %2520 = vmatprep.subr.mxu0 0.0
      %2521 = vmatpush1.msra.mxu0 %v2502
      %2522 = vmatprep.subr.mxu0 0.0
      %2523 = vmatpush1.msra.mxu0 %v2516
      %2524 = vmatprep.subr.mxu0 0.0
      %2525 = vmatpush1.msra.mxu0 0.0
      %2526 = vmatprep.subr.mxu0 0.0
      %2527 = vmatpush1.msra.mxu0 0.0
      %2528 = vmatprep.subr.mxu0 0.0
      %2529 = vmatpush1.msra.mxu0 0.0
      %2530 = vmatprep.subr.mxu0 0.0
      %2531 = vmatpush1.msra.mxu0 0.0
      %2532 = vmatprep.subr.mxu0 0.0
      %2533 = vmatpush1.msra.mxu0 0.0
      %2534 = vmatprep.subr.mxu0 0.0
      %2535 = vmatpush1.msra.mxu0 0.0
      %2536 = vmatprep.subr.mxu0 0.0
      %2537 = vmatpush1.msra.mxu0 0.0
      %2538 = vmatprep.subr.mxu0 0.0
      %2539 = vmatpush1.msra.mxu0 0.0
      %2540 = vmatprep.subr.mxu0 0.0
      %2541 = vmatpush1.msra.mxu0 0.0
      %2542 = vmatprep.subr.mxu0 0.0
      %2543 = vmatpush1.msra.mxu0 0.0
      %2544 = vmatprep.subr.mxu0 0.0
      %2545 = vmatpush1.msra.mxu0 0.0
      %2546 = vmatprep.subr.mxu0 0.0
      %2547 = vmatpush1.msra.mxu0 0.0
      %2548 = vmatprep.subr.mxu0 0.0
      %2549 = vmatpush1.msra.mxu0 0.0
      %2550 = vmatprep.subr.mxu0 0.0
      %2551 = vmatpush1.msra.mxu0 0.0
      %2552 = vmatprep.subr.mxu0 0.0
      %2553 = vmatpush1.msra.mxu0 0.0
      %2554 = vmatprep.subr.mxu0 0.0
      %2555 = vmatpush1.msra.mxu0 0.0
      %2556 = vmatprep.subr.mxu0 0.0
      %2557 = vmatpush1.msra.mxu0 0.0
      %2558 = vmatprep.subr.mxu0 0.0
      %2559 = vmatpush1.msra.mxu0 0.0
      %2560 = vmatprep.subr.mxu0 0.0
      %2561 = vmatpush1.msra.mxu0 0.0
      %2562 = vmatprep.subr.mxu0 0.0
      %2563 = vmatpush1.msra.mxu0 0.0
      %2564 = vmatprep.subr.mxu0 0.0
      %2565 = vmatpush1.msra.mxu0 0.0
      %2566 = vmatprep.subr.mxu0 0.0
      %2567 = vmatpush1.msra.mxu0 0.0
      %2568 = vmatprep.subr.mxu0 0.0
      %2569 = vmatpush1.msra.mxu0 0.0
      %2570 = vmatprep.subr.mxu0 0.0
      %2571 = vmatpush1.msra.mxu0 0.0
      %2572 = vmatprep.subr.mxu0 0.0
      %2573 = vmatpush1.msra.mxu0 0.0
      %2574 = vmatprep.subr.mxu0 0.0
      %2575 = vmatpush1.msra.mxu0 0.0
      %2576 = vmatprep.subr.mxu0 0.0
      %2577 = vmatpush1.msra.mxu0 0.0
      %2578 = vmatprep.subr.mxu0 0.0
      %2579 = vmatpush1.msra.mxu0 0.0
      %2580 = vmatprep.subr.mxu0 0.0
      %2581 = vmatpush1.msra.mxu0 0.0
      %2582 = vmatprep.mubr.f32.mxu0 0.0
      %2583 = vmatmul.mubr.f32.gmra.mrb[0].mxu0 %v2508
      %v2584 = vpop.f32.mrb[0].mxu0
      %v2585 = vadd.f32 0.0, %v2584
      %v2586 = vpop.f32.mrb[0].mxu0
      %2587 = vmatprep.mubr.f32.mxu0 0.0
      %2588 = vmatmul.mubr.f32.gmra.mrb[0].mxu0 %v2511
      %v2589 = vpop.f32.mrb[0].mxu0
      %v2590 = vadd.f32 0.0, %v2589
      %v2591 = vpop.f32.mrb[0].mxu0
      %2592 = vmatprep.mubr.f32.mxu0 0.0
      %2593 = vmatmul.mubr.f32.gmra.mrb[0].mxu0 %v2514
      %v2594 = vpop.f32.mrb[0].mxu0
      %v2595 = vadd.f32 0.0, %v2594
      %v2596 = vpop.f32.mrb[0].mxu0
      %2597 = vdwg.mxu0
      %v2599 = vsel %vm805, %v2585, 0
      %v2602 = vsel %vm805, %v2590, 0
      %v2605 = vsel %vm805, %v2595, 0
      %2607 = vmatprep.subr.mxu0 0.0
      %2608 = vmatpush1.msra.mxu0 %v1276
      %2609 = vmatprep.subr.mxu0 0.0
      %2610 = vmatpush1.msra.mxu0 0.0
      %2611 = vmatprep.subr.mxu0 0.0
      %2612 = vmatpush1.msra.mxu0 0.0
      %2613 = vmatprep.subr.mxu0 0.0
      %2614 = vmatpush1.msra.mxu0 0.0
      %2615 = vmatprep.subr.mxu0 0.0
      %2616 = vmatpush1.msra.mxu0 0.0
      %2617 = vmatprep.subr.mxu0 0.0
      %2618 = vmatpush1.msra.mxu0 0.0
      %2619 = vmatprep.subr.mxu0 0.0
      %2620 = vmatpush1.msra.mxu0 0.0
      %2621 = vmatprep.subr.mxu0 0.0
      %2622 = vmatpush1.msra.mxu0 0.0
      %2623 = vmatprep.subr.mxu0 0.0
      %2624 = vmatpush1.msra.mxu0 0.0
      %2625 = vmatprep.subr.mxu0 0.0
      %2626 = vmatpush1.msra.mxu0 0.0
      %2627 = vmatprep.subr.mxu0 0.0
      %2628 = vmatpush1.msra.mxu0 0.0
      %2629 = vmatprep.subr.mxu0 0.0
      %2630 = vmatpush1.msra.mxu0 0.0
      %2631 = vmatprep.subr.mxu0 0.0
      %2632 = vmatpush1.msra.mxu0 0.0
      %2633 = vmatprep.subr.mxu0 0.0
      %2634 = vmatpush1.msra.mxu0 0.0
      %2635 = vmatprep.subr.mxu0 0.0
      %2636 = vmatpush1.msra.mxu0 0.0
      %2637 = vmatprep.subr.mxu0 0.0
      %2638 = vmatpush1.msra.mxu0 0.0
      %2639 = vmatprep.subr.mxu0 0.0
      %2640 = vmatpush1.msra.mxu0 0.0
      %2641 = vmatprep.subr.mxu0 0.0
      %2642 = vmatpush1.msra.mxu0 0.0
      %2643 = vmatprep.subr.mxu0 0.0
      %2644 = vmatpush1.msra.mxu0 0.0
      %2645 = vmatprep.subr.mxu0 0.0
      %2646 = vmatpush1.msra.mxu0 0.0
      %2647 = vmatprep.subr.mxu0 0.0
      %2648 = vmatpush1.msra.mxu0 0.0
      %2649 = vmatprep.subr.mxu0 0.0
      %2650 = vmatpush1.msra.mxu0 0.0
      %2651 = vmatprep.subr.mxu0 0.0
      %2652 = vmatpush1.msra.mxu0 0.0
      %2653 = vmatprep.subr.mxu0 0.0
      %2654 = vmatpush1.msra.mxu0 0.0
      %2655 = vmatprep.subr.mxu0 0.0
      %2656 = vmatpush1.msra.mxu0 0.0
      %2657 = vmatprep.subr.mxu0 0.0
      %2658 = vmatpush1.msra.mxu0 0.0
      %2659 = vmatprep.subr.mxu0 0.0
      %2660 = vmatpush1.msra.mxu0 0.0
      %2661 = vmatprep.subr.mxu0 0.0
      %2662 = vmatpush1.msra.mxu0 0.0
      %2663 = vmatprep.subr.mxu0 0.0
      %2664 = vmatpush1.msra.mxu0 0.0
      %2665 = vmatprep.subr.mxu0 0.0
      %2666 = vmatpush1.msra.mxu0 0.0
      %2667 = vmatprep.subr.mxu0 0.0
      %2668 = vmatpush1.msra.mxu0 0.0
      %2669 = vmatprep.subr.mxu0 0.0
      %2670 = vmatpush1.msra.mxu0 0.0
      %2671 = vmatprep.mubr.f32.mxu0 0.0
      %2672 = vmatmul.mubr.f32.gmra.mrb[0].mxu0 %v2599
      %v2673 = vpop.f32.mrb[0].mxu0
      %v2674 = vadd.f32 0.0, %v2673
      %v2675 = vpop.f32.mrb[0].mxu0
      %2676 = vmatprep.mubr.f32.mxu0 0.0
      %2677 = vmatmul.mubr.f32.gmra.mrb[0].mxu0 %v2602
      %v2678 = vpop.f32.mrb[0].mxu0
      %v2679 = vadd.f32 0.0, %v2678
      %v2680 = vpop.f32.mrb[0].mxu0
      %2681 = vmatprep.mubr.f32.mxu0 0.0
      %2682 = vmatmul.mubr.f32.gmra.mrb[0].mxu0 %v2605
      %v2683 = vpop.f32.mrb[0].mxu0
      %v2684 = vadd.f32 0.0, %v2683
      %v2685 = vpop.f32.mrb[0].mxu0
      %2686 = vdwg.mxu0
      %v2688 = vsel %vm805, %v2349, 0
      %v2691 = vsel %vm805, %v2354, 0
      %v2694 = vsel %vm805, %v2359, 0
      %2696 = vmatprep.subr.mxu0 0.0
      %2697 = vmatpush1.msra.mxu0 %v1368
      %2698 = vmatprep.subr.mxu0 0.0
      %2699 = vmatpush1.msra.mxu0 0.0
      %2700 = vmatprep.subr.mxu0 0.0
      %2701 = vmatpush1.msra.mxu0 0.0
      %2702 = vmatprep.subr.mxu0 0.0
      %2703 = vmatpush1.msra.mxu0 0.0
      %2704 = vmatprep.subr.mxu0 0.0
      %2705 = vmatpush1.msra.mxu0 0.0
      %2706 = vmatprep.subr.mxu0 0.0
      %2707 = vmatpush1.msra.mxu0 0.0
      %2708 = vmatprep.subr.mxu0 0.0
      %2709 = vmatpush1.msra.mxu0 0.0
      %2710 = vmatprep.subr.mxu0 0.0
      %2711 = vmatpush1.msra.mxu0 0.0
      %2712 = vmatprep.subr.mxu0 0.0
      %2713 = vmatpush1.msra.mxu0 0.0
      %2714 = vmatprep.subr.mxu0 0.0
      %2715 = vmatpush1.msra.mxu0 0.0
      %2716 = vmatprep.subr.mxu0 0.0
      %2717 = vmatpush1.msra.mxu0 0.0
      %2718 = vmatprep.subr.mxu0 0.0
      %2719 = vmatpush1.msra.mxu0 0.0
      %2720 = vmatprep.subr.mxu0 0.0
      %2721 = vmatpush1.msra.mxu0 0.0
      %2722 = vmatprep.subr.mxu0 0.0
      %2723 = vmatpush1.msra.mxu0 0.0
      %2724 = vmatprep.subr.mxu0 0.0
      %2725 = vmatpush1.msra.mxu0 0.0
      %2726 = vmatprep.subr.mxu0 0.0
      %2727 = vmatpush1.msra.mxu0 0.0
      %2728 = vmatprep.subr.mxu0 0.0
      %2729 = vmatpush1.msra.mxu0 0.0
      %2730 = vmatprep.subr.mxu0 0.0
      %2731 = vmatpush1.msra.mxu0 0.0
      %2732 = vmatprep.subr.mxu0 0.0
      %2733 = vmatpush1.msra.mxu0 0.0
      %2734 = vmatprep.subr.mxu0 0.0
      %2735 = vmatpush1.msra.mxu0 0.0
      %2736 = vmatprep.subr.mxu0 0.0
      %2737 = vmatpush1.msra.mxu0 0.0
      %2738 = vmatprep.subr.mxu0 0.0
      %2739 = vmatpush1.msra.mxu0 0.0
      %2740 = vmatprep.subr.mxu0 0.0
      %2741 = vmatpush1.msra.mxu0 0.0
      %2742 = vmatprep.subr.mxu0 0.0
      %2743 = vmatpush1.msra.mxu0 0.0
      %2744 = vmatprep.subr.mxu0 0.0
      %2745 = vmatpush1.msra.mxu0 0.0
      %2746 = vmatprep.subr.mxu0 0.0
      %2747 = vmatpush1.msra.mxu0 0.0
      %2748 = vmatprep.subr.mxu0 0.0
      %2749 = vmatpush1.msra.mxu0 0.0
      %2750 = vmatprep.subr.mxu0 0.0
      %2751 = vmatpush1.msra.mxu0 0.0
      %2752 = vmatprep.subr.mxu0 0.0
      %2753 = vmatpush1.msra.mxu0 0.0
      %2754 = vmatprep.subr.mxu0 0.0
      %2755 = vmatpush1.msra.mxu0 0.0
      %2756 = vmatprep.subr.mxu0 0.0
      %2757 = vmatpush1.msra.mxu0 0.0
      %2758 = vmatprep.subr.mxu0 0.0
      %2759 = vmatpush1.msra.mxu0 0.0
      %2760 = vmatprep.mubr.f32.mxu0 0.0
      %2761 = vmatmul.mubr.f32.gmra.mrb[0].mxu0 %v2688
      %v2762 = vpop.f32.mrb[0].mxu0
      %v2763 = vadd.f32 %v2674, %v2762
      %v2764 = vpop.f32.mrb[0].mxu0
      %2765 = vmatprep.mubr.f32.mxu0 0.0
      %2766 = vmatmul.mubr.f32.gmra.mrb[0].mxu0 %v2691
      %v2767 = vpop.f32.mrb[0].mxu0
      %v2768 = vadd.f32 %v2679, %v2767
      %v2769 = vpop.f32.mrb[0].mxu0
      %2770 = vmatprep.mubr.f32.mxu0 0.0
      %2771 = vmatmul.mubr.f32.gmra.mrb[0].mxu0 %v2694
      %v2772 = vpop.f32.mrb[0].mxu0
      %v2773 = vadd.f32 %v2684, %v2772
      %v2774 = vpop.f32.mrb[0].mxu0
      %2775 = vdwg.mxu0
      %2776 = vrot.lane.b32.xlu0 %v2128, 112
      %v2777 = vpop.permute.xlu0 %2776
      %2778 = vrot.lane.b32.xlu0 %v2130, 112
      %v2779 = vpop.permute.xlu0 %2778
      %2780 = vrot.lane.b32.xlu0 %v2129, 112
      %v2781 = vpop.permute.xlu0 %2780
      %2782 = vrot.lane.b32.xlu0 %v2135, 112
      %v2783 = vpop.permute.xlu0 %2782
      %2784 = vrot.lane.b32.xlu0 %v2137, 112
      %v2785 = vpop.permute.xlu0 %2784
      %2786 = vrot.lane.b32.xlu0 %v2136, 112
      %v2787 = vpop.permute.xlu0 %2786
      %v2788 = vsel %vm805, %v2777, 0
      %v2790 = vsel %vm805, %v2779, 0
      %v2792 = vsel %vm805, %v2781, 0
      %v2794 = vsel %vm805, %v2783, 0
      %v2796 = vsel %vm805, %v2785, 0
      %v2798 = vsel %vm805, %v2787, 0
      %2800 = vmatprep.subr.mxu0 0.0
      %2801 = vmatpush1.xpose.msra.mxu0 %v2794
      %2802 = vmatprep.subr.mxu0 0.0
      %2803 = vmatpush1.xpose.msra.mxu0 %v2796
      %2804 = vmatprep.subr.mxu0 0.0
      %2805 = vmatpush1.xpose.msra.mxu0 %v2798
      %2806 = vmatprep.subr.mxu0 0.0
      %2807 = vmatpush1.xpose.msra.mxu0 0.0
      %2808 = vmatprep.subr.mxu0 0.0
      %2809 = vmatpush1.xpose.msra.mxu0 0.0
      %2810 = vmatprep.subr.mxu0 0.0
      %2811 = vmatpush1.xpose.msra.mxu0 0.0
      %2812 = vmatprep.subr.mxu0 0.0
      %2813 = vmatpush1.xpose.msra.mxu0 0.0
      %2814 = vmatprep.subr.mxu0 0.0
      %2815 = vmatpush1.xpose.msra.mxu0 0.0
      %2816 = vmatprep.subr.mxu0 0.0
      %2817 = vmatpush1.xpose.msra.mxu0 0.0
      %2818 = vmatprep.subr.mxu0 0.0
      %2819 = vmatpush1.xpose.msra.mxu0 0.0
      %2820 = vmatprep.subr.mxu0 0.0
      %2821 = vmatpush1.xpose.msra.mxu0 0.0
      %2822 = vmatprep.subr.mxu0 0.0
      %2823 = vmatpush1.xpose.msra.mxu0 0.0
      %2824 = vmatprep.subr.mxu0 0.0
      %2825 = vmatpush1.xpose.msra.mxu0 0.0
      %2826 = vmatprep.subr.mxu0 0.0
      %2827 = vmatpush1.xpose.msra.mxu0 0.0
      %2828 = vmatprep.subr.mxu0 0.0
      %2829 = vmatpush1.xpose.msra.mxu0 0.0
      %2830 = vmatprep.subr.mxu0 0.0
      %2831 = vmatpush1.xpose.msra.mxu0 0.0
      %2832 = vmatprep.subr.mxu0 0.0
      %2833 = vmatpush1.xpose.msra.mxu0 0.0
      %2834 = vmatprep.subr.mxu0 0.0
      %2835 = vmatpush1.xpose.msra.mxu0 0.0
      %2836 = vmatprep.subr.mxu0 0.0
      %2837 = vmatpush1.xpose.msra.mxu0 0.0
      %2838 = vmatprep.subr.mxu0 0.0
      %2839 = vmatpush1.xpose.msra.mxu0 0.0
      %2840 = vmatprep.subr.mxu0 0.0
      %2841 = vmatpush1.xpose.msra.mxu0 0.0
      %2842 = vmatprep.subr.mxu0 0.0
      %2843 = vmatpush1.xpose.msra.mxu0 0.0
      %2844 = vmatprep.subr.mxu0 0.0
      %2845 = vmatpush1.xpose.msra.mxu0 0.0
      %2846 = vmatprep.subr.mxu0 0.0
      %2847 = vmatpush1.xpose.msra.mxu0 0.0
      %2848 = vmatprep.subr.mxu0 0.0
      %2849 = vmatpush1.xpose.msra.mxu0 0.0
      %2850 = vmatprep.subr.mxu0 0.0
      %2851 = vmatpush1.xpose.msra.mxu0 0.0
      %2852 = vmatprep.subr.mxu0 0.0
      %2853 = vmatpush1.xpose.msra.mxu0 0.0
      %2854 = vmatprep.subr.mxu0 0.0
      %2855 = vmatpush1.xpose.msra.mxu0 0.0
      %2856 = vmatprep.subr.mxu0 0.0
      %2857 = vmatpush1.xpose.msra.mxu0 0.0
      %2858 = vmatprep.subr.mxu0 0.0
      %2859 = vmatpush1.xpose.msra.mxu0 0.0
      %2860 = vmatprep.subr.mxu0 0.0
      %2861 = vmatpush1.xpose.msra.mxu0 0.0
      %2862 = vmatprep.subr.mxu0 0.0
      %2863 = vmatpush1.xpose.msra.mxu0 0.0
      %2864 = vmatprep.mubr.f32.mxu0 0.0
      %2865 = vmatmul.mubr.f32.gmra.mrb[0].mxu0 %v2788
      %v2866 = vpop.f32.mrb[0].mxu0
      %v2867 = vadd.f32 0.0, %v2866
      %v2868 = vpop.f32.mrb[0].mxu0
      %2869 = vmatprep.mubr.f32.mxu0 0.0
      %2870 = vmatmul.mubr.f32.gmra.mrb[0].mxu0 %v2790
      %v2871 = vpop.f32.mrb[0].mxu0
      %v2872 = vadd.f32 0.0, %v2871
      %v2873 = vpop.f32.mrb[0].mxu0
      %2874 = vmatprep.mubr.f32.mxu0 0.0
      %2875 = vmatmul.mubr.f32.gmra.mrb[0].mxu0 %v2792
      %v2876 = vpop.f32.mrb[0].mxu0
      %v2877 = vadd.f32 0.0, %v2876
      %v2878 = vpop.f32.mrb[0].mxu0
      %2879 = vdwg.mxu0
      %v2880 = vsel %vm904, %v2867, -inf
      %2881 = vmax.xlane.f32.xlu0 %v2880
      %v2882 = vpop.xlane.xlu0 %2881
      %v2883 = vsel %vm904, %v2872, -inf
      %2884 = vmax.xlane.f32.xlu0 %v2883
      %v2885 = vpop.xlane.xlu0 %2884
      %v2886 = vsel %vm911, %v2877, -inf
      %2887 = vmax.xlane.f32.xlu0 %v2886
      %v2888 = vpop.xlane.xlu0 %2887
      %v2889 = vsub.f32 %v2867, %v2882
      %v2890 = vsub.f32 %v2872, %v2885
      %v2891 = vsub.f32 %v2877, %v2888
      %v2892 = vmul.f32 %v2889, 1.442695
      %v2893 = vpow.pop %v2892
      %v2894 = vmul.f32 %v2890, 1.442695
      %v2895 = vpow.pop %v2894
      %v2896 = vmul.f32 %v2891, 1.442695
      %v2897 = vpow.pop %v2896
      %v2898 = vsel %vm904, %v2893, 0.0
      %2899 = vadd.xlane.f32.xlu0 %v2898
      %v2900 = vpop.xlane.xlu0 %2899
      %v2901 = vsel %vm904, %v2895, 0.0
      %2902 = vadd.xlane.f32.xlu0 %v2901
      %v2903 = vpop.xlane.xlu0 %2902
      %v2904 = vsel %vm911, %v2897, 0.0
      %2905 = vadd.xlane.f32.xlu0 %v2904
      %v2906 = vpop.xlane.xlu0 %2905
      %v2907 = vrcp.pop %v2900
      %v2908 = vrcp.pop %v2903
      %v2909 = vrcp.pop %v2906
      %v2910 = vmul.f32 %v2893, %v2907
      %v2911 = vmul.f32 %v2895, %v2908
      %v2912 = vmul.f32 %v2897, %v2909
      %2913 = vrot.lane.b32.xlu0 %v2135, 80
      %v2914 = vpop.permute.xlu0 %2913
      %2915 = vrot.lane.b32.xlu0 %v2137, 80
      %v2916 = vpop.permute.xlu0 %2915
      %2917 = vrot.lane.b32.xlu0 %v2136, 80
      %v2918 = vpop.permute.xlu0 %2917
      %v2922 = vsel %vm904, %v2910, 0
      %v2925 = vsel %vm904, %v2911, 0
      %v2928 = vsel %vm904, %v2912, 0
      %v2930 = vsel %vm956, %v2918, 0
      %2932 = vmatprep.subr.mxu0 0.0
      %2933 = vmatpush1.msra.mxu0 %v2914
      %2934 = vmatprep.subr.mxu0 0.0
      %2935 = vmatpush1.msra.mxu0 %v2916
      %2936 = vmatprep.subr.mxu0 0.0
      %2937 = vmatpush1.msra.mxu0 %v2930
      %2938 = vmatprep.subr.mxu0 0.0
      %2939 = vmatpush1.msra.mxu0 0.0
      %2940 = vmatprep.subr.mxu0 0.0
      %2941 = vmatpush1.msra.mxu0 0.0
      %2942 = vmatprep.subr.mxu0 0.0
      %2943 = vmatpush1.msra.mxu0 0.0
      %2944 = vmatprep.subr.mxu0 0.0
      %2945 = vmatpush1.msra.mxu0 0.0
      %2946 = vmatprep.subr.mxu0 0.0
      %2947 = vmatpush1.msra.mxu0 0.0
      %2948 = vmatprep.subr.mxu0 0.0
      %2949 = vmatpush1.msra.mxu0 0.0
      %2950 = vmatprep.subr.mxu0 0.0
      %2951 = vmatpush1.msra.mxu0 0.0
      %2952 = vmatprep.subr.mxu0 0.0
      %2953 = vmatpush1.msra.mxu0 0.0
      %2954 = vmatprep.subr.mxu0 0.0
      %2955 = vmatpush1.msra.mxu0 0.0
      %2956 = vmatprep.subr.mxu0 0.0
      %2957 = vmatpush1.msra.mxu0 0.0
      %2958 = vmatprep.subr.mxu0 0.0
      %2959 = vmatpush1.msra.mxu0 0.0
      %2960 = vmatprep.subr.mxu0 0.0
      %2961 = vmatpush1.msra.mxu0 0.0
      %2962 = vmatprep.subr.mxu0 0.0
      %2963 = vmatpush1.msra.mxu0 0.0
      %2964 = vmatprep.subr.mxu0 0.0
      %2965 = vmatpush1.msra.mxu0 0.0
      %2966 = vmatprep.subr.mxu0 0.0
      %2967 = vmatpush1.msra.mxu0 0.0
      %2968 = vmatprep.subr.mxu0 0.0
      %2969 = vmatpush1.msra.mxu0 0.0
      %2970 = vmatprep.subr.mxu0 0.0
      %2971 = vmatpush1.msra.mxu0 0.0
      %2972 = vmatprep.subr.mxu0 0.0
      %2973 = vmatpush1.msra.mxu0 0.0
      %2974 = vmatprep.subr.mxu0 0.0
      %2975 = vmatpush1.msra.mxu0 0.0
      %2976 = vmatprep.subr.mxu0 0.0
      %2977 = vmatpush1.msra.mxu0 0.0
      %2978 = vmatprep.subr.mxu0 0.0
      %2979 = vmatpush1.msra.mxu0 0.0
      %2980 = vmatprep.subr.mxu0 0.0
      %2981 = vmatpush1.msra.mxu0 0.0
      %2982 = vmatprep.subr.mxu0 0.0
      %2983 = vmatpush1.msra.mxu0 0.0
      %2984 = vmatprep.subr.mxu0 0.0
      %2985 = vmatpush1.msra.mxu0 0.0
      %2986 = vmatprep.subr.mxu0 0.0
      %2987 = vmatpush1.msra.mxu0 0.0
      %2988 = vmatprep.subr.mxu0 0.0
      %2989 = vmatpush1.msra.mxu0 0.0
      %2990 = vmatprep.subr.mxu0 0.0
      %2991 = vmatpush1.msra.mxu0 0.0
      %2992 = vmatprep.subr.mxu0 0.0
      %2993 = vmatpush1.msra.mxu0 0.0
      %2994 = vmatprep.subr.mxu0 0.0
      %2995 = vmatpush1.msra.mxu0 0.0
      %2996 = vmatprep.mubr.f32.mxu0 0.0
      %2997 = vmatmul.mubr.f32.gmra.mrb[0].mxu0 %v2922
      %v2998 = vpop.f32.mrb[0].mxu0
      %v2999 = vadd.f32 0.0, %v2998
      %v3000 = vpop.f32.mrb[0].mxu0
      %3001 = vmatprep.mubr.f32.mxu0 0.0
      %3002 = vmatmul.mubr.f32.gmra.mrb[0].mxu0 %v2925
      %v3003 = vpop.f32.mrb[0].mxu0
      %v3004 = vadd.f32 0.0, %v3003
      %v3005 = vpop.f32.mrb[0].mxu0
      %3006 = vmatprep.mubr.f32.mxu0 0.0
      %3007 = vmatmul.mubr.f32.gmra.mrb[0].mxu0 %v2928
      %v3008 = vpop.f32.mrb[0].mxu0
      %v3009 = vadd.f32 0.0, %v3008
      %v3010 = vpop.f32.mrb[0].mxu0
      %3011 = vdwg.mxu0
      %v3013 = vsel %vm805, %v2999, 0
      %v3016 = vsel %vm805, %v3004, 0
      %v3019 = vsel %vm805, %v3009, 0
      %3021 = vmatprep.subr.mxu0 0.0
      %3022 = vmatpush1.msra.mxu0 %v1696
      %3023 = vmatprep.subr.mxu0 0.0
      %3024 = vmatpush1.msra.mxu0 0.0
      %3025 = vmatprep.subr.mxu0 0.0
      %3026 = vmatpush1.msra.mxu0 0.0
      %3027 = vmatprep.subr.mxu0 0.0
      %3028 = vmatpush1.msra.mxu0 0.0
      %3029 = vmatprep.subr.mxu0 0.0
      %3030 = vmatpush1.msra.mxu0 0.0
      %3031 = vmatprep.subr.mxu0 0.0
      %3032 = vmatpush1.msra.mxu0 0.0
      %3033 = vmatprep.subr.mxu0 0.0
      %3034 = vmatpush1.msra.mxu0 0.0
      %3035 = vmatprep.subr.mxu0 0.0
      %3036 = vmatpush1.msra.mxu0 0.0
      %3037 = vmatprep.subr.mxu0 0.0
      %3038 = vmatpush1.msra.mxu0 0.0
      %3039 = vmatprep.subr.mxu0 0.0
      %3040 = vmatpush1.msra.mxu0 0.0
      %3041 = vmatprep.subr.mxu0 0.0
      %3042 = vmatpush1.msra.mxu0 0.0
      %3043 = vmatprep.subr.mxu0 0.0
      %3044 = vmatpush1.msra.mxu0 0.0
      %3045 = vmatprep.subr.mxu0 0.0
      %3046 = vmatpush1.msra.mxu0 0.0
      %3047 = vmatprep.subr.mxu0 0.0
      %3048 = vmatpush1.msra.mxu0 0.0
      %3049 = vmatprep.subr.mxu0 0.0
      %3050 = vmatpush1.msra.mxu0 0.0
      %3051 = vmatprep.subr.mxu0 0.0
      %3052 = vmatpush1.msra.mxu0 0.0
      %3053 = vmatprep.subr.mxu0 0.0
      %3054 = vmatpush1.msra.mxu0 0.0
      %3055 = vmatprep.subr.mxu0 0.0
      %3056 = vmatpush1.msra.mxu0 0.0
      %3057 = vmatprep.subr.mxu0 0.0
      %3058 = vmatpush1.msra.mxu0 0.0
      %3059 = vmatprep.subr.mxu0 0.0
      %3060 = vmatpush1.msra.mxu0 0.0
      %3061 = vmatprep.subr.mxu0 0.0
      %3062 = vmatpush1.msra.mxu0 0.0
      %3063 = vmatprep.subr.mxu0 0.0
      %3064 = vmatpush1.msra.mxu0 0.0
      %3065 = vmatprep.subr.mxu0 0.0
      %3066 = vmatpush1.msra.mxu0 0.0
      %3067 = vmatprep.subr.mxu0 0.0
      %3068 = vmatpush1.msra.mxu0 0.0
      %3069 = vmatprep.subr.mxu0 0.0
      %3070 = vmatpush1.msra.mxu0 0.0
      %3071 = vmatprep.subr.mxu0 0.0
      %3072 = vmatpush1.msra.mxu0 0.0
      %3073 = vmatprep.subr.mxu0 0.0
      %3074 = vmatpush1.msra.mxu0 0.0
      %3075 = vmatprep.subr.mxu0 0.0
      %3076 = vmatpush1.msra.mxu0 0.0
      %3077 = vmatprep.subr.mxu0 0.0
      %3078 = vmatpush1.msra.mxu0 0.0
      %3079 = vmatprep.subr.mxu0 0.0
      %3080 = vmatpush1.msra.mxu0 0.0
      %3081 = vmatprep.subr.mxu0 0.0
      %3082 = vmatpush1.msra.mxu0 0.0
      %3083 = vmatprep.subr.mxu0 0.0
      %3084 = vmatpush1.msra.mxu0 0.0
      %3085 = vmatprep.mubr.f32.mxu0 0.0
      %3086 = vmatmul.mubr.f32.gmra.mrb[0].mxu0 %v3013
      %v3087 = vpop.f32.mrb[0].mxu0
      %v3088 = vadd.f32 0.0, %v3087
      %v3089 = vpop.f32.mrb[0].mxu0
      %3090 = vmatprep.mubr.f32.mxu0 0.0
      %3091 = vmatmul.mubr.f32.gmra.mrb[0].mxu0 %v3016
      %v3092 = vpop.f32.mrb[0].mxu0
      %v3093 = vadd.f32 0.0, %v3092
      %v3094 = vpop.f32.mrb[0].mxu0
      %3095 = vmatprep.mubr.f32.mxu0 0.0
      %3096 = vmatmul.mubr.f32.gmra.mrb[0].mxu0 %v3019
      %v3097 = vpop.f32.mrb[0].mxu0
      %v3098 = vadd.f32 0.0, %v3097
      %v3099 = vpop.f32.mrb[0].mxu0
      %3100 = vdwg.mxu0
      %v3101 = vadd.f32 %v2763, %v3088
      %v3102 = vadd.f32 %v2768, %v3093
      %v3103 = vadd.f32 %v2773, %v3098
      %3104 = vrot.lane.b32.xlu0 %v2128, 104
      %v3105 = vpop.permute.xlu0 %3104
      %3106 = vrot.lane.b32.xlu0 %v2130, 104
      %v3107 = vpop.permute.xlu0 %3106
      %3108 = vrot.lane.b32.xlu0 %v2129, 104
      %v3109 = vpop.permute.xlu0 %3108
      %3110 = vrot.lane.b32.xlu0 %v2135, 104
      %v3111 = vpop.permute.xlu0 %3110
      %3112 = vrot.lane.b32.xlu0 %v2137, 104
      %v3113 = vpop.permute.xlu0 %3112
      %3114 = vrot.lane.b32.xlu0 %v2136, 104
      %v3115 = vpop.permute.xlu0 %3114
      %v3116 = vsel %vm805, %v3105, 0
      %v3118 = vsel %vm805, %v3107, 0
      %v3120 = vsel %vm805, %v3109, 0
      %v3122 = vsel %vm805, %v3111, 0
      %v3124 = vsel %vm805, %v3113, 0
      %v3126 = vsel %vm805, %v3115, 0
      %3128 = vmatprep.subr.mxu0 0.0
      %3129 = vmatpush1.xpose.msra.mxu0 %v3122
      %3130 = vmatprep.subr.mxu0 0.0
      %3131 = vmatpush1.xpose.msra.mxu0 %v3124
      %3132 = vmatprep.subr.mxu0 0.0
      %3133 = vmatpush1.xpose.msra.mxu0 %v3126
      %3134 = vmatprep.subr.mxu0 0.0
      %3135 = vmatpush1.xpose.msra.mxu0 0.0
      %3136 = vmatprep.subr.mxu0 0.0
      %3137 = vmatpush1.xpose.msra.mxu0 0.0
      %3138 = vmatprep.subr.mxu0 0.0
      %3139 = vmatpush1.xpose.msra.mxu0 0.0
      %3140 = vmatprep.subr.mxu0 0.0
      %3141 = vmatpush1.xpose.msra.mxu0 0.0
      %3142 = vmatprep.subr.mxu0 0.0
      %3143 = vmatpush1.xpose.msra.mxu0 0.0
      %3144 = vmatprep.subr.mxu0 0.0
      %3145 = vmatpush1.xpose.msra.mxu0 0.0
      %3146 = vmatprep.subr.mxu0 0.0
      %3147 = vmatpush1.xpose.msra.mxu0 0.0
      %3148 = vmatprep.subr.mxu0 0.0
      %3149 = vmatpush1.xpose.msra.mxu0 0.0
      %3150 = vmatprep.subr.mxu0 0.0
      %3151 = vmatpush1.xpose.msra.mxu0 0.0
      %3152 = vmatprep.subr.mxu0 0.0
      %3153 = vmatpush1.xpose.msra.mxu0 0.0
      %3154 = vmatprep.subr.mxu0 0.0
      %3155 = vmatpush1.xpose.msra.mxu0 0.0
      %3156 = vmatprep.subr.mxu0 0.0
      %3157 = vmatpush1.xpose.msra.mxu0 0.0
      %3158 = vmatprep.subr.mxu0 0.0
      %3159 = vmatpush1.xpose.msra.mxu0 0.0
      %3160 = vmatprep.subr.mxu0 0.0
      %3161 = vmatpush1.xpose.msra.mxu0 0.0
      %3162 = vmatprep.subr.mxu0 0.0
      %3163 = vmatpush1.xpose.msra.mxu0 0.0
      %3164 = vmatprep.subr.mxu0 0.0
      %3165 = vmatpush1.xpose.msra.mxu0 0.0
      %3166 = vmatprep.subr.mxu0 0.0
      %3167 = vmatpush1.xpose.msra.mxu0 0.0
      %3168 = vmatprep.subr.mxu0 0.0
      %3169 = vmatpush1.xpose.msra.mxu0 0.0
      %3170 = vmatprep.subr.mxu0 0.0
      %3171 = vmatpush1.xpose.msra.mxu0 0.0
      %3172 = vmatprep.subr.mxu0 0.0
      %3173 = vmatpush1.xpose.msra.mxu0 0.0
      %3174 = vmatprep.subr.mxu0 0.0
      %3175 = vmatpush1.xpose.msra.mxu0 0.0
      %3176 = vmatprep.subr.mxu0 0.0
      %3177 = vmatpush1.xpose.msra.mxu0 0.0
      %3178 = vmatprep.subr.mxu0 0.0
      %3179 = vmatpush1.xpose.msra.mxu0 0.0
      %3180 = vmatprep.subr.mxu0 0.0
      %3181 = vmatpush1.xpose.msra.mxu0 0.0
      %3182 = vmatprep.subr.mxu0 0.0
      %3183 = vmatpush1.xpose.msra.mxu0 0.0
      %3184 = vmatprep.subr.mxu0 0.0
      %3185 = vmatpush1.xpose.msra.mxu0 0.0
      %3186 = vmatprep.subr.mxu0 0.0
      %3187 = vmatpush1.xpose.msra.mxu0 0.0
      %3188 = vmatprep.subr.mxu0 0.0
      %3189 = vmatpush1.xpose.msra.mxu0 0.0
      %3190 = vmatprep.subr.mxu0 0.0
      %3191 = vmatpush1.xpose.msra.mxu0 0.0
      %3192 = vmatprep.mubr.f32.mxu0 0.0
      %3193 = vmatmul.mubr.f32.gmra.mrb[0].mxu0 %v3116
      %v3194 = vpop.f32.mrb[0].mxu0
      %v3195 = vadd.f32 0.0, %v3194
      %v3196 = vpop.f32.mrb[0].mxu0
      %3197 = vmatprep.mubr.f32.mxu0 0.0
      %3198 = vmatmul.mubr.f32.gmra.mrb[0].mxu0 %v3118
      %v3199 = vpop.f32.mrb[0].mxu0
      %v3200 = vadd.f32 0.0, %v3199
      %v3201 = vpop.f32.mrb[0].mxu0
      %3202 = vmatprep.mubr.f32.mxu0 0.0
      %3203 = vmatmul.mubr.f32.gmra.mrb[0].mxu0 %v3120
      %v3204 = vpop.f32.mrb[0].mxu0
      %v3205 = vadd.f32 0.0, %v3204
      %v3206 = vpop.f32.mrb[0].mxu0
      %3207 = vdwg.mxu0
      %v3208 = vsel %vm904, %v3195, -inf
      %3209 = vmax.xlane.f32.xlu0 %v3208
      %v3210 = vpop.xlane.xlu0 %3209
      %v3211 = vsel %vm904, %v3200, -inf
      %3212 = vmax.xlane.f32.xlu0 %v3211
      %v3213 = vpop.xlane.xlu0 %3212
      %v3214 = vsel %vm911, %v3205, -inf
      %3215 = vmax.xlane.f32.xlu0 %v3214
      %v3216 = vpop.xlane.xlu0 %3215
      %v3217 = vsub.f32 %v3195, %v3210
      %v3218 = vsub.f32 %v3200, %v3213
      %v3219 = vsub.f32 %v3205, %v3216
      %v3220 = vmul.f32 %v3217, 1.442695
      %v3221 = vpow.pop %v3220
      %v3222 = vmul.f32 %v3218, 1.442695
      %v3223 = vpow.pop %v3222
      %v3224 = vmul.f32 %v3219, 1.442695
      %v3225 = vpow.pop %v3224
      %v3226 = vsel %vm904, %v3221, 0.0
      %3227 = vadd.xlane.f32.xlu0 %v3226
      %v3228 = vpop.xlane.xlu0 %3227
      %v3229 = vsel %vm904, %v3223, 0.0
      %3230 = vadd.xlane.f32.xlu0 %v3229
      %v3231 = vpop.xlane.xlu0 %3230
      %v3232 = vsel %vm911, %v3225, 0.0
      %3233 = vadd.xlane.f32.xlu0 %v3232
      %v3234 = vpop.xlane.xlu0 %3233
      %v3235 = vrcp.pop %v3228
      %v3236 = vrcp.pop %v3231
      %v3237 = vrcp.pop %v3234
      %v3238 = vmul.f32 %v3221, %v3235
      %v3239 = vmul.f32 %v3223, %v3236
      %v3240 = vmul.f32 %v3225, %v3237
      %3241 = vrot.lane.b32.xlu0 %v2135, 72
      %v3242 = vpop.permute.xlu0 %3241
      %3243 = vrot.lane.b32.xlu0 %v2137, 72
      %v3244 = vpop.permute.xlu0 %3243
      %3245 = vrot.lane.b32.xlu0 %v2136, 72
      %v3246 = vpop.permute.xlu0 %3245
      %v3250 = vsel %vm904, %v3238, 0
      %v3253 = vsel %vm904, %v3239, 0
      %v3256 = vsel %vm904, %v3240, 0
      %v3258 = vsel %vm956, %v3246, 0
      %3260 = vmatprep.subr.mxu0 0.0
      %3261 = vmatpush1.msra.mxu0 %v3242
      %3262 = vmatprep.subr.mxu0 0.0
      %3263 = vmatpush1.msra.mxu0 %v3244
      %3264 = vmatprep.subr.mxu0 0.0
      %3265 = vmatpush1.msra.mxu0 %v3258
      %3266 = vmatprep.subr.mxu0 0.0
      %3267 = vmatpush1.msra.mxu0 0.0
      %3268 = vmatprep.subr.mxu0 0.0
      %3269 = vmatpush1.msra.mxu0 0.0
      %3270 = vmatprep.subr.mxu0 0.0
      %3271 = vmatpush1.msra.mxu0 0.0
      %3272 = vmatprep.subr.mxu0 0.0
      %3273 = vmatpush1.msra.mxu0 0.0
      %3274 = vmatprep.subr.mxu0 0.0
      %3275 = vmatpush1.msra.mxu0 0.0
      %3276 = vmatprep.subr.mxu0 0.0
      %3277 = vmatpush1.msra.mxu0 0.0
      %3278 = vmatprep.subr.mxu0 0.0
      %3279 = vmatpush1.msra.mxu0 0.0
      %3280 = vmatprep.subr.mxu0 0.0
      %3281 = vmatpush1.msra.mxu0 0.0
      %3282 = vmatprep.subr.mxu0 0.0
      %3283 = vmatpush1.msra.mxu0 0.0
      %3284 = vmatprep.subr.mxu0 0.0
      %3285 = vmatpush1.msra.mxu0 0.0
      %3286 = vmatprep.subr.mxu0 0.0
      %3287 = vmatpush1.msra.mxu0 0.0
      %3288 = vmatprep.subr.mxu0 0.0
      %3289 = vmatpush1.msra.mxu0 0.0
      %3290 = vmatprep.subr.mxu0 0.0
      %3291 = vmatpush1.msra.mxu0 0.0
      %3292 = vmatprep.subr.mxu0 0.0
      %3293 = vmatpush1.msra.mxu0 0.0
      %3294 = vmatprep.subr.mxu0 0.0
      %3295 = vmatpush1.msra.mxu0 0.0
      %3296 = vmatprep.subr.mxu0 0.0
      %3297 = vmatpush1.msra.mxu0 0.0
      %3298 = vmatprep.subr.mxu0 0.0
      %3299 = vmatpush1.msra.mxu0 0.0
      %3300 = vmatprep.subr.mxu0 0.0
      %3301 = vmatpush1.msra.mxu0 0.0
      %3302 = vmatprep.subr.mxu0 0.0
      %3303 = vmatpush1.msra.mxu0 0.0
      %3304 = vmatprep.subr.mxu0 0.0
      %3305 = vmatpush1.msra.mxu0 0.0
      %3306 = vmatprep.subr.mxu0 0.0
      %3307 = vmatpush1.msra.mxu0 0.0
      %3308 = vmatprep.subr.mxu0 0.0
      %3309 = vmatpush1.msra.mxu0 0.0
      %3310 = vmatprep.subr.mxu0 0.0
      %3311 = vmatpush1.msra.mxu0 0.0
      %3312 = vmatprep.subr.mxu0 0.0
      %3313 = vmatpush1.msra.mxu0 0.0
      %3314 = vmatprep.subr.mxu0 0.0
      %3315 = vmatpush1.msra.mxu0 0.0
      %3316 = vmatprep.subr.mxu0 0.0
      %3317 = vmatpush1.msra.mxu0 0.0
      %3318 = vmatprep.subr.mxu0 0.0
      %3319 = vmatpush1.msra.mxu0 0.0
      %3320 = vmatprep.subr.mxu0 0.0
      %3321 = vmatpush1.msra.mxu0 0.0
      %3322 = vmatprep.subr.mxu0 0.0
      %3323 = vmatpush1.msra.mxu0 0.0
      %3324 = vmatprep.mubr.f32.mxu0 0.0
      %3325 = vmatmul.mubr.f32.gmra.mrb[0].mxu0 %v3250
      %v3326 = vpop.f32.mrb[0].mxu0
      %v3327 = vadd.f32 0.0, %v3326
      %v3328 = vpop.f32.mrb[0].mxu0
      %3329 = vmatprep.mubr.f32.mxu0 0.0
      %3330 = vmatmul.mubr.f32.gmra.mrb[0].mxu0 %v3253
      %v3331 = vpop.f32.mrb[0].mxu0
      %v3332 = vadd.f32 0.0, %v3331
      %v3333 = vpop.f32.mrb[0].mxu0
      %3334 = vmatprep.mubr.f32.mxu0 0.0
      %3335 = vmatmul.mubr.f32.gmra.mrb[0].mxu0 %v3256
      %v3336 = vpop.f32.mrb[0].mxu0
      %v3337 = vadd.f32 0.0, %v3336
      %v3338 = vpop.f32.mrb[0].mxu0
      %3339 = vdwg.mxu0
      %v3341 = vsel %vm805, %v3327, 0
      %v3344 = vsel %vm805, %v3332, 0
      %v3347 = vsel %vm805, %v3337, 0
      %3349 = vmatprep.subr.mxu0 0.0
      %3350 = vmatpush1.msra.mxu0 %v2027
      %3351 = vmatprep.subr.mxu0 0.0
      %3352 = vmatpush1.msra.mxu0 0.0
      %3353 = vmatprep.subr.mxu0 0.0
      %3354 = vmatpush1.msra.mxu0 0.0
      %3355 = vmatprep.subr.mxu0 0.0
      %3356 = vmatpush1.msra.mxu0 0.0
      %3357 = vmatprep.subr.mxu0 0.0
      %3358 = vmatpush1.msra.mxu0 0.0
      %3359 = vmatprep.subr.mxu0 0.0
      %3360 = vmatpush1.msra.mxu0 0.0
      %3361 = vmatprep.subr.mxu0 0.0
      %3362 = vmatpush1.msra.mxu0 0.0
      %3363 = vmatprep.subr.mxu0 0.0
      %3364 = vmatpush1.msra.mxu0 0.0
      %3365 = vmatprep.subr.mxu0 0.0
      %3366 = vmatpush1.msra.mxu0 0.0
      %3367 = vmatprep.subr.mxu0 0.0
      %3368 = vmatpush1.msra.mxu0 0.0
      %3369 = vmatprep.subr.mxu0 0.0
      %3370 = vmatpush1.msra.mxu0 0.0
      %3371 = vmatprep.subr.mxu0 0.0
      %3372 = vmatpush1.msra.mxu0 0.0
      %3373 = vmatprep.subr.mxu0 0.0
      %3374 = vmatpush1.msra.mxu0 0.0
      %3375 = vmatprep.subr.mxu0 0.0
      %3376 = vmatpush1.msra.mxu0 0.0
      %3377 = vmatprep.subr.mxu0 0.0
      %3378 = vmatpush1.msra.mxu0 0.0
      %3379 = vmatprep.subr.mxu0 0.0
      %3380 = vmatpush1.msra.mxu0 0.0
      %3381 = vmatprep.subr.mxu0 0.0
      %3382 = vmatpush1.msra.mxu0 0.0
      %3383 = vmatprep.subr.mxu0 0.0
      %3384 = vmatpush1.msra.mxu0 0.0
      %3385 = vmatprep.subr.mxu0 0.0
      %3386 = vmatpush1.msra.mxu0 0.0
      %3387 = vmatprep.subr.mxu0 0.0
      %3388 = vmatpush1.msra.mxu0 0.0
      %3389 = vmatprep.subr.mxu0 0.0
      %3390 = vmatpush1.msra.mxu0 0.0
      %3391 = vmatprep.subr.mxu0 0.0
      %3392 = vmatpush1.msra.mxu0 0.0
      %3393 = vmatprep.subr.mxu0 0.0
      %3394 = vmatpush1.msra.mxu0 0.0
      %3395 = vmatprep.subr.mxu0 0.0
      %3396 = vmatpush1.msra.mxu0 0.0
      %3397 = vmatprep.subr.mxu0 0.0
      %3398 = vmatpush1.msra.mxu0 0.0
      %3399 = vmatprep.subr.mxu0 0.0
      %3400 = vmatpush1.msra.mxu0 0.0
      %3401 = vmatprep.subr.mxu0 0.0
      %3402 = vmatpush1.msra.mxu0 0.0
      %3403 = vmatprep.subr.mxu0 0.0
      %3404 = vmatpush1.msra.mxu0 0.0
      %3405 = vmatprep.subr.mxu0 0.0
      %3406 = vmatpush1.msra.mxu0 0.0
      %3407 = vmatprep.subr.mxu0 0.0
      %3408 = vmatpush1.msra.mxu0 0.0
      %3409 = vmatprep.subr.mxu0 0.0
      %3410 = vmatpush1.msra.mxu0 0.0
      %3411 = vmatprep.subr.mxu0 0.0
      %3412 = vmatpush1.msra.mxu0 0.0
      %3413 = vmatprep.mubr.f32.mxu0 0.0
      %3414 = vmatmul.mubr.f32.gmra.mrb[0].mxu0 %v3341
      %v3415 = vpop.f32.mrb[0].mxu0
      %v3416 = vadd.f32 0.0, %v3415
      %v3417 = vpop.f32.mrb[0].mxu0
      %3418 = vmatprep.mubr.f32.mxu0 0.0
      %3419 = vmatmul.mubr.f32.gmra.mrb[0].mxu0 %v3344
      %v3420 = vpop.f32.mrb[0].mxu0
      %v3421 = vadd.f32 0.0, %v3420
      %v3422 = vpop.f32.mrb[0].mxu0
      %3423 = vmatprep.mubr.f32.mxu0 0.0
      %3424 = vmatmul.mubr.f32.gmra.mrb[0].mxu0 %v3347
      %v3425 = vpop.f32.mrb[0].mxu0
      %v3426 = vadd.f32 0.0, %v3425
      %v3427 = vpop.f32.mrb[0].mxu0
      %3428 = vdwg.mxu0
      %v3429 = vadd.f32 %v3101, %v3416
      %v3430 = vadd.f32 %v3102, %v3421
      %v3431 = vadd.f32 %v3103, %v3426
      %v3435 = vrot.slane %v3429, 7
      %v3436 = vrot.slane %v3430, 7
      %v3437 = vsel %vm956, %v3435, %v3436
      %v3438 = vrot.slane %v3431, 7
      %v3439 = vsel %vm956, %v3436, %v3438
      %v3443 = vsel %vm956, %v2120, %v3435
      %3444 = vrot.lane.b32.xlu0 %v585, 32
      %v3445 = vpop.permute.xlu0 %3444
      %v3447 = vadd.f32 %v2118, %v3445
      %v3448 = vadd.f32 %v2119, %v3445
      %v3449 = vadd.f32 %v3443, %v3445
      %v3450 = vadd.f32 %v3437, %v3445
      %v3451 = vadd.f32 %v3439, %v3445
      %v3452 = vadd.f32 %v577, %v3447
      %v3453 = vadd.f32 %v578, %v3448
      %v3454 = vadd.f32 %v579, %v3449
      %v3455 = vadd.f32 %v580, %v3450
      %v3456 = vadd.f32 %v581, %v3451
      %v3457 = vsel %vm586, %v3452, 0.0
      %3458 = vadd.xlane.f32.xlu0 %v3457
      %v3459 = vpop.xlane.xlu0 %3458
      %v3460 = vsel %vm586, %v3453, 0.0
      %3461 = vadd.xlane.f32.xlu0 %v3460
      %v3462 = vpop.xlane.xlu0 %3461
      %v3463 = vsel %vm586, %v3454, 0.0
      %3464 = vadd.xlane.f32.xlu0 %v3463
      %v3465 = vpop.xlane.xlu0 %3464
      %v3466 = vsel %vm586, %v3455, 0.0
      %3467 = vadd.xlane.f32.xlu0 %v3466
      %v3468 = vpop.xlane.xlu0 %3467
      %vm3469 = vcmask 254976
      %v3470 = vsel %vm3469, %v3456, 0.0
      %3471 = vadd.xlane.f32.xlu0 %v3470
      %v3472 = vpop.xlane.xlu0 %3471
      %v3473 = vrcp.pop 32.0
      %v3474 = vmul.f32 %v3459, %v3473
      %v3475 = vmul.f32 %v3462, %v3473
      %v3476 = vmul.f32 %v3465, %v3473
      %v3477 = vmul.f32 %v3468, %v3473
      %v3478 = vmul.f32 %v3472, %v3473
      %v3479 = vsub.f32 %v3452, %v3474
      %v3480 = vsub.f32 %v3453, %v3475
      %v3481 = vsub.f32 %v3454, %v3476
      %v3482 = vsub.f32 %v3455, %v3477
      %v3483 = vsub.f32 %v3456, %v3478
      %v3484 = vmul.f32 %v3479, %v3479
      %v3485 = vmul.f32 %v3480, %v3480
      %v3486 = vmul.f32 %v3481, %v3481
      %v3487 = vmul.f32 %v3482, %v3482
      %v3488 = vmul.f32 %v3483, %v3483
      %v3489 = vsel %vm586, %v3484, 0.0
      %3490 = vadd.xlane.f32.xlu0 %v3489
      %v3491 = vpop.xlane.xlu0 %3490
      %v3492 = vsel %vm586, %v3485, 0.0
      %3493 = vadd.xlane.f32.xlu0 %v3492
      %v3494 = vpop.xlane.xlu0 %3493
      %v3495 = vsel %vm586, %v3486, 0.0
      %3496 = vadd.xlane.f32.xlu0 %v3495
      %v3497 = vpop.xlane.xlu0 %3496
      %v3498 = vsel %vm586, %v3487, 0.0
      %3499 = vadd.xlane.f32.xlu0 %v3498
      %v3500 = vpop.xlane.xlu0 %3499
      %v3501 = vsel %vm3469, %v3488, 0.0
      %3502 = vadd.xlane.f32.xlu0 %v3501
      %v3503 = vpop.xlane.xlu0 %3502
      %v3504 = vmul.f32 %v3491, %v3473
      %v3505 = vmul.f32 %v3494, %v3473
      %v3506 = vmul.f32 %v3497, %v3473
      %v3507 = vmul.f32 %v3500, %v3473
      %v3508 = vmul.f32 %v3503, %v3473
      %v3509 = vadd.f32 %v3504, 1e-05
      %v3510 = vadd.f32 %v3505, 1e-05
      %v3511 = vadd.f32 %v3506, 1e-05
      %v3512 = vadd.f32 %v3507, 1e-05
      %v3513 = vadd.f32 %v3508, 1e-05
      %v3514 = vrsqrt.pop %v3509
      %v3515 = vrsqrt.pop %v3510
      %v3516 = vrsqrt.pop %v3511
      %v3517 = vrsqrt.pop %v3512
      %v3518 = vrsqrt.pop %v3513
      %v3519 = vmul.f32 %v3479, %v3514
      %v3520 = vmul.f32 %v3480, %v3515
      %v3521 = vmul.f32 %v3481, %v3516
      %v3522 = vmul.f32 %v3482, %v3517
      %v3523 = vmul.f32 %v3483, %v3518
      %v3524 = vlaneseq
      %v3525 = vshrl.u32 %v3524, 7
      %v3526 = vsub.s32 3, %v3525
      %v3527 = vrot.slane %v574, %v3526
      %3529 = vrot.lane.b32.xlu0 %v3527, 96
      %v3530 = vpop.permute.xlu0 %3529
      %v3532 = vmul.f32 %v3519, %v3530
      %v3533 = vmul.f32 %v3520, %v3530
      %v3534 = vmul.f32 %v3521, %v3530
      %v3535 = vmul.f32 %v3522, %v3530
      %v3536 = vmul.f32 %v3523, %v3530
      %3537 = vrot.lane.b32.xlu0 %v3527, 64
      %v3538 = vpop.permute.xlu0 %3537
      %v3540 = vadd.f32 %v3532, %v3538
      %v3541 = vadd.f32 %v3533, %v3538
      %v3542 = vadd.f32 %v3534, %v3538
      %v3543 = vadd.f32 %v3535, %v3538
      %v3544 = vadd.f32 %v3536, %v3538
      %v3545 = vlaneseq
      %v3546 = vshrl.u32 %v3545, 7
      %v3547 = vsub.s32 1, %v3546
      %v3548 = vrot.slane %v574, %v3547
      %v3550 = vsel %vm586, %v3540, 0
      %v3553 = vsel %vm586, %v3541, 0
      %v3556 = vsel %vm586, %v3542, 0
      %v3559 = vsel %vm586, %v3543, 0
      %v3562 = vsel %vm586, %v3544, 0
      %3564 = vmatprep.subr.mxu0 0.0
      %3565 = vmatpush1.msra.mxu0 %v547
      %3566 = vmatprep.subr.mxu0 0.0
      %3567 = vmatpush1.msra.mxu0 %v550
      %3568 = vmatprep.subr.mxu0 0.0
      %3569 = vmatpush1.msra.mxu0 %v553
      %3570 = vmatprep.subr.mxu0 0.0
      %3571 = vmatpush1.msra.mxu0 %v556
      %3572 = vmatprep.subr.mxu0 0.0
      %3573 = vmatpush1.msra.mxu0 0.0
      %3574 = vmatprep.subr.mxu0 0.0
      %3575 = vmatpush1.msra.mxu0 0.0
      %3576 = vmatprep.subr.mxu0 0.0
      %3577 = vmatpush1.msra.mxu0 0.0
      %3578 = vmatprep.subr.mxu0 0.0
      %3579 = vmatpush1.msra.mxu0 0.0
      %3580 = vmatprep.subr.mxu0 0.0
      %3581 = vmatpush1.msra.mxu0 0.0
      %3582 = vmatprep.subr.mxu0 0.0
      %3583 = vmatpush1.msra.mxu0 0.0
      %3584 = vmatprep.subr.mxu0 0.0
      %3585 = vmatpush1.msra.mxu0 0.0
      %3586 = vmatprep.subr.mxu0 0.0
      %3587 = vmatpush1.msra.mxu0 0.0
      %3588 = vmatprep.subr.mxu0 0.0
      %3589 = vmatpush1.msra.mxu0 0.0
      %3590 = vmatprep.subr.mxu0 0.0
      %3591 = vmatpush1.msra.mxu0 0.0
      %3592 = vmatprep.subr.mxu0 0.0
      %3593 = vmatpush1.msra.mxu0 0.0
      %3594 = vmatprep.subr.mxu0 0.0
      %3595 = vmatpush1.msra.mxu0 0.0
      %3596 = vmatprep.subr.mxu0 0.0
      %3597 = vmatpush1.msra.mxu0 0.0
      %3598 = vmatprep.subr.mxu0 0.0
      %3599 = vmatpush1.msra.mxu0 0.0
      %3600 = vmatprep.subr.mxu0 0.0
      %3601 = vmatpush1.msra.mxu0 0.0
      %3602 = vmatprep.subr.mxu0 0.0
      %3603 = vmatpush1.msra.mxu0 0.0
      %3604 = vmatprep.subr.mxu0 0.0
      %3605 = vmatpush1.msra.mxu0 0.0
      %3606 = vmatprep.subr.mxu0 0.0
      %3607 = vmatpush1.msra.mxu0 0.0
      %3608 = vmatprep.subr.mxu0 0.0
      %3609 = vmatpush1.msra.mxu0 0.0
      %3610 = vmatprep.subr.mxu0 0.0
      %3611 = vmatpush1.msra.mxu0 0.0
      %3612 = vmatprep.subr.mxu0 0.0
      %3613 = vmatpush1.msra.mxu0 0.0
      %3614 = vmatprep.subr.mxu0 0.0
      %3615 = vmatpush1.msra.mxu0 0.0
      %3616 = vmatprep.subr.mxu0 0.0
      %3617 = vmatpush1.msra.mxu0 0.0
      %3618 = vmatprep.subr.mxu0 0.0
      %3619 = vmatpush1.msra.mxu0 0.0
      %3620 = vmatprep.subr.mxu0 0.0
      %3621 = vmatpush1.msra.mxu0 0.0
      %3622 = vmatprep.subr.mxu0 0.0
      %3623 = vmatpush1.msra.mxu0 0.0
      %3624 = vmatprep.subr.mxu0 0.0
      %3625 = vmatpush1.msra.mxu0 0.0
      %3626 = vmatprep.subr.mxu0 0.0
      %3627 = vmatpush1.msra.mxu0 0.0
      %3628 = vmatprep.mubr.f32.mxu0 0.0
      %3629 = vmatmul.mubr.f32.gmra.mrb[0].mxu0 %v3550
      %v3630 = vpop.f32.mrb[0].mxu0
      %v3631 = vadd.f32 %v3548, %v3630
      %v3632 = vpop.f32.mrb[0].mxu0
      %3633 = vmatprep.mubr.f32.mxu0 0.0
      %3634 = vmatmul.mubr.f32.gmra.mrb[0].mxu0 %v3553
      %v3635 = vpop.f32.mrb[0].mxu0
      %v3636 = vadd.f32 %v3548, %v3635
      %v3637 = vpop.f32.mrb[0].mxu0
      %3638 = vmatprep.mubr.f32.mxu0 0.0
      %3639 = vmatmul.mubr.f32.gmra.mrb[0].mxu0 %v3556
      %v3640 = vpop.f32.mrb[0].mxu0
      %v3641 = vadd.f32 %v3548, %v3640
      %v3642 = vpop.f32.mrb[0].mxu0
      %3643 = vmatprep.mubr.f32.mxu0 0.0
      %3644 = vmatmul.mubr.f32.gmra.mrb[0].mxu0 %v3559
      %v3645 = vpop.f32.mrb[0].mxu0
      %v3646 = vadd.f32 %v3548, %v3645
      %v3647 = vpop.f32.mrb[0].mxu0
      %3648 = vmatprep.mubr.f32.mxu0 0.0
      %3649 = vmatmul.mubr.f32.gmra.mrb[0].mxu0 %v3562
      %v3650 = vpop.f32.mrb[0].mxu0
      %v3651 = vadd.f32 %v3548, %v3650
      %v3652 = vpop.f32.mrb[0].mxu0
      %3653 = vdwg.mxu0
      %3658 = vrot.lane.b32.xlu0 %v547, 96
      %v3659 = vpop.permute.xlu0 %3658
      %3660 = vrot.lane.b32.xlu0 %v550, 96
      %v3661 = vpop.permute.xlu0 %3660
      %3662 = vrot.lane.b32.xlu0 %v553, 96
      %v3663 = vpop.permute.xlu0 %3662
      %3664 = vrot.lane.b32.xlu0 %v556, 96
      %v3665 = vpop.permute.xlu0 %3664
      %3671 = vrot.lane.b32.xlu0 %v3548, 96
      %v3672 = vpop.permute.xlu0 %3671
      %v3675 = vsel %vm586, %v575, 0
      %v3678 = vsel %vm586, %v576, 0
      %3680 = vmatprep.subr.mxu0 0.0
      %3681 = vmatpush1.msra.mxu0 %v3659
      %3682 = vmatprep.subr.mxu0 0.0
      %3683 = vmatpush1.msra.mxu0 %v3661
      %3684 = vmatprep.subr.mxu0 0.0
      %3685 = vmatpush1.msra.mxu0 %v3663
      %3686 = vmatprep.subr.mxu0 0.0
      %3687 = vmatpush1.msra.mxu0 %v3665
      %3688 = vmatprep.subr.mxu0 0.0
      %3689 = vmatpush1.msra.mxu0 0.0
      %3690 = vmatprep.subr.mxu0 0.0
      %3691 = vmatpush1.msra.mxu0 0.0
      %3692 = vmatprep.subr.mxu0 0.0
      %3693 = vmatpush1.msra.mxu0 0.0
      %3694 = vmatprep.subr.mxu0 0.0
      %3695 = vmatpush1.msra.mxu0 0.0
      %3696 = vmatprep.subr.mxu0 0.0
      %3697 = vmatpush1.msra.mxu0 0.0
      %3698 = vmatprep.subr.mxu0 0.0
      %3699 = vmatpush1.msra.mxu0 0.0
      %3700 = vmatprep.subr.mxu0 0.0
      %3701 = vmatpush1.msra.mxu0 0.0
      %3702 = vmatprep.subr.mxu0 0.0
      %3703 = vmatpush1.msra.mxu0 0.0
      %3704 = vmatprep.subr.mxu0 0.0
      %3705 = vmatpush1.msra.mxu0 0.0
      %3706 = vmatprep.subr.mxu0 0.0
      %3707 = vmatpush1.msra.mxu0 0.0
      %3708 = vmatprep.subr.mxu0 0.0
      %3709 = vmatpush1.msra.mxu0 0.0
      %3710 = vmatprep.subr.mxu0 0.0
      %3711 = vmatpush1.msra.mxu0 0.0
      %3712 = vmatprep.subr.mxu0 0.0
      %3713 = vmatpush1.msra.mxu0 0.0
      %3714 = vmatprep.subr.mxu0 0.0
      %3715 = vmatpush1.msra.mxu0 0.0
      %3716 = vmatprep.subr.mxu0 0.0
      %3717 = vmatpush1.msra.mxu0 0.0
      %3718 = vmatprep.subr.mxu0 0.0
      %3719 = vmatpush1.msra.mxu0 0.0
      %3720 = vmatprep.subr.mxu0 0.0
      %3721 = vmatpush1.msra.mxu0 0.0
      %3722 = vmatprep.subr.mxu0 0.0
      %3723 = vmatpush1.msra.mxu0 0.0
      %3724 = vmatprep.subr.mxu0 0.0
      %3725 = vmatpush1.msra.mxu0 0.0
      %3726 = vmatprep.subr.mxu0 0.0
      %3727 = vmatpush1.msra.mxu0 0.0
      %3728 = vmatprep.subr.mxu0 0.0
      %3729 = vmatpush1.msra.mxu0 0.0
      %3730 = vmatprep.subr.mxu0 0.0
      %3731 = vmatpush1.msra.mxu0 0.0
      %3732 = vmatprep.subr.mxu0 0.0
      %3733 = vmatpush1.msra.mxu0 0.0
      %3734 = vmatprep.subr.mxu0 0.0
      %3735 = vmatpush1.msra.mxu0 0.0
      %3736 = vmatprep.subr.mxu0 0.0
      %3737 = vmatpush1.msra.mxu0 0.0
      %3738 = vmatprep.subr.mxu0 0.0
      %3739 = vmatpush1.msra.mxu0 0.0
      %3740 = vmatprep.subr.mxu0 0.0
      %3741 = vmatpush1.msra.mxu0 0.0
      %3742 = vmatprep.subr.mxu0 0.0
      %3743 = vmatpush1.msra.mxu0 0.0
      %3744 = vmatprep.mubr.f32.mxu0 0.0
      %3745 = vmatmul.mubr.f32.gmra.mrb[0].mxu0 %v3675
      %v3746 = vpop.f32.mrb[0].mxu0
      %v3747 = vadd.f32 %v3672, %v3746
      %v3748 = vpop.f32.mrb[0].mxu0
      %3749 = vmatprep.mubr.f32.mxu0 0.0
      %3750 = vmatmul.mubr.f32.gmra.mrb[0].mxu0 %v3678
      %v3751 = vpop.f32.mrb[0].mxu0
      %v3752 = vadd.f32 %v3672, %v3751
      %v3753 = vpop.f32.mrb[0].mxu0
      %3754 = vdwg.mxu0
      %v3755 = vmul.f32 %v3631, 0.35355338
      %v3756 = vmul.f32 %v3636, 0.35355338
      %v3757 = vmul.f32 %v3641, 0.35355338
      %v3759 = vsel %vm805, %v3755, 0
      %v3762 = vsel %vm805, %v3756, 0
      %v3765 = vsel %vm805, %v3757, 0
      %v3768 = vsel %vm805, %v3747, 0
      %3770 = vmatprep.subr.mxu0 0.0
      %3771 = vmatpush1.xpose.msra.mxu0 %v3768
      %3772 = vmatprep.subr.mxu0 0.0
      %3773 = vmatpush1.xpose.msra.mxu0 0.0
      %3774 = vmatprep.subr.mxu0 0.0
      %3775 = vmatpush1.xpose.msra.mxu0 0.0
      %3776 = vmatprep.subr.mxu0 0.0
      %3777 = vmatpush1.xpose.msra.mxu0 0.0
      %3778 = vmatprep.subr.mxu0 0.0
      %3779 = vmatpush1.xpose.msra.mxu0 0.0
      %3780 = vmatprep.subr.mxu0 0.0
      %3781 = vmatpush1.xpose.msra.mxu0 0.0
      %3782 = vmatprep.subr.mxu0 0.0
      %3783 = vmatpush1.xpose.msra.mxu0 0.0
      %3784 = vmatprep.subr.mxu0 0.0
      %3785 = vmatpush1.xpose.msra.mxu0 0.0
      %3786 = vmatprep.subr.mxu0 0.0
      %3787 = vmatpush1.xpose.msra.mxu0 0.0
      %3788 = vmatprep.subr.mxu0 0.0
      %3789 = vmatpush1.xpose.msra.mxu0 0.0
      %3790 = vmatprep.subr.mxu0 0.0
      %3791 = vmatpush1.xpose.msra.mxu0 0.0
      %3792 = vmatprep.subr.mxu0 0.0
      %3793 = vmatpush1.xpose.msra.mxu0 0.0
      %3794 = vmatprep.subr.mxu0 0.0
      %3795 = vmatpush1.xpose.msra.mxu0 0.0
      %3796 = vmatprep.subr.mxu0 0.0
      %3797 = vmatpush1.xpose.msra.mxu0 0.0
      %3798 = vmatprep.subr.mxu0 0.0
      %3799 = vmatpush1.xpose.msra.mxu0 0.0
      %3800 = vmatprep.subr.mxu0 0.0
      %3801 = vmatpush1.xpose.msra.mxu0 0.0
      %3802 = vmatprep.subr.mxu0 0.0
      %3803 = vmatpush1.xpose.msra.mxu0 0.0
      %3804 = vmatprep.subr.mxu0 0.0
      %3805 = vmatpush1.xpose.msra.mxu0 0.0
      %3806 = vmatprep.subr.mxu0 0.0
      %3807 = vmatpush1.xpose.msra.mxu0 0.0
      %3808 = vmatprep.subr.mxu0 0.0
      %3809 = vmatpush1.xpose.msra.mxu0 0.0
      %3810 = vmatprep.subr.mxu0 0.0
      %3811 = vmatpush1.xpose.msra.mxu0 0.0
      %3812 = vmatprep.subr.mxu0 0.0
      %3813 = vmatpush1.xpose.msra.mxu0 0.0
      %3814 = vmatprep.subr.mxu0 0.0
      %3815 = vmatpush1.xpose.msra.mxu0 0.0
      %3816 = vmatprep.subr.mxu0 0.0
      %3817 = vmatpush1.xpose.msra.mxu0 0.0
      %3818 = vmatprep.subr.mxu0 0.0
      %3819 = vmatpush1.xpose.msra.mxu0 0.0
      %3820 = vmatprep.subr.mxu0 0.0
      %3821 = vmatpush1.xpose.msra.mxu0 0.0
      %3822 = vmatprep.subr.mxu0 0.0
      %3823 = vmatpush1.xpose.msra.mxu0 0.0
      %3824 = vmatprep.subr.mxu0 0.0
      %3825 = vmatpush1.xpose.msra.mxu0 0.0
      %3826 = vmatprep.subr.mxu0 0.0
      %3827 = vmatpush1.xpose.msra.mxu0 0.0
      %3828 = vmatprep.subr.mxu0 0.0
      %3829 = vmatpush1.xpose.msra.mxu0 0.0
      %3830 = vmatprep.subr.mxu0 0.0
      %3831 = vmatpush1.xpose.msra.mxu0 0.0
      %3832 = vmatprep.subr.mxu0 0.0
      %3833 = vmatpush1.xpose.msra.mxu0 0.0
      %3834 = vmatprep.mubr.f32.mxu0 0.0
      %3835 = vmatmul.mubr.f32.gmra.mrb[0].mxu0 %v3759
      %v3836 = vpop.f32.mrb[0].mxu0
      %v3837 = vadd.f32 0.0, %v3836
      %v3838 = vpop.f32.mrb[0].mxu0
      %3839 = vmatprep.mubr.f32.mxu0 0.0
      %3840 = vmatmul.mubr.f32.gmra.mrb[0].mxu0 %v3762
      %v3841 = vpop.f32.mrb[0].mxu0
      %v3842 = vadd.f32 0.0, %v3841
      %v3843 = vpop.f32.mrb[0].mxu0
      %3844 = vmatprep.mubr.f32.mxu0 0.0
      %3845 = vmatmul.mubr.f32.gmra.mrb[0].mxu0 %v3765
      %v3846 = vpop.f32.mrb[0].mxu0
      %v3847 = vadd.f32 0.0, %v3846
      %v3848 = vpop.f32.mrb[0].mxu0
      %3849 = vdwg.mxu0
      %v3850 = vsel %vm805, %v3837, -inf
      %3851 = vmax.xlane.f32.xlu0 %v3850
      %v3852 = vpop.xlane.xlu0 %3851
      %v3853 = vsel %vm805, %v3842, -inf
      %3854 = vmax.xlane.f32.xlu0 %v3853
      %v3855 = vpop.xlane.xlu0 %3854
      %vm3856 = vcmask 57344
      %v3857 = vsel %vm3856, %v3847, -inf
      %3858 = vmax.xlane.f32.xlu0 %v3857
      %v3859 = vpop.xlane.xlu0 %3858
      %v3860 = vsub.f32 %v3837, %v3852
      %v3861 = vsub.f32 %v3842, %v3855
      %v3862 = vsub.f32 %v3847, %v3859
      %v3863 = vmul.f32 %v3860, 1.442695
      %v3864 = vpow.pop %v3863
      %v3865 = vmul.f32 %v3861, 1.442695
      %v3866 = vpow.pop %v3865
      %v3867 = vmul.f32 %v3862, 1.442695
      %v3868 = vpow.pop %v3867
      %v3869 = vsel %vm805, %v3864, 0.0
      %3870 = vadd.xlane.f32.xlu0 %v3869
      %v3871 = vpop.xlane.xlu0 %3870
      %v3872 = vsel %vm805, %v3866, 0.0
      %3873 = vadd.xlane.f32.xlu0 %v3872
      %v3874 = vpop.xlane.xlu0 %3873
      %v3875 = vsel %vm3856, %v3868, 0.0
      %3876 = vadd.xlane.f32.xlu0 %v3875
      %v3877 = vpop.xlane.xlu0 %3876
      %v3878 = vrcp.pop %v3871
      %v3879 = vrcp.pop %v3874
      %v3880 = vrcp.pop %v3877
      %v3881 = vmul.f32 %v3864, %v3878
      %v3882 = vmul.f32 %v3866, %v3879
      %v3883 = vmul.f32 %v3868, %v3880
      %3884 = vrot.lane.b32.xlu0 %v3747, 96
      %v3885 = vpop.permute.xlu0 %3884
      %v3888 = vsel %vm805, %v3881, 0
      %v3891 = vsel %vm805, %v3882, 0
      %v3894 = vsel %vm805, %v3883, 0
      %3896 = vmatprep.subr.mxu0 0.0
      %3897 = vmatpush1.msra.mxu0 %v3885
      %3898 = vmatprep.subr.mxu0 0.0
      %3899 = vmatpush1.msra.mxu0 0.0
      %3900 = vmatprep.subr.mxu0 0.0
      %3901 = vmatpush1.msra.mxu0 0.0
      %3902 = vmatprep.subr.mxu0 0.0
      %3903 = vmatpush1.msra.mxu0 0.0
      %3904 = vmatprep.subr.mxu0 0.0
      %3905 = vmatpush1.msra.mxu0 0.0
      %3906 = vmatprep.subr.mxu0 0.0
      %3907 = vmatpush1.msra.mxu0 0.0
      %3908 = vmatprep.subr.mxu0 0.0
      %3909 = vmatpush1.msra.mxu0 0.0
      %3910 = vmatprep.subr.mxu0 0.0
      %3911 = vmatpush1.msra.mxu0 0.0
      %3912 = vmatprep.subr.mxu0 0.0
      %3913 = vmatpush1.msra.mxu0 0.0
      %3914 = vmatprep.subr.mxu0 0.0
      %3915 = vmatpush1.msra.mxu0 0.0
      %3916 = vmatprep.subr.mxu0 0.0
      %3917 = vmatpush1.msra.mxu0 0.0
      %3918 = vmatprep.subr.mxu0 0.0
      %3919 = vmatpush1.msra.mxu0 0.0
      %3920 = vmatprep.subr.mxu0 0.0
      %3921 = vmatpush1.msra.mxu0 0.0
      %3922 = vmatprep.subr.mxu0 0.0
      %3923 = vmatpush1.msra.mxu0 0.0
      %3924 = vmatprep.subr.mxu0 0.0
      %3925 = vmatpush1.msra.mxu0 0.0
      %3926 = vmatprep.subr.mxu0 0.0
      %3927 = vmatpush1.msra.mxu0 0.0
      %3928 = vmatprep.subr.mxu0 0.0
      %3929 = vmatpush1.msra.mxu0 0.0
      %3930 = vmatprep.subr.mxu0 0.0
      %3931 = vmatpush1.msra.mxu0 0.0
      %3932 = vmatprep.subr.mxu0 0.0
      %3933 = vmatpush1.msra.mxu0 0.0
      %3934 = vmatprep.subr.mxu0 0.0
      %3935 = vmatpush1.msra.mxu0 0.0
      %3936 = vmatprep.subr.mxu0 0.0
      %3937 = vmatpush1.msra.mxu0 0.0
      %3938 = vmatprep.subr.mxu0 0.0
      %3939 = vmatpush1.msra.mxu0 0.0
      %3940 = vmatprep.subr.mxu0 0.0
      %3941 = vmatpush1.msra.mxu0 0.0
      %3942 = vmatprep.subr.mxu0 0.0
      %3943 = vmatpush1.msra.mxu0 0.0
      %3944 = vmatprep.subr.mxu0 0.0
      %3945 = vmatpush1.msra.mxu0 0.0
      %3946 = vmatprep.subr.mxu0 0.0
      %3947 = vmatpush1.msra.mxu0 0.0
      %3948 = vmatprep.subr.mxu0 0.0
      %3949 = vmatpush1.msra.mxu0 0.0
      %3950 = vmatprep.subr.mxu0 0.0
      %3951 = vmatpush1.msra.mxu0 0.0
      %3952 = vmatprep.subr.mxu0 0.0
      %3953 = vmatpush1.msra.mxu0 0.0
      %3954 = vmatprep.subr.mxu0 0.0
      %3955 = vmatpush1.msra.mxu0 0.0
      %3956 = vmatprep.subr.mxu0 0.0
      %3957 = vmatpush1.msra.mxu0 0.0
      %3958 = vmatprep.subr.mxu0 0.0
      %3959 = vmatpush1.msra.mxu0 0.0
      %3960 = vmatprep.mubr.f32.mxu0 0.0
      %3961 = vmatmul.mubr.f32.gmra.mrb[0].mxu0 %v3888
      %v3962 = vpop.f32.mrb[0].mxu0
      %v3963 = vadd.f32 0.0, %v3962
      %v3964 = vpop.f32.mrb[0].mxu0
      %3965 = vmatprep.mubr.f32.mxu0 0.0
      %3966 = vmatmul.mubr.f32.gmra.mrb[0].mxu0 %v3891
      %v3967 = vpop.f32.mrb[0].mxu0
      %v3968 = vadd.f32 0.0, %v3967
      %v3969 = vpop.f32.mrb[0].mxu0
      %3970 = vmatprep.mubr.f32.mxu0 0.0
      %3971 = vmatmul.mubr.f32.gmra.mrb[0].mxu0 %v3894
      %v3972 = vpop.f32.mrb[0].mxu0
      %v3973 = vadd.f32 0.0, %v3972
      %v3974 = vpop.f32.mrb[0].mxu0
      %3975 = vdwg.mxu0
      %3976 = vrot.lane.b32.xlu0 %v3755, 120
      %v3977 = vpop.permute.xlu0 %3976
      %3978 = vrot.lane.b32.xlu0 %v3756, 120
      %v3979 = vpop.permute.xlu0 %3978
      %3980 = vrot.lane.b32.xlu0 %v3757, 120
      %v3981 = vpop.permute.xlu0 %3980
      %3982 = vrot.lane.b32.xlu0 %v3747, 120
      %v3983 = vpop.permute.xlu0 %3982
      %v3984 = vsel %vm805, %v3977, 0
      %v3986 = vsel %vm805, %v3979, 0
      %v3988 = vsel %vm805, %v3981, 0
      %v3990 = vsel %vm805, %v3983, 0
      %3992 = vmatprep.subr.mxu0 0.0
      %3993 = vmatpush1.xpose.msra.mxu0 %v3990
      %3994 = vmatprep.subr.mxu0 0.0
      %3995 = vmatpush1.xpose.msra.mxu0 0.0
      %3996 = vmatprep.subr.mxu0 0.0
      %3997 = vmatpush1.xpose.msra.mxu0 0.0
      %3998 = vmatprep.subr.mxu0 0.0
      %3999 = vmatpush1.xpose.msra.mxu0 0.0
      %4000 = vmatprep.subr.mxu0 0.0
      %4001 = vmatpush1.xpose.msra.mxu0 0.0
      %4002 = vmatprep.subr.mxu0 0.0
      %4003 = vmatpush1.xpose.msra.mxu0 0.0
      %4004 = vmatprep.subr.mxu0 0.0
      %4005 = vmatpush1.xpose.msra.mxu0 0.0
      %4006 = vmatprep.subr.mxu0 0.0
      %4007 = vmatpush1.xpose.msra.mxu0 0.0
      %4008 = vmatprep.subr.mxu0 0.0
      %4009 = vmatpush1.xpose.msra.mxu0 0.0
      %4010 = vmatprep.subr.mxu0 0.0
      %4011 = vmatpush1.xpose.msra.mxu0 0.0
      %4012 = vmatprep.subr.mxu0 0.0
      %4013 = vmatpush1.xpose.msra.mxu0 0.0
      %4014 = vmatprep.subr.mxu0 0.0
      %4015 = vmatpush1.xpose.msra.mxu0 0.0
      %4016 = vmatprep.subr.mxu0 0.0
      %4017 = vmatpush1.xpose.msra.mxu0 0.0
      %4018 = vmatprep.subr.mxu0 0.0
      %4019 = vmatpush1.xpose.msra.mxu0 0.0
      %4020 = vmatprep.subr.mxu0 0.0
      %4021 = vmatpush1.xpose.msra.mxu0 0.0
      %4022 = vmatprep.subr.mxu0 0.0
      %4023 = vmatpush1.xpose.msra.mxu0 0.0
      %4024 = vmatprep.subr.mxu0 0.0
      %4025 = vmatpush1.xpose.msra.mxu0 0.0
      %4026 = vmatprep.subr.mxu0 0.0
      %4027 = vmatpush1.xpose.msra.mxu0 0.0
      %4028 = vmatprep.subr.mxu0 0.0
      %4029 = vmatpush1.xpose.msra.mxu0 0.0
      %4030 = vmatprep.subr.mxu0 0.0
      %4031 = vmatpush1.xpose.msra.mxu0 0.0
      %4032 = vmatprep.subr.mxu0 0.0
      %4033 = vmatpush1.xpose.msra.mxu0 0.0
      %4034 = vmatprep.subr.mxu0 0.0
      %4035 = vmatpush1.xpose.msra.mxu0 0.0
      %4036 = vmatprep.subr.mxu0 0.0
      %4037 = vmatpush1.xpose.msra.mxu0 0.0
      %4038 = vmatprep.subr.mxu0 0.0
      %4039 = vmatpush1.xpose.msra.mxu0 0.0
      %4040 = vmatprep.subr.mxu0 0.0
      %4041 = vmatpush1.xpose.msra.mxu0 0.0
      %4042 = vmatprep.subr.mxu0 0.0
      %4043 = vmatpush1.xpose.msra.mxu0 0.0
      %4044 = vmatprep.subr.mxu0 0.0
      %4045 = vmatpush1.xpose.msra.mxu0 0.0
      %4046 = vmatprep.subr.mxu0 0.0
      %4047 = vmatpush1.xpose.msra.mxu0 0.0
      %4048 = vmatprep.subr.mxu0 0.0
      %4049 = vmatpush1.xpose.msra.mxu0 0.0
      %4050 = vmatprep.subr.mxu0 0.0
      %4051 = vmatpush1.xpose.msra.mxu0 0.0
      %4052 = vmatprep.subr.mxu0 0.0
      %4053 = vmatpush1.xpose.msra.mxu0 0.0
      %4054 = vmatprep.subr.mxu0 0.0
      %4055 = vmatpush1.xpose.msra.mxu0 0.0
      %4056 = vmatprep.mubr.f32.mxu0 0.0
      %4057 = vmatmul.mubr.f32.gmra.mrb[0].mxu0 %v3984
      %v4058 = vpop.f32.mrb[0].mxu0
      %v4059 = vadd.f32 0.0, %v4058
      %v4060 = vpop.f32.mrb[0].mxu0
      %4061 = vmatprep.mubr.f32.mxu0 0.0
      %4062 = vmatmul.mubr.f32.gmra.mrb[0].mxu0 %v3986
      %v4063 = vpop.f32.mrb[0].mxu0
      %v4064 = vadd.f32 0.0, %v4063
      %v4065 = vpop.f32.mrb[0].mxu0
      %4066 = vmatprep.mubr.f32.mxu0 0.0
      %4067 = vmatmul.mubr.f32.gmra.mrb[0].mxu0 %v3988
      %v4068 = vpop.f32.mrb[0].mxu0
      %v4069 = vadd.f32 0.0, %v4068
      %v4070 = vpop.f32.mrb[0].mxu0
      %4071 = vdwg.mxu0
      %v4072 = vsel %vm805, %v4059, -inf
      %4073 = vmax.xlane.f32.xlu0 %v4072
      %v4074 = vpop.xlane.xlu0 %4073
      %v4075 = vsel %vm805, %v4064, -inf
      %4076 = vmax.xlane.f32.xlu0 %v4075
      %v4077 = vpop.xlane.xlu0 %4076
      %v4078 = vsel %vm3856, %v4069, -inf
      %4079 = vmax.xlane.f32.xlu0 %v4078
      %v4080 = vpop.xlane.xlu0 %4079
      %v4081 = vsub.f32 %v4059, %v4074
      %v4082 = vsub.f32 %v4064, %v4077
      %v4083 = vsub.f32 %v4069, %v4080
      %v4084 = vmul.f32 %v4081, 1.442695
      %v4085 = vpow.pop %v4084
      %v4086 = vmul.f32 %v4082, 1.442695
      %v4087 = vpow.pop %v4086
      %v4088 = vmul.f32 %v4083, 1.442695
      %v4089 = vpow.pop %v4088
      %v4090 = vsel %vm805, %v4085, 0.0
      %4091 = vadd.xlane.f32.xlu0 %v4090
      %v4092 = vpop.xlane.xlu0 %4091
      %v4093 = vsel %vm805, %v4087, 0.0
      %4094 = vadd.xlane.f32.xlu0 %v4093
      %v4095 = vpop.xlane.xlu0 %4094
      %v4096 = vsel %vm3856, %v4089, 0.0
      %4097 = vadd.xlane.f32.xlu0 %v4096
      %v4098 = vpop.xlane.xlu0 %4097
      %v4099 = vrcp.pop %v4092
      %v4100 = vrcp.pop %v4095
      %v4101 = vrcp.pop %v4098
      %v4102 = vmul.f32 %v4085, %v4099
      %v4103 = vmul.f32 %v4087, %v4100
      %v4104 = vmul.f32 %v4089, %v4101
      %4105 = vrot.lane.b32.xlu0 %v3747, 88
      %v4106 = vpop.permute.xlu0 %4105
      %v4109 = vsel %vm805, %v4102, 0
      %v4112 = vsel %vm805, %v4103, 0
      %v4115 = vsel %vm805, %v4104, 0
      %4117 = vmatprep.subr.mxu0 0.0
      %4118 = vmatpush1.msra.mxu0 %v4106
      %4119 = vmatprep.subr.mxu0 0.0
      %4120 = vmatpush1.msra.mxu0 0.0
      %4121 = vmatprep.subr.mxu0 0.0
      %4122 = vmatpush1.msra.mxu0 0.0
      %4123 = vmatprep.subr.mxu0 0.0
      %4124 = vmatpush1.msra.mxu0 0.0
      %4125 = vmatprep.subr.mxu0 0.0
      %4126 = vmatpush1.msra.mxu0 0.0
      %4127 = vmatprep.subr.mxu0 0.0
      %4128 = vmatpush1.msra.mxu0 0.0
      %4129 = vmatprep.subr.mxu0 0.0
      %4130 = vmatpush1.msra.mxu0 0.0
      %4131 = vmatprep.subr.mxu0 0.0
      %4132 = vmatpush1.msra.mxu0 0.0
      %4133 = vmatprep.subr.mxu0 0.0
      %4134 = vmatpush1.msra.mxu0 0.0
      %4135 = vmatprep.subr.mxu0 0.0
      %4136 = vmatpush1.msra.mxu0 0.0
      %4137 = vmatprep.subr.mxu0 0.0
      %4138 = vmatpush1.msra.mxu0 0.0
      %4139 = vmatprep.subr.mxu0 0.0
      %4140 = vmatpush1.msra.mxu0 0.0
      %4141 = vmatprep.subr.mxu0 0.0
      %4142 = vmatpush1.msra.mxu0 0.0
      %4143 = vmatprep.subr.mxu0 0.0
      %4144 = vmatpush1.msra.mxu0 0.0
      %4145 = vmatprep.subr.mxu0 0.0
      %4146 = vmatpush1.msra.mxu0 0.0
      %4147 = vmatprep.subr.mxu0 0.0
      %4148 = vmatpush1.msra.mxu0 0.0
      %4149 = vmatprep.subr.mxu0 0.0
      %4150 = vmatpush1.msra.mxu0 0.0
      %4151 = vmatprep.subr.mxu0 0.0
      %4152 = vmatpush1.msra.mxu0 0.0
      %4153 = vmatprep.subr.mxu0 0.0
      %4154 = vmatpush1.msra.mxu0 0.0
      %4155 = vmatprep.subr.mxu0 0.0
      %4156 = vmatpush1.msra.mxu0 0.0
      %4157 = vmatprep.subr.mxu0 0.0
      %4158 = vmatpush1.msra.mxu0 0.0
      %4159 = vmatprep.subr.mxu0 0.0
      %4160 = vmatpush1.msra.mxu0 0.0
      %4161 = vmatprep.subr.mxu0 0.0
      %4162 = vmatpush1.msra.mxu0 0.0
      %4163 = vmatprep.subr.mxu0 0.0
      %4164 = vmatpush1.msra.mxu0 0.0
      %4165 = vmatprep.subr.mxu0 0.0
      %4166 = vmatpush1.msra.mxu0 0.0
      %4167 = vmatprep.subr.mxu0 0.0
      %4168 = vmatpush1.msra.mxu0 0.0
      %4169 = vmatprep.subr.mxu0 0.0
      %4170 = vmatpush1.msra.mxu0 0.0
      %4171 = vmatprep.subr.mxu0 0.0
      %4172 = vmatpush1.msra.mxu0 0.0
      %4173 = vmatprep.subr.mxu0 0.0
      %4174 = vmatpush1.msra.mxu0 0.0
      %4175 = vmatprep.subr.mxu0 0.0
      %4176 = vmatpush1.msra.mxu0 0.0
      %4177 = vmatprep.subr.mxu0 0.0
      %4178 = vmatpush1.msra.mxu0 0.0
      %4179 = vmatprep.subr.mxu0 0.0
      %4180 = vmatpush1.msra.mxu0 0.0
      %4181 = vmatprep.mubr.f32.mxu0 0.0
      %4182 = vmatmul.mubr.f32.gmra.mrb[0].mxu0 %v4109
      %v4183 = vpop.f32.mrb[0].mxu0
      %v4184 = vadd.f32 0.0, %v4183
      %v4185 = vpop.f32.mrb[0].mxu0
      %4186 = vmatprep.mubr.f32.mxu0 0.0
      %4187 = vmatmul.mubr.f32.gmra.mrb[0].mxu0 %v4112
      %v4188 = vpop.f32.mrb[0].mxu0
      %v4189 = vadd.f32 0.0, %v4188
      %v4190 = vpop.f32.mrb[0].mxu0
      %4191 = vmatprep.mubr.f32.mxu0 0.0
      %4192 = vmatmul.mubr.f32.gmra.mrb[0].mxu0 %v4115
      %v4193 = vpop.f32.mrb[0].mxu0
      %v4194 = vadd.f32 0.0, %v4193
      %v4195 = vpop.f32.mrb[0].mxu0
      %4196 = vdwg.mxu0
      %4197 = vrot.lane.b32.xlu0 %v550, 32
      %v4198 = vpop.permute.xlu0 %4197
      %v4201 = vsel %vm805, %v4184, 0
      %v4204 = vsel %vm805, %v4189, 0
      %v4207 = vsel %vm805, %v4194, 0
      %4209 = vmatprep.subr.mxu0 0.0
      %4210 = vmatpush1.msra.mxu0 %v4198
      %4211 = vmatprep.subr.mxu0 0.0
      %4212 = vmatpush1.msra.mxu0 0.0
      %4213 = vmatprep.subr.mxu0 0.0
      %4214 = vmatpush1.msra.mxu0 0.0
      %4215 = vmatprep.subr.mxu0 0.0
      %4216 = vmatpush1.msra.mxu0 0.0
      %4217 = vmatprep.subr.mxu0 0.0
      %4218 = vmatpush1.msra.mxu0 0.0
      %4219 = vmatprep.subr.mxu0 0.0
      %4220 = vmatpush1.msra.mxu0 0.0
      %4221 = vmatprep.subr.mxu0 0.0
      %4222 = vmatpush1.msra.mxu0 0.0
      %4223 = vmatprep.subr.mxu0 0.0
      %4224 = vmatpush1.msra.mxu0 0.0
      %4225 = vmatprep.subr.mxu0 0.0
      %4226 = vmatpush1.msra.mxu0 0.0
      %4227 = vmatprep.subr.mxu0 0.0
      %4228 = vmatpush1.msra.mxu0 0.0
      %4229 = vmatprep.subr.mxu0 0.0
      %4230 = vmatpush1.msra.mxu0 0.0
      %4231 = vmatprep.subr.mxu0 0.0
      %4232 = vmatpush1.msra.mxu0 0.0
      %4233 = vmatprep.subr.mxu0 0.0
      %4234 = vmatpush1.msra.mxu0 0.0
      %4235 = vmatprep.subr.mxu0 0.0
      %4236 = vmatpush1.msra.mxu0 0.0
      %4237 = vmatprep.subr.mxu0 0.0
      %4238 = vmatpush1.msra.mxu0 0.0
      %4239 = vmatprep.subr.mxu0 0.0
      %4240 = vmatpush1.msra.mxu0 0.0
      %4241 = vmatprep.subr.mxu0 0.0
      %4242 = vmatpush1.msra.mxu0 0.0
      %4243 = vmatprep.subr.mxu0 0.0
      %4244 = vmatpush1.msra.mxu0 0.0
      %4245 = vmatprep.subr.mxu0 0.0
      %4246 = vmatpush1.msra.mxu0 0.0
      %4247 = vmatprep.subr.mxu0 0.0
      %4248 = vmatpush1.msra.mxu0 0.0
      %4249 = vmatprep.subr.mxu0 0.0
      %4250 = vmatpush1.msra.mxu0 0.0
      %4251 = vmatprep.subr.mxu0 0.0
      %4252 = vmatpush1.msra.mxu0 0.0
      %4253 = vmatprep.subr.mxu0 0.0
      %4254 = vmatpush1.msra.mxu0 0.0
      %4255 = vmatprep.subr.mxu0 0.0
      %4256 = vmatpush1.msra.mxu0 0.0
      %4257 = vmatprep.subr.mxu0 0.0
      %4258 = vmatpush1.msra.mxu0 0.0
      %4259 = vmatprep.subr.mxu0 0.0
      %4260 = vmatpush1.msra.mxu0 0.0
      %4261 = vmatprep.subr.mxu0 0.0
      %4262 = vmatpush1.msra.mxu0 0.0
      %4263 = vmatprep.subr.mxu0 0.0
      %4264 = vmatpush1.msra.mxu0 0.0
      %4265 = vmatprep.subr.mxu0 0.0
      %4266 = vmatpush1.msra.mxu0 0.0
      %4267 = vmatprep.subr.mxu0 0.0
      %4268 = vmatpush1.msra.mxu0 0.0
      %4269 = vmatprep.subr.mxu0 0.0
      %4270 = vmatpush1.msra.mxu0 0.0
      %4271 = vmatprep.subr.mxu0 0.0
      %4272 = vmatpush1.msra.mxu0 0.0
      %4273 = vmatprep.mubr.f32.mxu0 0.0
      %4274 = vmatmul.mubr.f32.gmra.mrb[0].mxu0 %v4201
      %v4275 = vpop.f32.mrb[0].mxu0
      %v4276 = vadd.f32 0.0, %v4275
      %v4277 = vpop.f32.mrb[0].mxu0
      %4278 = vmatprep.mubr.f32.mxu0 0.0
      %4279 = vmatmul.mubr.f32.gmra.mrb[0].mxu0 %v4204
      %v4280 = vpop.f32.mrb[0].mxu0
      %v4281 = vadd.f32 0.0, %v4280
      %v4282 = vpop.f32.mrb[0].mxu0
      %4283 = vmatprep.mubr.f32.mxu0 0.0
      %4284 = vmatmul.mubr.f32.gmra.mrb[0].mxu0 %v4207
      %v4285 = vpop.f32.mrb[0].mxu0
      %v4286 = vadd.f32 0.0, %v4285
      %v4287 = vpop.f32.mrb[0].mxu0
      %4288 = vdwg.mxu0
      %4289 = vrot.lane.b32.xlu0 %v547, 32
      %v4290 = vpop.permute.xlu0 %4289
      %v4293 = vsel %vm805, %v3963, 0
      %v4296 = vsel %vm805, %v3968, 0
      %v4299 = vsel %vm805, %v3973, 0
      %4301 = vmatprep.subr.mxu0 0.0
      %4302 = vmatpush1.msra.mxu0 %v4290
      %4303 = vmatprep.subr.mxu0 0.0
      %4304 = vmatpush1.msra.mxu0 0.0
      %4305 = vmatprep.subr.mxu0 0.0
      %4306 = vmatpush1.msra.mxu0 0.0
      %4307 = vmatprep.subr.mxu0 0.0
      %4308 = vmatpush1.msra.mxu0 0.0
      %4309 = vmatprep.subr.mxu0 0.0
      %4310 = vmatpush1.msra.mxu0 0.0
      %4311 = vmatprep.subr.mxu0 0.0
      %4312 = vmatpush1.msra.mxu0 0.0
      %4313 = vmatprep.subr.mxu0 0.0
      %4314 = vmatpush1.msra.mxu0 0.0
      %4315 = vmatprep.subr.mxu0 0.0
      %4316 = vmatpush1.msra.mxu0 0.0
      %4317 = vmatprep.subr.mxu0 0.0
      %4318 = vmatpush1.msra.mxu0 0.0
      %4319 = vmatprep.subr.mxu0 0.0
      %4320 = vmatpush1.msra.mxu0 0.0
      %4321 = vmatprep.subr.mxu0 0.0
      %4322 = vmatpush1.msra.mxu0 0.0
      %4323 = vmatprep.subr.mxu0 0.0
      %4324 = vmatpush1.msra.mxu0 0.0
      %4325 = vmatprep.subr.mxu0 0.0
      %4326 = vmatpush1.msra.mxu0 0.0
      %4327 = vmatprep.subr.mxu0 0.0
      %4328 = vmatpush1.msra.mxu0 0.0
      %4329 = vmatprep.subr.mxu0 0.0
      %4330 = vmatpush1.msra.mxu0 0.0
      %4331 = vmatprep.subr.mxu0 0.0
      %4332 = vmatpush1.msra.mxu0 0.0
      %4333 = vmatprep.subr.mxu0 0.0
      %4334 = vmatpush1.msra.mxu0 0.0
      %4335 = vmatprep.subr.mxu0 0.0
      %4336 = vmatpush1.msra.mxu0 0.0
      %4337 = vmatprep.subr.mxu0 0.0
      %4338 = vmatpush1.msra.mxu0 0.0
      %4339 = vmatprep.subr.mxu0 0.0
      %4340 = vmatpush1.msra.mxu0 0.0
      %4341 = vmatprep.subr.mxu0 0.0
      %4342 = vmatpush1.msra.mxu0 0.0
      %4343 = vmatprep.subr.mxu0 0.0
      %4344 = vmatpush1.msra.mxu0 0.0
      %4345 = vmatprep.subr.mxu0 0.0
      %4346 = vmatpush1.msra.mxu0 0.0
      %4347 = vmatprep.subr.mxu0 0.0
      %4348 = vmatpush1.msra.mxu0 0.0
      %4349 = vmatprep.subr.mxu0 0.0
      %4350 = vmatpush1.msra.mxu0 0.0
      %4351 = vmatprep.subr.mxu0 0.0
      %4352 = vmatpush1.msra.mxu0 0.0
      %4353 = vmatprep.subr.mxu0 0.0
      %4354 = vmatpush1.msra.mxu0 0.0
      %4355 = vmatprep.subr.mxu0 0.0
      %4356 = vmatpush1.msra.mxu0 0.0
      %4357 = vmatprep.subr.mxu0 0.0
      %4358 = vmatpush1.msra.mxu0 0.0
      %4359 = vmatprep.subr.mxu0 0.0
      %4360 = vmatpush1.msra.mxu0 0.0
      %4361 = vmatprep.subr.mxu0 0.0
      %4362 = vmatpush1.msra.mxu0 0.0
      %4363 = vmatprep.subr.mxu0 0.0
      %4364 = vmatpush1.msra.mxu0 0.0
      %4365 = vmatprep.mubr.f32.mxu0 0.0
      %4366 = vmatmul.mubr.f32.gmra.mrb[0].mxu0 %v4293
      %v4367 = vpop.f32.mrb[0].mxu0
      %v4368 = vadd.f32 %v4276, %v4367
      %v4369 = vpop.f32.mrb[0].mxu0
      %4370 = vmatprep.mubr.f32.mxu0 0.0
      %4371 = vmatmul.mubr.f32.gmra.mrb[0].mxu0 %v4296
      %v4372 = vpop.f32.mrb[0].mxu0
      %v4373 = vadd.f32 %v4281, %v4372
      %v4374 = vpop.f32.mrb[0].mxu0
      %4375 = vmatprep.mubr.f32.mxu0 0.0
      %4376 = vmatmul.mubr.f32.gmra.mrb[0].mxu0 %v4299
      %v4377 = vpop.f32.mrb[0].mxu0
      %v4378 = vadd.f32 %v4286, %v4377
      %v4379 = vpop.f32.mrb[0].mxu0
      %4380 = vdwg.mxu0
      %4381 = vrot.lane.b32.xlu0 %v3755, 112
      %v4382 = vpop.permute.xlu0 %4381
      %4383 = vrot.lane.b32.xlu0 %v3756, 112
      %v4384 = vpop.permute.xlu0 %4383
      %4385 = vrot.lane.b32.xlu0 %v3757, 112
      %v4386 = vpop.permute.xlu0 %4385
      %4387 = vrot.lane.b32.xlu0 %v3747, 112
      %v4388 = vpop.permute.xlu0 %4387
      %v4389 = vsel %vm805, %v4382, 0
      %v4391 = vsel %vm805, %v4384, 0
      %v4393 = vsel %vm805, %v4386, 0
      %v4395 = vsel %vm805, %v4388, 0
      %4397 = vmatprep.subr.mxu0 0.0
      %4398 = vmatpush1.xpose.msra.mxu0 %v4395
      %4399 = vmatprep.subr.mxu0 0.0
      %4400 = vmatpush1.xpose.msra.mxu0 0.0
      %4401 = vmatprep.subr.mxu0 0.0
      %4402 = vmatpush1.xpose.msra.mxu0 0.0
      %4403 = vmatprep.subr.mxu0 0.0
      %4404 = vmatpush1.xpose.msra.mxu0 0.0
      %4405 = vmatprep.subr.mxu0 0.0
      %4406 = vmatpush1.xpose.msra.mxu0 0.0
      %4407 = vmatprep.subr.mxu0 0.0
      %4408 = vmatpush1.xpose.msra.mxu0 0.0
      %4409 = vmatprep.subr.mxu0 0.0
      %4410 = vmatpush1.xpose.msra.mxu0 0.0
      %4411 = vmatprep.subr.mxu0 0.0
      %4412 = vmatpush1.xpose.msra.mxu0 0.0
      %4413 = vmatprep.subr.mxu0 0.0
      %4414 = vmatpush1.xpose.msra.mxu0 0.0
      %4415 = vmatprep.subr.mxu0 0.0
      %4416 = vmatpush1.xpose.msra.mxu0 0.0
      %4417 = vmatprep.subr.mxu0 0.0
      %4418 = vmatpush1.xpose.msra.mxu0 0.0
      %4419 = vmatprep.subr.mxu0 0.0
      %4420 = vmatpush1.xpose.msra.mxu0 0.0
      %4421 = vmatprep.subr.mxu0 0.0
      %4422 = vmatpush1.xpose.msra.mxu0 0.0
      %4423 = vmatprep.subr.mxu0 0.0
      %4424 = vmatpush1.xpose.msra.mxu0 0.0
      %4425 = vmatprep.subr.mxu0 0.0
      %4426 = vmatpush1.xpose.msra.mxu0 0.0
      %4427 = vmatprep.subr.mxu0 0.0
      %4428 = vmatpush1.xpose.msra.mxu0 0.0
      %4429 = vmatprep.subr.mxu0 0.0
      %4430 = vmatpush1.xpose.msra.mxu0 0.0
      %4431 = vmatprep.subr.mxu0 0.0
      %4432 = vmatpush1.xpose.msra.mxu0 0.0
      %4433 = vmatprep.subr.mxu0 0.0
      %4434 = vmatpush1.xpose.msra.mxu0 0.0
      %4435 = vmatprep.subr.mxu0 0.0
      %4436 = vmatpush1.xpose.msra.mxu0 0.0
      %4437 = vmatprep.subr.mxu0 0.0
      %4438 = vmatpush1.xpose.msra.mxu0 0.0
      %4439 = vmatprep.subr.mxu0 0.0
      %4440 = vmatpush1.xpose.msra.mxu0 0.0
      %4441 = vmatprep.subr.mxu0 0.0
      %4442 = vmatpush1.xpose.msra.mxu0 0.0
      %4443 = vmatprep.subr.mxu0 0.0
      %4444 = vmatpush1.xpose.msra.mxu0 0.0
      %4445 = vmatprep.subr.mxu0 0.0
      %4446 = vmatpush1.xpose.msra.mxu0 0.0
      %4447 = vmatprep.subr.mxu0 0.0
      %4448 = vmatpush1.xpose.msra.mxu0 0.0
      %4449 = vmatprep.subr.mxu0 0.0
      %4450 = vmatpush1.xpose.msra.mxu0 0.0
      %4451 = vmatprep.subr.mxu0 0.0
      %4452 = vmatpush1.xpose.msra.mxu0 0.0
      %4453 = vmatprep.subr.mxu0 0.0
      %4454 = vmatpush1.xpose.msra.mxu0 0.0
      %4455 = vmatprep.subr.mxu0 0.0
      %4456 = vmatpush1.xpose.msra.mxu0 0.0
      %4457 = vmatprep.subr.mxu0 0.0
      %4458 = vmatpush1.xpose.msra.mxu0 0.0
      %4459 = vmatprep.subr.mxu0 0.0
      %4460 = vmatpush1.xpose.msra.mxu0 0.0
      %4461 = vmatprep.mubr.f32.mxu0 0.0
      %4462 = vmatmul.mubr.f32.gmra.mrb[0].mxu0 %v4389
      %v4463 = vpop.f32.mrb[0].mxu0
      %v4464 = vadd.f32 0.0, %v4463
      %v4465 = vpop.f32.mrb[0].mxu0
      %4466 = vmatprep.mubr.f32.mxu0 0.0
      %4467 = vmatmul.mubr.f32.gmra.mrb[0].mxu0 %v4391
      %v4468 = vpop.f32.mrb[0].mxu0
      %v4469 = vadd.f32 0.0, %v4468
      %v4470 = vpop.f32.mrb[0].mxu0
      %4471 = vmatprep.mubr.f32.mxu0 0.0
      %4472 = vmatmul.mubr.f32.gmra.mrb[0].mxu0 %v4393
      %v4473 = vpop.f32.mrb[0].mxu0
      %v4474 = vadd.f32 0.0, %v4473
      %v4475 = vpop.f32.mrb[0].mxu0
      %4476 = vdwg.mxu0
      %v4477 = vsel %vm805, %v4464, -inf
      %4478 = vmax.xlane.f32.xlu0 %v4477
      %v4479 = vpop.xlane.xlu0 %4478
      %v4480 = vsel %vm805, %v4469, -inf
      %4481 = vmax.xlane.f32.xlu0 %v4480
      %v4482 = vpop.xlane.xlu0 %4481
      %v4483 = vsel %vm3856, %v4474, -inf
      %4484 = vmax.xlane.f32.xlu0 %v4483
      %v4485 = vpop.xlane.xlu0 %4484
      %v4486 = vsub.f32 %v4464, %v4479
      %v4487 = vsub.f32 %v4469, %v4482
      %v4488 = vsub.f32 %v4474, %v4485
      %v4489 = vmul.f32 %v4486, 1.442695
      %v4490 = vpow.pop %v4489
      %v4491 = vmul.f32 %v4487, 1.442695
      %v4492 = vpow.pop %v4491
      %v4493 = vmul.f32 %v4488, 1.442695
      %v4494 = vpow.pop %v4493
      %v4495 = vsel %vm805, %v4490, 0.0
      %4496 = vadd.xlane.f32.xlu0 %v4495
      %v4497 = vpop.xlane.xlu0 %4496
      %v4498 = vsel %vm805, %v4492, 0.0
      %4499 = vadd.xlane.f32.xlu0 %v4498
      %v4500 = vpop.xlane.xlu0 %4499
      %v4501 = vsel %vm3856, %v4494, 0.0
      %4502 = vadd.xlane.f32.xlu0 %v4501
      %v4503 = vpop.xlane.xlu0 %4502
      %v4504 = vrcp.pop %v4497
      %v4505 = vrcp.pop %v4500
      %v4506 = vrcp.pop %v4503
      %v4507 = vmul.f32 %v4490, %v4504
      %v4508 = vmul.f32 %v4492, %v4505
      %v4509 = vmul.f32 %v4494, %v4506
      %4510 = vrot.lane.b32.xlu0 %v3747, 80
      %v4511 = vpop.permute.xlu0 %4510
      %v4514 = vsel %vm805, %v4507, 0
      %v4517 = vsel %vm805, %v4508, 0
      %v4520 = vsel %vm805, %v4509, 0
      %4522 = vmatprep.subr.mxu0 0.0
      %4523 = vmatpush1.msra.mxu0 %v4511
      %4524 = vmatprep.subr.mxu0 0.0
      %4525 = vmatpush1.msra.mxu0 0.0
      %4526 = vmatprep.subr.mxu0 0.0
      %4527 = vmatpush1.msra.mxu0 0.0
      %4528 = vmatprep.subr.mxu0 0.0
      %4529 = vmatpush1.msra.mxu0 0.0
      %4530 = vmatprep.subr.mxu0 0.0
      %4531 = vmatpush1.msra.mxu0 0.0
      %4532 = vmatprep.subr.mxu0 0.0
      %4533 = vmatpush1.msra.mxu0 0.0
      %4534 = vmatprep.subr.mxu0 0.0
      %4535 = vmatpush1.msra.mxu0 0.0
      %4536 = vmatprep.subr.mxu0 0.0
      %4537 = vmatpush1.msra.mxu0 0.0
      %4538 = vmatprep.subr.mxu0 0.0
      %4539 = vmatpush1.msra.mxu0 0.0
      %4540 = vmatprep.subr.mxu0 0.0
      %4541 = vmatpush1.msra.mxu0 0.0
      %4542 = vmatprep.subr.mxu0 0.0
      %4543 = vmatpush1.msra.mxu0 0.0
      %4544 = vmatprep.subr.mxu0 0.0
      %4545 = vmatpush1.msra.mxu0 0.0
      %4546 = vmatprep.subr.mxu0 0.0
      %4547 = vmatpush1.msra.mxu0 0.0
      %4548 = vmatprep.subr.mxu0 0.0
      %4549 = vmatpush1.msra.mxu0 0.0
      %4550 = vmatprep.subr.mxu0 0.0
      %4551 = vmatpush1.msra.mxu0 0.0
      %4552 = vmatprep.subr.mxu0 0.0
      %4553 = vmatpush1.msra.mxu0 0.0
      %4554 = vmatprep.subr.mxu0 0.0
      %4555 = vmatpush1.msra.mxu0 0.0
      %4556 = vmatprep.subr.mxu0 0.0
      %4557 = vmatpush1.msra.mxu0 0.0
      %4558 = vmatprep.subr.mxu0 0.0
      %4559 = vmatpush1.msra.mxu0 0.0
      %4560 = vmatprep.subr.mxu0 0.0
      %4561 = vmatpush1.msra.mxu0 0.0
      %4562 = vmatprep.subr.mxu0 0.0
      %4563 = vmatpush1.msra.mxu0 0.0
      %4564 = vmatprep.subr.mxu0 0.0
      %4565 = vmatpush1.msra.mxu0 0.0
      %4566 = vmatprep.subr.mxu0 0.0
      %4567 = vmatpush1.msra.mxu0 0.0
      %4568 = vmatprep.subr.mxu0 0.0
      %4569 = vmatpush1.msra.mxu0 0.0
      %4570 = vmatprep.subr.mxu0 0.0
      %4571 = vmatpush1.msra.mxu0 0.0
      %4572 = vmatprep.subr.mxu0 0.0
      %4573 = vmatpush1.msra.mxu0 0.0
      %4574 = vmatprep.subr.mxu0 0.0
      %4575 = vmatpush1.msra.mxu0 0.0
      %4576 = vmatprep.subr.mxu0 0.0
      %4577 = vmatpush1.msra.mxu0 0.0
      %4578 = vmatprep.subr.mxu0 0.0
      %4579 = vmatpush1.msra.mxu0 0.0
      %4580 = vmatprep.subr.mxu0 0.0
      %4581 = vmatpush1.msra.mxu0 0.0
      %4582 = vmatprep.subr.mxu0 0.0
      %4583 = vmatpush1.msra.mxu0 0.0
      %4584 = vmatprep.subr.mxu0 0.0
      %4585 = vmatpush1.msra.mxu0 0.0
      %4586 = vmatprep.mubr.f32.mxu0 0.0
      %4587 = vmatmul.mubr.f32.gmra.mrb[0].mxu0 %v4514
      %v4588 = vpop.f32.mrb[0].mxu0
      %v4589 = vadd.f32 0.0, %v4588
      %v4590 = vpop.f32.mrb[0].mxu0
      %4591 = vmatprep.mubr.f32.mxu0 0.0
      %4592 = vmatmul.mubr.f32.gmra.mrb[0].mxu0 %v4517
      %v4593 = vpop.f32.mrb[0].mxu0
      %v4594 = vadd.f32 0.0, %v4593
      %v4595 = vpop.f32.mrb[0].mxu0
      %4596 = vmatprep.mubr.f32.mxu0 0.0
      %4597 = vmatmul.mubr.f32.gmra.mrb[0].mxu0 %v4520
      %v4598 = vpop.f32.mrb[0].mxu0
      %v4599 = vadd.f32 0.0, %v4598
      %v4600 = vpop.f32.mrb[0].mxu0
      %4601 = vdwg.mxu0
      %4602 = vrot.lane.b32.xlu0 %v553, 32
      %v4603 = vpop.permute.xlu0 %4602
      %v4606 = vsel %vm805, %v4589, 0
      %v4609 = vsel %vm805, %v4594, 0
      %v4612 = vsel %vm805, %v4599, 0
      %4614 = vmatprep.subr.mxu0 0.0
      %4615 = vmatpush1.msra.mxu0 %v4603
      %4616 = vmatprep.subr.mxu0 0.0
      %4617 = vmatpush1.msra.mxu0 0.0
      %4618 = vmatprep.subr.mxu0 0.0
      %4619 = vmatpush1.msra.mxu0 0.0
      %4620 = vmatprep.subr.mxu0 0.0
      %4621 = vmatpush1.msra.mxu0 0.0
      %4622 = vmatprep.subr.mxu0 0.0
      %4623 = vmatpush1.msra.mxu0 0.0
      %4624 = vmatprep.subr.mxu0 0.0
      %4625 = vmatpush1.msra.mxu0 0.0
      %4626 = vmatprep.subr.mxu0 0.0
      %4627 = vmatpush1.msra.mxu0 0.0
      %4628 = vmatprep.subr.mxu0 0.0
      %4629 = vmatpush1.msra.mxu0 0.0
      %4630 = vmatprep.subr.mxu0 0.0
      %4631 = vmatpush1.msra.mxu0 0.0
      %4632 = vmatprep.subr.mxu0 0.0
      %4633 = vmatpush1.msra.mxu0 0.0
      %4634 = vmatprep.subr.mxu0 0.0
      %4635 = vmatpush1.msra.mxu0 0.0
      %4636 = vmatprep.subr.mxu0 0.0
      %4637 = vmatpush1.msra.mxu0 0.0
      %4638 = vmatprep.subr.mxu0 0.0
      %4639 = vmatpush1.msra.mxu0 0.0
      %4640 = vmatprep.subr.mxu0 0.0
      %4641 = vmatpush1.msra.mxu0 0.0
      %4642 = vmatprep.subr.mxu0 0.0
      %4643 = vmatpush1.msra.mxu0 0.0
      %4644 = vmatprep.subr.mxu0 0.0
      %4645 = vmatpush1.msra.mxu0 0.0
      %4646 = vmatprep.subr.mxu0 0.0
      %4647 = vmatpush1.msra.mxu0 0.0
      %4648 = vmatprep.subr.mxu0 0.0
      %4649 = vmatpush1.msra.mxu0 0.0
      %4650 = vmatprep.subr.mxu0 0.0
      %4651 = vmatpush1.msra.mxu0 0.0
      %4652 = vmatprep.subr.mxu0 0.0
      %4653 = vmatpush1.msra.mxu0 0.0
      %4654 = vmatprep.subr.mxu0 0.0
      %4655 = vmatpush1.msra.mxu0 0.0
      %4656 = vmatprep.subr.mxu0 0.0
      %4657 = vmatpush1.msra.mxu0 0.0
      %4658 = vmatprep.subr.mxu0 0.0
      %4659 = vmatpush1.msra.mxu0 0.0
      %4660 = vmatprep.subr.mxu0 0.0
      %4661 = vmatpush1.msra.mxu0 0.0
      %4662 = vmatprep.subr.mxu0 0.0
      %4663 = vmatpush1.msra.mxu0 0.0
      %4664 = vmatprep.subr.mxu0 0.0
      %4665 = vmatpush1.msra.mxu0 0.0
      %4666 = vmatprep.subr.mxu0 0.0
      %4667 = vmatpush1.msra.mxu0 0.0
      %4668 = vmatprep.subr.mxu0 0.0
      %4669 = vmatpush1.msra.mxu0 0.0
      %4670 = vmatprep.subr.mxu0 0.0
      %4671 = vmatpush1.msra.mxu0 0.0
      %4672 = vmatprep.subr.mxu0 0.0
      %4673 = vmatpush1.msra.mxu0 0.0
      %4674 = vmatprep.subr.mxu0 0.0
      %4675 = vmatpush1.msra.mxu0 0.0
      %4676 = vmatprep.subr.mxu0 0.0
      %4677 = vmatpush1.msra.mxu0 0.0
      %4678 = vmatprep.mubr.f32.mxu0 0.0
      %4679 = vmatmul.mubr.f32.gmra.mrb[0].mxu0 %v4606
      %v4680 = vpop.f32.mrb[0].mxu0
      %v4681 = vadd.f32 0.0, %v4680
      %v4682 = vpop.f32.mrb[0].mxu0
      %4683 = vmatprep.mubr.f32.mxu0 0.0
      %4684 = vmatmul.mubr.f32.gmra.mrb[0].mxu0 %v4609
      %v4685 = vpop.f32.mrb[0].mxu0
      %v4686 = vadd.f32 0.0, %v4685
      %v4687 = vpop.f32.mrb[0].mxu0
      %4688 = vmatprep.mubr.f32.mxu0 0.0
      %4689 = vmatmul.mubr.f32.gmra.mrb[0].mxu0 %v4612
      %v4690 = vpop.f32.mrb[0].mxu0
      %v4691 = vadd.f32 0.0, %v4690
      %v4692 = vpop.f32.mrb[0].mxu0
      %4693 = vdwg.mxu0
      %v4694 = vadd.f32 %v4368, %v4681
      %v4695 = vadd.f32 %v4373, %v4686
      %v4696 = vadd.f32 %v4378, %v4691
      %4697 = vrot.lane.b32.xlu0 %v3755, 104
      %v4698 = vpop.permute.xlu0 %4697
      %4699 = vrot.lane.b32.xlu0 %v3756, 104
      %v4700 = vpop.permute.xlu0 %4699
      %4701 = vrot.lane.b32.xlu0 %v3757, 104
      %v4702 = vpop.permute.xlu0 %4701
      %4703 = vrot.lane.b32.xlu0 %v3747, 104
      %v4704 = vpop.permute.xlu0 %4703
      %v4705 = vsel %vm805, %v4698, 0
      %v4707 = vsel %vm805, %v4700, 0
      %v4709 = vsel %vm805, %v4702, 0
      %v4711 = vsel %vm805, %v4704, 0
      %4713 = vmatprep.subr.mxu0 0.0
      %4714 = vmatpush1.xpose.msra.mxu0 %v4711
      %4715 = vmatprep.subr.mxu0 0.0
      %4716 = vmatpush1.xpose.msra.mxu0 0.0
      %4717 = vmatprep.subr.mxu0 0.0
      %4718 = vmatpush1.xpose.msra.mxu0 0.0
      %4719 = vmatprep.subr.mxu0 0.0
      %4720 = vmatpush1.xpose.msra.mxu0 0.0
      %4721 = vmatprep.subr.mxu0 0.0
      %4722 = vmatpush1.xpose.msra.mxu0 0.0
      %4723 = vmatprep.subr.mxu0 0.0
      %4724 = vmatpush1.xpose.msra.mxu0 0.0
      %4725 = vmatprep.subr.mxu0 0.0
      %4726 = vmatpush1.xpose.msra.mxu0 0.0
      %4727 = vmatprep.subr.mxu0 0.0
      %4728 = vmatpush1.xpose.msra.mxu0 0.0
      %4729 = vmatprep.subr.mxu0 0.0
      %4730 = vmatpush1.xpose.msra.mxu0 0.0
      %4731 = vmatprep.subr.mxu0 0.0
      %4732 = vmatpush1.xpose.msra.mxu0 0.0
      %4733 = vmatprep.subr.mxu0 0.0
      %4734 = vmatpush1.xpose.msra.mxu0 0.0
      %4735 = vmatprep.subr.mxu0 0.0
      %4736 = vmatpush1.xpose.msra.mxu0 0.0
      %4737 = vmatprep.subr.mxu0 0.0
      %4738 = vmatpush1.xpose.msra.mxu0 0.0
      %4739 = vmatprep.subr.mxu0 0.0
      %4740 = vmatpush1.xpose.msra.mxu0 0.0
      %4741 = vmatprep.subr.mxu0 0.0
      %4742 = vmatpush1.xpose.msra.mxu0 0.0
      %4743 = vmatprep.subr.mxu0 0.0
      %4744 = vmatpush1.xpose.msra.mxu0 0.0
      %4745 = vmatprep.subr.mxu0 0.0
      %4746 = vmatpush1.xpose.msra.mxu0 0.0
      %4747 = vmatprep.subr.mxu0 0.0
      %4748 = vmatpush1.xpose.msra.mxu0 0.0
      %4749 = vmatprep.subr.mxu0 0.0
      %4750 = vmatpush1.xpose.msra.mxu0 0.0
      %4751 = vmatprep.subr.mxu0 0.0
      %4752 = vmatpush1.xpose.msra.mxu0 0.0
      %4753 = vmatprep.subr.mxu0 0.0
      %4754 = vmatpush1.xpose.msra.mxu0 0.0
      %4755 = vmatprep.subr.mxu0 0.0
      %4756 = vmatpush1.xpose.msra.mxu0 0.0
      %4757 = vmatprep.subr.mxu0 0.0
      %4758 = vmatpush1.xpose.msra.mxu0 0.0
      %4759 = vmatprep.subr.mxu0 0.0
      %4760 = vmatpush1.xpose.msra.mxu0 0.0
      %4761 = vmatprep.subr.mxu0 0.0
      %4762 = vmatpush1.xpose.msra.mxu0 0.0
      %4763 = vmatprep.subr.mxu0 0.0
      %4764 = vmatpush1.xpose.msra.mxu0 0.0
      %4765 = vmatprep.subr.mxu0 0.0
      %4766 = vmatpush1.xpose.msra.mxu0 0.0
      %4767 = vmatprep.subr.mxu0 0.0
      %4768 = vmatpush1.xpose.msra.mxu0 0.0
      %4769 = vmatprep.subr.mxu0 0.0
      %4770 = vmatpush1.xpose.msra.mxu0 0.0
      %4771 = vmatprep.subr.mxu0 0.0
      %4772 = vmatpush1.xpose.msra.mxu0 0.0
      %4773 = vmatprep.subr.mxu0 0.0
      %4774 = vmatpush1.xpose.msra.mxu0 0.0
      %4775 = vmatprep.subr.mxu0 0.0
      %4776 = vmatpush1.xpose.msra.mxu0 0.0
      %4777 = vmatprep.mubr.f32.mxu0 0.0
      %4778 = vmatmul.mubr.f32.gmra.mrb[0].mxu0 %v4705
      %v4779 = vpop.f32.mrb[0].mxu0
      %v4780 = vadd.f32 0.0, %v4779
      %v4781 = vpop.f32.mrb[0].mxu0
      %4782 = vmatprep.mubr.f32.mxu0 0.0
      %4783 = vmatmul.mubr.f32.gmra.mrb[0].mxu0 %v4707
      %v4784 = vpop.f32.mrb[0].mxu0
      %v4785 = vadd.f32 0.0, %v4784
      %v4786 = vpop.f32.mrb[0].mxu0
      %4787 = vmatprep.mubr.f32.mxu0 0.0
      %4788 = vmatmul.mubr.f32.gmra.mrb[0].mxu0 %v4709
      %v4789 = vpop.f32.mrb[0].mxu0
      %v4790 = vadd.f32 0.0, %v4789
      %v4791 = vpop.f32.mrb[0].mxu0
      %4792 = vdwg.mxu0
      %v4793 = vsel %vm805, %v4780, -inf
      %4794 = vmax.xlane.f32.xlu0 %v4793
      %v4795 = vpop.xlane.xlu0 %4794
      %v4796 = vsel %vm805, %v4785, -inf
      %4797 = vmax.xlane.f32.xlu0 %v4796
      %v4798 = vpop.xlane.xlu0 %4797
      %v4799 = vsel %vm3856, %v4790, -inf
      %4800 = vmax.xlane.f32.xlu0 %v4799
      %v4801 = vpop.xlane.xlu0 %4800
      %v4802 = vsub.f32 %v4780, %v4795
      %v4803 = vsub.f32 %v4785, %v4798
      %v4804 = vsub.f32 %v4790, %v4801
      %v4805 = vmul.f32 %v4802, 1.442695
      %v4806 = vpow.pop %v4805
      %v4807 = vmul.f32 %v4803, 1.442695
      %v4808 = vpow.pop %v4807
      %v4809 = vmul.f32 %v4804, 1.442695
      %v4810 = vpow.pop %v4809
      %v4811 = vsel %vm805, %v4806, 0.0
      %4812 = vadd.xlane.f32.xlu0 %v4811
      %v4813 = vpop.xlane.xlu0 %4812
      %v4814 = vsel %vm805, %v4808, 0.0
      %4815 = vadd.xlane.f32.xlu0 %v4814
      %v4816 = vpop.xlane.xlu0 %4815
      %v4817 = vsel %vm3856, %v4810, 0.0
      %4818 = vadd.xlane.f32.xlu0 %v4817
      %v4819 = vpop.xlane.xlu0 %4818
      %v4820 = vrcp.pop %v4813
      %v4821 = vrcp.pop %v4816
      %v4822 = vrcp.pop %v4819
      %v4823 = vmul.f32 %v4806, %v4820
      %v4824 = vmul.f32 %v4808, %v4821
      %v4825 = vmul.f32 %v4810, %v4822
      %4826 = vrot.lane.b32.xlu0 %v3747, 72
      %v4827 = vpop.permute.xlu0 %4826
      %v4830 = vsel %vm805, %v4823, 0
      %v4833 = vsel %vm805, %v4824, 0
      %v4836 = vsel %vm805, %v4825, 0
      %4838 = vmatprep.subr.mxu0 0.0
      %4839 = vmatpush1.msra.mxu0 %v4827
      %4840 = vmatprep.subr.mxu0 0.0
      %4841 = vmatpush1.msra.mxu0 0.0
      %4842 = vmatprep.subr.mxu0 0.0
      %4843 = vmatpush1.msra.mxu0 0.0
      %4844 = vmatprep.subr.mxu0 0.0
      %4845 = vmatpush1.msra.mxu0 0.0
      %4846 = vmatprep.subr.mxu0 0.0
      %4847 = vmatpush1.msra.mxu0 0.0
      %4848 = vmatprep.subr.mxu0 0.0
      %4849 = vmatpush1.msra.mxu0 0.0
      %4850 = vmatprep.subr.mxu0 0.0
      %4851 = vmatpush1.msra.mxu0 0.0
      %4852 = vmatprep.subr.mxu0 0.0
      %4853 = vmatpush1.msra.mxu0 0.0
      %4854 = vmatprep.subr.mxu0 0.0
      %4855 = vmatpush1.msra.mxu0 0.0
      %4856 = vmatprep.subr.mxu0 0.0
      %4857 = vmatpush1.msra.mxu0 0.0
      %4858 = vmatprep.subr.mxu0 0.0
      %4859 = vmatpush1.msra.mxu0 0.0
      %4860 = vmatprep.subr.mxu0 0.0
      %4861 = vmatpush1.msra.mxu0 0.0
      %4862 = vmatprep.subr.mxu0 0.0
      %4863 = vmatpush1.msra.mxu0 0.0
      %4864 = vmatprep.subr.mxu0 0.0
      %4865 = vmatpush1.msra.mxu0 0.0
      %4866 = vmatprep.subr.mxu0 0.0
      %4867 = vmatpush1.msra.mxu0 0.0
      %4868 = vmatprep.subr.mxu0 0.0
      %4869 = vmatpush1.msra.mxu0 0.0
      %4870 = vmatprep.subr.mxu0 0.0
      %4871 = vmatpush1.msra.mxu0 0.0
      %4872 = vmatprep.subr.mxu0 0.0
      %4873 = vmatpush1.msra.mxu0 0.0
      %4874 = vmatprep.subr.mxu0 0.0
      %4875 = vmatpush1.msra.mxu0 0.0
      %4876 = vmatprep.subr.mxu0 0.0
      %4877 = vmatpush1.msra.mxu0 0.0
      %4878 = vmatprep.subr.mxu0 0.0
      %4879 = vmatpush1.msra.mxu0 0.0
      %4880 = vmatprep.subr.mxu0 0.0
      %4881 = vmatpush1.msra.mxu0 0.0
      %4882 = vmatprep.subr.mxu0 0.0
      %4883 = vmatpush1.msra.mxu0 0.0
      %4884 = vmatprep.subr.mxu0 0.0
      %4885 = vmatpush1.msra.mxu0 0.0
      %4886 = vmatprep.subr.mxu0 0.0
      %4887 = vmatpush1.msra.mxu0 0.0
      %4888 = vmatprep.subr.mxu0 0.0
      %4889 = vmatpush1.msra.mxu0 0.0
      %4890 = vmatprep.subr.mxu0 0.0
      %4891 = vmatpush1.msra.mxu0 0.0
      %4892 = vmatprep.subr.mxu0 0.0
      %4893 = vmatpush1.msra.mxu0 0.0
      %4894 = vmatprep.subr.mxu0 0.0
      %4895 = vmatpush1.msra.mxu0 0.0
      %4896 = vmatprep.subr.mxu0 0.0
      %4897 = vmatpush1.msra.mxu0 0.0
      %4898 = vmatprep.subr.mxu0 0.0
      %4899 = vmatpush1.msra.mxu0 0.0
      %4900 = vmatprep.subr.mxu0 0.0
      %4901 = vmatpush1.msra.mxu0 0.0
      %4902 = vmatprep.mubr.f32.mxu0 0.0
      %4903 = vmatmul.mubr.f32.gmra.mrb[0].mxu0 %v4830
      %v4904 = vpop.f32.mrb[0].mxu0
      %v4905 = vadd.f32 0.0, %v4904
      %v4906 = vpop.f32.mrb[0].mxu0
      %4907 = vmatprep.mubr.f32.mxu0 0.0
      %4908 = vmatmul.mubr.f32.gmra.mrb[0].mxu0 %v4833
      %v4909 = vpop.f32.mrb[0].mxu0
      %v4910 = vadd.f32 0.0, %v4909
      %v4911 = vpop.f32.mrb[0].mxu0
      %4912 = vmatprep.mubr.f32.mxu0 0.0
      %4913 = vmatmul.mubr.f32.gmra.mrb[0].mxu0 %v4836
      %v4914 = vpop.f32.mrb[0].mxu0
      %v4915 = vadd.f32 0.0, %v4914
      %v4916 = vpop.f32.mrb[0].mxu0
      %4917 = vdwg.mxu0
      %4918 = vrot.lane.b32.xlu0 %v556, 32
      %v4919 = vpop.permute.xlu0 %4918
      %v4922 = vsel %vm805, %v4905, 0
      %v4925 = vsel %vm805, %v4910, 0
      %v4928 = vsel %vm805, %v4915, 0
      %4930 = vmatprep.subr.mxu0 0.0
      %4931 = vmatpush1.msra.mxu0 %v4919
      %4932 = vmatprep.subr.mxu0 0.0
      %4933 = vmatpush1.msra.mxu0 0.0
      %4934 = vmatprep.subr.mxu0 0.0
      %4935 = vmatpush1.msra.mxu0 0.0
      %4936 = vmatprep.subr.mxu0 0.0
      %4937 = vmatpush1.msra.mxu0 0.0
      %4938 = vmatprep.subr.mxu0 0.0
      %4939 = vmatpush1.msra.mxu0 0.0
      %4940 = vmatprep.subr.mxu0 0.0
      %4941 = vmatpush1.msra.mxu0 0.0
      %4942 = vmatprep.subr.mxu0 0.0
      %4943 = vmatpush1.msra.mxu0 0.0
      %4944 = vmatprep.subr.mxu0 0.0
      %4945 = vmatpush1.msra.mxu0 0.0
      %4946 = vmatprep.subr.mxu0 0.0
      %4947 = vmatpush1.msra.mxu0 0.0
      %4948 = vmatprep.subr.mxu0 0.0
      %4949 = vmatpush1.msra.mxu0 0.0
      %4950 = vmatprep.subr.mxu0 0.0
      %4951 = vmatpush1.msra.mxu0 0.0
      %4952 = vmatprep.subr.mxu0 0.0
      %4953 = vmatpush1.msra.mxu0 0.0
      %4954 = vmatprep.subr.mxu0 0.0
      %4955 = vmatpush1.msra.mxu0 0.0
      %4956 = vmatprep.subr.mxu0 0.0
      %4957 = vmatpush1.msra.mxu0 0.0
      %4958 = vmatprep.subr.mxu0 0.0
      %4959 = vmatpush1.msra.mxu0 0.0
      %4960 = vmatprep.subr.mxu0 0.0
      %4961 = vmatpush1.msra.mxu0 0.0
      %4962 = vmatprep.subr.mxu0 0.0
      %4963 = vmatpush1.msra.mxu0 0.0
      %4964 = vmatprep.subr.mxu0 0.0
      %4965 = vmatpush1.msra.mxu0 0.0
      %4966 = vmatprep.subr.mxu0 0.0
      %4967 = vmatpush1.msra.mxu0 0.0
      %4968 = vmatprep.subr.mxu0 0.0
      %4969 = vmatpush1.msra.mxu0 0.0
      %4970 = vmatprep.subr.mxu0 0.0
      %4971 = vmatpush1.msra.mxu0 0.0
      %4972 = vmatprep.subr.mxu0 0.0
      %4973 = vmatpush1.msra.mxu0 0.0
      %4974 = vmatprep.subr.mxu0 0.0
      %4975 = vmatpush1.msra.mxu0 0.0
      %4976 = vmatprep.subr.mxu0 0.0
      %4977 = vmatpush1.msra.mxu0 0.0
      %4978 = vmatprep.subr.mxu0 0.0
      %4979 = vmatpush1.msra.mxu0 0.0
      %4980 = vmatprep.subr.mxu0 0.0
      %4981 = vmatpush1.msra.mxu0 0.0
      %4982 = vmatprep.subr.mxu0 0.0
      %4983 = vmatpush1.msra.mxu0 0.0
      %4984 = vmatprep.subr.mxu0 0.0
      %4985 = vmatpush1.msra.mxu0 0.0
      %4986 = vmatprep.subr.mxu0 0.0
      %4987 = vmatpush1.msra.mxu0 0.0
      %4988 = vmatprep.subr.mxu0 0.0
      %4989 = vmatpush1.msra.mxu0 0.0
      %4990 = vmatprep.subr.mxu0 0.0
      %4991 = vmatpush1.msra.mxu0 0.0
      %4992 = vmatprep.subr.mxu0 0.0
      %4993 = vmatpush1.msra.mxu0 0.0
      %4994 = vmatprep.mubr.f32.mxu0 0.0
      %4995 = vmatmul.mubr.f32.gmra.mrb[0].mxu0 %v4922
      %v4996 = vpop.f32.mrb[0].mxu0
      %v4997 = vadd.f32 0.0, %v4996
      %v4998 = vpop.f32.mrb[0].mxu0
      %4999 = vmatprep.mubr.f32.mxu0 0.0
      %5000 = vmatmul.mubr.f32.gmra.mrb[0].mxu0 %v4925
      %v5001 = vpop.f32.mrb[0].mxu0
      %v5002 = vadd.f32 0.0, %v5001
      %v5003 = vpop.f32.mrb[0].mxu0
      %5004 = vmatprep.mubr.f32.mxu0 0.0
      %5005 = vmatmul.mubr.f32.gmra.mrb[0].mxu0 %v4928
      %v5006 = vpop.f32.mrb[0].mxu0
      %v5007 = vadd.f32 0.0, %v5006
      %v5008 = vpop.f32.mrb[0].mxu0
      %5009 = vdwg.mxu0
      %v5010 = vadd.f32 %v4694, %v4997
      %v5011 = vadd.f32 %v4695, %v5002
      %v5012 = vadd.f32 %v4696, %v5007
      %v5013 = vmul.f32 %v3646, 0.35355338
      %v5014 = vmul.f32 %v3651, 0.35355338
      %v5017 = vrot.slane %v3757, 1
      %v5018 = vrot.slane %v5013, 1
      %v5019 = vsel %vm2125, %v5017, %v5018
      %v5020 = vrot.slane %v5014, 1
      %v5021 = vsel %vm2125, %v5018, %v5020
      %v5022 = vsel %vm805, %v5019, 0
      %v5024 = vsel %vm805, %v5021, 0
      %v5026 = vsel %vm805, %v5020, 0
      %v5029 = vsel %vm805, %v3752, 0
      %5031 = vmatprep.subr.mxu0 0.0
      %5032 = vmatpush1.xpose.msra.mxu0 %v5029
      %5033 = vmatprep.subr.mxu0 0.0
      %5034 = vmatpush1.xpose.msra.mxu0 0.0
      %5035 = vmatprep.subr.mxu0 0.0
      %5036 = vmatpush1.xpose.msra.mxu0 0.0
      %5037 = vmatprep.subr.mxu0 0.0
      %5038 = vmatpush1.xpose.msra.mxu0 0.0
      %5039 = vmatprep.subr.mxu0 0.0
      %5040 = vmatpush1.xpose.msra.mxu0 0.0
      %5041 = vmatprep.subr.mxu0 0.0
      %5042 = vmatpush1.xpose.msra.mxu0 0.0
      %5043 = vmatprep.subr.mxu0 0.0
      %5044 = vmatpush1.xpose.msra.mxu0 0.0
      %5045 = vmatprep.subr.mxu0 0.0
      %5046 = vmatpush1.xpose.msra.mxu0 0.0
      %5047 = vmatprep.subr.mxu0 0.0
      %5048 = vmatpush1.xpose.msra.mxu0 0.0
      %5049 = vmatprep.subr.mxu0 0.0
      %5050 = vmatpush1.xpose.msra.mxu0 0.0
      %5051 = vmatprep.subr.mxu0 0.0
      %5052 = vmatpush1.xpose.msra.mxu0 0.0
      %5053 = vmatprep.subr.mxu0 0.0
      %5054 = vmatpush1.xpose.msra.mxu0 0.0
      %5055 = vmatprep.subr.mxu0 0.0
      %5056 = vmatpush1.xpose.msra.mxu0 0.0
      %5057 = vmatprep.subr.mxu0 0.0
      %5058 = vmatpush1.xpose.msra.mxu0 0.0
      %5059 = vmatprep.subr.mxu0 0.0
      %5060 = vmatpush1.xpose.msra.mxu0 0.0
      %5061 = vmatprep.subr.mxu0 0.0
      %5062 = vmatpush1.xpose.msra.mxu0 0.0
      %5063 = vmatprep.subr.mxu0 0.0
      %5064 = vmatpush1.xpose.msra.mxu0 0.0
      %5065 = vmatprep.subr.mxu0 0.0
      %5066 = vmatpush1.xpose.msra.mxu0 0.0
      %5067 = vmatprep.subr.mxu0 0.0
      %5068 = vmatpush1.xpose.msra.mxu0 0.0
      %5069 = vmatprep.subr.mxu0 0.0
      %5070 = vmatpush1.xpose.msra.mxu0 0.0
      %5071 = vmatprep.subr.mxu0 0.0
      %5072 = vmatpush1.xpose.msra.mxu0 0.0
      %5073 = vmatprep.subr.mxu0 0.0
      %5074 = vmatpush1.xpose.msra.mxu0 0.0
      %5075 = vmatprep.subr.mxu0 0.0
      %5076 = vmatpush1.xpose.msra.mxu0 0.0
      %5077 = vmatprep.subr.mxu0 0.0
      %5078 = vmatpush1.xpose.msra.mxu0 0.0
      %5079 = vmatprep.subr.mxu0 0.0
      %5080 = vmatpush1.xpose.msra.mxu0 0.0
      %5081 = vmatprep.subr.mxu0 0.0
      %5082 = vmatpush1.xpose.msra.mxu0 0.0
      %5083 = vmatprep.subr.mxu0 0.0
      %5084 = vmatpush1.xpose.msra.mxu0 0.0
      %5085 = vmatprep.subr.mxu0 0.0
      %5086 = vmatpush1.xpose.msra.mxu0 0.0
      %5087 = vmatprep.subr.mxu0 0.0
      %5088 = vmatpush1.xpose.msra.mxu0 0.0
      %5089 = vmatprep.subr.mxu0 0.0
      %5090 = vmatpush1.xpose.msra.mxu0 0.0
      %5091 = vmatprep.subr.mxu0 0.0
      %5092 = vmatpush1.xpose.msra.mxu0 0.0
      %5093 = vmatprep.subr.mxu0 0.0
      %5094 = vmatpush1.xpose.msra.mxu0 0.0
      %5095 = vmatprep.mubr.f32.mxu0 0.0
      %5096 = vmatmul.mubr.f32.gmra.mrb[0].mxu0 %v5022
      %v5097 = vpop.f32.mrb[0].mxu0
      %v5098 = vadd.f32 0.0, %v5097
      %v5099 = vpop.f32.mrb[0].mxu0
      %5100 = vmatprep.mubr.f32.mxu0 0.0
      %5101 = vmatmul.mubr.f32.gmra.mrb[0].mxu0 %v5024
      %v5102 = vpop.f32.mrb[0].mxu0
      %v5103 = vadd.f32 0.0, %v5102
      %v5104 = vpop.f32.mrb[0].mxu0
      %5105 = vmatprep.mubr.f32.mxu0 0.0
      %5106 = vmatmul.mubr.f32.gmra.mrb[0].mxu0 %v5026
      %v5107 = vpop.f32.mrb[0].mxu0
      %v5108 = vadd.f32 0.0, %v5107
      %v5109 = vpop.f32.mrb[0].mxu0
      %5110 = vdwg.mxu0
      %v5111 = vsel %vm805, %v5098, -inf
      %5112 = vmax.xlane.f32.xlu0 %v5111
      %v5113 = vpop.xlane.xlu0 %5112
      %v5114 = vsel %vm805, %v5103, -inf
      %5115 = vmax.xlane.f32.xlu0 %v5114
      %v5116 = vpop.xlane.xlu0 %5115
      %v5117 = vsel %vm3856, %v5108, -inf
      %5118 = vmax.xlane.f32.xlu0 %v5117
      %v5119 = vpop.xlane.xlu0 %5118
      %v5120 = vsub.f32 %v5098, %v5113
      %v5121 = vsub.f32 %v5103, %v5116
      %v5122 = vsub.f32 %v5108, %v5119
      %v5123 = vmul.f32 %v5120, 1.442695
      %v5124 = vpow.pop %v5123
      %v5125 = vmul.f32 %v5121, 1.442695
      %v5126 = vpow.pop %v5125
      %v5127 = vmul.f32 %v5122, 1.442695
      %v5128 = vpow.pop %v5127
      %v5129 = vsel %vm805, %v5124, 0.0
      %5130 = vadd.xlane.f32.xlu0 %v5129
      %v5131 = vpop.xlane.xlu0 %5130
      %v5132 = vsel %vm805, %v5126, 0.0
      %5133 = vadd.xlane.f32.xlu0 %v5132
      %v5134 = vpop.xlane.xlu0 %5133
      %v5135 = vsel %vm3856, %v5128, 0.0
      %5136 = vadd.xlane.f32.xlu0 %v5135
      %v5137 = vpop.xlane.xlu0 %5136
      %v5138 = vrcp.pop %v5131
      %v5139 = vrcp.pop %v5134
      %v5140 = vrcp.pop %v5137
      %v5141 = vmul.f32 %v5124, %v5138
      %v5142 = vmul.f32 %v5126, %v5139
      %v5143 = vmul.f32 %v5128, %v5140
      %5144 = vrot.lane.b32.xlu0 %v3752, 96
      %v5145 = vpop.permute.xlu0 %5144
      %v5148 = vsel %vm805, %v5141, 0
      %v5151 = vsel %vm805, %v5142, 0
      %v5154 = vsel %vm805, %v5143, 0
      %5156 = vmatprep.subr.mxu0 0.0
      %5157 = vmatpush1.msra.mxu0 %v5145
      %5158 = vmatprep.subr.mxu0 0.0
      %5159 = vmatpush1.msra.mxu0 0.0
      %5160 = vmatprep.subr.mxu0 0.0
      %5161 = vmatpush1.msra.mxu0 0.0
      %5162 = vmatprep.subr.mxu0 0.0
      %5163 = vmatpush1.msra.mxu0 0.0
      %5164 = vmatprep.subr.mxu0 0.0
      %5165 = vmatpush1.msra.mxu0 0.0
      %5166 = vmatprep.subr.mxu0 0.0
      %5167 = vmatpush1.msra.mxu0 0.0
      %5168 = vmatprep.subr.mxu0 0.0
      %5169 = vmatpush1.msra.mxu0 0.0
      %5170 = vmatprep.subr.mxu0 0.0
      %5171 = vmatpush1.msra.mxu0 0.0
      %5172 = vmatprep.subr.mxu0 0.0
      %5173 = vmatpush1.msra.mxu0 0.0
      %5174 = vmatprep.subr.mxu0 0.0
      %5175 = vmatpush1.msra.mxu0 0.0
      %5176 = vmatprep.subr.mxu0 0.0
      %5177 = vmatpush1.msra.mxu0 0.0
      %5178 = vmatprep.subr.mxu0 0.0
      %5179 = vmatpush1.msra.mxu0 0.0
      %5180 = vmatprep.subr.mxu0 0.0
      %5181 = vmatpush1.msra.mxu0 0.0
      %5182 = vmatprep.subr.mxu0 0.0
      %5183 = vmatpush1.msra.mxu0 0.0
      %5184 = vmatprep.subr.mxu0 0.0
      %5185 = vmatpush1.msra.mxu0 0.0
      %5186 = vmatprep.subr.mxu0 0.0
      %5187 = vmatpush1.msra.mxu0 0.0
      %5188 = vmatprep.subr.mxu0 0.0
      %5189 = vmatpush1.msra.mxu0 0.0
      %5190 = vmatprep.subr.mxu0 0.0
      %5191 = vmatpush1.msra.mxu0 0.0
      %5192 = vmatprep.subr.mxu0 0.0
      %5193 = vmatpush1.msra.mxu0 0.0
      %5194 = vmatprep.subr.mxu0 0.0
      %5195 = vmatpush1.msra.mxu0 0.0
      %5196 = vmatprep.subr.mxu0 0.0
      %5197 = vmatpush1.msra.mxu0 0.0
      %5198 = vmatprep.subr.mxu0 0.0
      %5199 = vmatpush1.msra.mxu0 0.0
      %5200 = vmatprep.subr.mxu0 0.0
      %5201 = vmatpush1.msra.mxu0 0.0
      %5202 = vmatprep.subr.mxu0 0.0
      %5203 = vmatpush1.msra.mxu0 0.0
      %5204 = vmatprep.subr.mxu0 0.0
      %5205 = vmatpush1.msra.mxu0 0.0
      %5206 = vmatprep.subr.mxu0 0.0
      %5207 = vmatpush1.msra.mxu0 0.0
      %5208 = vmatprep.subr.mxu0 0.0
      %5209 = vmatpush1.msra.mxu0 0.0
      %5210 = vmatprep.subr.mxu0 0.0
      %5211 = vmatpush1.msra.mxu0 0.0
      %5212 = vmatprep.subr.mxu0 0.0
      %5213 = vmatpush1.msra.mxu0 0.0
      %5214 = vmatprep.subr.mxu0 0.0
      %5215 = vmatpush1.msra.mxu0 0.0
      %5216 = vmatprep.subr.mxu0 0.0
      %5217 = vmatpush1.msra.mxu0 0.0
      %5218 = vmatprep.subr.mxu0 0.0
      %5219 = vmatpush1.msra.mxu0 0.0
      %5220 = vmatprep.mubr.f32.mxu0 0.0
      %5221 = vmatmul.mubr.f32.gmra.mrb[0].mxu0 %v5148
      %v5222 = vpop.f32.mrb[0].mxu0
      %v5223 = vadd.f32 0.0, %v5222
      %v5224 = vpop.f32.mrb[0].mxu0
      %5225 = vmatprep.mubr.f32.mxu0 0.0
      %5226 = vmatmul.mubr.f32.gmra.mrb[0].mxu0 %v5151
      %v5227 = vpop.f32.mrb[0].mxu0
      %v5228 = vadd.f32 0.0, %v5227
      %v5229 = vpop.f32.mrb[0].mxu0
      %5230 = vmatprep.mubr.f32.mxu0 0.0
      %5231 = vmatmul.mubr.f32.gmra.mrb[0].mxu0 %v5154
      %v5232 = vpop.f32.mrb[0].mxu0
      %v5233 = vadd.f32 0.0, %v5232
      %v5234 = vpop.f32.mrb[0].mxu0
      %5235 = vdwg.mxu0
      %5236 = vrot.lane.b32.xlu0 %v5019, 120
      %v5237 = vpop.permute.xlu0 %5236
      %5238 = vrot.lane.b32.xlu0 %v5021, 120
      %v5239 = vpop.permute.xlu0 %5238
      %5240 = vrot.lane.b32.xlu0 %v5020, 120
      %v5241 = vpop.permute.xlu0 %5240
      %5242 = vrot.lane.b32.xlu0 %v3752, 120
      %v5243 = vpop.permute.xlu0 %5242
      %v5244 = vsel %vm805, %v5237, 0
      %v5246 = vsel %vm805, %v5239, 0
      %v5248 = vsel %vm805, %v5241, 0
      %v5250 = vsel %vm805, %v5243, 0
      %5252 = vmatprep.subr.mxu0 0.0
      %5253 = vmatpush1.xpose.msra.mxu0 %v5250
      %5254 = vmatprep.subr.mxu0 0.0
      %5255 = vmatpush1.xpose.msra.mxu0 0.0
      %5256 = vmatprep.subr.mxu0 0.0
      %5257 = vmatpush1.xpose.msra.mxu0 0.0
      %5258 = vmatprep.subr.mxu0 0.0
      %5259 = vmatpush1.xpose.msra.mxu0 0.0
      %5260 = vmatprep.subr.mxu0 0.0
      %5261 = vmatpush1.xpose.msra.mxu0 0.0
      %5262 = vmatprep.subr.mxu0 0.0
      %5263 = vmatpush1.xpose.msra.mxu0 0.0
      %5264 = vmatprep.subr.mxu0 0.0
      %5265 = vmatpush1.xpose.msra.mxu0 0.0
      %5266 = vmatprep.subr.mxu0 0.0
      %5267 = vmatpush1.xpose.msra.mxu0 0.0
      %5268 = vmatprep.subr.mxu0 0.0
      %5269 = vmatpush1.xpose.msra.mxu0 0.0
      %5270 = vmatprep.subr.mxu0 0.0
      %5271 = vmatpush1.xpose.msra.mxu0 0.0
      %5272 = vmatprep.subr.mxu0 0.0
      %5273 = vmatpush1.xpose.msra.mxu0 0.0
      %5274 = vmatprep.subr.mxu0 0.0
      %5275 = vmatpush1.xpose.msra.mxu0 0.0
      %5276 = vmatprep.subr.mxu0 0.0
      %5277 = vmatpush1.xpose.msra.mxu0 0.0
      %5278 = vmatprep.subr.mxu0 0.0
      %5279 = vmatpush1.xpose.msra.mxu0 0.0
      %5280 = vmatprep.subr.mxu0 0.0
      %5281 = vmatpush1.xpose.msra.mxu0 0.0
      %5282 = vmatprep.subr.mxu0 0.0
      %5283 = vmatpush1.xpose.msra.mxu0 0.0
      %5284 = vmatprep.subr.mxu0 0.0
      %5285 = vmatpush1.xpose.msra.mxu0 0.0
      %5286 = vmatprep.subr.mxu0 0.0
      %5287 = vmatpush1.xpose.msra.mxu0 0.0
      %5288 = vmatprep.subr.mxu0 0.0
      %5289 = vmatpush1.xpose.msra.mxu0 0.0
      %5290 = vmatprep.subr.mxu0 0.0
      %5291 = vmatpush1.xpose.msra.mxu0 0.0
      %5292 = vmatprep.subr.mxu0 0.0
      %5293 = vmatpush1.xpose.msra.mxu0 0.0
      %5294 = vmatprep.subr.mxu0 0.0
      %5295 = vmatpush1.xpose.msra.mxu0 0.0
      %5296 = vmatprep.subr.mxu0 0.0
      %5297 = vmatpush1.xpose.msra.mxu0 0.0
      %5298 = vmatprep.subr.mxu0 0.0
      %5299 = vmatpush1.xpose.msra.mxu0 0.0
      %5300 = vmatprep.subr.mxu0 0.0
      %5301 = vmatpush1.xpose.msra.mxu0 0.0
      %5302 = vmatprep.subr.mxu0 0.0
      %5303 = vmatpush1.xpose.msra.mxu0 0.0
      %5304 = vmatprep.subr.mxu0 0.0
      %5305 = vmatpush1.xpose.msra.mxu0 0.0
      %5306 = vmatprep.subr.mxu0 0.0
      %5307 = vmatpush1.xpose.msra.mxu0 0.0
      %5308 = vmatprep.subr.mxu0 0.0
      %5309 = vmatpush1.xpose.msra.mxu0 0.0
      %5310 = vmatprep.subr.mxu0 0.0
      %5311 = vmatpush1.xpose.msra.mxu0 0.0
      %5312 = vmatprep.subr.mxu0 0.0
      %5313 = vmatpush1.xpose.msra.mxu0 0.0
      %5314 = vmatprep.subr.mxu0 0.0
      %5315 = vmatpush1.xpose.msra.mxu0 0.0
      %5316 = vmatprep.mubr.f32.mxu0 0.0
      %5317 = vmatmul.mubr.f32.gmra.mrb[0].mxu0 %v5244
      %v5318 = vpop.f32.mrb[0].mxu0
      %v5319 = vadd.f32 0.0, %v5318
      %v5320 = vpop.f32.mrb[0].mxu0
      %5321 = vmatprep.mubr.f32.mxu0 0.0
      %5322 = vmatmul.mubr.f32.gmra.mrb[0].mxu0 %v5246
      %v5323 = vpop.f32.mrb[0].mxu0
      %v5324 = vadd.f32 0.0, %v5323
      %v5325 = vpop.f32.mrb[0].mxu0
      %5326 = vmatprep.mubr.f32.mxu0 0.0
      %5327 = vmatmul.mubr.f32.gmra.mrb[0].mxu0 %v5248
      %v5328 = vpop.f32.mrb[0].mxu0
      %v5329 = vadd.f32 0.0, %v5328
      %v5330 = vpop.f32.mrb[0].mxu0
      %5331 = vdwg.mxu0
      %v5332 = vsel %vm805, %v5319, -inf
      %5333 = vmax.xlane.f32.xlu0 %v5332
      %v5334 = vpop.xlane.xlu0 %5333
      %v5335 = vsel %vm805, %v5324, -inf
      %5336 = vmax.xlane.f32.xlu0 %v5335
      %v5337 = vpop.xlane.xlu0 %5336
      %v5338 = vsel %vm3856, %v5329, -inf
      %5339 = vmax.xlane.f32.xlu0 %v5338
      %v5340 = vpop.xlane.xlu0 %5339
      %v5341 = vsub.f32 %v5319, %v5334
      %v5342 = vsub.f32 %v5324, %v5337
      %v5343 = vsub.f32 %v5329, %v5340
      %v5344 = vmul.f32 %v5341, 1.442695
      %v5345 = vpow.pop %v5344
      %v5346 = vmul.f32 %v5342, 1.442695
      %v5347 = vpow.pop %v5346
      %v5348 = vmul.f32 %v5343, 1.442695
      %v5349 = vpow.pop %v5348
      %v5350 = vsel %vm805, %v5345, 0.0
      %5351 = vadd.xlane.f32.xlu0 %v5350
      %v5352 = vpop.xlane.xlu0 %5351
      %v5353 = vsel %vm805, %v5347, 0.0
      %5354 = vadd.xlane.f32.xlu0 %v5353
      %v5355 = vpop.xlane.xlu0 %5354
      %v5356 = vsel %vm3856, %v5349, 0.0
      %5357 = vadd.xlane.f32.xlu0 %v5356
      %v5358 = vpop.xlane.xlu0 %5357
      %v5359 = vrcp.pop %v5352
      %v5360 = vrcp.pop %v5355
      %v5361 = vrcp.pop %v5358
      %v5362 = vmul.f32 %v5345, %v5359
      %v5363 = vmul.f32 %v5347, %v5360
      %v5364 = vmul.f32 %v5349, %v5361
      %5365 = vrot.lane.b32.xlu0 %v3752, 88
      %v5366 = vpop.permute.xlu0 %5365
      %v5369 = vsel %vm805, %v5362, 0
      %v5372 = vsel %vm805, %v5363, 0
      %v5375 = vsel %vm805, %v5364, 0
      %5377 = vmatprep.subr.mxu0 0.0
      %5378 = vmatpush1.msra.mxu0 %v5366
      %5379 = vmatprep.subr.mxu0 0.0
      %5380 = vmatpush1.msra.mxu0 0.0
      %5381 = vmatprep.subr.mxu0 0.0
      %5382 = vmatpush1.msra.mxu0 0.0
      %5383 = vmatprep.subr.mxu0 0.0
      %5384 = vmatpush1.msra.mxu0 0.0
      %5385 = vmatprep.subr.mxu0 0.0
      %5386 = vmatpush1.msra.mxu0 0.0
      %5387 = vmatprep.subr.mxu0 0.0
      %5388 = vmatpush1.msra.mxu0 0.0
      %5389 = vmatprep.subr.mxu0 0.0
      %5390 = vmatpush1.msra.mxu0 0.0
      %5391 = vmatprep.subr.mxu0 0.0
      %5392 = vmatpush1.msra.mxu0 0.0
      %5393 = vmatprep.subr.mxu0 0.0
      %5394 = vmatpush1.msra.mxu0 0.0
      %5395 = vmatprep.subr.mxu0 0.0
      %5396 = vmatpush1.msra.mxu0 0.0
      %5397 = vmatprep.subr.mxu0 0.0
      %5398 = vmatpush1.msra.mxu0 0.0
      %5399 = vmatprep.subr.mxu0 0.0
      %5400 = vmatpush1.msra.mxu0 0.0
      %5401 = vmatprep.subr.mxu0 0.0
      %5402 = vmatpush1.msra.mxu0 0.0
      %5403 = vmatprep.subr.mxu0 0.0
      %5404 = vmatpush1.msra.mxu0 0.0
      %5405 = vmatprep.subr.mxu0 0.0
      %5406 = vmatpush1.msra.mxu0 0.0
      %5407 = vmatprep.subr.mxu0 0.0
      %5408 = vmatpush1.msra.mxu0 0.0
      %5409 = vmatprep.subr.mxu0 0.0
      %5410 = vmatpush1.msra.mxu0 0.0
      %5411 = vmatprep.subr.mxu0 0.0
      %5412 = vmatpush1.msra.mxu0 0.0
      %5413 = vmatprep.subr.mxu0 0.0
      %5414 = vmatpush1.msra.mxu0 0.0
      %5415 = vmatprep.subr.mxu0 0.0
      %5416 = vmatpush1.msra.mxu0 0.0
      %5417 = vmatprep.subr.mxu0 0.0
      %5418 = vmatpush1.msra.mxu0 0.0
      %5419 = vmatprep.subr.mxu0 0.0
      %5420 = vmatpush1.msra.mxu0 0.0
      %5421 = vmatprep.subr.mxu0 0.0
      %5422 = vmatpush1.msra.mxu0 0.0
      %5423 = vmatprep.subr.mxu0 0.0
      %5424 = vmatpush1.msra.mxu0 0.0
      %5425 = vmatprep.subr.mxu0 0.0
      %5426 = vmatpush1.msra.mxu0 0.0
      %5427 = vmatprep.subr.mxu0 0.0
      %5428 = vmatpush1.msra.mxu0 0.0
      %5429 = vmatprep.subr.mxu0 0.0
      %5430 = vmatpush1.msra.mxu0 0.0
      %5431 = vmatprep.subr.mxu0 0.0
      %5432 = vmatpush1.msra.mxu0 0.0
      %5433 = vmatprep.subr.mxu0 0.0
      %5434 = vmatpush1.msra.mxu0 0.0
      %5435 = vmatprep.subr.mxu0 0.0
      %5436 = vmatpush1.msra.mxu0 0.0
      %5437 = vmatprep.subr.mxu0 0.0
      %5438 = vmatpush1.msra.mxu0 0.0
      %5439 = vmatprep.subr.mxu0 0.0
      %5440 = vmatpush1.msra.mxu0 0.0
      %5441 = vmatprep.mubr.f32.mxu0 0.0
      %5442 = vmatmul.mubr.f32.gmra.mrb[0].mxu0 %v5369
      %v5443 = vpop.f32.mrb[0].mxu0
      %v5444 = vadd.f32 0.0, %v5443
      %v5445 = vpop.f32.mrb[0].mxu0
      %5446 = vmatprep.mubr.f32.mxu0 0.0
      %5447 = vmatmul.mubr.f32.gmra.mrb[0].mxu0 %v5372
      %v5448 = vpop.f32.mrb[0].mxu0
      %v5449 = vadd.f32 0.0, %v5448
      %v5450 = vpop.f32.mrb[0].mxu0
      %5451 = vmatprep.mubr.f32.mxu0 0.0
      %5452 = vmatmul.mubr.f32.gmra.mrb[0].mxu0 %v5375
      %v5453 = vpop.f32.mrb[0].mxu0
      %v5454 = vadd.f32 0.0, %v5453
      %v5455 = vpop.f32.mrb[0].mxu0
      %5456 = vdwg.mxu0
      %v5458 = vsel %vm805, %v5444, 0
      %v5461 = vsel %vm805, %v5449, 0
      %v5464 = vsel %vm805, %v5454, 0
      %5466 = vmatprep.subr.mxu0 0.0
      %5467 = vmatpush1.msra.mxu0 %v4198
      %5468 = vmatprep.subr.mxu0 0.0
      %5469 = vmatpush1.msra.mxu0 0.0
      %5470 = vmatprep.subr.mxu0 0.0
      %5471 = vmatpush1.msra.mxu0 0.0
      %5472 = vmatprep.subr.mxu0 0.0
      %5473 = vmatpush1.msra.mxu0 0.0
      %5474 = vmatprep.subr.mxu0 0.0
      %5475 = vmatpush1.msra.mxu0 0.0
      %5476 = vmatprep.subr.mxu0 0.0
      %5477 = vmatpush1.msra.mxu0 0.0
      %5478 = vmatprep.subr.mxu0 0.0
      %5479 = vmatpush1.msra.mxu0 0.0
      %5480 = vmatprep.subr.mxu0 0.0
      %5481 = vmatpush1.msra.mxu0 0.0
      %5482 = vmatprep.subr.mxu0 0.0
      %5483 = vmatpush1.msra.mxu0 0.0
      %5484 = vmatprep.subr.mxu0 0.0
      %5485 = vmatpush1.msra.mxu0 0.0
      %5486 = vmatprep.subr.mxu0 0.0
      %5487 = vmatpush1.msra.mxu0 0.0
      %5488 = vmatprep.subr.mxu0 0.0
      %5489 = vmatpush1.msra.mxu0 0.0
      %5490 = vmatprep.subr.mxu0 0.0
      %5491 = vmatpush1.msra.mxu0 0.0
      %5492 = vmatprep.subr.mxu0 0.0
      %5493 = vmatpush1.msra.mxu0 0.0
      %5494 = vmatprep.subr.mxu0 0.0
      %5495 = vmatpush1.msra.mxu0 0.0
      %5496 = vmatprep.subr.mxu0 0.0
      %5497 = vmatpush1.msra.mxu0 0.0
      %5498 = vmatprep.subr.mxu0 0.0
      %5499 = vmatpush1.msra.mxu0 0.0
      %5500 = vmatprep.subr.mxu0 0.0
      %5501 = vmatpush1.msra.mxu0 0.0
      %5502 = vmatprep.subr.mxu0 0.0
      %5503 = vmatpush1.msra.mxu0 0.0
      %5504 = vmatprep.subr.mxu0 0.0
      %5505 = vmatpush1.msra.mxu0 0.0
      %5506 = vmatprep.subr.mxu0 0.0
      %5507 = vmatpush1.msra.mxu0 0.0
      %5508 = vmatprep.subr.mxu0 0.0
      %5509 = vmatpush1.msra.mxu0 0.0
      %5510 = vmatprep.subr.mxu0 0.0
      %5511 = vmatpush1.msra.mxu0 0.0
      %5512 = vmatprep.subr.mxu0 0.0
      %5513 = vmatpush1.msra.mxu0 0.0
      %5514 = vmatprep.subr.mxu0 0.0
      %5515 = vmatpush1.msra.mxu0 0.0
      %5516 = vmatprep.subr.mxu0 0.0
      %5517 = vmatpush1.msra.mxu0 0.0
      %5518 = vmatprep.subr.mxu0 0.0
      %5519 = vmatpush1.msra.mxu0 0.0
      %5520 = vmatprep.subr.mxu0 0.0
      %5521 = vmatpush1.msra.mxu0 0.0
      %5522 = vmatprep.subr.mxu0 0.0
      %5523 = vmatpush1.msra.mxu0 0.0
      %5524 = vmatprep.subr.mxu0 0.0
      %5525 = vmatpush1.msra.mxu0 0.0
      %5526 = vmatprep.subr.mxu0 0.0
      %5527 = vmatpush1.msra.mxu0 0.0
      %5528 = vmatprep.subr.mxu0 0.0
      %5529 = vmatpush1.msra.mxu0 0.0
      %5530 = vmatprep.mubr.f32.mxu0 0.0
      %5531 = vmatmul.mubr.f32.gmra.mrb[0].mxu0 %v5458
      %v5532 = vpop.f32.mrb[0].mxu0
      %v5533 = vadd.f32 0.0, %v5532
      %v5534 = vpop.f32.mrb[0].mxu0
      %5535 = vmatprep.mubr.f32.mxu0 0.0
      %5536 = vmatmul.mubr.f32.gmra.mrb[0].mxu0 %v5461
      %v5537 = vpop.f32.mrb[0].mxu0
      %v5538 = vadd.f32 0.0, %v5537
      %v5539 = vpop.f32.mrb[0].mxu0
      %5540 = vmatprep.mubr.f32.mxu0 0.0
      %5541 = vmatmul.mubr.f32.gmra.mrb[0].mxu0 %v5464
      %v5542 = vpop.f32.mrb[0].mxu0
      %v5543 = vadd.f32 0.0, %v5542
      %v5544 = vpop.f32.mrb[0].mxu0
      %5545 = vdwg.mxu0
      %v5547 = vsel %vm805, %v5223, 0
      %v5550 = vsel %vm805, %v5228, 0
      %v5553 = vsel %vm805, %v5233, 0
      %5555 = vmatprep.subr.mxu0 0.0
      %5556 = vmatpush1.msra.mxu0 %v4290
      %5557 = vmatprep.subr.mxu0 0.0
      %5558 = vmatpush1.msra.mxu0 0.0
      %5559 = vmatprep.subr.mxu0 0.0
      %5560 = vmatpush1.msra.mxu0 0.0
      %5561 = vmatprep.subr.mxu0 0.0
      %5562 = vmatpush1.msra.mxu0 0.0
      %5563 = vmatprep.subr.mxu0 0.0
      %5564 = vmatpush1.msra.mxu0 0.0
      %5565 = vmatprep.subr.mxu0 0.0
      %5566 = vmatpush1.msra.mxu0 0.0
      %5567 = vmatprep.subr.mxu0 0.0
      %5568 = vmatpush1.msra.mxu0 0.0
      %5569 = vmatprep.subr.mxu0 0.0
      %5570 = vmatpush1.msra.mxu0 0.0
      %5571 = vmatprep.subr.mxu0 0.0
      %5572 = vmatpush1.msra.mxu0 0.0
      %5573 = vmatprep.subr.mxu0 0.0
      %5574 = vmatpush1.msra.mxu0 0.0
      %5575 = vmatprep.subr.mxu0 0.0
      %5576 = vmatpush1.msra.mxu0 0.0
      %5577 = vmatprep.subr.mxu0 0.0
      %5578 = vmatpush1.msra.mxu0 0.0
      %5579 = vmatprep.subr.mxu0 0.0
      %5580 = vmatpush1.msra.mxu0 0.0
      %5581 = vmatprep.subr.mxu0 0.0
      %5582 = vmatpush1.msra.mxu0 0.0
      %5583 = vmatprep.subr.mxu0 0.0
      %5584 = vmatpush1.msra.mxu0 0.0
      %5585 = vmatprep.subr.mxu0 0.0
      %5586 = vmatpush1.msra.mxu0 0.0
      %5587 = vmatprep.subr.mxu0 0.0
      %5588 = vmatpush1.msra.mxu0 0.0
      %5589 = vmatprep.subr.mxu0 0.0
      %5590 = vmatpush1.msra.mxu0 0.0
      %5591 = vmatprep.subr.mxu0 0.0
      %5592 = vmatpush1.msra.mxu0 0.0
      %5593 = vmatprep.subr.mxu0 0.0
      %5594 = vmatpush1.msra.mxu0 0.0
      %5595 = vmatprep.subr.mxu0 0.0
      %5596 = vmatpush1.msra.mxu0 0.0
      %5597 = vmatprep.subr.mxu0 0.0
      %5598 = vmatpush1.msra.mxu0 0.0
      %5599 = vmatprep.subr.mxu0 0.0
      %5600 = vmatpush1.msra.mxu0 0.0
      %5601 = vmatprep.subr.mxu0 0.0
      %5602 = vmatpush1.msra.mxu0 0.0
      %5603 = vmatprep.subr.mxu0 0.0
      %5604 = vmatpush1.msra.mxu0 0.0
      %5605 = vmatprep.subr.mxu0 0.0
      %5606 = vmatpush1.msra.mxu0 0.0
      %5607 = vmatprep.subr.mxu0 0.0
      %5608 = vmatpush1.msra.mxu0 0.0
      %5609 = vmatprep.subr.mxu0 0.0
      %5610 = vmatpush1.msra.mxu0 0.0
      %5611 = vmatprep.subr.mxu0 0.0
      %5612 = vmatpush1.msra.mxu0 0.0
      %5613 = vmatprep.subr.mxu0 0.0
      %5614 = vmatpush1.msra.mxu0 0.0
      %5615 = vmatprep.subr.mxu0 0.0
      %5616 = vmatpush1.msra.mxu0 0.0
      %5617 = vmatprep.subr.mxu0 0.0
      %5618 = vmatpush1.msra.mxu0 0.0
      %5619 = vmatprep.mubr.f32.mxu0 0.0
      %5620 = vmatmul.mubr.f32.gmra.mrb[0].mxu0 %v5547
      %v5621 = vpop.f32.mrb[0].mxu0
      %v5622 = vadd.f32 %v5533, %v5621
      %v5623 = vpop.f32.mrb[0].mxu0
      %5624 = vmatprep.mubr.f32.mxu0 0.0
      %5625 = vmatmul.mubr.f32.gmra.mrb[0].mxu0 %v5550
      %v5626 = vpop.f32.mrb[0].mxu0
      %v5627 = vadd.f32 %v5538, %v5626
      %v5628 = vpop.f32.mrb[0].mxu0
      %5629 = vmatprep.mubr.f32.mxu0 0.0
      %5630 = vmatmul.mubr.f32.gmra.mrb[0].mxu0 %v5553
      %v5631 = vpop.f32.mrb[0].mxu0
      %v5632 = vadd.f32 %v5543, %v5631
      %v5633 = vpop.f32.mrb[0].mxu0
      %5634 = vdwg.mxu0
      %5635 = vrot.lane.b32.xlu0 %v5019, 112
      %v5636 = vpop.permute.xlu0 %5635
      %5637 = vrot.lane.b32.xlu0 %v5021, 112
      %v5638 = vpop.permute.xlu0 %5637
      %5639 = vrot.lane.b32.xlu0 %v5020, 112
      %v5640 = vpop.permute.xlu0 %5639
      %5641 = vrot.lane.b32.xlu0 %v3752, 112
      %v5642 = vpop.permute.xlu0 %5641
      %v5643 = vsel %vm805, %v5636, 0
      %v5645 = vsel %vm805, %v5638, 0
      %v5647 = vsel %vm805, %v5640, 0
      %v5649 = vsel %vm805, %v5642, 0
      %5651 = vmatprep.subr.mxu0 0.0
      %5652 = vmatpush1.xpose.msra.mxu0 %v5649
      %5653 = vmatprep.subr.mxu0 0.0
      %5654 = vmatpush1.xpose.msra.mxu0 0.0
      %5655 = vmatprep.subr.mxu0 0.0
      %5656 = vmatpush1.xpose.msra.mxu0 0.0
      %5657 = vmatprep.subr.mxu0 0.0
      %5658 = vmatpush1.xpose.msra.mxu0 0.0
      %5659 = vmatprep.subr.mxu0 0.0
      %5660 = vmatpush1.xpose.msra.mxu0 0.0
      %5661 = vmatprep.subr.mxu0 0.0
      %5662 = vmatpush1.xpose.msra.mxu0 0.0
      %5663 = vmatprep.subr.mxu0 0.0
      %5664 = vmatpush1.xpose.msra.mxu0 0.0
      %5665 = vmatprep.subr.mxu0 0.0
      %5666 = vmatpush1.xpose.msra.mxu0 0.0
      %5667 = vmatprep.subr.mxu0 0.0
      %5668 = vmatpush1.xpose.msra.mxu0 0.0
      %5669 = vmatprep.subr.mxu0 0.0
      %5670 = vmatpush1.xpose.msra.mxu0 0.0
      %5671 = vmatprep.subr.mxu0 0.0
      %5672 = vmatpush1.xpose.msra.mxu0 0.0
      %5673 = vmatprep.subr.mxu0 0.0
      %5674 = vmatpush1.xpose.msra.mxu0 0.0
      %5675 = vmatprep.subr.mxu0 0.0
      %5676 = vmatpush1.xpose.msra.mxu0 0.0
      %5677 = vmatprep.subr.mxu0 0.0
      %5678 = vmatpush1.xpose.msra.mxu0 0.0
      %5679 = vmatprep.subr.mxu0 0.0
      %5680 = vmatpush1.xpose.msra.mxu0 0.0
      %5681 = vmatprep.subr.mxu0 0.0
      %5682 = vmatpush1.xpose.msra.mxu0 0.0
      %5683 = vmatprep.subr.mxu0 0.0
      %5684 = vmatpush1.xpose.msra.mxu0 0.0
      %5685 = vmatprep.subr.mxu0 0.0
      %5686 = vmatpush1.xpose.msra.mxu0 0.0
      %5687 = vmatprep.subr.mxu0 0.0
      %5688 = vmatpush1.xpose.msra.mxu0 0.0
      %5689 = vmatprep.subr.mxu0 0.0
      %5690 = vmatpush1.xpose.msra.mxu0 0.0
      %5691 = vmatprep.subr.mxu0 0.0
      %5692 = vmatpush1.xpose.msra.mxu0 0.0
      %5693 = vmatprep.subr.mxu0 0.0
      %5694 = vmatpush1.xpose.msra.mxu0 0.0
      %5695 = vmatprep.subr.mxu0 0.0
      %5696 = vmatpush1.xpose.msra.mxu0 0.0
      %5697 = vmatprep.subr.mxu0 0.0
      %5698 = vmatpush1.xpose.msra.mxu0 0.0
      %5699 = vmatprep.subr.mxu0 0.0
      %5700 = vmatpush1.xpose.msra.mxu0 0.0
      %5701 = vmatprep.subr.mxu0 0.0
      %5702 = vmatpush1.xpose.msra.mxu0 0.0
      %5703 = vmatprep.subr.mxu0 0.0
      %5704 = vmatpush1.xpose.msra.mxu0 0.0
      %5705 = vmatprep.subr.mxu0 0.0
      %5706 = vmatpush1.xpose.msra.mxu0 0.0
      %5707 = vmatprep.subr.mxu0 0.0
      %5708 = vmatpush1.xpose.msra.mxu0 0.0
      %5709 = vmatprep.subr.mxu0 0.0
      %5710 = vmatpush1.xpose.msra.mxu0 0.0
      %5711 = vmatprep.subr.mxu0 0.0
      %5712 = vmatpush1.xpose.msra.mxu0 0.0
      %5713 = vmatprep.subr.mxu0 0.0
      %5714 = vmatpush1.xpose.msra.mxu0 0.0
      %5715 = vmatprep.mubr.f32.mxu0 0.0
      %5716 = vmatmul.mubr.f32.gmra.mrb[0].mxu0 %v5643
      %v5717 = vpop.f32.mrb[0].mxu0
      %v5718 = vadd.f32 0.0, %v5717
      %v5719 = vpop.f32.mrb[0].mxu0
      %5720 = vmatprep.mubr.f32.mxu0 0.0
      %5721 = vmatmul.mubr.f32.gmra.mrb[0].mxu0 %v5645
      %v5722 = vpop.f32.mrb[0].mxu0
      %v5723 = vadd.f32 0.0, %v5722
      %v5724 = vpop.f32.mrb[0].mxu0
      %5725 = vmatprep.mubr.f32.mxu0 0.0
      %5726 = vmatmul.mubr.f32.gmra.mrb[0].mxu0 %v5647
      %v5727 = vpop.f32.mrb[0].mxu0
      %v5728 = vadd.f32 0.0, %v5727
      %v5729 = vpop.f32.mrb[0].mxu0
      %5730 = vdwg.mxu0
      %v5731 = vsel %vm805, %v5718, -inf
      %5732 = vmax.xlane.f32.xlu0 %v5731
      %v5733 = vpop.xlane.xlu0 %5732
      %v5734 = vsel %vm805, %v5723, -inf
      %5735 = vmax.xlane.f32.xlu0 %v5734
      %v5736 = vpop.xlane.xlu0 %5735
      %v5737 = vsel %vm3856, %v5728, -inf
      %5738 = vmax.xlane.f32.xlu0 %v5737
      %v5739 = vpop.xlane.xlu0 %5738
      %v5740 = vsub.f32 %v5718, %v5733
      %v5741 = vsub.f32 %v5723, %v5736
      %v5742 = vsub.f32 %v5728, %v5739
      %v5743 = vmul.f32 %v5740, 1.442695
      %v5744 = vpow.pop %v5743
      %v5745 = vmul.f32 %v5741, 1.442695
      %v5746 = vpow.pop %v5745
      %v5747 = vmul.f32 %v5742, 1.442695
      %v5748 = vpow.pop %v5747
      %v5749 = vsel %vm805, %v5744, 0.0
      %5750 = vadd.xlane.f32.xlu0 %v5749
      %v5751 = vpop.xlane.xlu0 %5750
      %v5752 = vsel %vm805, %v5746, 0.0
      %5753 = vadd.xlane.f32.xlu0 %v5752
      %v5754 = vpop.xlane.xlu0 %5753
      %v5755 = vsel %vm3856, %v5748, 0.0
      %5756 = vadd.xlane.f32.xlu0 %v5755
      %v5757 = vpop.xlane.xlu0 %5756
      %v5758 = vrcp.pop %v5751
      %v5759 = vrcp.pop %v5754
      %v5760 = vrcp.pop %v5757
      %v5761 = vmul.f32 %v5744, %v5758
      %v5762 = vmul.f32 %v5746, %v5759
      %v5763 = vmul.f32 %v5748, %v5760
      %5764 = vrot.lane.b32.xlu0 %v3752, 80
      %v5765 = vpop.permute.xlu0 %5764
      %v5768 = vsel %vm805, %v5761, 0
      %v5771 = vsel %vm805, %v5762, 0
      %v5774 = vsel %vm805, %v5763, 0
      %5776 = vmatprep.subr.mxu0 0.0
      %5777 = vmatpush1.msra.mxu0 %v5765
      %5778 = vmatprep.subr.mxu0 0.0
      %5779 = vmatpush1.msra.mxu0 0.0
      %5780 = vmatprep.subr.mxu0 0.0
      %5781 = vmatpush1.msra.mxu0 0.0
      %5782 = vmatprep.subr.mxu0 0.0
      %5783 = vmatpush1.msra.mxu0 0.0
      %5784 = vmatprep.subr.mxu0 0.0
      %5785 = vmatpush1.msra.mxu0 0.0
      %5786 = vmatprep.subr.mxu0 0.0
      %5787 = vmatpush1.msra.mxu0 0.0
      %5788 = vmatprep.subr.mxu0 0.0
      %5789 = vmatpush1.msra.mxu0 0.0
      %5790 = vmatprep.subr.mxu0 0.0
      %5791 = vmatpush1.msra.mxu0 0.0
      %5792 = vmatprep.subr.mxu0 0.0
      %5793 = vmatpush1.msra.mxu0 0.0
      %5794 = vmatprep.subr.mxu0 0.0
      %5795 = vmatpush1.msra.mxu0 0.0
      %5796 = vmatprep.subr.mxu0 0.0
      %5797 = vmatpush1.msra.mxu0 0.0
      %5798 = vmatprep.subr.mxu0 0.0
      %5799 = vmatpush1.msra.mxu0 0.0
      %5800 = vmatprep.subr.mxu0 0.0
      %5801 = vmatpush1.msra.mxu0 0.0
      %5802 = vmatprep.subr.mxu0 0.0
      %5803 = vmatpush1.msra.mxu0 0.0
      %5804 = vmatprep.subr.mxu0 0.0
      %5805 = vmatpush1.msra.mxu0 0.0
      %5806 = vmatprep.subr.mxu0 0.0
      %5807 = vmatpush1.msra.mxu0 0.0
      %5808 = vmatprep.subr.mxu0 0.0
      %5809 = vmatpush1.msra.mxu0 0.0
      %5810 = vmatprep.subr.mxu0 0.0
      %5811 = vmatpush1.msra.mxu0 0.0
      %5812 = vmatprep.subr.mxu0 0.0
      %5813 = vmatpush1.msra.mxu0 0.0
      %5814 = vmatprep.subr.mxu0 0.0
      %5815 = vmatpush1.msra.mxu0 0.0
      %5816 = vmatprep.subr.mxu0 0.0
      %5817 = vmatpush1.msra.mxu0 0.0
      %5818 = vmatprep.subr.mxu0 0.0
      %5819 = vmatpush1.msra.mxu0 0.0
      %5820 = vmatprep.subr.mxu0 0.0
      %5821 = vmatpush1.msra.mxu0 0.0
      %5822 = vmatprep.subr.mxu0 0.0
      %5823 = vmatpush1.msra.mxu0 0.0
      %5824 = vmatprep.subr.mxu0 0.0
      %5825 = vmatpush1.msra.mxu0 0.0
      %5826 = vmatprep.subr.mxu0 0.0
      %5827 = vmatpush1.msra.mxu0 0.0
      %5828 = vmatprep.subr.mxu0 0.0
      %5829 = vmatpush1.msra.mxu0 0.0
      %5830 = vmatprep.subr.mxu0 0.0
      %5831 = vmatpush1.msra.mxu0 0.0
      %5832 = vmatprep.subr.mxu0 0.0
      %5833 = vmatpush1.msra.mxu0 0.0
      %5834 = vmatprep.subr.mxu0 0.0
      %5835 = vmatpush1.msra.mxu0 0.0
      %5836 = vmatprep.subr.mxu0 0.0
      %5837 = vmatpush1.msra.mxu0 0.0
      %5838 = vmatprep.subr.mxu0 0.0
      %5839 = vmatpush1.msra.mxu0 0.0
      %5840 = vmatprep.mubr.f32.mxu0 0.0
      %5841 = vmatmul.mubr.f32.gmra.mrb[0].mxu0 %v5768
      %v5842 = vpop.f32.mrb[0].mxu0
      %v5843 = vadd.f32 0.0, %v5842
      %v5844 = vpop.f32.mrb[0].mxu0
      %5845 = vmatprep.mubr.f32.mxu0 0.0
      %5846 = vmatmul.mubr.f32.gmra.mrb[0].mxu0 %v5771
      %v5847 = vpop.f32.mrb[0].mxu0
      %v5848 = vadd.f32 0.0, %v5847
      %v5849 = vpop.f32.mrb[0].mxu0
      %5850 = vmatprep.mubr.f32.mxu0 0.0
      %5851 = vmatmul.mubr.f32.gmra.mrb[0].mxu0 %v5774
      %v5852 = vpop.f32.mrb[0].mxu0
      %v5853 = vadd.f32 0.0, %v5852
      %v5854 = vpop.f32.mrb[0].mxu0
      %5855 = vdwg.mxu0
      %v5857 = vsel %vm805, %v5843, 0
      %v5860 = vsel %vm805, %v5848, 0
      %v5863 = vsel %vm805, %v5853, 0
      %5865 = vmatprep.subr.mxu0 0.0
      %5866 = vmatpush1.msra.mxu0 %v4603
      %5867 = vmatprep.subr.mxu0 0.0
      %5868 = vmatpush1.msra.mxu0 0.0
      %5869 = vmatprep.subr.mxu0 0.0
      %5870 = vmatpush1.msra.mxu0 0.0
      %5871 = vmatprep.subr.mxu0 0.0
      %5872 = vmatpush1.msra.mxu0 0.0
      %5873 = vmatprep.subr.mxu0 0.0
      %5874 = vmatpush1.msra.mxu0 0.0
      %5875 = vmatprep.subr.mxu0 0.0
      %5876 = vmatpush1.msra.mxu0 0.0
      %5877 = vmatprep.subr.mxu0 0.0
      %5878 = vmatpush1.msra.mxu0 0.0
      %5879 = vmatprep.subr.mxu0 0.0
      %5880 = vmatpush1.msra.mxu0 0.0
      %5881 = vmatprep.subr.mxu0 0.0
      %5882 = vmatpush1.msra.mxu0 0.0
      %5883 = vmatprep.subr.mxu0 0.0
      %5884 = vmatpush1.msra.mxu0 0.0
      %5885 = vmatprep.subr.mxu0 0.0
      %5886 = vmatpush1.msra.mxu0 0.0
      %5887 = vmatprep.subr.mxu0 0.0
      %5888 = vmatpush1.msra.mxu0 0.0
      %5889 = vmatprep.subr.mxu0 0.0
      %5890 = vmatpush1.msra.mxu0 0.0
      %5891 = vmatprep.subr.mxu0 0.0
      %5892 = vmatpush1.msra.mxu0 0.0
      %5893 = vmatprep.subr.mxu0 0.0
      %5894 = vmatpush1.msra.mxu0 0.0
      %5895 = vmatprep.subr.mxu0 0.0
      %5896 = vmatpush1.msra.mxu0 0.0
      %5897 = vmatprep.subr.mxu0 0.0
      %5898 = vmatpush1.msra.mxu0 0.0
      %5899 = vmatprep.subr.mxu0 0.0
      %5900 = vmatpush1.msra.mxu0 0.0
      %5901 = vmatprep.subr.mxu0 0.0
      %5902 = vmatpush1.msra.mxu0 0.0
      %5903 = vmatprep.subr.mxu0 0.0
      %5904 = vmatpush1.msra.mxu0 0.0
      %5905 = vmatprep.subr.mxu0 0.0
      %5906 = vmatpush1.msra.mxu0 0.0
      %5907 = vmatprep.subr.mxu0 0.0
      %5908 = vmatpush1.msra.mxu0 0.0
      %5909 = vmatprep.subr.mxu0 0.0
      %5910 = vmatpush1.msra.mxu0 0.0
      %5911 = vmatprep.subr.mxu0 0.0
      %5912 = vmatpush1.msra.mxu0 0.0
      %5913 = vmatprep.subr.mxu0 0.0
      %5914 = vmatpush1.msra.mxu0 0.0
      %5915 = vmatprep.subr.mxu0 0.0
      %5916 = vmatpush1.msra.mxu0 0.0
      %5917 = vmatprep.subr.mxu0 0.0
      %5918 = vmatpush1.msra.mxu0 0.0
      %5919 = vmatprep.subr.mxu0 0.0
      %5920 = vmatpush1.msra.mxu0 0.0
      %5921 = vmatprep.subr.mxu0 0.0
      %5922 = vmatpush1.msra.mxu0 0.0
      %5923 = vmatprep.subr.mxu0 0.0
      %5924 = vmatpush1.msra.mxu0 0.0
      %5925 = vmatprep.subr.mxu0 0.0
      %5926 = vmatpush1.msra.mxu0 0.0
      %5927 = vmatprep.subr.mxu0 0.0
      %5928 = vmatpush1.msra.mxu0 0.0
      %5929 = vmatprep.mubr.f32.mxu0 0.0
      %5930 = vmatmul.mubr.f32.gmra.mrb[0].mxu0 %v5857
      %v5931 = vpop.f32.mrb[0].mxu0
      %v5932 = vadd.f32 0.0, %v5931
      %v5933 = vpop.f32.mrb[0].mxu0
      %5934 = vmatprep.mubr.f32.mxu0 0.0
      %5935 = vmatmul.mubr.f32.gmra.mrb[0].mxu0 %v5860
      %v5936 = vpop.f32.mrb[0].mxu0
      %v5937 = vadd.f32 0.0, %v5936
      %v5938 = vpop.f32.mrb[0].mxu0
      %5939 = vmatprep.mubr.f32.mxu0 0.0
      %5940 = vmatmul.mubr.f32.gmra.mrb[0].mxu0 %v5863
      %v5941 = vpop.f32.mrb[0].mxu0
      %v5942 = vadd.f32 0.0, %v5941
      %v5943 = vpop.f32.mrb[0].mxu0
      %5944 = vdwg.mxu0
      %v5945 = vadd.f32 %v5622, %v5932
      %v5946 = vadd.f32 %v5627, %v5937
      %v5947 = vadd.f32 %v5632, %v5942
      %5948 = vrot.lane.b32.xlu0 %v5019, 104
      %v5949 = vpop.permute.xlu0 %5948
      %5950 = vrot.lane.b32.xlu0 %v5021, 104
      %v5951 = vpop.permute.xlu0 %5950
      %5952 = vrot.lane.b32.xlu0 %v5020, 104
      %v5953 = vpop.permute.xlu0 %5952
      %5954 = vrot.lane.b32.xlu0 %v3752, 104
      %v5955 = vpop.permute.xlu0 %5954
      %v5956 = vsel %vm805, %v5949, 0
      %v5958 = vsel %vm805, %v5951, 0
      %v5960 = vsel %vm805, %v5953, 0
      %v5962 = vsel %vm805, %v5955, 0
      %5964 = vmatprep.subr.mxu0 0.0
      %5965 = vmatpush1.xpose.msra.mxu0 %v5962
      %5966 = vmatprep.subr.mxu0 0.0
      %5967 = vmatpush1.xpose.msra.mxu0 0.0
      %5968 = vmatprep.subr.mxu0 0.0
      %5969 = vmatpush1.xpose.msra.mxu0 0.0
      %5970 = vmatprep.subr.mxu0 0.0
      %5971 = vmatpush1.xpose.msra.mxu0 0.0
      %5972 = vmatprep.subr.mxu0 0.0
      %5973 = vmatpush1.xpose.msra.mxu0 0.0
      %5974 = vmatprep.subr.mxu0 0.0
      %5975 = vmatpush1.xpose.msra.mxu0 0.0
      %5976 = vmatprep.subr.mxu0 0.0
      %5977 = vmatpush1.xpose.msra.mxu0 0.0
      %5978 = vmatprep.subr.mxu0 0.0
      %5979 = vmatpush1.xpose.msra.mxu0 0.0
      %5980 = vmatprep.subr.mxu0 0.0
      %5981 = vmatpush1.xpose.msra.mxu0 0.0
      %5982 = vmatprep.subr.mxu0 0.0
      %5983 = vmatpush1.xpose.msra.mxu0 0.0
      %5984 = vmatprep.subr.mxu0 0.0
      %5985 = vmatpush1.xpose.msra.mxu0 0.0
      %5986 = vmatprep.subr.mxu0 0.0
      %5987 = vmatpush1.xpose.msra.mxu0 0.0
      %5988 = vmatprep.subr.mxu0 0.0
      %5989 = vmatpush1.xpose.msra.mxu0 0.0
      %5990 = vmatprep.subr.mxu0 0.0
      %5991 = vmatpush1.xpose.msra.mxu0 0.0
      %5992 = vmatprep.subr.mxu0 0.0
      %5993 = vmatpush1.xpose.msra.mxu0 0.0
      %5994 = vmatprep.subr.mxu0 0.0
      %5995 = vmatpush1.xpose.msra.mxu0 0.0
      %5996 = vmatprep.subr.mxu0 0.0
      %5997 = vmatpush1.xpose.msra.mxu0 0.0
      %5998 = vmatprep.subr.mxu0 0.0
      %5999 = vmatpush1.xpose.msra.mxu0 0.0
      %6000 = vmatprep.subr.mxu0 0.0
      %6001 = vmatpush1.xpose.msra.mxu0 0.0
      %6002 = vmatprep.subr.mxu0 0.0
      %6003 = vmatpush1.xpose.msra.mxu0 0.0
      %6004 = vmatprep.subr.mxu0 0.0
      %6005 = vmatpush1.xpose.msra.mxu0 0.0
      %6006 = vmatprep.subr.mxu0 0.0
      %6007 = vmatpush1.xpose.msra.mxu0 0.0
      %6008 = vmatprep.subr.mxu0 0.0
      %6009 = vmatpush1.xpose.msra.mxu0 0.0
      %6010 = vmatprep.subr.mxu0 0.0
      %6011 = vmatpush1.xpose.msra.mxu0 0.0
      %6012 = vmatprep.subr.mxu0 0.0
      %6013 = vmatpush1.xpose.msra.mxu0 0.0
      %6014 = vmatprep.subr.mxu0 0.0
      %6015 = vmatpush1.xpose.msra.mxu0 0.0
      %6016 = vmatprep.subr.mxu0 0.0
      %6017 = vmatpush1.xpose.msra.mxu0 0.0
      %6018 = vmatprep.subr.mxu0 0.0
      %6019 = vmatpush1.xpose.msra.mxu0 0.0
      %6020 = vmatprep.subr.mxu0 0.0
      %6021 = vmatpush1.xpose.msra.mxu0 0.0
      %6022 = vmatprep.subr.mxu0 0.0
      %6023 = vmatpush1.xpose.msra.mxu0 0.0
      %6024 = vmatprep.subr.mxu0 0.0
      %6025 = vmatpush1.xpose.msra.mxu0 0.0
      %6026 = vmatprep.subr.mxu0 0.0
      %6027 = vmatpush1.xpose.msra.mxu0 0.0
      %6028 = vmatprep.mubr.f32.mxu0 0.0
      %6029 = vmatmul.mubr.f32.gmra.mrb[0].mxu0 %v5956
      %v6030 = vpop.f32.mrb[0].mxu0
      %v6031 = vadd.f32 0.0, %v6030
      %v6032 = vpop.f32.mrb[0].mxu0
      %6033 = vmatprep.mubr.f32.mxu0 0.0
      %6034 = vmatmul.mubr.f32.gmra.mrb[0].mxu0 %v5958
      %v6035 = vpop.f32.mrb[0].mxu0
      %v6036 = vadd.f32 0.0, %v6035
      %v6037 = vpop.f32.mrb[0].mxu0
      %6038 = vmatprep.mubr.f32.mxu0 0.0
      %6039 = vmatmul.mubr.f32.gmra.mrb[0].mxu0 %v5960
      %v6040 = vpop.f32.mrb[0].mxu0
      %v6041 = vadd.f32 0.0, %v6040
      %v6042 = vpop.f32.mrb[0].mxu0
      %6043 = vdwg.mxu0
      %v6044 = vsel %vm805, %v6031, -inf
      %6045 = vmax.xlane.f32.xlu0 %v6044
      %v6046 = vpop.xlane.xlu0 %6045
      %v6047 = vsel %vm805, %v6036, -inf
      %6048 = vmax.xlane.f32.xlu0 %v6047
      %v6049 = vpop.xlane.xlu0 %6048
      %v6050 = vsel %vm3856, %v6041, -inf
      %6051 = vmax.xlane.f32.xlu0 %v6050
      %v6052 = vpop.xlane.xlu0 %6051
      %v6053 = vsub.f32 %v6031, %v6046
      %v6054 = vsub.f32 %v6036, %v6049
      %v6055 = vsub.f32 %v6041, %v6052
      %v6056 = vmul.f32 %v6053, 1.442695
      %v6057 = vpow.pop %v6056
      %v6058 = vmul.f32 %v6054, 1.442695
      %v6059 = vpow.pop %v6058
      %v6060 = vmul.f32 %v6055, 1.442695
      %v6061 = vpow.pop %v6060
      %v6062 = vsel %vm805, %v6057, 0.0
      %6063 = vadd.xlane.f32.xlu0 %v6062
      %v6064 = vpop.xlane.xlu0 %6063
      %v6065 = vsel %vm805, %v6059, 0.0
      %6066 = vadd.xlane.f32.xlu0 %v6065
      %v6067 = vpop.xlane.xlu0 %6066
      %v6068 = vsel %vm3856, %v6061, 0.0
      %6069 = vadd.xlane.f32.xlu0 %v6068
      %v6070 = vpop.xlane.xlu0 %6069
      %v6071 = vrcp.pop %v6064
      %v6072 = vrcp.pop %v6067
      %v6073 = vrcp.pop %v6070
      %v6074 = vmul.f32 %v6057, %v6071
      %v6075 = vmul.f32 %v6059, %v6072
      %v6076 = vmul.f32 %v6061, %v6073
      %6077 = vrot.lane.b32.xlu0 %v3752, 72
      %v6078 = vpop.permute.xlu0 %6077
      %v6081 = vsel %vm805, %v6074, 0
      %v6084 = vsel %vm805, %v6075, 0
      %v6087 = vsel %vm805, %v6076, 0
      %6089 = vmatprep.subr.mxu0 0.0
      %6090 = vmatpush1.msra.mxu0 %v6078
      %6091 = vmatprep.subr.mxu0 0.0
      %6092 = vmatpush1.msra.mxu0 0.0
      %6093 = vmatprep.subr.mxu0 0.0
      %6094 = vmatpush1.msra.mxu0 0.0
      %6095 = vmatprep.subr.mxu0 0.0
      %6096 = vmatpush1.msra.mxu0 0.0
      %6097 = vmatprep.subr.mxu0 0.0
      %6098 = vmatpush1.msra.mxu0 0.0
      %6099 = vmatprep.subr.mxu0 0.0
      %6100 = vmatpush1.msra.mxu0 0.0
      %6101 = vmatprep.subr.mxu0 0.0
      %6102 = vmatpush1.msra.mxu0 0.0
      %6103 = vmatprep.subr.mxu0 0.0
      %6104 = vmatpush1.msra.mxu0 0.0
      %6105 = vmatprep.subr.mxu0 0.0
      %6106 = vmatpush1.msra.mxu0 0.0
      %6107 = vmatprep.subr.mxu0 0.0
      %6108 = vmatpush1.msra.mxu0 0.0
      %6109 = vmatprep.subr.mxu0 0.0
      %6110 = vmatpush1.msra.mxu0 0.0
      %6111 = vmatprep.subr.mxu0 0.0
      %6112 = vmatpush1.msra.mxu0 0.0
      %6113 = vmatprep.subr.mxu0 0.0
      %6114 = vmatpush1.msra.mxu0 0.0
      %6115 = vmatprep.subr.mxu0 0.0
      %6116 = vmatpush1.msra.mxu0 0.0
      %6117 = vmatprep.subr.mxu0 0.0
      %6118 = vmatpush1.msra.mxu0 0.0
      %6119 = vmatprep.subr.mxu0 0.0
      %6120 = vmatpush1.msra.mxu0 0.0
      %6121 = vmatprep.subr.mxu0 0.0
      %6122 = vmatpush1.msra.mxu0 0.0
      %6123 = vmatprep.subr.mxu0 0.0
      %6124 = vmatpush1.msra.mxu0 0.0
      %6125 = vmatprep.subr.mxu0 0.0
      %6126 = vmatpush1.msra.mxu0 0.0
      %6127 = vmatprep.subr.mxu0 0.0
      %6128 = vmatpush1.msra.mxu0 0.0
      %6129 = vmatprep.subr.mxu0 0.0
      %6130 = vmatpush1.msra.mxu0 0.0
      %6131 = vmatprep.subr.mxu0 0.0
      %6132 = vmatpush1.msra.mxu0 0.0
      %6133 = vmatprep.subr.mxu0 0.0
      %6134 = vmatpush1.msra.mxu0 0.0
      %6135 = vmatprep.subr.mxu0 0.0
      %6136 = vmatpush1.msra.mxu0 0.0
      %6137 = vmatprep.subr.mxu0 0.0
      %6138 = vmatpush1.msra.mxu0 0.0
      %6139 = vmatprep.subr.mxu0 0.0
      %6140 = vmatpush1.msra.mxu0 0.0
      %6141 = vmatprep.subr.mxu0 0.0
      %6142 = vmatpush1.msra.mxu0 0.0
      %6143 = vmatprep.subr.mxu0 0.0
      %6144 = vmatpush1.msra.mxu0 0.0
      %6145 = vmatprep.subr.mxu0 0.0
      %6146 = vmatpush1.msra.mxu0 0.0
      %6147 = vmatprep.subr.mxu0 0.0
      %6148 = vmatpush1.msra.mxu0 0.0
      %6149 = vmatprep.subr.mxu0 0.0
      %6150 = vmatpush1.msra.mxu0 0.0
      %6151 = vmatprep.subr.mxu0 0.0
      %6152 = vmatpush1.msra.mxu0 0.0
      %6153 = vmatprep.mubr.f32.mxu0 0.0
      %6154 = vmatmul.mubr.f32.gmra.mrb[0].mxu0 %v6081
      %v6155 = vpop.f32.mrb[0].mxu0
      %v6156 = vadd.f32 0.0, %v6155
      %v6157 = vpop.f32.mrb[0].mxu0
      %6158 = vmatprep.mubr.f32.mxu0 0.0
      %6159 = vmatmul.mubr.f32.gmra.mrb[0].mxu0 %v6084
      %v6160 = vpop.f32.mrb[0].mxu0
      %v6161 = vadd.f32 0.0, %v6160
      %v6162 = vpop.f32.mrb[0].mxu0
      %6163 = vmatprep.mubr.f32.mxu0 0.0
      %6164 = vmatmul.mubr.f32.gmra.mrb[0].mxu0 %v6087
      %v6165 = vpop.f32.mrb[0].mxu0
      %v6166 = vadd.f32 0.0, %v6165
      %v6167 = vpop.f32.mrb[0].mxu0
      %6168 = vdwg.mxu0
      %v6170 = vsel %vm805, %v6156, 0
      %v6173 = vsel %vm805, %v6161, 0
      %v6176 = vsel %vm805, %v6166, 0
      %6178 = vmatprep.subr.mxu0 0.0
      %6179 = vmatpush1.msra.mxu0 %v4919
      %6180 = vmatprep.subr.mxu0 0.0
      %6181 = vmatpush1.msra.mxu0 0.0
      %6182 = vmatprep.subr.mxu0 0.0
      %6183 = vmatpush1.msra.mxu0 0.0
      %6184 = vmatprep.subr.mxu0 0.0
      %6185 = vmatpush1.msra.mxu0 0.0
      %6186 = vmatprep.subr.mxu0 0.0
      %6187 = vmatpush1.msra.mxu0 0.0
      %6188 = vmatprep.subr.mxu0 0.0
      %6189 = vmatpush1.msra.mxu0 0.0
      %6190 = vmatprep.subr.mxu0 0.0
      %6191 = vmatpush1.msra.mxu0 0.0
      %6192 = vmatprep.subr.mxu0 0.0
      %6193 = vmatpush1.msra.mxu0 0.0
      %6194 = vmatprep.subr.mxu0 0.0
      %6195 = vmatpush1.msra.mxu0 0.0
      %6196 = vmatprep.subr.mxu0 0.0
      %6197 = vmatpush1.msra.mxu0 0.0
      %6198 = vmatprep.subr.mxu0 0.0
      %6199 = vmatpush1.msra.mxu0 0.0
      %6200 = vmatprep.subr.mxu0 0.0
      %6201 = vmatpush1.msra.mxu0 0.0
      %6202 = vmatprep.subr.mxu0 0.0
      %6203 = vmatpush1.msra.mxu0 0.0
      %6204 = vmatprep.subr.mxu0 0.0
      %6205 = vmatpush1.msra.mxu0 0.0
      %6206 = vmatprep.subr.mxu0 0.0
      %6207 = vmatpush1.msra.mxu0 0.0
      %6208 = vmatprep.subr.mxu0 0.0
      %6209 = vmatpush1.msra.mxu0 0.0
      %6210 = vmatprep.subr.mxu0 0.0
      %6211 = vmatpush1.msra.mxu0 0.0
      %6212 = vmatprep.subr.mxu0 0.0
      %6213 = vmatpush1.msra.mxu0 0.0
      %6214 = vmatprep.subr.mxu0 0.0
      %6215 = vmatpush1.msra.mxu0 0.0
      %6216 = vmatprep.subr.mxu0 0.0
      %6217 = vmatpush1.msra.mxu0 0.0
      %6218 = vmatprep.subr.mxu0 0.0
      %6219 = vmatpush1.msra.mxu0 0.0
      %6220 = vmatprep.subr.mxu0 0.0
      %6221 = vmatpush1.msra.mxu0 0.0
      %6222 = vmatprep.subr.mxu0 0.0
      %6223 = vmatpush1.msra.mxu0 0.0
      %6224 = vmatprep.subr.mxu0 0.0
      %6225 = vmatpush1.msra.mxu0 0.0
      %6226 = vmatprep.subr.mxu0 0.0
      %6227 = vmatpush1.msra.mxu0 0.0
      %6228 = vmatprep.subr.mxu0 0.0
      %6229 = vmatpush1.msra.mxu0 0.0
      %6230 = vmatprep.subr.mxu0 0.0
      %6231 = vmatpush1.msra.mxu0 0.0
      %6232 = vmatprep.subr.mxu0 0.0
      %6233 = vmatpush1.msra.mxu0 0.0
      %6234 = vmatprep.subr.mxu0 0.0
      %6235 = vmatpush1.msra.mxu0 0.0
      %6236 = vmatprep.subr.mxu0 0.0
      %6237 = vmatpush1.msra.mxu0 0.0
      %6238 = vmatprep.subr.mxu0 0.0
      %6239 = vmatpush1.msra.mxu0 0.0
      %6240 = vmatprep.subr.mxu0 0.0
      %6241 = vmatpush1.msra.mxu0 0.0
      %6242 = vmatprep.mubr.f32.mxu0 0.0
      %6243 = vmatmul.mubr.f32.gmra.mrb[0].mxu0 %v6170
      %v6244 = vpop.f32.mrb[0].mxu0
      %v6245 = vadd.f32 0.0, %v6244
      %v6246 = vpop.f32.mrb[0].mxu0
      %6247 = vmatprep.mubr.f32.mxu0 0.0
      %6248 = vmatmul.mubr.f32.gmra.mrb[0].mxu0 %v6173
      %v6249 = vpop.f32.mrb[0].mxu0
      %v6250 = vadd.f32 0.0, %v6249
      %v6251 = vpop.f32.mrb[0].mxu0
      %6252 = vmatprep.mubr.f32.mxu0 0.0
      %6253 = vmatmul.mubr.f32.gmra.mrb[0].mxu0 %v6176
      %v6254 = vpop.f32.mrb[0].mxu0
      %v6255 = vadd.f32 0.0, %v6254
      %v6256 = vpop.f32.mrb[0].mxu0
      %6257 = vdwg.mxu0
      %v6258 = vadd.f32 %v5945, %v6245
      %v6259 = vadd.f32 %v5946, %v6250
      %v6260 = vadd.f32 %v5947, %v6255
      %v6264 = vrot.slane %v6258, 7
      %v6265 = vrot.slane %v6259, 7
      %v6266 = vsel %vm956, %v6264, %v6265
      %v6267 = vrot.slane %v6260, 7
      %v6268 = vsel %vm956, %v6265, %v6267
      %v6272 = vsel %vm956, %v5012, %v6264
      %6273 = vrot.lane.b32.xlu0 %v3548, 32
      %v6274 = vpop.permute.xlu0 %6273
      %v6276 = vadd.f32 %v5010, %v6274
      %v6277 = vadd.f32 %v5011, %v6274
      %v6278 = vadd.f32 %v6272, %v6274
      %v6279 = vadd.f32 %v6266, %v6274
      %v6280 = vadd.f32 %v6268, %v6274
      %v6281 = vadd.f32 %v3540, %v6276
      %v6282 = vadd.f32 %v3541, %v6277
      %v6283 = vadd.f32 %v3542, %v6278
      %v6284 = vadd.f32 %v3543, %v6279
      %v6285 = vadd.f32 %v3544, %v6280
      %v6286 = vsel %vm586, %v6281, 0.0
      %6287 = vadd.xlane.f32.xlu0 %v6286
      %v6288 = vpop.xlane.xlu0 %6287
      %v6289 = vsel %vm586, %v6282, 0.0
      %6290 = vadd.xlane.f32.xlu0 %v6289
      %v6291 = vpop.xlane.xlu0 %6290
      %v6292 = vsel %vm586, %v6283, 0.0
      %6293 = vadd.xlane.f32.xlu0 %v6292
      %v6294 = vpop.xlane.xlu0 %6293
      %v6295 = vsel %vm586, %v6284, 0.0
      %6296 = vadd.xlane.f32.xlu0 %v6295
      %v6297 = vpop.xlane.xlu0 %6296
      %v6298 = vsel %vm3469, %v6285, 0.0
      %6299 = vadd.xlane.f32.xlu0 %v6298
      %v6300 = vpop.xlane.xlu0 %6299
      %v6301 = vmul.f32 %v6288, %v3473
      %v6302 = vmul.f32 %v6291, %v3473
      %v6303 = vmul.f32 %v6294, %v3473
      %v6304 = vmul.f32 %v6297, %v3473
      %v6305 = vmul.f32 %v6300, %v3473
      %v6306 = vsub.f32 %v6281, %v6301
      %v6307 = vsub.f32 %v6282, %v6302
      %v6308 = vsub.f32 %v6283, %v6303
      %v6309 = vsub.f32 %v6284, %v6304
      %v6310 = vsub.f32 %v6285, %v6305
      %v6311 = vmul.f32 %v6306, %v6306
      %v6312 = vmul.f32 %v6307, %v6307
      %v6313 = vmul.f32 %v6308, %v6308
      %v6314 = vmul.f32 %v6309, %v6309
      %v6315 = vmul.f32 %v6310, %v6310
      %v6316 = vsel %vm586, %v6311, 0.0
      %6317 = vadd.xlane.f32.xlu0 %v6316
      %v6318 = vpop.xlane.xlu0 %6317
      %v6319 = vsel %vm586, %v6312, 0.0
      %6320 = vadd.xlane.f32.xlu0 %v6319
      %v6321 = vpop.xlane.xlu0 %6320
      %v6322 = vsel %vm586, %v6313, 0.0
      %6323 = vadd.xlane.f32.xlu0 %v6322
      %v6324 = vpop.xlane.xlu0 %6323
      %v6325 = vsel %vm586, %v6314, 0.0
      %6326 = vadd.xlane.f32.xlu0 %v6325
      %v6327 = vpop.xlane.xlu0 %6326
      %v6328 = vsel %vm3469, %v6315, 0.0
      %6329 = vadd.xlane.f32.xlu0 %v6328
      %v6330 = vpop.xlane.xlu0 %6329
      %v6331 = vmul.f32 %v6318, %v3473
      %v6332 = vmul.f32 %v6321, %v3473
      %v6333 = vmul.f32 %v6324, %v3473
      %v6334 = vmul.f32 %v6327, %v3473
      %v6335 = vmul.f32 %v6330, %v3473
      %v6336 = vadd.f32 %v6331, 1e-05
      %v6337 = vadd.f32 %v6332, 1e-05
      %v6338 = vadd.f32 %v6333, 1e-05
      %v6339 = vadd.f32 %v6334, 1e-05
      %v6340 = vadd.f32 %v6335, 1e-05
      %v6341 = vrsqrt.pop %v6336
      %v6342 = vrsqrt.pop %v6337
      %v6343 = vrsqrt.pop %v6338
      %v6344 = vrsqrt.pop %v6339
      %v6345 = vrsqrt.pop %v6340
      %v6346 = vmul.f32 %v6306, %v6341
      %v6347 = vmul.f32 %v6307, %v6342
      %v6348 = vmul.f32 %v6308, %v6343
      %v6349 = vmul.f32 %v6309, %v6344
      %v6350 = vmul.f32 %v6310, %v6345
      %6351 = vrot.lane.b32.xlu0 %v3527, 32
      %v6352 = vpop.permute.xlu0 %6351
      %v6354 = vmul.f32 %v6346, %v6352
      %v6355 = vmul.f32 %v6347, %v6352
      %v6356 = vmul.f32 %v6348, %v6352
      %v6357 = vmul.f32 %v6349, %v6352
      %v6358 = vmul.f32 %v6350, %v6352
      %v6359 = vlaneseq
      %v6360 = vshrl.u32 %v6359, 7
      %v6361 = vsub.s32 4, %v6360
      %v6362 = vrot.slane %v574, %v6361
      %v6363 = vadd.f32 %v6354, %v6362
      %v6364 = vadd.f32 %v6355, %v6362
      %v6365 = vadd.f32 %v6356, %v6362
      %v6366 = vadd.f32 %v6357, %v6362
      %v6367 = vadd.f32 %v6358, %v6362
      %v6368 = vlaneseq
      %v6369 = vshrl.u32 %v6368, 7
      %v6370 = vsub.s32 2, %v6369
      %v6371 = vrot.slane %v574, %v6370
      %v6373 = vsel %vm586, %v6363, 0
      %v6376 = vsel %vm586, %v6364, 0
      %v6379 = vsel %vm586, %v6365, 0
      %v6382 = vsel %vm586, %v6366, 0
      %v6385 = vsel %vm586, %v6367, 0
      %6387 = vmatprep.subr.mxu0 0.0
      %6388 = vmatpush1.msra.mxu0 %v548
      %6389 = vmatprep.subr.mxu0 0.0
      %6390 = vmatpush1.msra.mxu0 %v551
      %6391 = vmatprep.subr.mxu0 0.0
      %6392 = vmatpush1.msra.mxu0 %v554
      %6393 = vmatprep.subr.mxu0 0.0
      %6394 = vmatpush1.msra.mxu0 %v557
      %6395 = vmatprep.subr.mxu0 0.0
      %6396 = vmatpush1.msra.mxu0 0.0
      %6397 = vmatprep.subr.mxu0 0.0
      %6398 = vmatpush1.msra.mxu0 0.0
      %6399 = vmatprep.subr.mxu0 0.0
      %6400 = vmatpush1.msra.mxu0 0.0
      %6401 = vmatprep.subr.mxu0 0.0
      %6402 = vmatpush1.msra.mxu0 0.0
      %6403 = vmatprep.subr.mxu0 0.0
      %6404 = vmatpush1.msra.mxu0 0.0
      %6405 = vmatprep.subr.mxu0 0.0
      %6406 = vmatpush1.msra.mxu0 0.0
      %6407 = vmatprep.subr.mxu0 0.0
      %6408 = vmatpush1.msra.mxu0 0.0
      %6409 = vmatprep.subr.mxu0 0.0
      %6410 = vmatpush1.msra.mxu0 0.0
      %6411 = vmatprep.subr.mxu0 0.0
      %6412 = vmatpush1.msra.mxu0 0.0
      %6413 = vmatprep.subr.mxu0 0.0
      %6414 = vmatpush1.msra.mxu0 0.0
      %6415 = vmatprep.subr.mxu0 0.0
      %6416 = vmatpush1.msra.mxu0 0.0
      %6417 = vmatprep.subr.mxu0 0.0
      %6418 = vmatpush1.msra.mxu0 0.0
      %6419 = vmatprep.subr.mxu0 0.0
      %6420 = vmatpush1.msra.mxu0 0.0
      %6421 = vmatprep.subr.mxu0 0.0
      %6422 = vmatpush1.msra.mxu0 0.0
      %6423 = vmatprep.subr.mxu0 0.0
      %6424 = vmatpush1.msra.mxu0 0.0
      %6425 = vmatprep.subr.mxu0 0.0
      %6426 = vmatpush1.msra.mxu0 0.0
      %6427 = vmatprep.subr.mxu0 0.0
      %6428 = vmatpush1.msra.mxu0 0.0
      %6429 = vmatprep.subr.mxu0 0.0
      %6430 = vmatpush1.msra.mxu0 0.0
      %6431 = vmatprep.subr.mxu0 0.0
      %6432 = vmatpush1.msra.mxu0 0.0
      %6433 = vmatprep.subr.mxu0 0.0
      %6434 = vmatpush1.msra.mxu0 0.0
      %6435 = vmatprep.subr.mxu0 0.0
      %6436 = vmatpush1.msra.mxu0 0.0
      %6437 = vmatprep.subr.mxu0 0.0
      %6438 = vmatpush1.msra.mxu0 0.0
      %6439 = vmatprep.subr.mxu0 0.0
      %6440 = vmatpush1.msra.mxu0 0.0
      %6441 = vmatprep.subr.mxu0 0.0
      %6442 = vmatpush1.msra.mxu0 0.0
      %6443 = vmatprep.subr.mxu0 0.0
      %6444 = vmatpush1.msra.mxu0 0.0
      %6445 = vmatprep.subr.mxu0 0.0
      %6446 = vmatpush1.msra.mxu0 0.0
      %6447 = vmatprep.subr.mxu0 0.0
      %6448 = vmatpush1.msra.mxu0 0.0
      %6449 = vmatprep.subr.mxu0 0.0
      %6450 = vmatpush1.msra.mxu0 0.0
      %6451 = vmatprep.mubr.f32.mxu0 0.0
      %6452 = vmatmul.mubr.f32.gmra.mrb[0].mxu0 %v6373
      %v6453 = vpop.f32.mrb[0].mxu0
      %v6454 = vadd.f32 %v6371, %v6453
      %v6455 = vpop.f32.mrb[0].mxu0
      %6456 = vmatprep.mubr.f32.mxu0 0.0
      %6457 = vmatmul.mubr.f32.gmra.mrb[0].mxu0 %v6376
      %v6458 = vpop.f32.mrb[0].mxu0
      %v6459 = vadd.f32 %v6371, %v6458
      %v6460 = vpop.f32.mrb[0].mxu0
      %6461 = vmatprep.mubr.f32.mxu0 0.0
      %6462 = vmatmul.mubr.f32.gmra.mrb[0].mxu0 %v6379
      %v6463 = vpop.f32.mrb[0].mxu0
      %v6464 = vadd.f32 %v6371, %v6463
      %v6465 = vpop.f32.mrb[0].mxu0
      %6466 = vmatprep.mubr.f32.mxu0 0.0
      %6467 = vmatmul.mubr.f32.gmra.mrb[0].mxu0 %v6382
      %v6468 = vpop.f32.mrb[0].mxu0
      %v6469 = vadd.f32 %v6371, %v6468
      %v6470 = vpop.f32.mrb[0].mxu0
      %6471 = vmatprep.mubr.f32.mxu0 0.0
      %6472 = vmatmul.mubr.f32.gmra.mrb[0].mxu0 %v6385
      %v6473 = vpop.f32.mrb[0].mxu0
      %v6474 = vadd.f32 %v6371, %v6473
      %v6475 = vpop.f32.mrb[0].mxu0
      %6476 = vdwg.mxu0
      %v6477 = vmul.f32 %v6454, 0.5
      %v6478 = vmul.f32 %v6459, 0.5
      %v6479 = vmul.f32 %v6464, 0.5
      %v6480 = vmul.f32 %v6469, 0.5
      %v6481 = vmul.f32 %v6474, 0.5
      %v6482 = vmul.f32 %v6454, 0.70710677
      %v6483 = vmul.f32 %v6459, 0.70710677
      %v6484 = vmul.f32 %v6464, 0.70710677
      %v6485 = vmul.f32 %v6469, 0.70710677
      %v6486 = vmul.f32 %v6474, 0.70710677
      %vm6487 = vcmp.ge.f32.partialorder %v6482, 0.0
      %vm6488 = vcmp.ge.f32.partialorder %v6483, 0.0
      %vm6489 = vcmp.ge.f32.partialorder %v6484, 0.0
      %vm6490 = vcmp.ge.f32.partialorder %v6485, 0.0
      %vm6491 = vcmp.ge.f32.partialorder %v6486, 0.0
      %v6492 = vsel %vm6487, 1.0, -1.0
      %v6493 = vsel %vm6488, 1.0, -1.0
      %v6494 = vsel %vm6489, 1.0, -1.0
      %v6495 = vsel %vm6490, 1.0, -1.0
      %v6496 = vsel %vm6491, 1.0, -1.0
      %v6497 = vand.u32 2147483647, %v6482
      %v6498 = vand.u32 2147483647, %v6483
      %v6499 = vand.u32 2147483647, %v6484
      %v6500 = vand.u32 2147483647, %v6485
      %v6501 = vand.u32 2147483647, %v6486
      %v6502 = vmul.f32 %v6497, 0.3275911
      %v6503 = vmul.f32 %v6498, 0.3275911
      %v6504 = vmul.f32 %v6499, 0.3275911
      %v6505 = vmul.f32 %v6500, 0.3275911
      %v6506 = vmul.f32 %v6501, 0.3275911
      %v6507 = vadd.f32 %v6502, 1.0
      %v6508 = vadd.f32 %v6503, 1.0
      %v6509 = vadd.f32 %v6504, 1.0
      %v6510 = vadd.f32 %v6505, 1.0
      %v6511 = vadd.f32 %v6506, 1.0
      %v6512 = vrcp.pop %v6507
      %v6513 = vmul.f32 1.0, %v6512
      %v6514 = vrcp.pop %v6508
      %v6515 = vmul.f32 1.0, %v6514
      %v6516 = vrcp.pop %v6509
      %v6517 = vmul.f32 1.0, %v6516
      %v6518 = vrcp.pop %v6510
      %v6519 = vmul.f32 1.0, %v6518
      %v6520 = vrcp.pop %v6511
      %v6521 = vmul.f32 1.0, %v6520
      %v6522 = vmul.f32 %v6513, 1.0614054
      %v6523 = vmul.f32 %v6515, 1.0614054
      %v6524 = vmul.f32 %v6517, 1.0614054
      %v6525 = vmul.f32 %v6519, 1.0614054
      %v6526 = vmul.f32 %v6521, 1.0614054
      %v6527 = vadd.f32 %v6522, -1.4531521
      %v6528 = vadd.f32 %v6523, -1.4531521
      %v6529 = vadd.f32 %v6524, -1.4531521
      %v6530 = vadd.f32 %v6525, -1.4531521
      %v6531 = vadd.f32 %v6526, -1.4531521
      %v6532 = vmul.f32 %v6527, %v6513
      %v6533 = vmul.f32 %v6528, %v6515
      %v6534 = vmul.f32 %v6529, %v6517
      %v6535 = vmul.f32 %v6530, %v6519
      %v6536 = vmul.f32 %v6531, %v6521
      %v6537 = vadd.f32 %v6532, 1.4214138
      %v6538 = vadd.f32 %v6533, 1.4214138
      %v6539 = vadd.f32 %v6534, 1.4214138
      %v6540 = vadd.f32 %v6535, 1.4214138
      %v6541 = vadd.f32 %v6536, 1.4214138
      %v6542 = vmul.f32 %v6537, %v6513
      %v6543 = vmul.f32 %v6538, %v6515
      %v6544 = vmul.f32 %v6539, %v6517
      %v6545 = vmul.f32 %v6540, %v6519
      %v6546 = vmul.f32 %v6541, %v6521
      %v6547 = vadd.f32 %v6542, -0.28449672
      %v6548 = vadd.f32 %v6543, -0.28449672
      %v6549 = vadd.f32 %v6544, -0.28449672
      %v6550 = vadd.f32 %v6545, -0.28449672
      %v6551 = vadd.f32 %v6546, -0.28449672
      %v6552 = vmul.f32 %v6547, %v6513
      %v6553 = vmul.f32 %v6548, %v6515
      %v6554 = vmul.f32 %v6549, %v6517
      %v6555 = vmul.f32 %v6550, %v6519
      %v6556 = vmul.f32 %v6551, %v6521
      %v6557 = vadd.f32 %v6552, 0.2548296
      %v6558 = vadd.f32 %v6553, 0.2548296
      %v6559 = vadd.f32 %v6554, 0.2548296
      %v6560 = vadd.f32 %v6555, 0.2548296
      %v6561 = vadd.f32 %v6556, 0.2548296
      %v6562 = vmul.f32 %v6557, %v6513
      %v6563 = vmul.f32 %v6558, %v6515
      %v6564 = vmul.f32 %v6559, %v6517
      %v6565 = vmul.f32 %v6560, %v6519
      %v6566 = vmul.f32 %v6561, %v6521
      %v6567 = vsub.f32 0.0, %v6497
      %v6568 = vsub.f32 0.0, %v6498
      %v6569 = vsub.f32 0.0, %v6499
      %v6570 = vsub.f32 0.0, %v6500
      %v6571 = vsub.f32 0.0, %v6501
      %v6572 = vmul.f32 %v6567, %v6497
      %v6573 = vmul.f32 %v6568, %v6498
      %v6574 = vmul.f32 %v6569, %v6499
      %v6575 = vmul.f32 %v6570, %v6500
      %v6576 = vmul.f32 %v6571, %v6501
      %v6577 = vmul.f32 %v6572, 1.442695
      %v6578 = vpow.pop %v6577
      %v6579 = vmul.f32 %v6573, 1.442695
      %v6580 = vpow.pop %v6579
      %v6581 = vmul.f32 %v6574, 1.442695
      %v6582 = vpow.pop %v6581
      %v6583 = vmul.f32 %v6575, 1.442695
      %v6584 = vpow.pop %v6583
      %v6585 = vmul.f32 %v6576, 1.442695
      %v6586 = vpow.pop %v6585
      %v6587 = vmul.f32 %v6562, %v6578
      %v6588 = vmul.f32 %v6563, %v6580
      %v6589 = vmul.f32 %v6564, %v6582
      %v6590 = vmul.f32 %v6565, %v6584
      %v6591 = vmul.f32 %v6566, %v6586
      %v6592 = vsub.f32 1.0, %v6587
      %v6593 = vsub.f32 1.0, %v6588
      %v6594 = vsub.f32 1.0, %v6589
      %v6595 = vsub.f32 1.0, %v6590
      %v6596 = vsub.f32 1.0, %v6591
      %v6597 = vmul.f32 %v6492, %v6592
      %v6598 = vmul.f32 %v6493, %v6593
      %v6599 = vmul.f32 %v6494, %v6594
      %v6600 = vmul.f32 %v6495, %v6595
      %v6601 = vmul.f32 %v6496, %v6596
      %v6602 = vadd.f32 %v6597, 1.0
      %v6603 = vadd.f32 %v6598, 1.0
      %v6604 = vadd.f32 %v6599, 1.0
      %v6605 = vadd.f32 %v6600, 1.0
      %v6606 = vadd.f32 %v6601, 1.0
      %v6607 = vmul.f32 %v6477, %v6602
      %v6608 = vmul.f32 %v6478, %v6603
      %v6609 = vmul.f32 %v6479, %v6604
      %v6610 = vmul.f32 %v6480, %v6605
      %v6611 = vmul.f32 %v6481, %v6606
      %6612 = vmatprep.subr.mxu0 0.0
      %6613 = vmatpush1.msra.mxu0 %v558
      %6614 = vmatprep.subr.mxu0 0.0
      %6615 = vmatpush1.msra.mxu0 %v559
      %6616 = vmatprep.subr.mxu0 0.0
      %6617 = vmatpush1.msra.mxu0 %v560
      %6618 = vmatprep.subr.mxu0 0.0
      %6619 = vmatpush1.msra.mxu0 %v561
      %6620 = vmatprep.subr.mxu0 0.0
      %6621 = vmatpush1.msra.mxu0 %v562
      %6622 = vmatprep.subr.mxu0 0.0
      %6623 = vmatpush1.msra.mxu0 %v563
      %6624 = vmatprep.subr.mxu0 0.0
      %6625 = vmatpush1.msra.mxu0 %v564
      %6626 = vmatprep.subr.mxu0 0.0
      %6627 = vmatpush1.msra.mxu0 %v565
      %6628 = vmatprep.subr.mxu0 0.0
      %6629 = vmatpush1.msra.mxu0 %v566
      %6630 = vmatprep.subr.mxu0 0.0
      %6631 = vmatpush1.msra.mxu0 %v567
      %6632 = vmatprep.subr.mxu0 0.0
      %6633 = vmatpush1.msra.mxu0 %v568
      %6634 = vmatprep.subr.mxu0 0.0
      %6635 = vmatpush1.msra.mxu0 %v569
      %6636 = vmatprep.subr.mxu0 0.0
      %6637 = vmatpush1.msra.mxu0 %v570
      %6638 = vmatprep.subr.mxu0 0.0
      %6639 = vmatpush1.msra.mxu0 %v571
      %6640 = vmatprep.subr.mxu0 0.0
      %6641 = vmatpush1.msra.mxu0 %v572
      %6642 = vmatprep.subr.mxu0 0.0
      %6643 = vmatpush1.msra.mxu0 %v573
      %6644 = vmatprep.subr.mxu0 0.0
      %6645 = vmatpush1.msra.mxu0 0.0
      %6646 = vmatprep.subr.mxu0 0.0
      %6647 = vmatpush1.msra.mxu0 0.0
      %6648 = vmatprep.subr.mxu0 0.0
      %6649 = vmatpush1.msra.mxu0 0.0
      %6650 = vmatprep.subr.mxu0 0.0
      %6651 = vmatpush1.msra.mxu0 0.0
      %6652 = vmatprep.subr.mxu0 0.0
      %6653 = vmatpush1.msra.mxu0 0.0
      %6654 = vmatprep.subr.mxu0 0.0
      %6655 = vmatpush1.msra.mxu0 0.0
      %6656 = vmatprep.subr.mxu0 0.0
      %6657 = vmatpush1.msra.mxu0 0.0
      %6658 = vmatprep.subr.mxu0 0.0
      %6659 = vmatpush1.msra.mxu0 0.0
      %6660 = vmatprep.subr.mxu0 0.0
      %6661 = vmatpush1.msra.mxu0 0.0
      %6662 = vmatprep.subr.mxu0 0.0
      %6663 = vmatpush1.msra.mxu0 0.0
      %6664 = vmatprep.subr.mxu0 0.0
      %6665 = vmatpush1.msra.mxu0 0.0
      %6666 = vmatprep.subr.mxu0 0.0
      %6667 = vmatpush1.msra.mxu0 0.0
      %6668 = vmatprep.subr.mxu0 0.0
      %6669 = vmatpush1.msra.mxu0 0.0
      %6670 = vmatprep.subr.mxu0 0.0
      %6671 = vmatpush1.msra.mxu0 0.0
      %6672 = vmatprep.subr.mxu0 0.0
      %6673 = vmatpush1.msra.mxu0 0.0
      %6674 = vmatprep.subr.mxu0 0.0
      %6675 = vmatpush1.msra.mxu0 0.0
      %6676 = vmatprep.mubr.f32.mxu0 0.0
      %6677 = vmatmul.mubr.f32.gmra.mrb[0].mxu0 %v6607
      %v6678 = vpop.f32.mrb[0].mxu0
      %v6679 = vadd.f32 %v3527, %v6678
      %v6680 = vpop.f32.mrb[0].mxu0
      %6681 = vmatprep.mubr.f32.mxu0 0.0
      %6682 = vmatmul.mubr.f32.gmra.mrb[0].mxu0 %v6608
      %v6683 = vpop.f32.mrb[0].mxu0
      %v6684 = vadd.f32 %v3527, %v6683
      %v6685 = vpop.f32.mrb[0].mxu0
      %6686 = vmatprep.mubr.f32.mxu0 0.0
      %6687 = vmatmul.mubr.f32.gmra.mrb[0].mxu0 %v6609
      %v6688 = vpop.f32.mrb[0].mxu0
      %v6689 = vadd.f32 %v3527, %v6688
      %v6690 = vpop.f32.mrb[0].mxu0
      %6691 = vmatprep.mubr.f32.mxu0 0.0
      %6692 = vmatmul.mubr.f32.gmra.mrb[0].mxu0 %v6610
      %v6693 = vpop.f32.mrb[0].mxu0
      %v6694 = vadd.f32 %v3527, %v6693
      %v6695 = vpop.f32.mrb[0].mxu0
      %6696 = vmatprep.mubr.f32.mxu0 0.0
      %6697 = vmatmul.mubr.f32.gmra.mrb[0].mxu0 %v6611
      %v6698 = vpop.f32.mrb[0].mxu0
      %v6699 = vadd.f32 %v3527, %v6698
      %v6700 = vpop.f32.mrb[0].mxu0
      %6701 = vdwg.mxu0
      %v6702 = vadd.f32 %v6363, %v6679
      %v6703 = vadd.f32 %v6364, %v6684
      %v6704 = vadd.f32 %v6365, %v6689
      %v6705 = vadd.f32 %v6366, %v6694
      %v6706 = vadd.f32 %v6367, %v6699
      %v6707 = vsel %vm586, %v6702, 0.0
      %6708 = vadd.xlane.f32.xlu0 %v6707
      %v6709 = vpop.xlane.xlu0 %6708
      %v6710 = vsel %vm586, %v6703, 0.0
      %6711 = vadd.xlane.f32.xlu0 %v6710
      %v6712 = vpop.xlane.xlu0 %6711
      %v6713 = vsel %vm586, %v6704, 0.0
      %6714 = vadd.xlane.f32.xlu0 %v6713
      %v6715 = vpop.xlane.xlu0 %6714
      %v6716 = vsel %vm586, %v6705, 0.0
      %6717 = vadd.xlane.f32.xlu0 %v6716
      %v6718 = vpop.xlane.xlu0 %6717
      %v6719 = vsel %vm3469, %v6706, 0.0
      %6720 = vadd.xlane.f32.xlu0 %v6719
      %v6721 = vpop.xlane.xlu0 %6720
      %v6722 = vmul.f32 %v6709, %v3473
      %v6723 = vmul.f32 %v6712, %v3473
      %v6724 = vmul.f32 %v6715, %v3473
      %v6725 = vmul.f32 %v6718, %v3473
      %v6726 = vmul.f32 %v6721, %v3473
      %v6727 = vsub.f32 %v6702, %v6722
      %v6728 = vsub.f32 %v6703, %v6723
      %v6729 = vsub.f32 %v6704, %v6724
      %v6730 = vsub.f32 %v6705, %v6725
      %v6731 = vsub.f32 %v6706, %v6726
      %v6732 = vmul.f32 %v6727, %v6727
      %v6733 = vmul.f32 %v6728, %v6728
      %v6734 = vmul.f32 %v6729, %v6729
      %v6735 = vmul.f32 %v6730, %v6730
      %v6736 = vmul.f32 %v6731, %v6731
      %v6737 = vsel %vm586, %v6732, 0.0
      %6738 = vadd.xlane.f32.xlu0 %v6737
      %v6739 = vpop.xlane.xlu0 %6738
      %v6740 = vsel %vm586, %v6733, 0.0
      %6741 = vadd.xlane.f32.xlu0 %v6740
      %v6742 = vpop.xlane.xlu0 %6741
      %v6743 = vsel %vm586, %v6734, 0.0
      %6744 = vadd.xlane.f32.xlu0 %v6743
      %v6745 = vpop.xlane.xlu0 %6744
      %v6746 = vsel %vm586, %v6735, 0.0
      %6747 = vadd.xlane.f32.xlu0 %v6746
      %v6748 = vpop.xlane.xlu0 %6747
      %v6749 = vsel %vm3469, %v6736, 0.0
      %6750 = vadd.xlane.f32.xlu0 %v6749
      %v6751 = vpop.xlane.xlu0 %6750
      %v6752 = vmul.f32 %v6739, %v3473
      %v6753 = vmul.f32 %v6742, %v3473
      %v6754 = vmul.f32 %v6745, %v3473
      %v6755 = vmul.f32 %v6748, %v3473
      %v6756 = vmul.f32 %v6751, %v3473
      %v6757 = vadd.f32 %v6752, 1e-05
      %v6758 = vadd.f32 %v6753, 1e-05
      %v6759 = vadd.f32 %v6754, 1e-05
      %v6760 = vadd.f32 %v6755, 1e-05
      %v6761 = vadd.f32 %v6756, 1e-05
      %v6762 = vrsqrt.pop %v6757
      %v6763 = vrsqrt.pop %v6758
      %v6764 = vrsqrt.pop %v6759
      %v6765 = vrsqrt.pop %v6760
      %v6766 = vrsqrt.pop %v6761
      %v6767 = vmul.f32 %v6727, %v6762
      %v6768 = vmul.f32 %v6728, %v6763
      %v6769 = vmul.f32 %v6729, %v6764
      %v6770 = vmul.f32 %v6730, %v6765
      %v6771 = vmul.f32 %v6731, %v6766
      %6773 = vrot.lane.b32.xlu0 %v6362, 96
      %v6774 = vpop.permute.xlu0 %6773
      %v6776 = vmul.f32 %v6767, %v6774
      %v6777 = vmul.f32 %v6768, %v6774
      %v6778 = vmul.f32 %v6769, %v6774
      %v6779 = vmul.f32 %v6770, %v6774
      %v6780 = vmul.f32 %v6771, %v6774
      %6781 = vrot.lane.b32.xlu0 %v6362, 64
      %v6782 = vpop.permute.xlu0 %6781
      %v6784 = vadd.f32 %v6776, %v6782
      %v6785 = vadd.f32 %v6777, %v6782
      %v6786 = vadd.f32 %v6778, %v6782
      %v6787 = vadd.f32 %v6779, %v6782
      %v6788 = vadd.f32 %v6780, %v6782
      %6789 = vst.msk [vmem:[#allocation2] sm:$0xff] %vm586, %v6784
      %6790 = vst.msk [vmem:[#allocation2 + $0x8] sm:$0xff] %vm586, %v6785
      %6791 = vst.msk [vmem:[#allocation2 + $0x10] sm:$0xff] %vm586, %v6786
      %6792 = vst.msk [vmem:[#allocation2 + $0x18] sm:$0xff] %vm586, %v6787
      %6793 = vst.msk [vmem:[#allocation2 + $0x20] sm:$0x3] %vm3469, %v6788
      %p6794 = scmp.eq.s32.totalorder %s19, 1
      // Predicated region
      $region57: #{cross_guided_mlmh_forward.1} parent=51 // pred_check
        %p6795 = pneg %p6794
      $region58: #{cross_guided_mlmh_forward.1} parent=51 // pred_check_branch
        %6797 = sbr.rel (%p6795) target = $region60
      $region59: #{cross_guided_mlmh_forward.1} parent=51 // pred_region
        %v6798 = vld [vmem:[%s4] sm:$0x1]
        %v6799 = vld [vmem:[%s3] sm:$0xff]
        %v6800 = vld [vmem:[%s3 + $0x8] sm:$0xff]
        %v6801 = vld [vmem:[%s3 + $0x10] sm:$0xff]
        %v6802 = vld [vmem:[%s3 + $0x18] sm:$0xff]
        %v6803 = vld [vmem:[%s3 + $0x20] sm:$0x1]
        %v6804 = vsel %vm586, %v6784, 0.0
        %6805 = vadd.xlane.f32.xlu0 %v6804
        %v6806 = vpop.xlane.xlu0 %6805
        %v6807 = vsel %vm586, %v6785, 0.0
        %6808 = vadd.xlane.f32.xlu0 %v6807
        %v6809 = vpop.xlane.xlu0 %6808
        %v6810 = vsel %vm586, %v6786, 0.0
        %6811 = vadd.xlane.f32.xlu0 %v6810
        %v6812 = vpop.xlane.xlu0 %6811
        %v6813 = vsel %vm586, %v6787, 0.0
        %6814 = vadd.xlane.f32.xlu0 %v6813
        %v6815 = vpop.xlane.xlu0 %6814
        %v6816 = vsel %vm3469, %v6788, 0.0
        %6817 = vadd.xlane.f32.xlu0 %v6816
        %v6818 = vpop.xlane.xlu0 %6817
        %v6819 = vmul.f32 %v6806, %v3473
        %v6820 = vmul.f32 %v6809, %v3473
        %v6821 = vmul.f32 %v6812, %v3473
        %v6822 = vmul.f32 %v6815, %v3473
        %v6823 = vmul.f32 %v6818, %v3473
        %v6824 = vsub.f32 %v6784, %v6819
        %v6825 = vsub.f32 %v6785, %v6820
        %v6826 = vsub.f32 %v6786, %v6821
        %v6827 = vsub.f32 %v6787, %v6822
        %v6828 = vsub.f32 %v6788, %v6823
        %v6829 = vmul.f32 %v6824, %v6824
        %v6830 = vmul.f32 %v6825, %v6825
        %v6831 = vmul.f32 %v6826, %v6826
        %v6832 = vmul.f32 %v6827, %v6827
        %v6833 = vmul.f32 %v6828, %v6828
        %v6834 = vsel %vm586, %v6829, 0.0
        %6835 = vadd.xlane.f32.xlu0 %v6834
        %v6836 = vpop.xlane.xlu0 %6835
        %v6837 = vsel %vm586, %v6830, 0.0
        %6838 = vadd.xlane.f32.xlu0 %v6837
        %v6839 = vpop.xlane.xlu0 %6838
        %v6840 = vsel %vm586, %v6831, 0.0
        %6841 = vadd.xlane.f32.xlu0 %v6840
        %v6842 = vpop.xlane.xlu0 %6841
        %v6843 = vsel %vm586, %v6832, 0.0
        %6844 = vadd.xlane.f32.xlu0 %v6843
        %v6845 = vpop.xlane.xlu0 %6844
        %v6846 = vsel %vm3469, %v6833, 0.0
        %6847 = vadd.xlane.f32.xlu0 %v6846
        %v6848 = vpop.xlane.xlu0 %6847
        %v6849 = vmul.f32 %v6836, %v3473
        %v6850 = vmul.f32 %v6839, %v3473
        %v6851 = vmul.f32 %v6842, %v3473
        %v6852 = vmul.f32 %v6845, %v3473
        %v6853 = vmul.f32 %v6848, %v3473
        %v6854 = vadd.f32 %v6849, 1e-05
        %v6855 = vadd.f32 %v6850, 1e-05
        %v6856 = vadd.f32 %v6851, 1e-05
        %v6857 = vadd.f32 %v6852, 1e-05
        %v6858 = vadd.f32 %v6853, 1e-05
        %v6859 = vrsqrt.pop %v6854
        %v6860 = vrsqrt.pop %v6855
        %v6861 = vrsqrt.pop %v6856
        %v6862 = vrsqrt.pop %v6857
        %v6863 = vrsqrt.pop %v6858
        %v6864 = vmul.f32 %v6824, %v6859
        %v6865 = vmul.f32 %v6825, %v6860
        %v6866 = vmul.f32 %v6826, %v6861
        %v6867 = vmul.f32 %v6827, %v6862
        %v6868 = vmul.f32 %v6828, %v6863
        %v6870 = vlaneseq
        %v6871 = vshrl.u32 %v6870, 7
        %v6872 = vsub.s32 0, %v6871
        %v6873 = vrot.slane %v6798, %v6872
        %6874 = vrot.lane.b32.xlu0 %v6873, 64
        %v6875 = vpop.permute.xlu0 %6874
        %v6877 = vmul.f32 %v6864, %v6875
        %v6878 = vmul.f32 %v6865, %v6875
        %v6879 = vmul.f32 %v6866, %v6875
        %v6880 = vmul.f32 %v6867, %v6875
        %v6881 = vmul.f32 %v6868, %v6875
        %6882 = vrot.lane.b32.xlu0 %v6873, 32
        %v6883 = vpop.permute.xlu0 %6882
        %v6885 = vadd.f32 %v6877, %v6883
        %v6886 = vadd.f32 %v6878, %v6883
        %v6887 = vadd.f32 %v6879, %v6883
        %v6888 = vadd.f32 %v6880, %v6883
        %v6889 = vadd.f32 %v6881, %v6883
        %v6890 = vlaneseq
        %v6891 = vshrl.u32 %v6890, 7
        %v6892 = vsub.s32 0, %v6891
        %v6893 = vrot.slane %v6803, %v6892
        %v6895 = vsel %vm586, %v6885, 0
        %v6898 = vsel %vm586, %v6886, 0
        %v6901 = vsel %vm586, %v6887, 0
        %v6904 = vsel %vm586, %v6888, 0
        %v6907 = vsel %vm586, %v6889, 0
        %6909 = vmatprep.subr.mxu0 0.0
        %6910 = vmatpush1.msra.mxu0 %v6799
        %6911 = vmatprep.subr.mxu0 0.0
        %6912 = vmatpush1.msra.mxu0 %v6800
        %6913 = vmatprep.subr.mxu0 0.0
        %6914 = vmatpush1.msra.mxu0 %v6801
        %6915 = vmatprep.subr.mxu0 0.0
        %6916 = vmatpush1.msra.mxu0 %v6802
        %6917 = vmatprep.subr.mxu0 0.0
        %6918 = vmatpush1.msra.mxu0 0.0
        %6919 = vmatprep.subr.mxu0 0.0
        %6920 = vmatpush1.msra.mxu0 0.0
        %6921 = vmatprep.subr.mxu0 0.0
        %6922 = vmatpush1.msra.mxu0 0.0
        %6923 = vmatprep.subr.mxu0 0.0
        %6924 = vmatpush1.msra.mxu0 0.0
        %6925 = vmatprep.subr.mxu0 0.0
        %6926 = vmatpush1.msra.mxu0 0.0
        %6927 = vmatprep.subr.mxu0 0.0
        %6928 = vmatpush1.msra.mxu0 0.0
        %6929 = vmatprep.subr.mxu0 0.0
        %6930 = vmatpush1.msra.mxu0 0.0
        %6931 = vmatprep.subr.mxu0 0.0
        %6932 = vmatpush1.msra.mxu0 0.0
        %6933 = vmatprep.subr.mxu0 0.0
        %6934 = vmatpush1.msra.mxu0 0.0
        %6935 = vmatprep.subr.mxu0 0.0
        %6936 = vmatpush1.msra.mxu0 0.0
        %6937 = vmatprep.subr.mxu0 0.0
        %6938 = vmatpush1.msra.mxu0 0.0
        %6939 = vmatprep.subr.mxu0 0.0
        %6940 = vmatpush1.msra.mxu0 0.0
        %6941 = vmatprep.subr.mxu0 0.0
        %6942 = vmatpush1.msra.mxu0 0.0
        %6943 = vmatprep.subr.mxu0 0.0
        %6944 = vmatpush1.msra.mxu0 0.0
        %6945 = vmatprep.subr.mxu0 0.0
        %6946 = vmatpush1.msra.mxu0 0.0
        %6947 = vmatprep.subr.mxu0 0.0
        %6948 = vmatpush1.msra.mxu0 0.0
        %6949 = vmatprep.subr.mxu0 0.0
        %6950 = vmatpush1.msra.mxu0 0.0
        %6951 = vmatprep.subr.mxu0 0.0
        %6952 = vmatpush1.msra.mxu0 0.0
        %6953 = vmatprep.subr.mxu0 0.0
        %6954 = vmatpush1.msra.mxu0 0.0
        %6955 = vmatprep.subr.mxu0 0.0
        %6956 = vmatpush1.msra.mxu0 0.0
        %6957 = vmatprep.subr.mxu0 0.0
        %6958 = vmatpush1.msra.mxu0 0.0
        %6959 = vmatprep.subr.mxu0 0.0
        %6960 = vmatpush1.msra.mxu0 0.0
        %6961 = vmatprep.subr.mxu0 0.0
        %6962 = vmatpush1.msra.mxu0 0.0
        %6963 = vmatprep.subr.mxu0 0.0
        %6964 = vmatpush1.msra.mxu0 0.0
        %6965 = vmatprep.subr.mxu0 0.0
        %6966 = vmatpush1.msra.mxu0 0.0
        %6967 = vmatprep.subr.mxu0 0.0
        %6968 = vmatpush1.msra.mxu0 0.0
        %6969 = vmatprep.subr.mxu0 0.0
        %6970 = vmatpush1.msra.mxu0 0.0
        %6971 = vmatprep.subr.mxu0 0.0
        %6972 = vmatpush1.msra.mxu0 0.0
        %6973 = vmatprep.mubr.f32.mxu0 0.0
        %6974 = vmatmul.mubr.f32.gmra.mrb[0].mxu0 %v6895
        %v6975 = vpop.f32.mrb[0].mxu0
        %v6976 = vadd.f32 %v6893, %v6975
        %v6977 = vpop.f32.mrb[0].mxu0
        %6978 = vmatprep.mubr.f32.mxu0 0.0
        %6979 = vmatmul.mubr.f32.gmra.mrb[0].mxu0 %v6898
        %v6980 = vpop.f32.mrb[0].mxu0
        %v6981 = vadd.f32 %v6893, %v6980
        %v6982 = vpop.f32.mrb[0].mxu0
        %6983 = vmatprep.mubr.f32.mxu0 0.0
        %6984 = vmatmul.mubr.f32.gmra.mrb[0].mxu0 %v6901
        %v6985 = vpop.f32.mrb[0].mxu0
        %v6986 = vadd.f32 %v6893, %v6985
        %v6987 = vpop.f32.mrb[0].mxu0
        %6988 = vmatprep.mubr.f32.mxu0 0.0
        %6989 = vmatmul.mubr.f32.gmra.mrb[0].mxu0 %v6904
        %v6990 = vpop.f32.mrb[0].mxu0
        %v6991 = vadd.f32 %v6893, %v6990
        %v6992 = vpop.f32.mrb[0].mxu0
        %6993 = vmatprep.mubr.f32.mxu0 0.0
        %6994 = vmatmul.mubr.f32.gmra.mrb[0].mxu0 %v6907
        %v6995 = vpop.f32.mrb[0].mxu0
        %v6996 = vadd.f32 %v6893, %v6995
        %v6997 = vpop.f32.mrb[0].mxu0
        %6998 = vdwg.mxu0
        %6999 = vst [vmem:[%s8] sm:$0xff] %v6976
        %7000 = vst [vmem:[%s8 + $0x8] sm:$0xff] %v6981
        %7001 = vst [vmem:[%s8 + $0x10] sm:$0xff] %v6986
        %7002 = vst [vmem:[%s8 + $0x18] sm:$0xff] %v6991
        %7003 = vst [vmem:[%s8 + $0x20] sm:$0x3] %v6996
      $region60: #{cross_guided_mlmh_forward.1} parent=51 // pred_fallthru
        _
      // Predicated region
      $region61: #{cross_guided_mlmh_forward.1} parent=51 // pred_check
        %p7004 = pneg %p215
      $region62: #{cross_guided_mlmh_forward.1} parent=51 // pred_check_branch
        %7006 = sbr.rel (%p7004) target = $region64
      $region63: #{cross_guided_mlmh_forward.1} parent=51 // pred_region
        _
      $region64: #{cross_guided_mlmh_forward.1} parent=51 // pred_fallthru
        _
      // Predicated region
      $region65: #{cross_guided_mlmh_forward.1} parent=51 // pred_check
        %p7007 = pneg %p215
      $region66: #{cross_guided_mlmh_forward.1} parent=51 // pred_check_branch
        %7009 = sbr.rel (%p7007) target = $region68
      $region67: #{cross_guided_mlmh_forward.1} parent=51 // pred_region
        _
      $region68: #{cross_guided_mlmh_forward.1} parent=51 // pred_fallthru
        _
    $region52: #{cross_guided_mlmh_forward.1} parent=5 // pred_fallthru
      _
    %p7010 = scmp.le.s32.totalorder 2, %s14
    // Predicated region
    $region69: #{cross_guided_mlmh_forward.1} parent=5 // pred_check
      %p7011 = pneg %p7010
    $region70: #{cross_guided_mlmh_forward.1} parent=5 // pred_check_branch
      %7013 = sbr.rel (%p7011) target = $region72
    $region71: #{cross_guided_mlmh_forward.1} parent=5 // pred_region
      %s7014 = ssub.s32 %s14, 2
    $region72: #{cross_guided_mlmh_forward.1} parent=5 // pred_fallthru
      _
  $region6: #{cross_guided_mlmh_forward.1} parent=0 // loop_footer
    %s18 = sadd.s32 1, %s14
  $region7: #{cross_guided_mlmh_forward.1} parent=0 // loop_footer_branch
    %13 = sbr.rel target = $region3
  $region8: #{cross_guided_mlmh_forward.1} parent=0 // loop_exit
    _

</llo_original>
